<compile_context>
chip_gen: v5e
topology: v5e:2x2
jax: 0.10.0
libtpu: 0.0.40
codegen_flags: <defaults>
</compile_context>

<pallas_src>
import functools

import jax
import jax.numpy as jnp
from jax.experimental import pallas as pl
from jax.experimental.pallas import tpu as pltpu

_LANE = 128


def _cdiv(a, b):
    return (a + b - 1) // b


def _round_up(v, m):
    return ((v + m - 1) // m) * m


def _mhcls_kernel(x_ref, w_ref, b_ref, out_ref, acc_ref):
    # x_ref:   (TB, CC, HW)     VMEM -- NCHW with spatial flattened; HW on lanes
    # w_ref:   (CC, OUT_PAD)    VMEM -- channel chunk of the concatenated weights
    # b_ref:   (1, OUT_PAD)     VMEM -- concatenated biases
    # out_ref: (TB, OUT_PAD)    VMEM
    # acc_ref: (TB, OUT_PAD)    VMEM f32 scratch, resident across the channel axis
    k = pl.program_id(1)

    @pl.when(k == 0)
    def _():
        acc_ref[...] = jnp.zeros_like(acc_ref)

    # Lane-axis (HW) max on the XLU; any relayout of pooled before the MXU LHS is
    # hidden under the next tile's DMA once the grid has >= 2 steps.
    pooled = jnp.max(x_ref[...], axis=-1)                      # (TB, CC)
    acc_ref[...] += jnp.dot(pooled.astype(w_ref.dtype), w_ref[...],
                            preferred_element_type=jnp.float32)

    @pl.when(k == pl.num_programs(1) - 1)
    def _():
        out_ref[...] = acc_ref[...] + b_ref[...]


def _vmem_budget_and_limit():
    """Per-chip VMEM budget (for tile sizing) and an explicit Mosaic limit."""
    try:
        cap = int(pltpu.get_tpu_info().vmem_capacity_bytes)    # 128 MiB v5e/v6e, 64 MiB v7x
    except Exception:
        cap = 64 * 1024 * 1024                                 # conservative fallback
    budget = cap // 2                 # what our own arithmetic targets
    limit = (cap * 3) // 4            # explicit scoped-VMEM limit for the compiler
    return budget, limit


def _pick_tiles(B, C, HW, x_itemsize, w_itemsize, out_pad, vmem_budget):
    """Pick (batch tile, channel chunk) from the *padded* VMEM footprint."""
    sub_x = 32 // x_itemsize          # sublane pack: 8 (f32), 16 (bf16)
    sub_w = 32 // w_itemsize
    hw_p = _round_up(HW, _LANE)       # lane padding of the short spatial minor axis

    # Resident bytes that do not scale with tb (worst case: W double-buffered).
    fixed = 2 * _round_up(C, sub_w) * out_pad * w_itemsize     # weight blocks
    fixed += 8 * out_pad * 4                                   # bias block
    # Bytes per batch row: x block (x2 buffers, lane+sublane padded),
    # out block (x2 buffers) and the f32 accumulator scratch.
    per_row = 2 * _round_up(C, sub_x) * hw_p * x_itemsize
    per_row += 3 * out_pad * 4
    tb = max(1, (vmem_budget - fixed) // per_row)

    # Keep ~4 batch grid steps when B allows: >=2 needed for double-buffering and
    # v7x megacore sharding; per-step overhead (~0.35us) stays negligible.
    tb = min(tb, max(8, 8 * _cdiv(_cdiv(B, 4), 8)), B)
    if tb < B:
        tb = max(8, (tb // 8) * 8)    # out-block sublane constraint: tb % 8 == 0
        tb = min(tb, B)
    nb = _cdiv(B, tb)

    # Channel chunking: (a) the double-buffered x block must fit the budget,
    # (b) if the batch grid has a single step, chunk C anyway so the DMA pipeline
    #     has multiple stages (small-B resnet50 case).
    avail_for_x = max(1, vmem_budget - fixed - 3 * tb * out_pad * 4)

    def x_bytes(cc):
        return 2 * tb * _round_up(cc, sub_x) * hw_p * x_itemsize

    nk = 1
    for cand in (1, 2, 4, 8, 16):
        if C % cand != 0 or (C // cand) % 8 != 0:
            continue
        nk = cand
        if x_bytes(C // cand) <= avail_for_x:
            break
    if nk == 1 and nb == 1 and x_bytes(C) >= (1 << 20):
        for cand in (4, 2):
            if C % cand == 0 and (C // cand) % 8 == 0:
                nk = cand
                break
    return tb, C // nk


@functools.partial(
    jax.jit,
    static_argnames=("out_pad", "tb", "c_chunk", "vmem_limit", "single_buffer_consts"))
def _mhcls_pallas(x_flat, w_cat, b_cat, *, out_pad, tb, c_chunk, vmem_limit,
                  single_buffer_consts):
    B, C, HW = x_flat.shape
    nb = _cdiv(B, tb)
    nk = C // c_chunk
    x_item = jnp.dtype(x_flat.dtype).itemsize
    w_item = jnp.dtype(w_cat.dtype).itemsize

    const_mode = dict(pipeline_mode=pl.Buffered(1)) if single_buffer_consts else {}
    b_spec = pl.BlockSpec((1, out_pad), lambda i, k: (0, 0), **const_mode)
    if nk == 1:
        # Constant block index across the whole grid -> single buffer saves VMEM.
        w_spec = pl.BlockSpec((c_chunk, out_pad), lambda i, k: (0, 0), **const_mode)
    else:
        w_spec = pl.BlockSpec((c_chunk, out_pad), lambda i, k: (k, 0))

    cost = pl.CostEstimate(
        flops=2 * B * C * out_pad + B * C * HW,
        transcendentals=0,
        bytes_accessed=(B * C * HW * x_item + C * out_pad * w_item
                        + out_pad * 4 + B * out_pad * 4),
    )

    return pl.pallas_call(
        _mhcls_kernel,
        out_shape=jax.ShapeDtypeStruct((B, out_pad), jnp.float32),
        grid=(nb, nk),
        in_specs=[
            # Last two block dims: (c_chunk, HW).  c_chunk is a multiple of 8 (or
            # full C); HW equals the full array dim -> layout-legal even when HW
            # is not a multiple of 128.
            pl.BlockSpec((tb, c_chunk, HW), lambda i, k: (i, k, 0)),
            w_spec,
            b_spec,
        ],
        out_specs=pl.BlockSpec((tb, out_pad), lambda i, k: (i, 0)),
        scratch_shapes=[pltpu.VMEM((tb, out_pad), jnp.float32)],
        compiler_params=pltpu.CompilerParams(
            dimension_semantics=("parallel", "arbitrary"),
            vmem_limit_bytes=vmem_limit,
        ),
        cost_estimate=cost,
    )(x_flat, w_cat, b_cat)


class MHCLSPallas:
    """Deterministically-initialized JAX/Pallas equivalent of MHCLS."""

    def __init__(self, num_heads, num_invade, num_surgery, num_essential,
                 backbone="resnet18", key=None):
        if backbone in ("resnet18", "resnet34"):
            in_ch = 512
        elif backbone == "resnet50":
            in_ch = 2048
        else:
            raise NotImplementedError(backbone)
        self.in_ch = in_ch
        self.num_heads = num_heads
        self.sizes = (num_invade, num_surgery, num_essential)

        if key is None:
            key = jax.random.PRNGKey(0)

        # Per-(task, head) Linear params: weight (n_out, C), bias (n_out,),
        # matching nn.Linear semantics y = x @ W.T + b. Deterministic init.
        self.weights = []   # list of (W, b) in concatenation order
        self.segments = []  # (task_idx, head_idx, start, size) into concatenated output
        offset = 0
        k = key
        for task_idx, n_out in enumerate(self.sizes):
            for head in range(num_heads):
                k, k_w, k_b = jax.random.split(k, 3)
                bound = 1.0 / (in_ch ** 0.5)
                W = jax.random.uniform(k_w, (n_out, in_ch), jnp.float32, -bound, bound)
                b = jax.random.uniform(k_b, (n_out,), jnp.float32, -bound, bound)
                self.weights.append((W, b))
                self.segments.append((task_idx, head, offset, n_out))
                offset += n_out

        self.total_out = offset
        # Smallest multiple of 128 -> unmasked full-lane output stores.
        self.out_pad = max(128, _round_up(self.total_out, 128))

        W_cat = jnp.concatenate([W for W, _ in self.weights], axis=0)   # (TOTAL, C)
        b_cat = jnp.concatenate([b for _, b in self.weights], axis=0)   # (TOTAL,)
        pad = self.out_pad - self.total_out
        self.W_cat = jnp.pad(W_cat, ((0, pad), (0, 0))).T               # (C, OUT_PAD) f32
        self.b_cat = jnp.pad(b_cat, ((0, pad),)).reshape(1, self.out_pad)
        self._W_cat_bf16 = None

        self._vmem_budget, self._vmem_limit = _vmem_budget_and_limit()

    def __call__(self, x_nchw):
        B, C, H, W = x_nchw.shape
        assert C == self.in_ch
        # Free reshape of NCHW -> (B, C, H*W): no transpose, no extra HBM pass.
        x_flat = x_nchw.reshape(B, C, H * W)

        w_cat = self.W_cat
        if x_nchw.dtype == jnp.bfloat16:
            # Halve HBM traffic for the dominant x read; matmul still accumulates in f32.
            if self._W_cat_bf16 is None:
                self._W_cat_bf16 = self.W_cat.astype(jnp.bfloat16)
            w_cat = self._W_cat_bf16

        tb, c_chunk = _pick_tiles(
            B, C, H * W,
            jnp.dtype(x_nchw.dtype).itemsize, jnp.dtype(w_cat.dtype).itemsize,
            self.out_pad, self._vmem_budget)

        kwargs = dict(out_pad=self.out_pad, tb=tb, c_chunk=c_chunk,
                      vmem_limit=self._vmem_limit)
        try:
            out = _mhcls_pallas(x_flat, w_cat, self.b_cat,
                                single_buffer_consts=True, **kwargs)
        except Exception:
            # pl.Buffered(1) on the constant weight/bias blocks is a VMEM-saving
            # hint only; fall back to default double-buffering if rejected.
            out = _mhcls_pallas(x_flat, w_cat, self.b_cat,
                                single_buffer_consts=False, **kwargs)

        pred_invade = [None] * self.num_heads
        pred_surgery = [None] * self.num_heads
        pred_essential = [None] * self.num_heads
        lists = (pred_invade, pred_surgery, pred_essential)
        for task_idx, head, start, size in self.segments:
            lists[task_idx][head] = out[:, start:start + size]
        return pred_invade, pred_surgery, pred_essential


def _reference(x_nchw, model):
    """Plain-JAX reference for verification."""
    pooled = jnp.max(x_nchw.astype(jnp.float32), axis=(2, 3))   # (B, C)
    preds = [[], [], []]
    for (task_idx, head, _, _), (W, b) in zip(model.segments, model.weights):
        preds[task_idx].append(pooled @ W.T + b)
    return preds


if __name__ == "__main__":
    key = jax.random.PRNGKey(0)
    k1, k2, k3, k4 = jax.random.split(key, 4)

    def check(model, x):
        pi, ps, pe = model(x)
        jax.block_until_ready(pi + ps + pe)
        ri, rs, re = _reference(x, model)
        for got, want in zip(pi + ps + pe, ri + rs + re):
            assert got.shape == want.shape
            err = float(jnp.max(jnp.abs(got - want)))
            assert jnp.allclose(got, want, atol=1e-3, rtol=1e-3), err

    # Case 1: resnet18 head (C=512), batch large enough for a multi-step batch grid
    # (tb capped at 8 -> 2 "parallel" batch tiles, nk == 1, single-buffered weights).
    m18 = MHCLSPallas(2, 3, 4, 2, backbone="resnet18", key=k1)
    x18 = jax.random.normal(k2, (16, 512, 8, 8), jnp.float32)
    check(m18, x18)

    # Case 2: resnet50 head (C=2048), tiny batch -> channel-chunked "arbitrary" axis
    # with the f32 accumulator path (grid = (1, 4)).
    m50 = MHCLSPallas(2, 3, 4, 2, backbone="resnet50", key=k3)
    x50 = jax.random.normal(k4, (2, 2048, 8, 8), jnp.float32)
    check(m50, x50)

    print("KERNEL_OK")
</pallas_src>

<mosaic_0001>
module attributes {stable_mosaic.version = 11 : i64} {
  func.func @_mhcls_kernel(%arg0: i32, %arg1: i32, %arg2: memref<8x512x64xf32, #tpu.memory_space<vmem>>, %arg3: memref<512x128xf32, #tpu.memory_space<vmem>>, %arg4: memref<1x128xf32, #tpu.memory_space<vmem>>, %arg5: memref<8x128xf32, #tpu.memory_space<vmem>>, %arg6: memref<8x128xf32, #tpu.memory_space<vmem>>) attributes {dimension_semantics = [#tpu.dimension_semantics<parallel>, #tpu.dimension_semantics<arbitrary>], iteration_bounds = array<i64: 2, 1>, scalar_prefetch = 0 : i64, scratch_operands = 1 : i64, tpu.core_type = #tpu.core_type<tc>, window_params = [{transform_indices = @transform_0, window_bounds = array<i64: 8, 512, 64>}, {pipeline_mode = #tpu.pipeline_mode<synchronous>, transform_indices = @transform_1, window_bounds = array<i64: 512, 128>}, {pipeline_mode = #tpu.pipeline_mode<synchronous>, transform_indices = @transform_2, window_bounds = array<i64: 1, 128>}, {transform_indices = @transform_3, window_bounds = array<i64: 8, 128>}]} {
    %c0_i32 = arith.constant 0 : i32
    %0 = arith.cmpi eq, %arg1, %c0_i32 : i32
    %1 = arith.extui %0 : i1 to i32
    %c0_i32_0 = arith.constant 0 : i32
    %2 = arith.cmpi ne, %1, %c0_i32_0 : i32
    scf.if %2 {
      %cst_12 = arith.constant 0.000000e+00 : f32
      %13 = vector.broadcast %cst_12 : f32 to vector<8x128xf32>
      %c0_13 = arith.constant 0 : index
      %c0_14 = arith.constant 0 : index
      %14 = vector.load %arg6[%c0_13, %c0_14] : memref<8x128xf32, #tpu.memory_space<vmem>>, vector<8x128xf32>
      tpu.vector_store %arg6[%c0_13, %c0_14], %13 {strides = array<i32>} : memref<8x128xf32, #tpu.memory_space<vmem>>, vector<8x128xf32>,
    } else {
    }
    %c0 = arith.constant 0 : index
    %c0_1 = arith.constant 0 : index
    %c0_2 = arith.constant 0 : index
    %3 = vector.load %arg2[%c0, %c0_1, %c0_2] : memref<8x512x64xf32, #tpu.memory_space<vmem>>, vector<8x512x64xf32>
    %cst = arith.constant dense<0xFF800000> : vector<8x512xf32>
    %4 = vector.multi_reduction <maximumf>, %3, %cst [2] : vector<8x512x64xf32> to vector<8x512xf32>
    %c0_3 = arith.constant 0 : index
    %c0_4 = arith.constant 0 : index
    %5 = vector.load %arg6[%c0_3, %c0_4] : memref<8x128xf32, #tpu.memory_space<vmem>>, vector<8x128xf32>
    %c0_5 = arith.constant 0 : index
    %c0_6 = arith.constant 0 : index
    %6 = vector.load %arg3[%c0_5, %c0_6] : memref<512x128xf32, #tpu.memory_space<vmem>>, vector<512x128xf32>
    %cst_7 = arith.constant dense<0.000000e+00> : vector<8x128xf32>
    %7 = tpu.matmul %4, %6, %cst_7 {dimension_numbers = #tpu.dot_dimension_numbers<[1], [0], [0], [1], [0, 0, 1, 1], [], []>} : vector<8x512xf32>, vector<512x128xf32>, vector<8x128xf32> -> vector<8x128xf32>
    %8 = arith.addf %5, %7 : vector<8x128xf32>
    %c0_8 = arith.constant 0 : index
    %c0_9 = arith.constant 0 : index
    %9 = vector.load %arg6[%c0_8, %c0_9] : memref<8x128xf32, #tpu.memory_space<vmem>>, vector<8x128xf32>
    tpu.vector_store %arg6[%c0_8, %c0_9], %8 {strides = array<i32>} : memref<8x128xf32, #tpu.memory_space<vmem>>, vector<8x128xf32>,
    %c0_i32_10 = arith.constant 0 : i32
    %10 = arith.cmpi eq, %arg1, %c0_i32_10 : i32
    %11 = arith.extui %10 : i1 to i32
    %c0_i32_11 = arith.constant 0 : i32
    %12 = arith.cmpi ne, %11, %c0_i32_11 : i32
    scf.if %12 {
      %c0_12 = arith.constant 0 : index
      %c0_13 = arith.constant 0 : index
      %13 = vector.load %arg6[%c0_12, %c0_13] : memref<8x128xf32, #tpu.memory_space<vmem>>, vector<8x128xf32>
      %c0_14 = arith.constant 0 : index
      %c0_15 = arith.constant 0 : index
      %14 = vector.load %arg4[%c0_14, %c0_15] : memref<1x128xf32, #tpu.memory_space<vmem>>, vector<1x128xf32>
      %15 = vector.broadcast %14 : vector<1x128xf32> to vector<8x128xf32>
      %16 = arith.addf %13, %15 : vector<8x128xf32>
      %c0_16 = arith.constant 0 : index
      %c0_17 = arith.constant 0 : index
      %17 = vector.load %arg5[%c0_16, %c0_17] : memref<8x128xf32, #tpu.memory_space<vmem>>, vector<8x128xf32>
      tpu.vector_store %arg5[%c0_16, %c0_17], %16 {strides = array<i32>} : memref<8x128xf32, #tpu.memory_space<vmem>>, vector<8x128xf32>,
    } else {
    }
    return
  }
  func.func @transform_0(%arg0: i32, %arg1: i32) -> (i32, i32, i32) {
    %c0_i32 = arith.constant 0 : i32
    %c0_i32_0 = arith.constant 0 : i32
    return %arg0, %arg1, %c0_i32 : i32, i32, i32
  }
  func.func @transform_1(%arg0: i32, %arg1: i32) -> (i32, i32) {
    %c0_i32 = arith.constant 0 : i32
    %c0_i32_0 = arith.constant 0 : i32
    %c0_i32_1 = arith.constant 0 : i32
    return %c0_i32, %c0_i32_0 : i32, i32
  }
  func.func @transform_2(%arg0: i32, %arg1: i32) -> (i32, i32) {
    %c0_i32 = arith.constant 0 : i32
    %c0_i32_0 = arith.constant 0 : i32
    %c0_i32_1 = arith.constant 0 : i32
    return %c0_i32, %c0_i32_0 : i32, i32
  }
  func.func @transform_3(%arg0: i32, %arg1: i32) -> (i32, i32) {
    %c0_i32 = arith.constant 0 : i32
    %c0_i32_0 = arith.constant 0 : i32
    return %arg0, %c0_i32 : i32, i32
  }
}

module attributes {stable_mosaic.version = 11 : i64} {
  func.func @_mhcls_kernel(%arg0: i32, %arg1: i32, %arg2: memref<8x512x64xf32, #tpu.memory_space<vmem>>, %arg3: memref<512x128xf32, #tpu.memory_space<vmem>>, %arg4: memref<1x128xf32, #tpu.memory_space<vmem>>, %arg5: memref<8x128xf32, #tpu.memory_space<vmem>>, %arg6: memref<8x128xf32, #tpu.memory_space<vmem>>) attributes {dimension_semantics = [#tpu.dimension_semantics<parallel>, #tpu.dimension_semantics<arbitrary>], iteration_bounds = array<i64: 2, 1>, scalar_prefetch = 0 : i64, scratch_operands = 1 : i64, tpu.core_type = #tpu.core_type<tc>, window_params = [{transform_indices = @transform_0, window_bounds = array<i64: 8, 512, 64>}, {pipeline_mode = #tpu.pipeline_mode<synchronous>, transform_indices = @transform_1, window_bounds = array<i64: 512, 128>}, {pipeline_mode = #tpu.pipeline_mode<synchronous>, transform_indices = @transform_2, window_bounds = array<i64: 1, 128>}, {transform_indices = @transform_3, window_bounds = array<i64: 8, 128>}]} {
    %c0_i32 = arith.constant 0 : i32
    %0 = arith.cmpi eq, %arg1, %c0_i32 : i32
    %1 = arith.extui %0 : i1 to i32
    %c0_i32_0 = arith.constant 0 : i32
    %2 = arith.cmpi ne, %1, %c0_i32_0 : i32
    scf.if %2 {
      %cst_12 = arith.constant 0.000000e+00 : f32
      %13 = vector.broadcast %cst_12 : f32 to vector<8x128xf32>
      %c0_13 = arith.constant 0 : index
      %c0_14 = arith.constant 0 : index
      %14 = vector.load %arg6[%c0_13, %c0_14] : memref<8x128xf32, #tpu.memory_space<vmem>>, vector<8x128xf32>
      tpu.vector_store %arg6[%c0_13, %c0_14], %13 {strides = array<i32>} : memref<8x128xf32, #tpu.memory_space<vmem>>, vector<8x128xf32>,
    } else {
    }
    %c0 = arith.constant 0 : index
    %c0_1 = arith.constant 0 : index
    %c0_2 = arith.constant 0 : index
    %3 = vector.load %arg2[%c0, %c0_1, %c0_2] : memref<8x512x64xf32, #tpu.memory_space<vmem>>, vector<8x512x64xf32>
    %cst = arith.constant dense<0xFF800000> : vector<8x512xf32>
    %4 = vector.multi_reduction <maximumf>, %3, %cst [2] : vector<8x512x64xf32> to vector<8x512xf32>
    %c0_3 = arith.constant 0 : index
    %c0_4 = arith.constant 0 : index
    %5 = vector.load %arg6[%c0_3, %c0_4] : memref<8x128xf32, #tpu.memory_space<vmem>>, vector<8x128xf32>
    %c0_5 = arith.constant 0 : index
    %c0_6 = arith.constant 0 : index
    %6 = vector.load %arg3[%c0_5, %c0_6] : memref<512x128xf32, #tpu.memory_space<vmem>>, vector<512x128xf32>
    %cst_7 = arith.constant dense<0.000000e+00> : vector<8x128xf32>
    %7 = tpu.matmul %4, %6, %cst_7 {dimension_numbers = #tpu.dot_dimension_numbers<[1], [0], [0], [1], [0, 0, 1, 1], [], []>} : vector<8x512xf32>, vector<512x128xf32>, vector<8x128xf32> -> vector<8x128xf32>
    %8 = arith.addf %5, %7 : vector<8x128xf32>
    %c0_8 = arith.constant 0 : index
    %c0_9 = arith.constant 0 : index
    %9 = vector.load %arg6[%c0_8, %c0_9] : memref<8x128xf32, #tpu.memory_space<vmem>>, vector<8x128xf32>
    tpu.vector_store %arg6[%c0_8, %c0_9], %8 {strides = array<i32>} : memref<8x128xf32, #tpu.memory_space<vmem>>, vector<8x128xf32>,
    %c0_i32_10 = arith.constant 0 : i32
    %10 = arith.cmpi eq, %arg1, %c0_i32_10 : i32
    %11 = arith.extui %10 : i1 to i32
    %c0_i32_11 = arith.constant 0 : i32
    %12 = arith.cmpi ne, %11, %c0_i32_11 : i32
    scf.if %12 {
      %c0_12 = arith.constant 0 : index
      %c0_13 = arith.constant 0 : index
      %13 = vector.load %arg6[%c0_12, %c0_13] : memref<8x128xf32, #tpu.memory_space<vmem>>, vector<8x128xf32>
      %c0_14 = arith.constant 0 : index
      %c0_15 = arith.constant 0 : index
      %14 = vector.load %arg4[%c0_14, %c0_15] : memref<1x128xf32, #tpu.memory_space<vmem>>, vector<1x128xf32>
      %15 = vector.broadcast %14 : vector<1x128xf32> to vector<8x128xf32>
      %16 = arith.addf %13, %15 : vector<8x128xf32>
      %c0_16 = arith.constant 0 : index
      %c0_17 = arith.constant 0 : index
      %17 = vector.load %arg5[%c0_16, %c0_17] : memref<8x128xf32, #tpu.memory_space<vmem>>, vector<8x128xf32>
      tpu.vector_store %arg5[%c0_16, %c0_17], %16 {strides = array<i32>} : memref<8x128xf32, #tpu.memory_space<vmem>>, vector<8x128xf32>,
    } else {
    }
    return
  }
  func.func @transform_0(%arg0: i32, %arg1: i32) -> (i32, i32, i32) {
    %c0_i32 = arith.constant 0 : i32
    %c0_i32_0 = arith.constant 0 : i32
    return %arg0, %arg1, %c0_i32 : i32, i32, i32
  }
  func.func @transform_1(%arg0: i32, %arg1: i32) -> (i32, i32) {
    %c0_i32 = arith.constant 0 : i32
    %c0_i32_0 = arith.constant 0 : i32
    %c0_i32_1 = arith.constant 0 : i32
    return %c0_i32, %c0_i32_0 : i32, i32
  }
  func.func @transform_2(%arg0: i32, %arg1: i32) -> (i32, i32) {
    %c0_i32 = arith.constant 0 : i32
    %c0_i32_0 = arith.constant 0 : i32
    %c0_i32_1 = arith.constant 0 : i32
    return %c0_i32, %c0_i32_0 : i32, i32
  }
  func.func @transform_3(%arg0: i32, %arg1: i32) -> (i32, i32) {
    %c0_i32 = arith.constant 0 : i32
    %c0_i32_0 = arith.constant 0 : i32
    return %arg0, %c0_i32 : i32, i32
  }
}

</mosaic_0001>

<llo_original>
// kernel: _mhcls_pallas.1
$region0: #{_mhcls_pallas.1}
  #allocation0 [shape = 'u32[]', space=smem, size = 0x4, offset = 0x4, fixed_abs, tag = 'smem constant byte address 0x4 - core index']
  #allocation1 [shape = 'u32[72,128]{1,0:T(1,128)}', space=vmem, size = 0x9000, scoped, tag = 'internal scratch']
  #allocation2 [shape = 'f32[8,128]{1,0:T(8,128)}', space=vmem, size = 0x1000, scoped, tag = 'scratch operand']
  %s0 = inlined_call_operand.vmem [shape: f32[16,512,64], index: 0, kind: input, shape index: {}]
  %s1 = inlined_call_operand.vmem [shape: f32[512,128], index: 1, kind: input, shape index: {}]
  %s2 = inlined_call_operand.vmem [shape: f32[1,128], index: 2, kind: input, shape index: {}]
  %s3 = inlined_call_operand.hbm [shape: f32[16,128], index: 3, kind: output, shape index: {}]
  %s4 = sld [smem:[#allocation0]]
  $region53: #{_mhcls_pallas.1} parent=0
    _
  %s6 = ssub.s32 1, %s4
  %s7 = scalar_select 0, %s6, %s4
  $region1: #{_mhcls_pallas.1} parent=0
    #allocation3 [shape = 'u8[8192]{0}', space=vmem, size = 0x2000, scoped, tag = 'output window, operand 0']
    #allocation4 [shape = 's32[2]{0}', space=sflag, size = 0x8, scoped, tag = 'scoped memory for _mhcls_pallas.1']
    %8 = vsyncpa [#allocation4], 0
    %s9 = scalar_lea.sflag [#allocation4], 1
    %10 = vsyncpa %s9, 0
    loop: start=0, step=1, limit=4
    $region2: #{_mhcls_pallas.1} parent=1 // loop_pre_header
      _
    $region3: #{_mhcls_pallas.1} parent=1 // loop_header
      %s12 = sphi 0, %s16
      %p13 = scmp.ge.s32.totalorder %s12, 4
      %s19 = sphi 0, %s31
      %s20 = sphi 0, %s27
      %s21 = sphi 0, %s19
      %s22 = sphi 0, %s20
      %s23 = sphi 0, %s21
      %s24 = sphi 0, %s22
      %s36 = sphi 0, %s38
      %s39 = sphi 0, %s36
      %s40 = sphi 0, %s39
      %s56 = sphi 0, %s40
      %s60 = sphi 0, %s60
      %s62 = sphi 0, %s60
      %s63 = sphi 0, %s62
      %s77 = sphi 0, %s63
      %s81 = sphi 0, %s81
      %s83 = sphi 0, %s81
      %s84 = sphi 0, %s83
      %s98 = sphi 0, %s84
      %s104 = sphi 0, %s106
      %s107 = sphi 0, %s104
      %s108 = sphi 0, %s107
      %s124 = sphi 0, %s108
    $region4: #{_mhcls_pallas.1} parent=1 // loop_header_branch
      %15 = sbr.rel (%p13) target = $region8
    $region5: #{_mhcls_pallas.1} parent=1 // loop_body
      %s17 = ssub.s32 %s12, 1
      %s18 = ssub.s32 %s12, 2
      %s25 = sadd.s32 1, %s20
      %p26 = scmp.ge.s32.totalorder %s25, 1
      %s27 = scalar_select %p26, 0, %s25
      %s28 = sadd.s32 1, %s19
      %s29 = scalar_select %p26, %s28, %s19
      %p30 = scmp.ge.s32.totalorder %s29, 2
      %s31 = scalar_select %p30, 0, %s29
      %s32 = ssub.s32 %s19, %s31
      %s33 = ssub.s32 %s20, %s27
      %s34 = sor.u32 %s32, %s33
      %p35 = scmp.eq.s32.totalorder %s34, 0
      %s37 = sadd.s32 %s36, 1
      %s38 = scalar_select %p35, %s36, %s37
      %p41 = pneg %p35
      %p42 = scmp.eq.s32.totalorder %s12, 1
      %p43 = por %p41, %p42
      %p44 = scmp.ne.s32.totalorder %s36, %s39
      %p45 = scmp.eq.s32.totalorder %s12, 0
      %p46 = por %p44, %p45
      %p47 = scmp.ne.s32.totalorder %s36, %s39
      %p48 = scmp.eq.s32.totalorder %s17, 1
      %p49 = por %p47, %p48
      %p50 = scmp.ne.s32.totalorder %s39, %s40
      %p51 = scmp.eq.s32.totalorder %s17, 0
      %p52 = por %p50, %p51
      %p53 = scmp.ne.s32.totalorder %s39, %s40
      %p54 = scmp.eq.s32.totalorder %s18, 1
      %p55 = por %p53, %p54
      %p57 = scmp.ne.s32.totalorder %s40, %s56
      %p58 = scmp.eq.s32.totalorder %s18, 0
      %p59 = por %p57, %p58
      %s61 = sadd.s32 %s60, 1
      %p64 = scmp.eq.s32.totalorder %s12, 1
      %p65 = scmp.ne.s32.totalorder %s60, %s62
      %p66 = scmp.eq.s32.totalorder %s12, 0
      %p67 = por %p65, %p66
      %p68 = scmp.ne.s32.totalorder %s60, %s62
      %p69 = scmp.eq.s32.totalorder %s17, 1
      %p70 = por %p68, %p69
      %p71 = scmp.ne.s32.totalorder %s62, %s63
      %p72 = scmp.eq.s32.totalorder %s17, 0
      %p73 = por %p71, %p72
      %p74 = scmp.ne.s32.totalorder %s62, %s63
      %p75 = scmp.eq.s32.totalorder %s18, 1
      %p76 = por %p74, %p75
      %p78 = scmp.ne.s32.totalorder %s63, %s77
      %p79 = scmp.eq.s32.totalorder %s18, 0
      %p80 = por %p78, %p79
      %s82 = sadd.s32 %s81, 1
      %p85 = scmp.eq.s32.totalorder %s12, 1
      %p86 = scmp.ne.s32.totalorder %s81, %s83
      %p87 = scmp.eq.s32.totalorder %s12, 0
      %p88 = por %p86, %p87
      %p89 = scmp.ne.s32.totalorder %s81, %s83
      %p90 = scmp.eq.s32.totalorder %s17, 1
      %p91 = por %p89, %p90
      %p92 = scmp.ne.s32.totalorder %s83, %s84
      %p93 = scmp.eq.s32.totalorder %s17, 0
      %p94 = por %p92, %p93
      %p95 = scmp.ne.s32.totalorder %s83, %s84
      %p96 = scmp.eq.s32.totalorder %s18, 1
      %p97 = por %p95, %p96
      %p99 = scmp.ne.s32.totalorder %s84, %s98
      %p100 = scmp.eq.s32.totalorder %s18, 0
      %p101 = por %p99, %p100
      %s102 = ssub.s32 %s19, %s31
      %p103 = scmp.eq.s32.totalorder %s102, 0
      %s105 = sadd.s32 %s104, 1
      %s106 = scalar_select %p103, %s104, %s105
      %p109 = pneg %p103
      %p110 = scmp.eq.s32.totalorder %s12, 1
      %p111 = por %p109, %p110
      %p112 = scmp.ne.s32.totalorder %s104, %s107
      %p113 = scmp.eq.s32.totalorder %s12, 0
      %p114 = por %p112, %p113
      %p115 = scmp.ne.s32.totalorder %s104, %s107
      %p116 = scmp.eq.s32.totalorder %s17, 1
      %p117 = por %p115, %p116
      %p118 = scmp.ne.s32.totalorder %s107, %s108
      %p119 = scmp.eq.s32.totalorder %s17, 0
      %p120 = por %p118, %p119
      %p121 = scmp.ne.s32.totalorder %s107, %s108
      %p122 = scmp.eq.s32.totalorder %s18, 1
      %p123 = por %p121, %p122
      %p125 = scmp.ne.s32.totalorder %s108, %s124
      %p126 = scmp.eq.s32.totalorder %s18, 0
      %p127 = por %p125, %p126
      %p128 = scmp.le.s32.totalorder 1, %s12
      %p129 = scmp.lt.s32.totalorder %s12, 3
      %p130 = pnand %p128, %p129
      %p131 = pneg %p130
      // Predicated region
      $region9: #{_mhcls_pallas.1} parent=5 // pred_check
        _
      $region10: #{_mhcls_pallas.1} parent=5 // pred_check_branch
        %133 = sbr.rel (%p130) target = $region12
      $region11: #{_mhcls_pallas.1} parent=5 // pred_region
        %s134 = ssub.s32 %s12, 1
        // Predicated region
        $region13: #{_mhcls_pallas.1} parent=11 // pred_check
          %p135 = pneg %p73
        $region14: #{_mhcls_pallas.1} parent=11 // pred_check_branch
          %137 = sbr.rel (%p135) target = $region16
        $region15: #{_mhcls_pallas.1} parent=11 // pred_region
          _
        $region16: #{_mhcls_pallas.1} parent=11 // pred_fallthru
          _
        // Predicated region
        $region17: #{_mhcls_pallas.1} parent=11 // pred_check
          %p138 = pneg %p94
        $region18: #{_mhcls_pallas.1} parent=11 // pred_check_branch
          %140 = sbr.rel (%p138) target = $region20
        $region19: #{_mhcls_pallas.1} parent=11 // pred_region
          _
        $region20: #{_mhcls_pallas.1} parent=11 // pred_fallthru
          _
      $region12: #{_mhcls_pallas.1} parent=5 // pred_fallthru
        _
      %p141 = scmp.lt.s32.totalorder %s12, 2
      // Predicated region
      $region21: #{_mhcls_pallas.1} parent=5 // pred_check
        %p142 = pneg %p141
      $region22: #{_mhcls_pallas.1} parent=5 // pred_check_branch
        %144 = sbr.rel (%p142) target = $region24
      $region23: #{_mhcls_pallas.1} parent=5 // pred_region
        // Predicated region
        $region25: #{_mhcls_pallas.1} parent=23 // pred_check
          %p145 = pneg %p46
        $region26: #{_mhcls_pallas.1} parent=23 // pred_check_branch
          %147 = sbr.rel (%p145) target = $region28
        $region27: #{_mhcls_pallas.1} parent=23 // pred_region
          %s148 = smul.u32 8, %s19
          %s149 = smul.u32 64, %s20
          %p150 = scmp.lt.s32.totalorder %s148, 15
          %s151 = scalar_select %p150, %s148, 15
          %p152 = scmp.lt.s32.totalorder %s149, 63
          %s153 = scalar_select %p152, %s149, 63
          %s154 = smul.addr %s151, 64
          %s155 = sadd.s32 %s153, %s154
          %s156 = smul.addr %s155, 8
          %s157 = scalar_lea.vmem %s0, %s156
          %s158 = smul.u32 8, %s19
          %s159 = smul.u32 64, %s20
        $region28: #{_mhcls_pallas.1} parent=23 // pred_fallthru
          _
      $region24: #{_mhcls_pallas.1} parent=5 // pred_fallthru
        _
      %p160 = scmp.le.s32.totalorder 1, %s12
      %p161 = scmp.lt.s32.totalorder %s12, 3
      %p162 = pnand %p160, %p161
      %p163 = pneg %p162
      // Predicated region
      $region29: #{_mhcls_pallas.1} parent=5 // pred_check
        _
      $region30: #{_mhcls_pallas.1} parent=5 // pred_check_branch
        %165 = sbr.rel (%p162) target = $region32
      $region31: #{_mhcls_pallas.1} parent=5 // pred_region
        %s166 = ssub.s32 %s12, 1
        %s167 = smul.u32 8, %s21
        %s168 = smul.u32 64, %s22
        %p169 = scmp.lt.s32.totalorder %s167, 15
        %s170 = scalar_select %p169, %s167, 15
        %p171 = scmp.lt.s32.totalorder %s168, 63
        %s172 = scalar_select %p171, %s168, 63
        %s173 = smul.addr %s170, 64
        %s174 = sadd.s32 %s172, %s173
        %s175 = smul.addr %s174, 8
        %s176 = scalar_lea.vmem %s0, %s175
        %p177 = pneg %p52
        %p178 = pneg %p49
        %p179 = pneg %p73
        %p180 = pneg %p70
        %p181 = pneg %p94
        %p182 = pneg %p91
        %p183 = pneg %p120
        %p184 = pneg %p117
        %s185 = sand.u32 %s107, 1
        %s186 = scalar_lea.sflag [#allocation4], %s185
        %s187 = sand.u32 %s107, 1
        %s188 = smul.addr %s187, 8
        %s189 = scalar_lea.vmem [#allocation3], %s188
        %s190 = smul.u32 8, %s21
        %s191 = smul.u32 64, %s22
        %p192 = scmp.lt.s32.totalorder %s190, 15
        %s193 = scalar_select %p192, %s190, 15
        %p194 = scmp.lt.s32.totalorder %s191, 63
        %s195 = scalar_select %p194, %s191, 63
        %s196 = smul.addr %s193, 64
        %s197 = sadd.s32 %s195, %s196
        %s198 = smul.addr %s197, 8
        %s199 = scalar_lea.vmem %s0, %s198
        %s200 = smul.u32 8, %s21
        %s201 = smul.u32 64, %s22
        %p202 = scmp.eq.s32.totalorder %s22, 0
        // Predicated region
        $region33: #{_mhcls_pallas.1} parent=31 // pred_check
          %p203 = pneg %p202
        $region34: #{_mhcls_pallas.1} parent=31 // pred_check_branch
          %205 = sbr.rel (%p203) target = $region36
        $region35: #{_mhcls_pallas.1} parent=31 // pred_region
          %206 = vst [vmem:[#allocation2] sm:$0xff] 0.0
        $region36: #{_mhcls_pallas.1} parent=31 // pred_fallthru
          _
        %v207 = vld [vmem:[%s199] sm:$0xff]
        %v208 = vld [vmem:[%s199 + $0x8] sm:$0xff]
        %v209 = vld [vmem:[%s199 + $0x10] sm:$0xff]
        %v210 = vld [vmem:[%s199 + $0x18] sm:$0xff]
        %v211 = vld [vmem:[%s199 + $0x20] sm:$0xff]
        %v212 = vld [vmem:[%s199 + $0x28] sm:$0xff]
        %v213 = vld [vmem:[%s199 + $0x30] sm:$0xff]
        %v214 = vld [vmem:[%s199 + $0x38] sm:$0xff]
        %v215 = vld [vmem:[%s199 + $0x40] sm:$0xff]
        %v216 = vld [vmem:[%s199 + $0x48] sm:$0xff]
        %v217 = vld [vmem:[%s199 + $0x50] sm:$0xff]
        %v218 = vld [vmem:[%s199 + $0x58] sm:$0xff]
        %v219 = vld [vmem:[%s199 + $0x60] sm:$0xff]
        %v220 = vld [vmem:[%s199 + $0x68] sm:$0xff]
        %v221 = vld [vmem:[%s199 + $0x70] sm:$0xff]
        %v222 = vld [vmem:[%s199 + $0x78] sm:$0xff]
        %v223 = vld [vmem:[%s199 + $0x80] sm:$0xff]
        %v224 = vld [vmem:[%s199 + $0x88] sm:$0xff]
        %v225 = vld [vmem:[%s199 + $0x90] sm:$0xff]
        %v226 = vld [vmem:[%s199 + $0x98] sm:$0xff]
        %v227 = vld [vmem:[%s199 + $0xa0] sm:$0xff]
        %v228 = vld [vmem:[%s199 + $0xa8] sm:$0xff]
        %v229 = vld [vmem:[%s199 + $0xb0] sm:$0xff]
        %v230 = vld [vmem:[%s199 + $0xb8] sm:$0xff]
        %v231 = vld [vmem:[%s199 + $0xc0] sm:$0xff]
        %v232 = vld [vmem:[%s199 + $0xc8] sm:$0xff]
        %v233 = vld [vmem:[%s199 + $0xd0] sm:$0xff]
        %v234 = vld [vmem:[%s199 + $0xd8] sm:$0xff]
        %v235 = vld [vmem:[%s199 + $0xe0] sm:$0xff]
        %v236 = vld [vmem:[%s199 + $0xe8] sm:$0xff]
        %v237 = vld [vmem:[%s199 + $0xf0] sm:$0xff]
        %v238 = vld [vmem:[%s199 + $0xf8] sm:$0xff]
        %v239 = vld [vmem:[%s199 + $0x100] sm:$0xff]
        %v240 = vld [vmem:[%s199 + $0x108] sm:$0xff]
        %v241 = vld [vmem:[%s199 + $0x110] sm:$0xff]
        %v242 = vld [vmem:[%s199 + $0x118] sm:$0xff]
        %v243 = vld [vmem:[%s199 + $0x120] sm:$0xff]
        %v244 = vld [vmem:[%s199 + $0x128] sm:$0xff]
        %v245 = vld [vmem:[%s199 + $0x130] sm:$0xff]
        %v246 = vld [vmem:[%s199 + $0x138] sm:$0xff]
        %v247 = vld [vmem:[%s199 + $0x140] sm:$0xff]
        %v248 = vld [vmem:[%s199 + $0x148] sm:$0xff]
        %v249 = vld [vmem:[%s199 + $0x150] sm:$0xff]
        %v250 = vld [vmem:[%s199 + $0x158] sm:$0xff]
        %v251 = vld [vmem:[%s199 + $0x160] sm:$0xff]
        %v252 = vld [vmem:[%s199 + $0x168] sm:$0xff]
        %v253 = vld [vmem:[%s199 + $0x170] sm:$0xff]
        %v254 = vld [vmem:[%s199 + $0x178] sm:$0xff]
        %v255 = vld [vmem:[%s199 + $0x180] sm:$0xff]
        %v256 = vld [vmem:[%s199 + $0x188] sm:$0xff]
        %v257 = vld [vmem:[%s199 + $0x190] sm:$0xff]
        %v258 = vld [vmem:[%s199 + $0x198] sm:$0xff]
        %v259 = vld [vmem:[%s199 + $0x1a0] sm:$0xff]
        %v260 = vld [vmem:[%s199 + $0x1a8] sm:$0xff]
        %v261 = vld [vmem:[%s199 + $0x1b0] sm:$0xff]
        %v262 = vld [vmem:[%s199 + $0x1b8] sm:$0xff]
        %v263 = vld [vmem:[%s199 + $0x1c0] sm:$0xff]
        %v264 = vld [vmem:[%s199 + $0x1c8] sm:$0xff]
        %v265 = vld [vmem:[%s199 + $0x1d0] sm:$0xff]
        %v266 = vld [vmem:[%s199 + $0x1d8] sm:$0xff]
        %v267 = vld [vmem:[%s199 + $0x1e0] sm:$0xff]
        %v268 = vld [vmem:[%s199 + $0x1e8] sm:$0xff]
        %v269 = vld [vmem:[%s199 + $0x1f0] sm:$0xff]
        %v270 = vld [vmem:[%s199 + $0x1f8] sm:$0xff]
        %v271 = vld [vmem:[%s199 + $0x200] sm:$0xff]
        %v272 = vld [vmem:[%s199 + $0x208] sm:$0xff]
        %v273 = vld [vmem:[%s199 + $0x210] sm:$0xff]
        %v274 = vld [vmem:[%s199 + $0x218] sm:$0xff]
        %v275 = vld [vmem:[%s199 + $0x220] sm:$0xff]
        %v276 = vld [vmem:[%s199 + $0x228] sm:$0xff]
        %v277 = vld [vmem:[%s199 + $0x230] sm:$0xff]
        %v278 = vld [vmem:[%s199 + $0x238] sm:$0xff]
        %v279 = vld [vmem:[%s199 + $0x240] sm:$0xff]
        %v280 = vld [vmem:[%s199 + $0x248] sm:$0xff]
        %v281 = vld [vmem:[%s199 + $0x250] sm:$0xff]
        %v282 = vld [vmem:[%s199 + $0x258] sm:$0xff]
        %v283 = vld [vmem:[%s199 + $0x260] sm:$0xff]
        %v284 = vld [vmem:[%s199 + $0x268] sm:$0xff]
        %v285 = vld [vmem:[%s199 + $0x270] sm:$0xff]
        %v286 = vld [vmem:[%s199 + $0x278] sm:$0xff]
        %v287 = vld [vmem:[%s199 + $0x280] sm:$0xff]
        %v288 = vld [vmem:[%s199 + $0x288] sm:$0xff]
        %v289 = vld [vmem:[%s199 + $0x290] sm:$0xff]
        %v290 = vld [vmem:[%s199 + $0x298] sm:$0xff]
        %v291 = vld [vmem:[%s199 + $0x2a0] sm:$0xff]
        %v292 = vld [vmem:[%s199 + $0x2a8] sm:$0xff]
        %v293 = vld [vmem:[%s199 + $0x2b0] sm:$0xff]
        %v294 = vld [vmem:[%s199 + $0x2b8] sm:$0xff]
        %v295 = vld [vmem:[%s199 + $0x2c0] sm:$0xff]
        %v296 = vld [vmem:[%s199 + $0x2c8] sm:$0xff]
        %v297 = vld [vmem:[%s199 + $0x2d0] sm:$0xff]
        %v298 = vld [vmem:[%s199 + $0x2d8] sm:$0xff]
        %v299 = vld [vmem:[%s199 + $0x2e0] sm:$0xff]
        %v300 = vld [vmem:[%s199 + $0x2e8] sm:$0xff]
        %v301 = vld [vmem:[%s199 + $0x2f0] sm:$0xff]
        %v302 = vld [vmem:[%s199 + $0x2f8] sm:$0xff]
        %v303 = vld [vmem:[%s199 + $0x300] sm:$0xff]
        %v304 = vld [vmem:[%s199 + $0x308] sm:$0xff]
        %v305 = vld [vmem:[%s199 + $0x310] sm:$0xff]
        %v306 = vld [vmem:[%s199 + $0x318] sm:$0xff]
        %v307 = vld [vmem:[%s199 + $0x320] sm:$0xff]
        %v308 = vld [vmem:[%s199 + $0x328] sm:$0xff]
        %v309 = vld [vmem:[%s199 + $0x330] sm:$0xff]
        %v310 = vld [vmem:[%s199 + $0x338] sm:$0xff]
        %v311 = vld [vmem:[%s199 + $0x340] sm:$0xff]
        %v312 = vld [vmem:[%s199 + $0x348] sm:$0xff]
        %v313 = vld [vmem:[%s199 + $0x350] sm:$0xff]
        %v314 = vld [vmem:[%s199 + $0x358] sm:$0xff]
        %v315 = vld [vmem:[%s199 + $0x360] sm:$0xff]
        %v316 = vld [vmem:[%s199 + $0x368] sm:$0xff]
        %v317 = vld [vmem:[%s199 + $0x370] sm:$0xff]
        %v318 = vld [vmem:[%s199 + $0x378] sm:$0xff]
        %v319 = vld [vmem:[%s199 + $0x380] sm:$0xff]
        %v320 = vld [vmem:[%s199 + $0x388] sm:$0xff]
        %v321 = vld [vmem:[%s199 + $0x390] sm:$0xff]
        %v322 = vld [vmem:[%s199 + $0x398] sm:$0xff]
        %v323 = vld [vmem:[%s199 + $0x3a0] sm:$0xff]
        %v324 = vld [vmem:[%s199 + $0x3a8] sm:$0xff]
        %v325 = vld [vmem:[%s199 + $0x3b0] sm:$0xff]
        %v326 = vld [vmem:[%s199 + $0x3b8] sm:$0xff]
        %v327 = vld [vmem:[%s199 + $0x3c0] sm:$0xff]
        %v328 = vld [vmem:[%s199 + $0x3c8] sm:$0xff]
        %v329 = vld [vmem:[%s199 + $0x3d0] sm:$0xff]
        %v330 = vld [vmem:[%s199 + $0x3d8] sm:$0xff]
        %v331 = vld [vmem:[%s199 + $0x3e0] sm:$0xff]
        %v332 = vld [vmem:[%s199 + $0x3e8] sm:$0xff]
        %v333 = vld [vmem:[%s199 + $0x3f0] sm:$0xff]
        %v334 = vld [vmem:[%s199 + $0x3f8] sm:$0xff]
        %v335 = vld [vmem:[%s199 + $0x400] sm:$0xff]
        %v336 = vld [vmem:[%s199 + $0x408] sm:$0xff]
        %v337 = vld [vmem:[%s199 + $0x410] sm:$0xff]
        %v338 = vld [vmem:[%s199 + $0x418] sm:$0xff]
        %v339 = vld [vmem:[%s199 + $0x420] sm:$0xff]
        %v340 = vld [vmem:[%s199 + $0x428] sm:$0xff]
        %v341 = vld [vmem:[%s199 + $0x430] sm:$0xff]
        %v342 = vld [vmem:[%s199 + $0x438] sm:$0xff]
        %v343 = vld [vmem:[%s199 + $0x440] sm:$0xff]
        %v344 = vld [vmem:[%s199 + $0x448] sm:$0xff]
        %v345 = vld [vmem:[%s199 + $0x450] sm:$0xff]
        %v346 = vld [vmem:[%s199 + $0x458] sm:$0xff]
        %v347 = vld [vmem:[%s199 + $0x460] sm:$0xff]
        %v348 = vld [vmem:[%s199 + $0x468] sm:$0xff]
        %v349 = vld [vmem:[%s199 + $0x470] sm:$0xff]
        %v350 = vld [vmem:[%s199 + $0x478] sm:$0xff]
        %v351 = vld [vmem:[%s199 + $0x480] sm:$0xff]
        %v352 = vld [vmem:[%s199 + $0x488] sm:$0xff]
        %v353 = vld [vmem:[%s199 + $0x490] sm:$0xff]
        %v354 = vld [vmem:[%s199 + $0x498] sm:$0xff]
        %v355 = vld [vmem:[%s199 + $0x4a0] sm:$0xff]
        %v356 = vld [vmem:[%s199 + $0x4a8] sm:$0xff]
        %v357 = vld [vmem:[%s199 + $0x4b0] sm:$0xff]
        %v358 = vld [vmem:[%s199 + $0x4b8] sm:$0xff]
        %v359 = vld [vmem:[%s199 + $0x4c0] sm:$0xff]
        %v360 = vld [vmem:[%s199 + $0x4c8] sm:$0xff]
        %v361 = vld [vmem:[%s199 + $0x4d0] sm:$0xff]
        %v362 = vld [vmem:[%s199 + $0x4d8] sm:$0xff]
        %v363 = vld [vmem:[%s199 + $0x4e0] sm:$0xff]
        %v364 = vld [vmem:[%s199 + $0x4e8] sm:$0xff]
        %v365 = vld [vmem:[%s199 + $0x4f0] sm:$0xff]
        %v366 = vld [vmem:[%s199 + $0x4f8] sm:$0xff]
        %v367 = vld [vmem:[%s199 + $0x500] sm:$0xff]
        %v368 = vld [vmem:[%s199 + $0x508] sm:$0xff]
        %v369 = vld [vmem:[%s199 + $0x510] sm:$0xff]
        %v370 = vld [vmem:[%s199 + $0x518] sm:$0xff]
        %v371 = vld [vmem:[%s199 + $0x520] sm:$0xff]
        %v372 = vld [vmem:[%s199 + $0x528] sm:$0xff]
        %v373 = vld [vmem:[%s199 + $0x530] sm:$0xff]
        %v374 = vld [vmem:[%s199 + $0x538] sm:$0xff]
        %v375 = vld [vmem:[%s199 + $0x540] sm:$0xff]
        %v376 = vld [vmem:[%s199 + $0x548] sm:$0xff]
        %v377 = vld [vmem:[%s199 + $0x550] sm:$0xff]
        %v378 = vld [vmem:[%s199 + $0x558] sm:$0xff]
        %v379 = vld [vmem:[%s199 + $0x560] sm:$0xff]
        %v380 = vld [vmem:[%s199 + $0x568] sm:$0xff]
        %v381 = vld [vmem:[%s199 + $0x570] sm:$0xff]
        %v382 = vld [vmem:[%s199 + $0x578] sm:$0xff]
        %v383 = vld [vmem:[%s199 + $0x580] sm:$0xff]
        %v384 = vld [vmem:[%s199 + $0x588] sm:$0xff]
        %v385 = vld [vmem:[%s199 + $0x590] sm:$0xff]
        %v386 = vld [vmem:[%s199 + $0x598] sm:$0xff]
        %v387 = vld [vmem:[%s199 + $0x5a0] sm:$0xff]
        %v388 = vld [vmem:[%s199 + $0x5a8] sm:$0xff]
        %v389 = vld [vmem:[%s199 + $0x5b0] sm:$0xff]
        %v390 = vld [vmem:[%s199 + $0x5b8] sm:$0xff]
        %v391 = vld [vmem:[%s199 + $0x5c0] sm:$0xff]
        %v392 = vld [vmem:[%s199 + $0x5c8] sm:$0xff]
        %v393 = vld [vmem:[%s199 + $0x5d0] sm:$0xff]
        %v394 = vld [vmem:[%s199 + $0x5d8] sm:$0xff]
        %v395 = vld [vmem:[%s199 + $0x5e0] sm:$0xff]
        %v396 = vld [vmem:[%s199 + $0x5e8] sm:$0xff]
        %v397 = vld [vmem:[%s199 + $0x5f0] sm:$0xff]
        %v398 = vld [vmem:[%s199 + $0x5f8] sm:$0xff]
        %v399 = vld [vmem:[%s199 + $0x600] sm:$0xff]
        %v400 = vld [vmem:[%s199 + $0x608] sm:$0xff]
        %v401 = vld [vmem:[%s199 + $0x610] sm:$0xff]
        %v402 = vld [vmem:[%s199 + $0x618] sm:$0xff]
        %v403 = vld [vmem:[%s199 + $0x620] sm:$0xff]
        %v404 = vld [vmem:[%s199 + $0x628] sm:$0xff]
        %v405 = vld [vmem:[%s199 + $0x630] sm:$0xff]
        %v406 = vld [vmem:[%s199 + $0x638] sm:$0xff]
        %v407 = vld [vmem:[%s199 + $0x640] sm:$0xff]
        %v408 = vld [vmem:[%s199 + $0x648] sm:$0xff]
        %v409 = vld [vmem:[%s199 + $0x650] sm:$0xff]
        %v410 = vld [vmem:[%s199 + $0x658] sm:$0xff]
        %v411 = vld [vmem:[%s199 + $0x660] sm:$0xff]
        %v412 = vld [vmem:[%s199 + $0x668] sm:$0xff]
        %v413 = vld [vmem:[%s199 + $0x670] sm:$0xff]
        %v414 = vld [vmem:[%s199 + $0x678] sm:$0xff]
        %v415 = vld [vmem:[%s199 + $0x680] sm:$0xff]
        %v416 = vld [vmem:[%s199 + $0x688] sm:$0xff]
        %v417 = vld [vmem:[%s199 + $0x690] sm:$0xff]
        %v418 = vld [vmem:[%s199 + $0x698] sm:$0xff]
        %v419 = vld [vmem:[%s199 + $0x6a0] sm:$0xff]
        %v420 = vld [vmem:[%s199 + $0x6a8] sm:$0xff]
        %v421 = vld [vmem:[%s199 + $0x6b0] sm:$0xff]
        %v422 = vld [vmem:[%s199 + $0x6b8] sm:$0xff]
        %v423 = vld [vmem:[%s199 + $0x6c0] sm:$0xff]
        %v424 = vld [vmem:[%s199 + $0x6c8] sm:$0xff]
        %v425 = vld [vmem:[%s199 + $0x6d0] sm:$0xff]
        %v426 = vld [vmem:[%s199 + $0x6d8] sm:$0xff]
        %v427 = vld [vmem:[%s199 + $0x6e0] sm:$0xff]
        %v428 = vld [vmem:[%s199 + $0x6e8] sm:$0xff]
        %v429 = vld [vmem:[%s199 + $0x6f0] sm:$0xff]
        %v430 = vld [vmem:[%s199 + $0x6f8] sm:$0xff]
        %v431 = vld [vmem:[%s199 + $0x700] sm:$0xff]
        %v432 = vld [vmem:[%s199 + $0x708] sm:$0xff]
        %v433 = vld [vmem:[%s199 + $0x710] sm:$0xff]
        %v434 = vld [vmem:[%s199 + $0x718] sm:$0xff]
        %v435 = vld [vmem:[%s199 + $0x720] sm:$0xff]
        %v436 = vld [vmem:[%s199 + $0x728] sm:$0xff]
        %v437 = vld [vmem:[%s199 + $0x730] sm:$0xff]
        %v438 = vld [vmem:[%s199 + $0x738] sm:$0xff]
        %v439 = vld [vmem:[%s199 + $0x740] sm:$0xff]
        %v440 = vld [vmem:[%s199 + $0x748] sm:$0xff]
        %v441 = vld [vmem:[%s199 + $0x750] sm:$0xff]
        %v442 = vld [vmem:[%s199 + $0x758] sm:$0xff]
        %v443 = vld [vmem:[%s199 + $0x760] sm:$0xff]
        %v444 = vld [vmem:[%s199 + $0x768] sm:$0xff]
        %v445 = vld [vmem:[%s199 + $0x770] sm:$0xff]
        %v446 = vld [vmem:[%s199 + $0x778] sm:$0xff]
        %v447 = vld [vmem:[%s199 + $0x780] sm:$0xff]
        %v448 = vld [vmem:[%s199 + $0x788] sm:$0xff]
        %v449 = vld [vmem:[%s199 + $0x790] sm:$0xff]
        %v450 = vld [vmem:[%s199 + $0x798] sm:$0xff]
        %v451 = vld [vmem:[%s199 + $0x7a0] sm:$0xff]
        %v452 = vld [vmem:[%s199 + $0x7a8] sm:$0xff]
        %v453 = vld [vmem:[%s199 + $0x7b0] sm:$0xff]
        %v454 = vld [vmem:[%s199 + $0x7b8] sm:$0xff]
        %v455 = vld [vmem:[%s199 + $0x7c0] sm:$0xff]
        %v456 = vld [vmem:[%s199 + $0x7c8] sm:$0xff]
        %v457 = vld [vmem:[%s199 + $0x7d0] sm:$0xff]
        %v458 = vld [vmem:[%s199 + $0x7d8] sm:$0xff]
        %v459 = vld [vmem:[%s199 + $0x7e0] sm:$0xff]
        %v460 = vld [vmem:[%s199 + $0x7e8] sm:$0xff]
        %v461 = vld [vmem:[%s199 + $0x7f0] sm:$0xff]
        %v462 = vld [vmem:[%s199 + $0x7f8] sm:$0xff]
        %v463 = vld [vmem:[%s199 + $0x800] sm:$0xff]
        %v464 = vld [vmem:[%s199 + $0x808] sm:$0xff]
        %v465 = vld [vmem:[%s199 + $0x810] sm:$0xff]
        %v466 = vld [vmem:[%s199 + $0x818] sm:$0xff]
        %v467 = vld [vmem:[%s199 + $0x820] sm:$0xff]
        %v468 = vld [vmem:[%s199 + $0x828] sm:$0xff]
        %v469 = vld [vmem:[%s199 + $0x830] sm:$0xff]
        %v470 = vld [vmem:[%s199 + $0x838] sm:$0xff]
        %v471 = vld [vmem:[%s199 + $0x840] sm:$0xff]
        %v472 = vld [vmem:[%s199 + $0x848] sm:$0xff]
        %v473 = vld [vmem:[%s199 + $0x850] sm:$0xff]
        %v474 = vld [vmem:[%s199 + $0x858] sm:$0xff]
        %v475 = vld [vmem:[%s199 + $0x860] sm:$0xff]
        %v476 = vld [vmem:[%s199 + $0x868] sm:$0xff]
        %v477 = vld [vmem:[%s199 + $0x870] sm:$0xff]
        %v478 = vld [vmem:[%s199 + $0x878] sm:$0xff]
        %v479 = vld [vmem:[%s199 + $0x880] sm:$0xff]
        %v480 = vld [vmem:[%s199 + $0x888] sm:$0xff]
        %v481 = vld [vmem:[%s199 + $0x890] sm:$0xff]
        %v482 = vld [vmem:[%s199 + $0x898] sm:$0xff]
        %v483 = vld [vmem:[%s199 + $0x8a0] sm:$0xff]
        %v484 = vld [vmem:[%s199 + $0x8a8] sm:$0xff]
        %v485 = vld [vmem:[%s199 + $0x8b0] sm:$0xff]
        %v486 = vld [vmem:[%s199 + $0x8b8] sm:$0xff]
        %v487 = vld [vmem:[%s199 + $0x8c0] sm:$0xff]
        %v488 = vld [vmem:[%s199 + $0x8c8] sm:$0xff]
        %v489 = vld [vmem:[%s199 + $0x8d0] sm:$0xff]
        %v490 = vld [vmem:[%s199 + $0x8d8] sm:$0xff]
        %v491 = vld [vmem:[%s199 + $0x8e0] sm:$0xff]
        %v492 = vld [vmem:[%s199 + $0x8e8] sm:$0xff]
        %v493 = vld [vmem:[%s199 + $0x8f0] sm:$0xff]
        %v494 = vld [vmem:[%s199 + $0x8f8] sm:$0xff]
        %v495 = vld [vmem:[%s199 + $0x900] sm:$0xff]
        %v496 = vld [vmem:[%s199 + $0x908] sm:$0xff]
        %v497 = vld [vmem:[%s199 + $0x910] sm:$0xff]
        %v498 = vld [vmem:[%s199 + $0x918] sm:$0xff]
        %v499 = vld [vmem:[%s199 + $0x920] sm:$0xff]
        %v500 = vld [vmem:[%s199 + $0x928] sm:$0xff]
        %v501 = vld [vmem:[%s199 + $0x930] sm:$0xff]
        %v502 = vld [vmem:[%s199 + $0x938] sm:$0xff]
        %v503 = vld [vmem:[%s199 + $0x940] sm:$0xff]
        %v504 = vld [vmem:[%s199 + $0x948] sm:$0xff]
        %v505 = vld [vmem:[%s199 + $0x950] sm:$0xff]
        %v506 = vld [vmem:[%s199 + $0x958] sm:$0xff]
        %v507 = vld [vmem:[%s199 + $0x960] sm:$0xff]
        %v508 = vld [vmem:[%s199 + $0x968] sm:$0xff]
        %v509 = vld [vmem:[%s199 + $0x970] sm:$0xff]
        %v510 = vld [vmem:[%s199 + $0x978] sm:$0xff]
        %v511 = vld [vmem:[%s199 + $0x980] sm:$0xff]
        %v512 = vld [vmem:[%s199 + $0x988] sm:$0xff]
        %v513 = vld [vmem:[%s199 + $0x990] sm:$0xff]
        %v514 = vld [vmem:[%s199 + $0x998] sm:$0xff]
        %v515 = vld [vmem:[%s199 + $0x9a0] sm:$0xff]
        %v516 = vld [vmem:[%s199 + $0x9a8] sm:$0xff]
        %v517 = vld [vmem:[%s199 + $0x9b0] sm:$0xff]
        %v518 = vld [vmem:[%s199 + $0x9b8] sm:$0xff]
        %v519 = vld [vmem:[%s199 + $0x9c0] sm:$0xff]
        %v520 = vld [vmem:[%s199 + $0x9c8] sm:$0xff]
        %v521 = vld [vmem:[%s199 + $0x9d0] sm:$0xff]
        %v522 = vld [vmem:[%s199 + $0x9d8] sm:$0xff]
        %v523 = vld [vmem:[%s199 + $0x9e0] sm:$0xff]
        %v524 = vld [vmem:[%s199 + $0x9e8] sm:$0xff]
        %v525 = vld [vmem:[%s199 + $0x9f0] sm:$0xff]
        %v526 = vld [vmem:[%s199 + $0x9f8] sm:$0xff]
        %v527 = vld [vmem:[%s199 + $0xa00] sm:$0xff]
        %v528 = vld [vmem:[%s199 + $0xa08] sm:$0xff]
        %v529 = vld [vmem:[%s199 + $0xa10] sm:$0xff]
        %v530 = vld [vmem:[%s199 + $0xa18] sm:$0xff]
        %v531 = vld [vmem:[%s199 + $0xa20] sm:$0xff]
        %v532 = vld [vmem:[%s199 + $0xa28] sm:$0xff]
        %v533 = vld [vmem:[%s199 + $0xa30] sm:$0xff]
        %v534 = vld [vmem:[%s199 + $0xa38] sm:$0xff]
        %v535 = vld [vmem:[%s199 + $0xa40] sm:$0xff]
        %v536 = vld [vmem:[%s199 + $0xa48] sm:$0xff]
        %v537 = vld [vmem:[%s199 + $0xa50] sm:$0xff]
        %v538 = vld [vmem:[%s199 + $0xa58] sm:$0xff]
        %v539 = vld [vmem:[%s199 + $0xa60] sm:$0xff]
        %v540 = vld [vmem:[%s199 + $0xa68] sm:$0xff]
        %v541 = vld [vmem:[%s199 + $0xa70] sm:$0xff]
        %v542 = vld [vmem:[%s199 + $0xa78] sm:$0xff]
        %v543 = vld [vmem:[%s199 + $0xa80] sm:$0xff]
        %v544 = vld [vmem:[%s199 + $0xa88] sm:$0xff]
        %v545 = vld [vmem:[%s199 + $0xa90] sm:$0xff]
        %v546 = vld [vmem:[%s199 + $0xa98] sm:$0xff]
        %v547 = vld [vmem:[%s199 + $0xaa0] sm:$0xff]
        %v548 = vld [vmem:[%s199 + $0xaa8] sm:$0xff]
        %v549 = vld [vmem:[%s199 + $0xab0] sm:$0xff]
        %v550 = vld [vmem:[%s199 + $0xab8] sm:$0xff]
        %v551 = vld [vmem:[%s199 + $0xac0] sm:$0xff]
        %v552 = vld [vmem:[%s199 + $0xac8] sm:$0xff]
        %v553 = vld [vmem:[%s199 + $0xad0] sm:$0xff]
        %v554 = vld [vmem:[%s199 + $0xad8] sm:$0xff]
        %v555 = vld [vmem:[%s199 + $0xae0] sm:$0xff]
        %v556 = vld [vmem:[%s199 + $0xae8] sm:$0xff]
        %v557 = vld [vmem:[%s199 + $0xaf0] sm:$0xff]
        %v558 = vld [vmem:[%s199 + $0xaf8] sm:$0xff]
        %v559 = vld [vmem:[%s199 + $0xb00] sm:$0xff]
        %v560 = vld [vmem:[%s199 + $0xb08] sm:$0xff]
        %v561 = vld [vmem:[%s199 + $0xb10] sm:$0xff]
        %v562 = vld [vmem:[%s199 + $0xb18] sm:$0xff]
        %v563 = vld [vmem:[%s199 + $0xb20] sm:$0xff]
        %v564 = vld [vmem:[%s199 + $0xb28] sm:$0xff]
        %v565 = vld [vmem:[%s199 + $0xb30] sm:$0xff]
        %v566 = vld [vmem:[%s199 + $0xb38] sm:$0xff]
        %v567 = vld [vmem:[%s199 + $0xb40] sm:$0xff]
        %v568 = vld [vmem:[%s199 + $0xb48] sm:$0xff]
        %v569 = vld [vmem:[%s199 + $0xb50] sm:$0xff]
        %v570 = vld [vmem:[%s199 + $0xb58] sm:$0xff]
        %v571 = vld [vmem:[%s199 + $0xb60] sm:$0xff]
        %v572 = vld [vmem:[%s199 + $0xb68] sm:$0xff]
        %v573 = vld [vmem:[%s199 + $0xb70] sm:$0xff]
        %v574 = vld [vmem:[%s199 + $0xb78] sm:$0xff]
        %v575 = vld [vmem:[%s199 + $0xb80] sm:$0xff]
        %v576 = vld [vmem:[%s199 + $0xb88] sm:$0xff]
        %v577 = vld [vmem:[%s199 + $0xb90] sm:$0xff]
        %v578 = vld [vmem:[%s199 + $0xb98] sm:$0xff]
        %v579 = vld [vmem:[%s199 + $0xba0] sm:$0xff]
        %v580 = vld [vmem:[%s199 + $0xba8] sm:$0xff]
        %v581 = vld [vmem:[%s199 + $0xbb0] sm:$0xff]
        %v582 = vld [vmem:[%s199 + $0xbb8] sm:$0xff]
        %v583 = vld [vmem:[%s199 + $0xbc0] sm:$0xff]
        %v584 = vld [vmem:[%s199 + $0xbc8] sm:$0xff]
        %v585 = vld [vmem:[%s199 + $0xbd0] sm:$0xff]
        %v586 = vld [vmem:[%s199 + $0xbd8] sm:$0xff]
        %v587 = vld [vmem:[%s199 + $0xbe0] sm:$0xff]
        %v588 = vld [vmem:[%s199 + $0xbe8] sm:$0xff]
        %v589 = vld [vmem:[%s199 + $0xbf0] sm:$0xff]
        %v590 = vld [vmem:[%s199 + $0xbf8] sm:$0xff]
        %v591 = vld [vmem:[%s199 + $0xc00] sm:$0xff]
        %v592 = vld [vmem:[%s199 + $0xc08] sm:$0xff]
        %v593 = vld [vmem:[%s199 + $0xc10] sm:$0xff]
        %v594 = vld [vmem:[%s199 + $0xc18] sm:$0xff]
        %v595 = vld [vmem:[%s199 + $0xc20] sm:$0xff]
        %v596 = vld [vmem:[%s199 + $0xc28] sm:$0xff]
        %v597 = vld [vmem:[%s199 + $0xc30] sm:$0xff]
        %v598 = vld [vmem:[%s199 + $0xc38] sm:$0xff]
        %v599 = vld [vmem:[%s199 + $0xc40] sm:$0xff]
        %v600 = vld [vmem:[%s199 + $0xc48] sm:$0xff]
        %v601 = vld [vmem:[%s199 + $0xc50] sm:$0xff]
        %v602 = vld [vmem:[%s199 + $0xc58] sm:$0xff]
        %v603 = vld [vmem:[%s199 + $0xc60] sm:$0xff]
        %v604 = vld [vmem:[%s199 + $0xc68] sm:$0xff]
        %v605 = vld [vmem:[%s199 + $0xc70] sm:$0xff]
        %v606 = vld [vmem:[%s199 + $0xc78] sm:$0xff]
        %v607 = vld [vmem:[%s199 + $0xc80] sm:$0xff]
        %v608 = vld [vmem:[%s199 + $0xc88] sm:$0xff]
        %v609 = vld [vmem:[%s199 + $0xc90] sm:$0xff]
        %v610 = vld [vmem:[%s199 + $0xc98] sm:$0xff]
        %v611 = vld [vmem:[%s199 + $0xca0] sm:$0xff]
        %v612 = vld [vmem:[%s199 + $0xca8] sm:$0xff]
        %v613 = vld [vmem:[%s199 + $0xcb0] sm:$0xff]
        %v614 = vld [vmem:[%s199 + $0xcb8] sm:$0xff]
        %v615 = vld [vmem:[%s199 + $0xcc0] sm:$0xff]
        %v616 = vld [vmem:[%s199 + $0xcc8] sm:$0xff]
        %v617 = vld [vmem:[%s199 + $0xcd0] sm:$0xff]
        %v618 = vld [vmem:[%s199 + $0xcd8] sm:$0xff]
        %v619 = vld [vmem:[%s199 + $0xce0] sm:$0xff]
        %v620 = vld [vmem:[%s199 + $0xce8] sm:$0xff]
        %v621 = vld [vmem:[%s199 + $0xcf0] sm:$0xff]
        %v622 = vld [vmem:[%s199 + $0xcf8] sm:$0xff]
        %v623 = vld [vmem:[%s199 + $0xd00] sm:$0xff]
        %v624 = vld [vmem:[%s199 + $0xd08] sm:$0xff]
        %v625 = vld [vmem:[%s199 + $0xd10] sm:$0xff]
        %v626 = vld [vmem:[%s199 + $0xd18] sm:$0xff]
        %v627 = vld [vmem:[%s199 + $0xd20] sm:$0xff]
        %v628 = vld [vmem:[%s199 + $0xd28] sm:$0xff]
        %v629 = vld [vmem:[%s199 + $0xd30] sm:$0xff]
        %v630 = vld [vmem:[%s199 + $0xd38] sm:$0xff]
        %v631 = vld [vmem:[%s199 + $0xd40] sm:$0xff]
        %v632 = vld [vmem:[%s199 + $0xd48] sm:$0xff]
        %v633 = vld [vmem:[%s199 + $0xd50] sm:$0xff]
        %v634 = vld [vmem:[%s199 + $0xd58] sm:$0xff]
        %v635 = vld [vmem:[%s199 + $0xd60] sm:$0xff]
        %v636 = vld [vmem:[%s199 + $0xd68] sm:$0xff]
        %v637 = vld [vmem:[%s199 + $0xd70] sm:$0xff]
        %v638 = vld [vmem:[%s199 + $0xd78] sm:$0xff]
        %v639 = vld [vmem:[%s199 + $0xd80] sm:$0xff]
        %v640 = vld [vmem:[%s199 + $0xd88] sm:$0xff]
        %v641 = vld [vmem:[%s199 + $0xd90] sm:$0xff]
        %v642 = vld [vmem:[%s199 + $0xd98] sm:$0xff]
        %v643 = vld [vmem:[%s199 + $0xda0] sm:$0xff]
        %v644 = vld [vmem:[%s199 + $0xda8] sm:$0xff]
        %v645 = vld [vmem:[%s199 + $0xdb0] sm:$0xff]
        %v646 = vld [vmem:[%s199 + $0xdb8] sm:$0xff]
        %v647 = vld [vmem:[%s199 + $0xdc0] sm:$0xff]
        %v648 = vld [vmem:[%s199 + $0xdc8] sm:$0xff]
        %v649 = vld [vmem:[%s199 + $0xdd0] sm:$0xff]
        %v650 = vld [vmem:[%s199 + $0xdd8] sm:$0xff]
        %v651 = vld [vmem:[%s199 + $0xde0] sm:$0xff]
        %v652 = vld [vmem:[%s199 + $0xde8] sm:$0xff]
        %v653 = vld [vmem:[%s199 + $0xdf0] sm:$0xff]
        %v654 = vld [vmem:[%s199 + $0xdf8] sm:$0xff]
        %v655 = vld [vmem:[%s199 + $0xe00] sm:$0xff]
        %v656 = vld [vmem:[%s199 + $0xe08] sm:$0xff]
        %v657 = vld [vmem:[%s199 + $0xe10] sm:$0xff]
        %v658 = vld [vmem:[%s199 + $0xe18] sm:$0xff]
        %v659 = vld [vmem:[%s199 + $0xe20] sm:$0xff]
        %v660 = vld [vmem:[%s199 + $0xe28] sm:$0xff]
        %v661 = vld [vmem:[%s199 + $0xe30] sm:$0xff]
        %v662 = vld [vmem:[%s199 + $0xe38] sm:$0xff]
        %v663 = vld [vmem:[%s199 + $0xe40] sm:$0xff]
        %v664 = vld [vmem:[%s199 + $0xe48] sm:$0xff]
        %v665 = vld [vmem:[%s199 + $0xe50] sm:$0xff]
        %v666 = vld [vmem:[%s199 + $0xe58] sm:$0xff]
        %v667 = vld [vmem:[%s199 + $0xe60] sm:$0xff]
        %v668 = vld [vmem:[%s199 + $0xe68] sm:$0xff]
        %v669 = vld [vmem:[%s199 + $0xe70] sm:$0xff]
        %v670 = vld [vmem:[%s199 + $0xe78] sm:$0xff]
        %v671 = vld [vmem:[%s199 + $0xe80] sm:$0xff]
        %v672 = vld [vmem:[%s199 + $0xe88] sm:$0xff]
        %v673 = vld [vmem:[%s199 + $0xe90] sm:$0xff]
        %v674 = vld [vmem:[%s199 + $0xe98] sm:$0xff]
        %v675 = vld [vmem:[%s199 + $0xea0] sm:$0xff]
        %v676 = vld [vmem:[%s199 + $0xea8] sm:$0xff]
        %v677 = vld [vmem:[%s199 + $0xeb0] sm:$0xff]
        %v678 = vld [vmem:[%s199 + $0xeb8] sm:$0xff]
        %v679 = vld [vmem:[%s199 + $0xec0] sm:$0xff]
        %v680 = vld [vmem:[%s199 + $0xec8] sm:$0xff]
        %v681 = vld [vmem:[%s199 + $0xed0] sm:$0xff]
        %v682 = vld [vmem:[%s199 + $0xed8] sm:$0xff]
        %v683 = vld [vmem:[%s199 + $0xee0] sm:$0xff]
        %v684 = vld [vmem:[%s199 + $0xee8] sm:$0xff]
        %v685 = vld [vmem:[%s199 + $0xef0] sm:$0xff]
        %v686 = vld [vmem:[%s199 + $0xef8] sm:$0xff]
        %v687 = vld [vmem:[%s199 + $0xf00] sm:$0xff]
        %v688 = vld [vmem:[%s199 + $0xf08] sm:$0xff]
        %v689 = vld [vmem:[%s199 + $0xf10] sm:$0xff]
        %v690 = vld [vmem:[%s199 + $0xf18] sm:$0xff]
        %v691 = vld [vmem:[%s199 + $0xf20] sm:$0xff]
        %v692 = vld [vmem:[%s199 + $0xf28] sm:$0xff]
        %v693 = vld [vmem:[%s199 + $0xf30] sm:$0xff]
        %v694 = vld [vmem:[%s199 + $0xf38] sm:$0xff]
        %v695 = vld [vmem:[%s199 + $0xf40] sm:$0xff]
        %v696 = vld [vmem:[%s199 + $0xf48] sm:$0xff]
        %v697 = vld [vmem:[%s199 + $0xf50] sm:$0xff]
        %v698 = vld [vmem:[%s199 + $0xf58] sm:$0xff]
        %v699 = vld [vmem:[%s199 + $0xf60] sm:$0xff]
        %v700 = vld [vmem:[%s199 + $0xf68] sm:$0xff]
        %v701 = vld [vmem:[%s199 + $0xf70] sm:$0xff]
        %v702 = vld [vmem:[%s199 + $0xf78] sm:$0xff]
        %v703 = vld [vmem:[%s199 + $0xf80] sm:$0xff]
        %v704 = vld [vmem:[%s199 + $0xf88] sm:$0xff]
        %v705 = vld [vmem:[%s199 + $0xf90] sm:$0xff]
        %v706 = vld [vmem:[%s199 + $0xf98] sm:$0xff]
        %v707 = vld [vmem:[%s199 + $0xfa0] sm:$0xff]
        %v708 = vld [vmem:[%s199 + $0xfa8] sm:$0xff]
        %v709 = vld [vmem:[%s199 + $0xfb0] sm:$0xff]
        %v710 = vld [vmem:[%s199 + $0xfb8] sm:$0xff]
        %v711 = vld [vmem:[%s199 + $0xfc0] sm:$0xff]
        %v712 = vld [vmem:[%s199 + $0xfc8] sm:$0xff]
        %v713 = vld [vmem:[%s199 + $0xfd0] sm:$0xff]
        %v714 = vld [vmem:[%s199 + $0xfd8] sm:$0xff]
        %v715 = vld [vmem:[%s199 + $0xfe0] sm:$0xff]
        %v716 = vld [vmem:[%s199 + $0xfe8] sm:$0xff]
        %v717 = vld [vmem:[%s199 + $0xff0] sm:$0xff]
        %v718 = vld [vmem:[%s199 + $0xff8] sm:$0xff]
        %vm719 = vcmask 523264
        %v720 = vsel %vm719, %v207, -inf
        %721 = vmax.xlane.f32.xlu0 %v720
        %v722 = vpop.xlane.xlu0 %721
        %v723 = vsel %vm719, %v208, -inf
        %724 = vmax.xlane.f32.xlu0 %v723
        %v725 = vpop.xlane.xlu0 %724
        %v726 = vsel %vm719, %v209, -inf
        %727 = vmax.xlane.f32.xlu0 %v726
        %v728 = vpop.xlane.xlu0 %727
        %v729 = vsel %vm719, %v210, -inf
        %730 = vmax.xlane.f32.xlu0 %v729
        %v731 = vpop.xlane.xlu0 %730
        %v732 = vsel %vm719, %v211, -inf
        %733 = vmax.xlane.f32.xlu0 %v732
        %v734 = vpop.xlane.xlu0 %733
        %v735 = vsel %vm719, %v212, -inf
        %736 = vmax.xlane.f32.xlu0 %v735
        %v737 = vpop.xlane.xlu0 %736
        %v738 = vsel %vm719, %v213, -inf
        %739 = vmax.xlane.f32.xlu0 %v738
        %v740 = vpop.xlane.xlu0 %739
        %v741 = vsel %vm719, %v214, -inf
        %742 = vmax.xlane.f32.xlu0 %v741
        %v743 = vpop.xlane.xlu0 %742
        %v744 = vsel %vm719, %v215, -inf
        %745 = vmax.xlane.f32.xlu0 %v744
        %v746 = vpop.xlane.xlu0 %745
        %v747 = vsel %vm719, %v216, -inf
        %748 = vmax.xlane.f32.xlu0 %v747
        %v749 = vpop.xlane.xlu0 %748
        %v750 = vsel %vm719, %v217, -inf
        %751 = vmax.xlane.f32.xlu0 %v750
        %v752 = vpop.xlane.xlu0 %751
        %v753 = vsel %vm719, %v218, -inf
        %754 = vmax.xlane.f32.xlu0 %v753
        %v755 = vpop.xlane.xlu0 %754
        %v756 = vsel %vm719, %v219, -inf
        %757 = vmax.xlane.f32.xlu0 %v756
        %v758 = vpop.xlane.xlu0 %757
        %v759 = vsel %vm719, %v220, -inf
        %760 = vmax.xlane.f32.xlu0 %v759
        %v761 = vpop.xlane.xlu0 %760
        %v762 = vsel %vm719, %v221, -inf
        %763 = vmax.xlane.f32.xlu0 %v762
        %v764 = vpop.xlane.xlu0 %763
        %v765 = vsel %vm719, %v222, -inf
        %766 = vmax.xlane.f32.xlu0 %v765
        %v767 = vpop.xlane.xlu0 %766
        %v768 = vsel %vm719, %v223, -inf
        %769 = vmax.xlane.f32.xlu0 %v768
        %v770 = vpop.xlane.xlu0 %769
        %v771 = vsel %vm719, %v224, -inf
        %772 = vmax.xlane.f32.xlu0 %v771
        %v773 = vpop.xlane.xlu0 %772
        %v774 = vsel %vm719, %v225, -inf
        %775 = vmax.xlane.f32.xlu0 %v774
        %v776 = vpop.xlane.xlu0 %775
        %v777 = vsel %vm719, %v226, -inf
        %778 = vmax.xlane.f32.xlu0 %v777
        %v779 = vpop.xlane.xlu0 %778
        %v780 = vsel %vm719, %v227, -inf
        %781 = vmax.xlane.f32.xlu0 %v780
        %v782 = vpop.xlane.xlu0 %781
        %v783 = vsel %vm719, %v228, -inf
        %784 = vmax.xlane.f32.xlu0 %v783
        %v785 = vpop.xlane.xlu0 %784
        %v786 = vsel %vm719, %v229, -inf
        %787 = vmax.xlane.f32.xlu0 %v786
        %v788 = vpop.xlane.xlu0 %787
        %v789 = vsel %vm719, %v230, -inf
        %790 = vmax.xlane.f32.xlu0 %v789
        %v791 = vpop.xlane.xlu0 %790
        %v792 = vsel %vm719, %v231, -inf
        %793 = vmax.xlane.f32.xlu0 %v792
        %v794 = vpop.xlane.xlu0 %793
        %v795 = vsel %vm719, %v232, -inf
        %796 = vmax.xlane.f32.xlu0 %v795
        %v797 = vpop.xlane.xlu0 %796
        %v798 = vsel %vm719, %v233, -inf
        %799 = vmax.xlane.f32.xlu0 %v798
        %v800 = vpop.xlane.xlu0 %799
        %v801 = vsel %vm719, %v234, -inf
        %802 = vmax.xlane.f32.xlu0 %v801
        %v803 = vpop.xlane.xlu0 %802
        %v804 = vsel %vm719, %v235, -inf
        %805 = vmax.xlane.f32.xlu0 %v804
        %v806 = vpop.xlane.xlu0 %805
        %v807 = vsel %vm719, %v236, -inf
        %808 = vmax.xlane.f32.xlu0 %v807
        %v809 = vpop.xlane.xlu0 %808
        %v810 = vsel %vm719, %v237, -inf
        %811 = vmax.xlane.f32.xlu0 %v810
        %v812 = vpop.xlane.xlu0 %811
        %v813 = vsel %vm719, %v238, -inf
        %814 = vmax.xlane.f32.xlu0 %v813
        %v815 = vpop.xlane.xlu0 %814
        %v816 = vsel %vm719, %v239, -inf
        %817 = vmax.xlane.f32.xlu0 %v816
        %v818 = vpop.xlane.xlu0 %817
        %v819 = vsel %vm719, %v240, -inf
        %820 = vmax.xlane.f32.xlu0 %v819
        %v821 = vpop.xlane.xlu0 %820
        %v822 = vsel %vm719, %v241, -inf
        %823 = vmax.xlane.f32.xlu0 %v822
        %v824 = vpop.xlane.xlu0 %823
        %v825 = vsel %vm719, %v242, -inf
        %826 = vmax.xlane.f32.xlu0 %v825
        %v827 = vpop.xlane.xlu0 %826
        %v828 = vsel %vm719, %v243, -inf
        %829 = vmax.xlane.f32.xlu0 %v828
        %v830 = vpop.xlane.xlu0 %829
        %v831 = vsel %vm719, %v244, -inf
        %832 = vmax.xlane.f32.xlu0 %v831
        %v833 = vpop.xlane.xlu0 %832
        %v834 = vsel %vm719, %v245, -inf
        %835 = vmax.xlane.f32.xlu0 %v834
        %v836 = vpop.xlane.xlu0 %835
        %v837 = vsel %vm719, %v246, -inf
        %838 = vmax.xlane.f32.xlu0 %v837
        %v839 = vpop.xlane.xlu0 %838
        %v840 = vsel %vm719, %v247, -inf
        %841 = vmax.xlane.f32.xlu0 %v840
        %v842 = vpop.xlane.xlu0 %841
        %v843 = vsel %vm719, %v248, -inf
        %844 = vmax.xlane.f32.xlu0 %v843
        %v845 = vpop.xlane.xlu0 %844
        %v846 = vsel %vm719, %v249, -inf
        %847 = vmax.xlane.f32.xlu0 %v846
        %v848 = vpop.xlane.xlu0 %847
        %v849 = vsel %vm719, %v250, -inf
        %850 = vmax.xlane.f32.xlu0 %v849
        %v851 = vpop.xlane.xlu0 %850
        %v852 = vsel %vm719, %v251, -inf
        %853 = vmax.xlane.f32.xlu0 %v852
        %v854 = vpop.xlane.xlu0 %853
        %v855 = vsel %vm719, %v252, -inf
        %856 = vmax.xlane.f32.xlu0 %v855
        %v857 = vpop.xlane.xlu0 %856
        %v858 = vsel %vm719, %v253, -inf
        %859 = vmax.xlane.f32.xlu0 %v858
        %v860 = vpop.xlane.xlu0 %859
        %v861 = vsel %vm719, %v254, -inf
        %862 = vmax.xlane.f32.xlu0 %v861
        %v863 = vpop.xlane.xlu0 %862
        %v864 = vsel %vm719, %v255, -inf
        %865 = vmax.xlane.f32.xlu0 %v864
        %v866 = vpop.xlane.xlu0 %865
        %v867 = vsel %vm719, %v256, -inf
        %868 = vmax.xlane.f32.xlu0 %v867
        %v869 = vpop.xlane.xlu0 %868
        %v870 = vsel %vm719, %v257, -inf
        %871 = vmax.xlane.f32.xlu0 %v870
        %v872 = vpop.xlane.xlu0 %871
        %v873 = vsel %vm719, %v258, -inf
        %874 = vmax.xlane.f32.xlu0 %v873
        %v875 = vpop.xlane.xlu0 %874
        %v876 = vsel %vm719, %v259, -inf
        %877 = vmax.xlane.f32.xlu0 %v876
        %v878 = vpop.xlane.xlu0 %877
        %v879 = vsel %vm719, %v260, -inf
        %880 = vmax.xlane.f32.xlu0 %v879
        %v881 = vpop.xlane.xlu0 %880
        %v882 = vsel %vm719, %v261, -inf
        %883 = vmax.xlane.f32.xlu0 %v882
        %v884 = vpop.xlane.xlu0 %883
        %v885 = vsel %vm719, %v262, -inf
        %886 = vmax.xlane.f32.xlu0 %v885
        %v887 = vpop.xlane.xlu0 %886
        %v888 = vsel %vm719, %v263, -inf
        %889 = vmax.xlane.f32.xlu0 %v888
        %v890 = vpop.xlane.xlu0 %889
        %v891 = vsel %vm719, %v264, -inf
        %892 = vmax.xlane.f32.xlu0 %v891
        %v893 = vpop.xlane.xlu0 %892
        %v894 = vsel %vm719, %v265, -inf
        %895 = vmax.xlane.f32.xlu0 %v894
        %v896 = vpop.xlane.xlu0 %895
        %v897 = vsel %vm719, %v266, -inf
        %898 = vmax.xlane.f32.xlu0 %v897
        %v899 = vpop.xlane.xlu0 %898
        %v900 = vsel %vm719, %v267, -inf
        %901 = vmax.xlane.f32.xlu0 %v900
        %v902 = vpop.xlane.xlu0 %901
        %v903 = vsel %vm719, %v268, -inf
        %904 = vmax.xlane.f32.xlu0 %v903
        %v905 = vpop.xlane.xlu0 %904
        %v906 = vsel %vm719, %v269, -inf
        %907 = vmax.xlane.f32.xlu0 %v906
        %v908 = vpop.xlane.xlu0 %907
        %v909 = vsel %vm719, %v270, -inf
        %910 = vmax.xlane.f32.xlu0 %v909
        %v911 = vpop.xlane.xlu0 %910
        %v912 = vsel %vm719, %v271, -inf
        %913 = vmax.xlane.f32.xlu0 %v912
        %v914 = vpop.xlane.xlu0 %913
        %v915 = vsel %vm719, %v272, -inf
        %916 = vmax.xlane.f32.xlu0 %v915
        %v917 = vpop.xlane.xlu0 %916
        %v918 = vsel %vm719, %v273, -inf
        %919 = vmax.xlane.f32.xlu0 %v918
        %v920 = vpop.xlane.xlu0 %919
        %v921 = vsel %vm719, %v274, -inf
        %922 = vmax.xlane.f32.xlu0 %v921
        %v923 = vpop.xlane.xlu0 %922
        %v924 = vsel %vm719, %v275, -inf
        %925 = vmax.xlane.f32.xlu0 %v924
        %v926 = vpop.xlane.xlu0 %925
        %v927 = vsel %vm719, %v276, -inf
        %928 = vmax.xlane.f32.xlu0 %v927
        %v929 = vpop.xlane.xlu0 %928
        %v930 = vsel %vm719, %v277, -inf
        %931 = vmax.xlane.f32.xlu0 %v930
        %v932 = vpop.xlane.xlu0 %931
        %v933 = vsel %vm719, %v278, -inf
        %934 = vmax.xlane.f32.xlu0 %v933
        %v935 = vpop.xlane.xlu0 %934
        %v936 = vsel %vm719, %v279, -inf
        %937 = vmax.xlane.f32.xlu0 %v936
        %v938 = vpop.xlane.xlu0 %937
        %v939 = vsel %vm719, %v280, -inf
        %940 = vmax.xlane.f32.xlu0 %v939
        %v941 = vpop.xlane.xlu0 %940
        %v942 = vsel %vm719, %v281, -inf
        %943 = vmax.xlane.f32.xlu0 %v942
        %v944 = vpop.xlane.xlu0 %943
        %v945 = vsel %vm719, %v282, -inf
        %946 = vmax.xlane.f32.xlu0 %v945
        %v947 = vpop.xlane.xlu0 %946
        %v948 = vsel %vm719, %v283, -inf
        %949 = vmax.xlane.f32.xlu0 %v948
        %v950 = vpop.xlane.xlu0 %949
        %v951 = vsel %vm719, %v284, -inf
        %952 = vmax.xlane.f32.xlu0 %v951
        %v953 = vpop.xlane.xlu0 %952
        %v954 = vsel %vm719, %v285, -inf
        %955 = vmax.xlane.f32.xlu0 %v954
        %v956 = vpop.xlane.xlu0 %955
        %v957 = vsel %vm719, %v286, -inf
        %958 = vmax.xlane.f32.xlu0 %v957
        %v959 = vpop.xlane.xlu0 %958
        %v960 = vsel %vm719, %v287, -inf
        %961 = vmax.xlane.f32.xlu0 %v960
        %v962 = vpop.xlane.xlu0 %961
        %v963 = vsel %vm719, %v288, -inf
        %964 = vmax.xlane.f32.xlu0 %v963
        %v965 = vpop.xlane.xlu0 %964
        %v966 = vsel %vm719, %v289, -inf
        %967 = vmax.xlane.f32.xlu0 %v966
        %v968 = vpop.xlane.xlu0 %967
        %v969 = vsel %vm719, %v290, -inf
        %970 = vmax.xlane.f32.xlu0 %v969
        %v971 = vpop.xlane.xlu0 %970
        %v972 = vsel %vm719, %v291, -inf
        %973 = vmax.xlane.f32.xlu0 %v972
        %v974 = vpop.xlane.xlu0 %973
        %v975 = vsel %vm719, %v292, -inf
        %976 = vmax.xlane.f32.xlu0 %v975
        %v977 = vpop.xlane.xlu0 %976
        %v978 = vsel %vm719, %v293, -inf
        %979 = vmax.xlane.f32.xlu0 %v978
        %v980 = vpop.xlane.xlu0 %979
        %v981 = vsel %vm719, %v294, -inf
        %982 = vmax.xlane.f32.xlu0 %v981
        %v983 = vpop.xlane.xlu0 %982
        %v984 = vsel %vm719, %v295, -inf
        %985 = vmax.xlane.f32.xlu0 %v984
        %v986 = vpop.xlane.xlu0 %985
        %v987 = vsel %vm719, %v296, -inf
        %988 = vmax.xlane.f32.xlu0 %v987
        %v989 = vpop.xlane.xlu0 %988
        %v990 = vsel %vm719, %v297, -inf
        %991 = vmax.xlane.f32.xlu0 %v990
        %v992 = vpop.xlane.xlu0 %991
        %v993 = vsel %vm719, %v298, -inf
        %994 = vmax.xlane.f32.xlu0 %v993
        %v995 = vpop.xlane.xlu0 %994
        %v996 = vsel %vm719, %v299, -inf
        %997 = vmax.xlane.f32.xlu0 %v996
        %v998 = vpop.xlane.xlu0 %997
        %v999 = vsel %vm719, %v300, -inf
        %1000 = vmax.xlane.f32.xlu0 %v999
        %v1001 = vpop.xlane.xlu0 %1000
        %v1002 = vsel %vm719, %v301, -inf
        %1003 = vmax.xlane.f32.xlu0 %v1002
        %v1004 = vpop.xlane.xlu0 %1003
        %v1005 = vsel %vm719, %v302, -inf
        %1006 = vmax.xlane.f32.xlu0 %v1005
        %v1007 = vpop.xlane.xlu0 %1006
        %v1008 = vsel %vm719, %v303, -inf
        %1009 = vmax.xlane.f32.xlu0 %v1008
        %v1010 = vpop.xlane.xlu0 %1009
        %v1011 = vsel %vm719, %v304, -inf
        %1012 = vmax.xlane.f32.xlu0 %v1011
        %v1013 = vpop.xlane.xlu0 %1012
        %v1014 = vsel %vm719, %v305, -inf
        %1015 = vmax.xlane.f32.xlu0 %v1014
        %v1016 = vpop.xlane.xlu0 %1015
        %v1017 = vsel %vm719, %v306, -inf
        %1018 = vmax.xlane.f32.xlu0 %v1017
        %v1019 = vpop.xlane.xlu0 %1018
        %v1020 = vsel %vm719, %v307, -inf
        %1021 = vmax.xlane.f32.xlu0 %v1020
        %v1022 = vpop.xlane.xlu0 %1021
        %v1023 = vsel %vm719, %v308, -inf
        %1024 = vmax.xlane.f32.xlu0 %v1023
        %v1025 = vpop.xlane.xlu0 %1024
        %v1026 = vsel %vm719, %v309, -inf
        %1027 = vmax.xlane.f32.xlu0 %v1026
        %v1028 = vpop.xlane.xlu0 %1027
        %v1029 = vsel %vm719, %v310, -inf
        %1030 = vmax.xlane.f32.xlu0 %v1029
        %v1031 = vpop.xlane.xlu0 %1030
        %v1032 = vsel %vm719, %v311, -inf
        %1033 = vmax.xlane.f32.xlu0 %v1032
        %v1034 = vpop.xlane.xlu0 %1033
        %v1035 = vsel %vm719, %v312, -inf
        %1036 = vmax.xlane.f32.xlu0 %v1035
        %v1037 = vpop.xlane.xlu0 %1036
        %v1038 = vsel %vm719, %v313, -inf
        %1039 = vmax.xlane.f32.xlu0 %v1038
        %v1040 = vpop.xlane.xlu0 %1039
        %v1041 = vsel %vm719, %v314, -inf
        %1042 = vmax.xlane.f32.xlu0 %v1041
        %v1043 = vpop.xlane.xlu0 %1042
        %v1044 = vsel %vm719, %v315, -inf
        %1045 = vmax.xlane.f32.xlu0 %v1044
        %v1046 = vpop.xlane.xlu0 %1045
        %v1047 = vsel %vm719, %v316, -inf
        %1048 = vmax.xlane.f32.xlu0 %v1047
        %v1049 = vpop.xlane.xlu0 %1048
        %v1050 = vsel %vm719, %v317, -inf
        %1051 = vmax.xlane.f32.xlu0 %v1050
        %v1052 = vpop.xlane.xlu0 %1051
        %v1053 = vsel %vm719, %v318, -inf
        %1054 = vmax.xlane.f32.xlu0 %v1053
        %v1055 = vpop.xlane.xlu0 %1054
        %v1056 = vsel %vm719, %v319, -inf
        %1057 = vmax.xlane.f32.xlu0 %v1056
        %v1058 = vpop.xlane.xlu0 %1057
        %v1059 = vsel %vm719, %v320, -inf
        %1060 = vmax.xlane.f32.xlu0 %v1059
        %v1061 = vpop.xlane.xlu0 %1060
        %v1062 = vsel %vm719, %v321, -inf
        %1063 = vmax.xlane.f32.xlu0 %v1062
        %v1064 = vpop.xlane.xlu0 %1063
        %v1065 = vsel %vm719, %v322, -inf
        %1066 = vmax.xlane.f32.xlu0 %v1065
        %v1067 = vpop.xlane.xlu0 %1066
        %v1068 = vsel %vm719, %v323, -inf
        %1069 = vmax.xlane.f32.xlu0 %v1068
        %v1070 = vpop.xlane.xlu0 %1069
        %v1071 = vsel %vm719, %v324, -inf
        %1072 = vmax.xlane.f32.xlu0 %v1071
        %v1073 = vpop.xlane.xlu0 %1072
        %v1074 = vsel %vm719, %v325, -inf
        %1075 = vmax.xlane.f32.xlu0 %v1074
        %v1076 = vpop.xlane.xlu0 %1075
        %v1077 = vsel %vm719, %v326, -inf
        %1078 = vmax.xlane.f32.xlu0 %v1077
        %v1079 = vpop.xlane.xlu0 %1078
        %v1080 = vsel %vm719, %v327, -inf
        %1081 = vmax.xlane.f32.xlu0 %v1080
        %v1082 = vpop.xlane.xlu0 %1081
        %v1083 = vsel %vm719, %v328, -inf
        %1084 = vmax.xlane.f32.xlu0 %v1083
        %v1085 = vpop.xlane.xlu0 %1084
        %v1086 = vsel %vm719, %v329, -inf
        %1087 = vmax.xlane.f32.xlu0 %v1086
        %v1088 = vpop.xlane.xlu0 %1087
        %v1089 = vsel %vm719, %v330, -inf
        %1090 = vmax.xlane.f32.xlu0 %v1089
        %v1091 = vpop.xlane.xlu0 %1090
        %v1092 = vsel %vm719, %v331, -inf
        %1093 = vmax.xlane.f32.xlu0 %v1092
        %v1094 = vpop.xlane.xlu0 %1093
        %v1095 = vsel %vm719, %v332, -inf
        %1096 = vmax.xlane.f32.xlu0 %v1095
        %v1097 = vpop.xlane.xlu0 %1096
        %v1098 = vsel %vm719, %v333, -inf
        %1099 = vmax.xlane.f32.xlu0 %v1098
        %v1100 = vpop.xlane.xlu0 %1099
        %v1101 = vsel %vm719, %v334, -inf
        %1102 = vmax.xlane.f32.xlu0 %v1101
        %v1103 = vpop.xlane.xlu0 %1102
        %v1104 = vsel %vm719, %v335, -inf
        %1105 = vmax.xlane.f32.xlu0 %v1104
        %v1106 = vpop.xlane.xlu0 %1105
        %v1107 = vsel %vm719, %v336, -inf
        %1108 = vmax.xlane.f32.xlu0 %v1107
        %v1109 = vpop.xlane.xlu0 %1108
        %v1110 = vsel %vm719, %v337, -inf
        %1111 = vmax.xlane.f32.xlu0 %v1110
        %v1112 = vpop.xlane.xlu0 %1111
        %v1113 = vsel %vm719, %v338, -inf
        %1114 = vmax.xlane.f32.xlu0 %v1113
        %v1115 = vpop.xlane.xlu0 %1114
        %v1116 = vsel %vm719, %v339, -inf
        %1117 = vmax.xlane.f32.xlu0 %v1116
        %v1118 = vpop.xlane.xlu0 %1117
        %v1119 = vsel %vm719, %v340, -inf
        %1120 = vmax.xlane.f32.xlu0 %v1119
        %v1121 = vpop.xlane.xlu0 %1120
        %v1122 = vsel %vm719, %v341, -inf
        %1123 = vmax.xlane.f32.xlu0 %v1122
        %v1124 = vpop.xlane.xlu0 %1123
        %v1125 = vsel %vm719, %v342, -inf
        %1126 = vmax.xlane.f32.xlu0 %v1125
        %v1127 = vpop.xlane.xlu0 %1126
        %v1128 = vsel %vm719, %v343, -inf
        %1129 = vmax.xlane.f32.xlu0 %v1128
        %v1130 = vpop.xlane.xlu0 %1129
        %v1131 = vsel %vm719, %v344, -inf
        %1132 = vmax.xlane.f32.xlu0 %v1131
        %v1133 = vpop.xlane.xlu0 %1132
        %v1134 = vsel %vm719, %v345, -inf
        %1135 = vmax.xlane.f32.xlu0 %v1134
        %v1136 = vpop.xlane.xlu0 %1135
        %v1137 = vsel %vm719, %v346, -inf
        %1138 = vmax.xlane.f32.xlu0 %v1137
        %v1139 = vpop.xlane.xlu0 %1138
        %v1140 = vsel %vm719, %v347, -inf
        %1141 = vmax.xlane.f32.xlu0 %v1140
        %v1142 = vpop.xlane.xlu0 %1141
        %v1143 = vsel %vm719, %v348, -inf
        %1144 = vmax.xlane.f32.xlu0 %v1143
        %v1145 = vpop.xlane.xlu0 %1144
        %v1146 = vsel %vm719, %v349, -inf
        %1147 = vmax.xlane.f32.xlu0 %v1146
        %v1148 = vpop.xlane.xlu0 %1147
        %v1149 = vsel %vm719, %v350, -inf
        %1150 = vmax.xlane.f32.xlu0 %v1149
        %v1151 = vpop.xlane.xlu0 %1150
        %v1152 = vsel %vm719, %v351, -inf
        %1153 = vmax.xlane.f32.xlu0 %v1152
        %v1154 = vpop.xlane.xlu0 %1153
        %v1155 = vsel %vm719, %v352, -inf
        %1156 = vmax.xlane.f32.xlu0 %v1155
        %v1157 = vpop.xlane.xlu0 %1156
        %v1158 = vsel %vm719, %v353, -inf
        %1159 = vmax.xlane.f32.xlu0 %v1158
        %v1160 = vpop.xlane.xlu0 %1159
        %v1161 = vsel %vm719, %v354, -inf
        %1162 = vmax.xlane.f32.xlu0 %v1161
        %v1163 = vpop.xlane.xlu0 %1162
        %v1164 = vsel %vm719, %v355, -inf
        %1165 = vmax.xlane.f32.xlu0 %v1164
        %v1166 = vpop.xlane.xlu0 %1165
        %v1167 = vsel %vm719, %v356, -inf
        %1168 = vmax.xlane.f32.xlu0 %v1167
        %v1169 = vpop.xlane.xlu0 %1168
        %v1170 = vsel %vm719, %v357, -inf
        %1171 = vmax.xlane.f32.xlu0 %v1170
        %v1172 = vpop.xlane.xlu0 %1171
        %v1173 = vsel %vm719, %v358, -inf
        %1174 = vmax.xlane.f32.xlu0 %v1173
        %v1175 = vpop.xlane.xlu0 %1174
        %v1176 = vsel %vm719, %v359, -inf
        %1177 = vmax.xlane.f32.xlu0 %v1176
        %v1178 = vpop.xlane.xlu0 %1177
        %v1179 = vsel %vm719, %v360, -inf
        %1180 = vmax.xlane.f32.xlu0 %v1179
        %v1181 = vpop.xlane.xlu0 %1180
        %v1182 = vsel %vm719, %v361, -inf
        %1183 = vmax.xlane.f32.xlu0 %v1182
        %v1184 = vpop.xlane.xlu0 %1183
        %v1185 = vsel %vm719, %v362, -inf
        %1186 = vmax.xlane.f32.xlu0 %v1185
        %v1187 = vpop.xlane.xlu0 %1186
        %v1188 = vsel %vm719, %v363, -inf
        %1189 = vmax.xlane.f32.xlu0 %v1188
        %v1190 = vpop.xlane.xlu0 %1189
        %v1191 = vsel %vm719, %v364, -inf
        %1192 = vmax.xlane.f32.xlu0 %v1191
        %v1193 = vpop.xlane.xlu0 %1192
        %v1194 = vsel %vm719, %v365, -inf
        %1195 = vmax.xlane.f32.xlu0 %v1194
        %v1196 = vpop.xlane.xlu0 %1195
        %v1197 = vsel %vm719, %v366, -inf
        %1198 = vmax.xlane.f32.xlu0 %v1197
        %v1199 = vpop.xlane.xlu0 %1198
        %v1200 = vsel %vm719, %v367, -inf
        %1201 = vmax.xlane.f32.xlu0 %v1200
        %v1202 = vpop.xlane.xlu0 %1201
        %v1203 = vsel %vm719, %v368, -inf
        %1204 = vmax.xlane.f32.xlu0 %v1203
        %v1205 = vpop.xlane.xlu0 %1204
        %v1206 = vsel %vm719, %v369, -inf
        %1207 = vmax.xlane.f32.xlu0 %v1206
        %v1208 = vpop.xlane.xlu0 %1207
        %v1209 = vsel %vm719, %v370, -inf
        %1210 = vmax.xlane.f32.xlu0 %v1209
        %v1211 = vpop.xlane.xlu0 %1210
        %v1212 = vsel %vm719, %v371, -inf
        %1213 = vmax.xlane.f32.xlu0 %v1212
        %v1214 = vpop.xlane.xlu0 %1213
        %v1215 = vsel %vm719, %v372, -inf
        %1216 = vmax.xlane.f32.xlu0 %v1215
        %v1217 = vpop.xlane.xlu0 %1216
        %v1218 = vsel %vm719, %v373, -inf
        %1219 = vmax.xlane.f32.xlu0 %v1218
        %v1220 = vpop.xlane.xlu0 %1219
        %v1221 = vsel %vm719, %v374, -inf
        %1222 = vmax.xlane.f32.xlu0 %v1221
        %v1223 = vpop.xlane.xlu0 %1222
        %v1224 = vsel %vm719, %v375, -inf
        %1225 = vmax.xlane.f32.xlu0 %v1224
        %v1226 = vpop.xlane.xlu0 %1225
        %v1227 = vsel %vm719, %v376, -inf
        %1228 = vmax.xlane.f32.xlu0 %v1227
        %v1229 = vpop.xlane.xlu0 %1228
        %v1230 = vsel %vm719, %v377, -inf
        %1231 = vmax.xlane.f32.xlu0 %v1230
        %v1232 = vpop.xlane.xlu0 %1231
        %v1233 = vsel %vm719, %v378, -inf
        %1234 = vmax.xlane.f32.xlu0 %v1233
        %v1235 = vpop.xlane.xlu0 %1234
        %v1236 = vsel %vm719, %v379, -inf
        %1237 = vmax.xlane.f32.xlu0 %v1236
        %v1238 = vpop.xlane.xlu0 %1237
        %v1239 = vsel %vm719, %v380, -inf
        %1240 = vmax.xlane.f32.xlu0 %v1239
        %v1241 = vpop.xlane.xlu0 %1240
        %v1242 = vsel %vm719, %v381, -inf
        %1243 = vmax.xlane.f32.xlu0 %v1242
        %v1244 = vpop.xlane.xlu0 %1243
        %v1245 = vsel %vm719, %v382, -inf
        %1246 = vmax.xlane.f32.xlu0 %v1245
        %v1247 = vpop.xlane.xlu0 %1246
        %v1248 = vsel %vm719, %v383, -inf
        %1249 = vmax.xlane.f32.xlu0 %v1248
        %v1250 = vpop.xlane.xlu0 %1249
        %v1251 = vsel %vm719, %v384, -inf
        %1252 = vmax.xlane.f32.xlu0 %v1251
        %v1253 = vpop.xlane.xlu0 %1252
        %v1254 = vsel %vm719, %v385, -inf
        %1255 = vmax.xlane.f32.xlu0 %v1254
        %v1256 = vpop.xlane.xlu0 %1255
        %v1257 = vsel %vm719, %v386, -inf
        %1258 = vmax.xlane.f32.xlu0 %v1257
        %v1259 = vpop.xlane.xlu0 %1258
        %v1260 = vsel %vm719, %v387, -inf
        %1261 = vmax.xlane.f32.xlu0 %v1260
        %v1262 = vpop.xlane.xlu0 %1261
        %v1263 = vsel %vm719, %v388, -inf
        %1264 = vmax.xlane.f32.xlu0 %v1263
        %v1265 = vpop.xlane.xlu0 %1264
        %v1266 = vsel %vm719, %v389, -inf
        %1267 = vmax.xlane.f32.xlu0 %v1266
        %v1268 = vpop.xlane.xlu0 %1267
        %v1269 = vsel %vm719, %v390, -inf
        %1270 = vmax.xlane.f32.xlu0 %v1269
        %v1271 = vpop.xlane.xlu0 %1270
        %v1272 = vsel %vm719, %v391, -inf
        %1273 = vmax.xlane.f32.xlu0 %v1272
        %v1274 = vpop.xlane.xlu0 %1273
        %v1275 = vsel %vm719, %v392, -inf
        %1276 = vmax.xlane.f32.xlu0 %v1275
        %v1277 = vpop.xlane.xlu0 %1276
        %v1278 = vsel %vm719, %v393, -inf
        %1279 = vmax.xlane.f32.xlu0 %v1278
        %v1280 = vpop.xlane.xlu0 %1279
        %v1281 = vsel %vm719, %v394, -inf
        %1282 = vmax.xlane.f32.xlu0 %v1281
        %v1283 = vpop.xlane.xlu0 %1282
        %v1284 = vsel %vm719, %v395, -inf
        %1285 = vmax.xlane.f32.xlu0 %v1284
        %v1286 = vpop.xlane.xlu0 %1285
        %v1287 = vsel %vm719, %v396, -inf
        %1288 = vmax.xlane.f32.xlu0 %v1287
        %v1289 = vpop.xlane.xlu0 %1288
        %v1290 = vsel %vm719, %v397, -inf
        %1291 = vmax.xlane.f32.xlu0 %v1290
        %v1292 = vpop.xlane.xlu0 %1291
        %v1293 = vsel %vm719, %v398, -inf
        %1294 = vmax.xlane.f32.xlu0 %v1293
        %v1295 = vpop.xlane.xlu0 %1294
        %v1296 = vsel %vm719, %v399, -inf
        %1297 = vmax.xlane.f32.xlu0 %v1296
        %v1298 = vpop.xlane.xlu0 %1297
        %v1299 = vsel %vm719, %v400, -inf
        %1300 = vmax.xlane.f32.xlu0 %v1299
        %v1301 = vpop.xlane.xlu0 %1300
        %v1302 = vsel %vm719, %v401, -inf
        %1303 = vmax.xlane.f32.xlu0 %v1302
        %v1304 = vpop.xlane.xlu0 %1303
        %v1305 = vsel %vm719, %v402, -inf
        %1306 = vmax.xlane.f32.xlu0 %v1305
        %v1307 = vpop.xlane.xlu0 %1306
        %v1308 = vsel %vm719, %v403, -inf
        %1309 = vmax.xlane.f32.xlu0 %v1308
        %v1310 = vpop.xlane.xlu0 %1309
        %v1311 = vsel %vm719, %v404, -inf
        %1312 = vmax.xlane.f32.xlu0 %v1311
        %v1313 = vpop.xlane.xlu0 %1312
        %v1314 = vsel %vm719, %v405, -inf
        %1315 = vmax.xlane.f32.xlu0 %v1314
        %v1316 = vpop.xlane.xlu0 %1315
        %v1317 = vsel %vm719, %v406, -inf
        %1318 = vmax.xlane.f32.xlu0 %v1317
        %v1319 = vpop.xlane.xlu0 %1318
        %v1320 = vsel %vm719, %v407, -inf
        %1321 = vmax.xlane.f32.xlu0 %v1320
        %v1322 = vpop.xlane.xlu0 %1321
        %v1323 = vsel %vm719, %v408, -inf
        %1324 = vmax.xlane.f32.xlu0 %v1323
        %v1325 = vpop.xlane.xlu0 %1324
        %v1326 = vsel %vm719, %v409, -inf
        %1327 = vmax.xlane.f32.xlu0 %v1326
        %v1328 = vpop.xlane.xlu0 %1327
        %v1329 = vsel %vm719, %v410, -inf
        %1330 = vmax.xlane.f32.xlu0 %v1329
        %v1331 = vpop.xlane.xlu0 %1330
        %v1332 = vsel %vm719, %v411, -inf
        %1333 = vmax.xlane.f32.xlu0 %v1332
        %v1334 = vpop.xlane.xlu0 %1333
        %v1335 = vsel %vm719, %v412, -inf
        %1336 = vmax.xlane.f32.xlu0 %v1335
        %v1337 = vpop.xlane.xlu0 %1336
        %v1338 = vsel %vm719, %v413, -inf
        %1339 = vmax.xlane.f32.xlu0 %v1338
        %v1340 = vpop.xlane.xlu0 %1339
        %v1341 = vsel %vm719, %v414, -inf
        %1342 = vmax.xlane.f32.xlu0 %v1341
        %v1343 = vpop.xlane.xlu0 %1342
        %v1344 = vsel %vm719, %v415, -inf
        %1345 = vmax.xlane.f32.xlu0 %v1344
        %v1346 = vpop.xlane.xlu0 %1345
        %v1347 = vsel %vm719, %v416, -inf
        %1348 = vmax.xlane.f32.xlu0 %v1347
        %v1349 = vpop.xlane.xlu0 %1348
        %v1350 = vsel %vm719, %v417, -inf
        %1351 = vmax.xlane.f32.xlu0 %v1350
        %v1352 = vpop.xlane.xlu0 %1351
        %v1353 = vsel %vm719, %v418, -inf
        %1354 = vmax.xlane.f32.xlu0 %v1353
        %v1355 = vpop.xlane.xlu0 %1354
        %v1356 = vsel %vm719, %v419, -inf
        %1357 = vmax.xlane.f32.xlu0 %v1356
        %v1358 = vpop.xlane.xlu0 %1357
        %v1359 = vsel %vm719, %v420, -inf
        %1360 = vmax.xlane.f32.xlu0 %v1359
        %v1361 = vpop.xlane.xlu0 %1360
        %v1362 = vsel %vm719, %v421, -inf
        %1363 = vmax.xlane.f32.xlu0 %v1362
        %v1364 = vpop.xlane.xlu0 %1363
        %v1365 = vsel %vm719, %v422, -inf
        %1366 = vmax.xlane.f32.xlu0 %v1365
        %v1367 = vpop.xlane.xlu0 %1366
        %v1368 = vsel %vm719, %v423, -inf
        %1369 = vmax.xlane.f32.xlu0 %v1368
        %v1370 = vpop.xlane.xlu0 %1369
        %v1371 = vsel %vm719, %v424, -inf
        %1372 = vmax.xlane.f32.xlu0 %v1371
        %v1373 = vpop.xlane.xlu0 %1372
        %v1374 = vsel %vm719, %v425, -inf
        %1375 = vmax.xlane.f32.xlu0 %v1374
        %v1376 = vpop.xlane.xlu0 %1375
        %v1377 = vsel %vm719, %v426, -inf
        %1378 = vmax.xlane.f32.xlu0 %v1377
        %v1379 = vpop.xlane.xlu0 %1378
        %v1380 = vsel %vm719, %v427, -inf
        %1381 = vmax.xlane.f32.xlu0 %v1380
        %v1382 = vpop.xlane.xlu0 %1381
        %v1383 = vsel %vm719, %v428, -inf
        %1384 = vmax.xlane.f32.xlu0 %v1383
        %v1385 = vpop.xlane.xlu0 %1384
        %v1386 = vsel %vm719, %v429, -inf
        %1387 = vmax.xlane.f32.xlu0 %v1386
        %v1388 = vpop.xlane.xlu0 %1387
        %v1389 = vsel %vm719, %v430, -inf
        %1390 = vmax.xlane.f32.xlu0 %v1389
        %v1391 = vpop.xlane.xlu0 %1390
        %v1392 = vsel %vm719, %v431, -inf
        %1393 = vmax.xlane.f32.xlu0 %v1392
        %v1394 = vpop.xlane.xlu0 %1393
        %v1395 = vsel %vm719, %v432, -inf
        %1396 = vmax.xlane.f32.xlu0 %v1395
        %v1397 = vpop.xlane.xlu0 %1396
        %v1398 = vsel %vm719, %v433, -inf
        %1399 = vmax.xlane.f32.xlu0 %v1398
        %v1400 = vpop.xlane.xlu0 %1399
        %v1401 = vsel %vm719, %v434, -inf
        %1402 = vmax.xlane.f32.xlu0 %v1401
        %v1403 = vpop.xlane.xlu0 %1402
        %v1404 = vsel %vm719, %v435, -inf
        %1405 = vmax.xlane.f32.xlu0 %v1404
        %v1406 = vpop.xlane.xlu0 %1405
        %v1407 = vsel %vm719, %v436, -inf
        %1408 = vmax.xlane.f32.xlu0 %v1407
        %v1409 = vpop.xlane.xlu0 %1408
        %v1410 = vsel %vm719, %v437, -inf
        %1411 = vmax.xlane.f32.xlu0 %v1410
        %v1412 = vpop.xlane.xlu0 %1411
        %v1413 = vsel %vm719, %v438, -inf
        %1414 = vmax.xlane.f32.xlu0 %v1413
        %v1415 = vpop.xlane.xlu0 %1414
        %v1416 = vsel %vm719, %v439, -inf
        %1417 = vmax.xlane.f32.xlu0 %v1416
        %v1418 = vpop.xlane.xlu0 %1417
        %v1419 = vsel %vm719, %v440, -inf
        %1420 = vmax.xlane.f32.xlu0 %v1419
        %v1421 = vpop.xlane.xlu0 %1420
        %v1422 = vsel %vm719, %v441, -inf
        %1423 = vmax.xlane.f32.xlu0 %v1422
        %v1424 = vpop.xlane.xlu0 %1423
        %v1425 = vsel %vm719, %v442, -inf
        %1426 = vmax.xlane.f32.xlu0 %v1425
        %v1427 = vpop.xlane.xlu0 %1426
        %v1428 = vsel %vm719, %v443, -inf
        %1429 = vmax.xlane.f32.xlu0 %v1428
        %v1430 = vpop.xlane.xlu0 %1429
        %v1431 = vsel %vm719, %v444, -inf
        %1432 = vmax.xlane.f32.xlu0 %v1431
        %v1433 = vpop.xlane.xlu0 %1432
        %v1434 = vsel %vm719, %v445, -inf
        %1435 = vmax.xlane.f32.xlu0 %v1434
        %v1436 = vpop.xlane.xlu0 %1435
        %v1437 = vsel %vm719, %v446, -inf
        %1438 = vmax.xlane.f32.xlu0 %v1437
        %v1439 = vpop.xlane.xlu0 %1438
        %v1440 = vsel %vm719, %v447, -inf
        %1441 = vmax.xlane.f32.xlu0 %v1440
        %v1442 = vpop.xlane.xlu0 %1441
        %v1443 = vsel %vm719, %v448, -inf
        %1444 = vmax.xlane.f32.xlu0 %v1443
        %v1445 = vpop.xlane.xlu0 %1444
        %v1446 = vsel %vm719, %v449, -inf
        %1447 = vmax.xlane.f32.xlu0 %v1446
        %v1448 = vpop.xlane.xlu0 %1447
        %v1449 = vsel %vm719, %v450, -inf
        %1450 = vmax.xlane.f32.xlu0 %v1449
        %v1451 = vpop.xlane.xlu0 %1450
        %v1452 = vsel %vm719, %v451, -inf
        %1453 = vmax.xlane.f32.xlu0 %v1452
        %v1454 = vpop.xlane.xlu0 %1453
        %v1455 = vsel %vm719, %v452, -inf
        %1456 = vmax.xlane.f32.xlu0 %v1455
        %v1457 = vpop.xlane.xlu0 %1456
        %v1458 = vsel %vm719, %v453, -inf
        %1459 = vmax.xlane.f32.xlu0 %v1458
        %v1460 = vpop.xlane.xlu0 %1459
        %v1461 = vsel %vm719, %v454, -inf
        %1462 = vmax.xlane.f32.xlu0 %v1461
        %v1463 = vpop.xlane.xlu0 %1462
        %v1464 = vsel %vm719, %v455, -inf
        %1465 = vmax.xlane.f32.xlu0 %v1464
        %v1466 = vpop.xlane.xlu0 %1465
        %v1467 = vsel %vm719, %v456, -inf
        %1468 = vmax.xlane.f32.xlu0 %v1467
        %v1469 = vpop.xlane.xlu0 %1468
        %v1470 = vsel %vm719, %v457, -inf
        %1471 = vmax.xlane.f32.xlu0 %v1470
        %v1472 = vpop.xlane.xlu0 %1471
        %v1473 = vsel %vm719, %v458, -inf
        %1474 = vmax.xlane.f32.xlu0 %v1473
        %v1475 = vpop.xlane.xlu0 %1474
        %v1476 = vsel %vm719, %v459, -inf
        %1477 = vmax.xlane.f32.xlu0 %v1476
        %v1478 = vpop.xlane.xlu0 %1477
        %v1479 = vsel %vm719, %v460, -inf
        %1480 = vmax.xlane.f32.xlu0 %v1479
        %v1481 = vpop.xlane.xlu0 %1480
        %v1482 = vsel %vm719, %v461, -inf
        %1483 = vmax.xlane.f32.xlu0 %v1482
        %v1484 = vpop.xlane.xlu0 %1483
        %v1485 = vsel %vm719, %v462, -inf
        %1486 = vmax.xlane.f32.xlu0 %v1485
        %v1487 = vpop.xlane.xlu0 %1486
        %v1488 = vsel %vm719, %v463, -inf
        %1489 = vmax.xlane.f32.xlu0 %v1488
        %v1490 = vpop.xlane.xlu0 %1489
        %v1491 = vsel %vm719, %v464, -inf
        %1492 = vmax.xlane.f32.xlu0 %v1491
        %v1493 = vpop.xlane.xlu0 %1492
        %v1494 = vsel %vm719, %v465, -inf
        %1495 = vmax.xlane.f32.xlu0 %v1494
        %v1496 = vpop.xlane.xlu0 %1495
        %v1497 = vsel %vm719, %v466, -inf
        %1498 = vmax.xlane.f32.xlu0 %v1497
        %v1499 = vpop.xlane.xlu0 %1498
        %v1500 = vsel %vm719, %v467, -inf
        %1501 = vmax.xlane.f32.xlu0 %v1500
        %v1502 = vpop.xlane.xlu0 %1501
        %v1503 = vsel %vm719, %v468, -inf
        %1504 = vmax.xlane.f32.xlu0 %v1503
        %v1505 = vpop.xlane.xlu0 %1504
        %v1506 = vsel %vm719, %v469, -inf
        %1507 = vmax.xlane.f32.xlu0 %v1506
        %v1508 = vpop.xlane.xlu0 %1507
        %v1509 = vsel %vm719, %v470, -inf
        %1510 = vmax.xlane.f32.xlu0 %v1509
        %v1511 = vpop.xlane.xlu0 %1510
        %v1512 = vsel %vm719, %v471, -inf
        %1513 = vmax.xlane.f32.xlu0 %v1512
        %v1514 = vpop.xlane.xlu0 %1513
        %v1515 = vsel %vm719, %v472, -inf
        %1516 = vmax.xlane.f32.xlu0 %v1515
        %v1517 = vpop.xlane.xlu0 %1516
        %v1518 = vsel %vm719, %v473, -inf
        %1519 = vmax.xlane.f32.xlu0 %v1518
        %v1520 = vpop.xlane.xlu0 %1519
        %v1521 = vsel %vm719, %v474, -inf
        %1522 = vmax.xlane.f32.xlu0 %v1521
        %v1523 = vpop.xlane.xlu0 %1522
        %v1524 = vsel %vm719, %v475, -inf
        %1525 = vmax.xlane.f32.xlu0 %v1524
        %v1526 = vpop.xlane.xlu0 %1525
        %v1527 = vsel %vm719, %v476, -inf
        %1528 = vmax.xlane.f32.xlu0 %v1527
        %v1529 = vpop.xlane.xlu0 %1528
        %v1530 = vsel %vm719, %v477, -inf
        %1531 = vmax.xlane.f32.xlu0 %v1530
        %v1532 = vpop.xlane.xlu0 %1531
        %v1533 = vsel %vm719, %v478, -inf
        %1534 = vmax.xlane.f32.xlu0 %v1533
        %v1535 = vpop.xlane.xlu0 %1534
        %v1536 = vsel %vm719, %v479, -inf
        %1537 = vmax.xlane.f32.xlu0 %v1536
        %v1538 = vpop.xlane.xlu0 %1537
        %v1539 = vsel %vm719, %v480, -inf
        %1540 = vmax.xlane.f32.xlu0 %v1539
        %v1541 = vpop.xlane.xlu0 %1540
        %v1542 = vsel %vm719, %v481, -inf
        %1543 = vmax.xlane.f32.xlu0 %v1542
        %v1544 = vpop.xlane.xlu0 %1543
        %v1545 = vsel %vm719, %v482, -inf
        %1546 = vmax.xlane.f32.xlu0 %v1545
        %v1547 = vpop.xlane.xlu0 %1546
        %v1548 = vsel %vm719, %v483, -inf
        %1549 = vmax.xlane.f32.xlu0 %v1548
        %v1550 = vpop.xlane.xlu0 %1549
        %v1551 = vsel %vm719, %v484, -inf
        %1552 = vmax.xlane.f32.xlu0 %v1551
        %v1553 = vpop.xlane.xlu0 %1552
        %v1554 = vsel %vm719, %v485, -inf
        %1555 = vmax.xlane.f32.xlu0 %v1554
        %v1556 = vpop.xlane.xlu0 %1555
        %v1557 = vsel %vm719, %v486, -inf
        %1558 = vmax.xlane.f32.xlu0 %v1557
        %v1559 = vpop.xlane.xlu0 %1558
        %v1560 = vsel %vm719, %v487, -inf
        %1561 = vmax.xlane.f32.xlu0 %v1560
        %v1562 = vpop.xlane.xlu0 %1561
        %v1563 = vsel %vm719, %v488, -inf
        %1564 = vmax.xlane.f32.xlu0 %v1563
        %v1565 = vpop.xlane.xlu0 %1564
        %v1566 = vsel %vm719, %v489, -inf
        %1567 = vmax.xlane.f32.xlu0 %v1566
        %v1568 = vpop.xlane.xlu0 %1567
        %v1569 = vsel %vm719, %v490, -inf
        %1570 = vmax.xlane.f32.xlu0 %v1569
        %v1571 = vpop.xlane.xlu0 %1570
        %v1572 = vsel %vm719, %v491, -inf
        %1573 = vmax.xlane.f32.xlu0 %v1572
        %v1574 = vpop.xlane.xlu0 %1573
        %v1575 = vsel %vm719, %v492, -inf
        %1576 = vmax.xlane.f32.xlu0 %v1575
        %v1577 = vpop.xlane.xlu0 %1576
        %v1578 = vsel %vm719, %v493, -inf
        %1579 = vmax.xlane.f32.xlu0 %v1578
        %v1580 = vpop.xlane.xlu0 %1579
        %v1581 = vsel %vm719, %v494, -inf
        %1582 = vmax.xlane.f32.xlu0 %v1581
        %v1583 = vpop.xlane.xlu0 %1582
        %v1584 = vsel %vm719, %v495, -inf
        %1585 = vmax.xlane.f32.xlu0 %v1584
        %v1586 = vpop.xlane.xlu0 %1585
        %v1587 = vsel %vm719, %v496, -inf
        %1588 = vmax.xlane.f32.xlu0 %v1587
        %v1589 = vpop.xlane.xlu0 %1588
        %v1590 = vsel %vm719, %v497, -inf
        %1591 = vmax.xlane.f32.xlu0 %v1590
        %v1592 = vpop.xlane.xlu0 %1591
        %v1593 = vsel %vm719, %v498, -inf
        %1594 = vmax.xlane.f32.xlu0 %v1593
        %v1595 = vpop.xlane.xlu0 %1594
        %v1596 = vsel %vm719, %v499, -inf
        %1597 = vmax.xlane.f32.xlu0 %v1596
        %v1598 = vpop.xlane.xlu0 %1597
        %v1599 = vsel %vm719, %v500, -inf
        %1600 = vmax.xlane.f32.xlu0 %v1599
        %v1601 = vpop.xlane.xlu0 %1600
        %v1602 = vsel %vm719, %v501, -inf
        %1603 = vmax.xlane.f32.xlu0 %v1602
        %v1604 = vpop.xlane.xlu0 %1603
        %v1605 = vsel %vm719, %v502, -inf
        %1606 = vmax.xlane.f32.xlu0 %v1605
        %v1607 = vpop.xlane.xlu0 %1606
        %v1608 = vsel %vm719, %v503, -inf
        %1609 = vmax.xlane.f32.xlu0 %v1608
        %v1610 = vpop.xlane.xlu0 %1609
        %v1611 = vsel %vm719, %v504, -inf
        %1612 = vmax.xlane.f32.xlu0 %v1611
        %v1613 = vpop.xlane.xlu0 %1612
        %v1614 = vsel %vm719, %v505, -inf
        %1615 = vmax.xlane.f32.xlu0 %v1614
        %v1616 = vpop.xlane.xlu0 %1615
        %v1617 = vsel %vm719, %v506, -inf
        %1618 = vmax.xlane.f32.xlu0 %v1617
        %v1619 = vpop.xlane.xlu0 %1618
        %v1620 = vsel %vm719, %v507, -inf
        %1621 = vmax.xlane.f32.xlu0 %v1620
        %v1622 = vpop.xlane.xlu0 %1621
        %v1623 = vsel %vm719, %v508, -inf
        %1624 = vmax.xlane.f32.xlu0 %v1623
        %v1625 = vpop.xlane.xlu0 %1624
        %v1626 = vsel %vm719, %v509, -inf
        %1627 = vmax.xlane.f32.xlu0 %v1626
        %v1628 = vpop.xlane.xlu0 %1627
        %v1629 = vsel %vm719, %v510, -inf
        %1630 = vmax.xlane.f32.xlu0 %v1629
        %v1631 = vpop.xlane.xlu0 %1630
        %v1632 = vsel %vm719, %v511, -inf
        %1633 = vmax.xlane.f32.xlu0 %v1632
        %v1634 = vpop.xlane.xlu0 %1633
        %v1635 = vsel %vm719, %v512, -inf
        %1636 = vmax.xlane.f32.xlu0 %v1635
        %v1637 = vpop.xlane.xlu0 %1636
        %v1638 = vsel %vm719, %v513, -inf
        %1639 = vmax.xlane.f32.xlu0 %v1638
        %v1640 = vpop.xlane.xlu0 %1639
        %v1641 = vsel %vm719, %v514, -inf
        %1642 = vmax.xlane.f32.xlu0 %v1641
        %v1643 = vpop.xlane.xlu0 %1642
        %v1644 = vsel %vm719, %v515, -inf
        %1645 = vmax.xlane.f32.xlu0 %v1644
        %v1646 = vpop.xlane.xlu0 %1645
        %v1647 = vsel %vm719, %v516, -inf
        %1648 = vmax.xlane.f32.xlu0 %v1647
        %v1649 = vpop.xlane.xlu0 %1648
        %v1650 = vsel %vm719, %v517, -inf
        %1651 = vmax.xlane.f32.xlu0 %v1650
        %v1652 = vpop.xlane.xlu0 %1651
        %v1653 = vsel %vm719, %v518, -inf
        %1654 = vmax.xlane.f32.xlu0 %v1653
        %v1655 = vpop.xlane.xlu0 %1654
        %v1656 = vsel %vm719, %v519, -inf
        %1657 = vmax.xlane.f32.xlu0 %v1656
        %v1658 = vpop.xlane.xlu0 %1657
        %v1659 = vsel %vm719, %v520, -inf
        %1660 = vmax.xlane.f32.xlu0 %v1659
        %v1661 = vpop.xlane.xlu0 %1660
        %v1662 = vsel %vm719, %v521, -inf
        %1663 = vmax.xlane.f32.xlu0 %v1662
        %v1664 = vpop.xlane.xlu0 %1663
        %v1665 = vsel %vm719, %v522, -inf
        %1666 = vmax.xlane.f32.xlu0 %v1665
        %v1667 = vpop.xlane.xlu0 %1666
        %v1668 = vsel %vm719, %v523, -inf
        %1669 = vmax.xlane.f32.xlu0 %v1668
        %v1670 = vpop.xlane.xlu0 %1669
        %v1671 = vsel %vm719, %v524, -inf
        %1672 = vmax.xlane.f32.xlu0 %v1671
        %v1673 = vpop.xlane.xlu0 %1672
        %v1674 = vsel %vm719, %v525, -inf
        %1675 = vmax.xlane.f32.xlu0 %v1674
        %v1676 = vpop.xlane.xlu0 %1675
        %v1677 = vsel %vm719, %v526, -inf
        %1678 = vmax.xlane.f32.xlu0 %v1677
        %v1679 = vpop.xlane.xlu0 %1678
        %v1680 = vsel %vm719, %v527, -inf
        %1681 = vmax.xlane.f32.xlu0 %v1680
        %v1682 = vpop.xlane.xlu0 %1681
        %v1683 = vsel %vm719, %v528, -inf
        %1684 = vmax.xlane.f32.xlu0 %v1683
        %v1685 = vpop.xlane.xlu0 %1684
        %v1686 = vsel %vm719, %v529, -inf
        %1687 = vmax.xlane.f32.xlu0 %v1686
        %v1688 = vpop.xlane.xlu0 %1687
        %v1689 = vsel %vm719, %v530, -inf
        %1690 = vmax.xlane.f32.xlu0 %v1689
        %v1691 = vpop.xlane.xlu0 %1690
        %v1692 = vsel %vm719, %v531, -inf
        %1693 = vmax.xlane.f32.xlu0 %v1692
        %v1694 = vpop.xlane.xlu0 %1693
        %v1695 = vsel %vm719, %v532, -inf
        %1696 = vmax.xlane.f32.xlu0 %v1695
        %v1697 = vpop.xlane.xlu0 %1696
        %v1698 = vsel %vm719, %v533, -inf
        %1699 = vmax.xlane.f32.xlu0 %v1698
        %v1700 = vpop.xlane.xlu0 %1699
        %v1701 = vsel %vm719, %v534, -inf
        %1702 = vmax.xlane.f32.xlu0 %v1701
        %v1703 = vpop.xlane.xlu0 %1702
        %v1704 = vsel %vm719, %v535, -inf
        %1705 = vmax.xlane.f32.xlu0 %v1704
        %v1706 = vpop.xlane.xlu0 %1705
        %v1707 = vsel %vm719, %v536, -inf
        %1708 = vmax.xlane.f32.xlu0 %v1707
        %v1709 = vpop.xlane.xlu0 %1708
        %v1710 = vsel %vm719, %v537, -inf
        %1711 = vmax.xlane.f32.xlu0 %v1710
        %v1712 = vpop.xlane.xlu0 %1711
        %v1713 = vsel %vm719, %v538, -inf
        %1714 = vmax.xlane.f32.xlu0 %v1713
        %v1715 = vpop.xlane.xlu0 %1714
        %v1716 = vsel %vm719, %v539, -inf
        %1717 = vmax.xlane.f32.xlu0 %v1716
        %v1718 = vpop.xlane.xlu0 %1717
        %v1719 = vsel %vm719, %v540, -inf
        %1720 = vmax.xlane.f32.xlu0 %v1719
        %v1721 = vpop.xlane.xlu0 %1720
        %v1722 = vsel %vm719, %v541, -inf
        %1723 = vmax.xlane.f32.xlu0 %v1722
        %v1724 = vpop.xlane.xlu0 %1723
        %v1725 = vsel %vm719, %v542, -inf
        %1726 = vmax.xlane.f32.xlu0 %v1725
        %v1727 = vpop.xlane.xlu0 %1726
        %v1728 = vsel %vm719, %v543, -inf
        %1729 = vmax.xlane.f32.xlu0 %v1728
        %v1730 = vpop.xlane.xlu0 %1729
        %v1731 = vsel %vm719, %v544, -inf
        %1732 = vmax.xlane.f32.xlu0 %v1731
        %v1733 = vpop.xlane.xlu0 %1732
        %v1734 = vsel %vm719, %v545, -inf
        %1735 = vmax.xlane.f32.xlu0 %v1734
        %v1736 = vpop.xlane.xlu0 %1735
        %v1737 = vsel %vm719, %v546, -inf
        %1738 = vmax.xlane.f32.xlu0 %v1737
        %v1739 = vpop.xlane.xlu0 %1738
        %v1740 = vsel %vm719, %v547, -inf
        %1741 = vmax.xlane.f32.xlu0 %v1740
        %v1742 = vpop.xlane.xlu0 %1741
        %v1743 = vsel %vm719, %v548, -inf
        %1744 = vmax.xlane.f32.xlu0 %v1743
        %v1745 = vpop.xlane.xlu0 %1744
        %v1746 = vsel %vm719, %v549, -inf
        %1747 = vmax.xlane.f32.xlu0 %v1746
        %v1748 = vpop.xlane.xlu0 %1747
        %v1749 = vsel %vm719, %v550, -inf
        %1750 = vmax.xlane.f32.xlu0 %v1749
        %v1751 = vpop.xlane.xlu0 %1750
        %v1752 = vsel %vm719, %v551, -inf
        %1753 = vmax.xlane.f32.xlu0 %v1752
        %v1754 = vpop.xlane.xlu0 %1753
        %v1755 = vsel %vm719, %v552, -inf
        %1756 = vmax.xlane.f32.xlu0 %v1755
        %v1757 = vpop.xlane.xlu0 %1756
        %v1758 = vsel %vm719, %v553, -inf
        %1759 = vmax.xlane.f32.xlu0 %v1758
        %v1760 = vpop.xlane.xlu0 %1759
        %v1761 = vsel %vm719, %v554, -inf
        %1762 = vmax.xlane.f32.xlu0 %v1761
        %v1763 = vpop.xlane.xlu0 %1762
        %v1764 = vsel %vm719, %v555, -inf
        %1765 = vmax.xlane.f32.xlu0 %v1764
        %v1766 = vpop.xlane.xlu0 %1765
        %v1767 = vsel %vm719, %v556, -inf
        %1768 = vmax.xlane.f32.xlu0 %v1767
        %v1769 = vpop.xlane.xlu0 %1768
        %v1770 = vsel %vm719, %v557, -inf
        %1771 = vmax.xlane.f32.xlu0 %v1770
        %v1772 = vpop.xlane.xlu0 %1771
        %v1773 = vsel %vm719, %v558, -inf
        %1774 = vmax.xlane.f32.xlu0 %v1773
        %v1775 = vpop.xlane.xlu0 %1774
        %v1776 = vsel %vm719, %v559, -inf
        %1777 = vmax.xlane.f32.xlu0 %v1776
        %v1778 = vpop.xlane.xlu0 %1777
        %v1779 = vsel %vm719, %v560, -inf
        %1780 = vmax.xlane.f32.xlu0 %v1779
        %v1781 = vpop.xlane.xlu0 %1780
        %v1782 = vsel %vm719, %v561, -inf
        %1783 = vmax.xlane.f32.xlu0 %v1782
        %v1784 = vpop.xlane.xlu0 %1783
        %v1785 = vsel %vm719, %v562, -inf
        %1786 = vmax.xlane.f32.xlu0 %v1785
        %v1787 = vpop.xlane.xlu0 %1786
        %v1788 = vsel %vm719, %v563, -inf
        %1789 = vmax.xlane.f32.xlu0 %v1788
        %v1790 = vpop.xlane.xlu0 %1789
        %v1791 = vsel %vm719, %v564, -inf
        %1792 = vmax.xlane.f32.xlu0 %v1791
        %v1793 = vpop.xlane.xlu0 %1792
        %v1794 = vsel %vm719, %v565, -inf
        %1795 = vmax.xlane.f32.xlu0 %v1794
        %v1796 = vpop.xlane.xlu0 %1795
        %v1797 = vsel %vm719, %v566, -inf
        %1798 = vmax.xlane.f32.xlu0 %v1797
        %v1799 = vpop.xlane.xlu0 %1798
        %v1800 = vsel %vm719, %v567, -inf
        %1801 = vmax.xlane.f32.xlu0 %v1800
        %v1802 = vpop.xlane.xlu0 %1801
        %v1803 = vsel %vm719, %v568, -inf
        %1804 = vmax.xlane.f32.xlu0 %v1803
        %v1805 = vpop.xlane.xlu0 %1804
        %v1806 = vsel %vm719, %v569, -inf
        %1807 = vmax.xlane.f32.xlu0 %v1806
        %v1808 = vpop.xlane.xlu0 %1807
        %v1809 = vsel %vm719, %v570, -inf
        %1810 = vmax.xlane.f32.xlu0 %v1809
        %v1811 = vpop.xlane.xlu0 %1810
        %v1812 = vsel %vm719, %v571, -inf
        %1813 = vmax.xlane.f32.xlu0 %v1812
        %v1814 = vpop.xlane.xlu0 %1813
        %v1815 = vsel %vm719, %v572, -inf
        %1816 = vmax.xlane.f32.xlu0 %v1815
        %v1817 = vpop.xlane.xlu0 %1816
        %v1818 = vsel %vm719, %v573, -inf
        %1819 = vmax.xlane.f32.xlu0 %v1818
        %v1820 = vpop.xlane.xlu0 %1819
        %v1821 = vsel %vm719, %v574, -inf
        %1822 = vmax.xlane.f32.xlu0 %v1821
        %v1823 = vpop.xlane.xlu0 %1822
        %v1824 = vsel %vm719, %v575, -inf
        %1825 = vmax.xlane.f32.xlu0 %v1824
        %v1826 = vpop.xlane.xlu0 %1825
        %v1827 = vsel %vm719, %v576, -inf
        %1828 = vmax.xlane.f32.xlu0 %v1827
        %v1829 = vpop.xlane.xlu0 %1828
        %v1830 = vsel %vm719, %v577, -inf
        %1831 = vmax.xlane.f32.xlu0 %v1830
        %v1832 = vpop.xlane.xlu0 %1831
        %v1833 = vsel %vm719, %v578, -inf
        %1834 = vmax.xlane.f32.xlu0 %v1833
        %v1835 = vpop.xlane.xlu0 %1834
        %v1836 = vsel %vm719, %v579, -inf
        %1837 = vmax.xlane.f32.xlu0 %v1836
        %v1838 = vpop.xlane.xlu0 %1837
        %v1839 = vsel %vm719, %v580, -inf
        %1840 = vmax.xlane.f32.xlu0 %v1839
        %v1841 = vpop.xlane.xlu0 %1840
        %v1842 = vsel %vm719, %v581, -inf
        %1843 = vmax.xlane.f32.xlu0 %v1842
        %v1844 = vpop.xlane.xlu0 %1843
        %v1845 = vsel %vm719, %v582, -inf
        %1846 = vmax.xlane.f32.xlu0 %v1845
        %v1847 = vpop.xlane.xlu0 %1846
        %v1848 = vsel %vm719, %v583, -inf
        %1849 = vmax.xlane.f32.xlu0 %v1848
        %v1850 = vpop.xlane.xlu0 %1849
        %v1851 = vsel %vm719, %v584, -inf
        %1852 = vmax.xlane.f32.xlu0 %v1851
        %v1853 = vpop.xlane.xlu0 %1852
        %v1854 = vsel %vm719, %v585, -inf
        %1855 = vmax.xlane.f32.xlu0 %v1854
        %v1856 = vpop.xlane.xlu0 %1855
        %v1857 = vsel %vm719, %v586, -inf
        %1858 = vmax.xlane.f32.xlu0 %v1857
        %v1859 = vpop.xlane.xlu0 %1858
        %v1860 = vsel %vm719, %v587, -inf
        %1861 = vmax.xlane.f32.xlu0 %v1860
        %v1862 = vpop.xlane.xlu0 %1861
        %v1863 = vsel %vm719, %v588, -inf
        %1864 = vmax.xlane.f32.xlu0 %v1863
        %v1865 = vpop.xlane.xlu0 %1864
        %v1866 = vsel %vm719, %v589, -inf
        %1867 = vmax.xlane.f32.xlu0 %v1866
        %v1868 = vpop.xlane.xlu0 %1867
        %v1869 = vsel %vm719, %v590, -inf
        %1870 = vmax.xlane.f32.xlu0 %v1869
        %v1871 = vpop.xlane.xlu0 %1870
        %v1872 = vsel %vm719, %v591, -inf
        %1873 = vmax.xlane.f32.xlu0 %v1872
        %v1874 = vpop.xlane.xlu0 %1873
        %v1875 = vsel %vm719, %v592, -inf
        %1876 = vmax.xlane.f32.xlu0 %v1875
        %v1877 = vpop.xlane.xlu0 %1876
        %v1878 = vsel %vm719, %v593, -inf
        %1879 = vmax.xlane.f32.xlu0 %v1878
        %v1880 = vpop.xlane.xlu0 %1879
        %v1881 = vsel %vm719, %v594, -inf
        %1882 = vmax.xlane.f32.xlu0 %v1881
        %v1883 = vpop.xlane.xlu0 %1882
        %v1884 = vsel %vm719, %v595, -inf
        %1885 = vmax.xlane.f32.xlu0 %v1884
        %v1886 = vpop.xlane.xlu0 %1885
        %v1887 = vsel %vm719, %v596, -inf
        %1888 = vmax.xlane.f32.xlu0 %v1887
        %v1889 = vpop.xlane.xlu0 %1888
        %v1890 = vsel %vm719, %v597, -inf
        %1891 = vmax.xlane.f32.xlu0 %v1890
        %v1892 = vpop.xlane.xlu0 %1891
        %v1893 = vsel %vm719, %v598, -inf
        %1894 = vmax.xlane.f32.xlu0 %v1893
        %v1895 = vpop.xlane.xlu0 %1894
        %v1896 = vsel %vm719, %v599, -inf
        %1897 = vmax.xlane.f32.xlu0 %v1896
        %v1898 = vpop.xlane.xlu0 %1897
        %v1899 = vsel %vm719, %v600, -inf
        %1900 = vmax.xlane.f32.xlu0 %v1899
        %v1901 = vpop.xlane.xlu0 %1900
        %v1902 = vsel %vm719, %v601, -inf
        %1903 = vmax.xlane.f32.xlu0 %v1902
        %v1904 = vpop.xlane.xlu0 %1903
        %v1905 = vsel %vm719, %v602, -inf
        %1906 = vmax.xlane.f32.xlu0 %v1905
        %v1907 = vpop.xlane.xlu0 %1906
        %v1908 = vsel %vm719, %v603, -inf
        %1909 = vmax.xlane.f32.xlu0 %v1908
        %v1910 = vpop.xlane.xlu0 %1909
        %v1911 = vsel %vm719, %v604, -inf
        %1912 = vmax.xlane.f32.xlu0 %v1911
        %v1913 = vpop.xlane.xlu0 %1912
        %v1914 = vsel %vm719, %v605, -inf
        %1915 = vmax.xlane.f32.xlu0 %v1914
        %v1916 = vpop.xlane.xlu0 %1915
        %v1917 = vsel %vm719, %v606, -inf
        %1918 = vmax.xlane.f32.xlu0 %v1917
        %v1919 = vpop.xlane.xlu0 %1918
        %v1920 = vsel %vm719, %v607, -inf
        %1921 = vmax.xlane.f32.xlu0 %v1920
        %v1922 = vpop.xlane.xlu0 %1921
        %v1923 = vsel %vm719, %v608, -inf
        %1924 = vmax.xlane.f32.xlu0 %v1923
        %v1925 = vpop.xlane.xlu0 %1924
        %v1926 = vsel %vm719, %v609, -inf
        %1927 = vmax.xlane.f32.xlu0 %v1926
        %v1928 = vpop.xlane.xlu0 %1927
        %v1929 = vsel %vm719, %v610, -inf
        %1930 = vmax.xlane.f32.xlu0 %v1929
        %v1931 = vpop.xlane.xlu0 %1930
        %v1932 = vsel %vm719, %v611, -inf
        %1933 = vmax.xlane.f32.xlu0 %v1932
        %v1934 = vpop.xlane.xlu0 %1933
        %v1935 = vsel %vm719, %v612, -inf
        %1936 = vmax.xlane.f32.xlu0 %v1935
        %v1937 = vpop.xlane.xlu0 %1936
        %v1938 = vsel %vm719, %v613, -inf
        %1939 = vmax.xlane.f32.xlu0 %v1938
        %v1940 = vpop.xlane.xlu0 %1939
        %v1941 = vsel %vm719, %v614, -inf
        %1942 = vmax.xlane.f32.xlu0 %v1941
        %v1943 = vpop.xlane.xlu0 %1942
        %v1944 = vsel %vm719, %v615, -inf
        %1945 = vmax.xlane.f32.xlu0 %v1944
        %v1946 = vpop.xlane.xlu0 %1945
        %v1947 = vsel %vm719, %v616, -inf
        %1948 = vmax.xlane.f32.xlu0 %v1947
        %v1949 = vpop.xlane.xlu0 %1948
        %v1950 = vsel %vm719, %v617, -inf
        %1951 = vmax.xlane.f32.xlu0 %v1950
        %v1952 = vpop.xlane.xlu0 %1951
        %v1953 = vsel %vm719, %v618, -inf
        %1954 = vmax.xlane.f32.xlu0 %v1953
        %v1955 = vpop.xlane.xlu0 %1954
        %v1956 = vsel %vm719, %v619, -inf
        %1957 = vmax.xlane.f32.xlu0 %v1956
        %v1958 = vpop.xlane.xlu0 %1957
        %v1959 = vsel %vm719, %v620, -inf
        %1960 = vmax.xlane.f32.xlu0 %v1959
        %v1961 = vpop.xlane.xlu0 %1960
        %v1962 = vsel %vm719, %v621, -inf
        %1963 = vmax.xlane.f32.xlu0 %v1962
        %v1964 = vpop.xlane.xlu0 %1963
        %v1965 = vsel %vm719, %v622, -inf
        %1966 = vmax.xlane.f32.xlu0 %v1965
        %v1967 = vpop.xlane.xlu0 %1966
        %v1968 = vsel %vm719, %v623, -inf
        %1969 = vmax.xlane.f32.xlu0 %v1968
        %v1970 = vpop.xlane.xlu0 %1969
        %v1971 = vsel %vm719, %v624, -inf
        %1972 = vmax.xlane.f32.xlu0 %v1971
        %v1973 = vpop.xlane.xlu0 %1972
        %v1974 = vsel %vm719, %v625, -inf
        %1975 = vmax.xlane.f32.xlu0 %v1974
        %v1976 = vpop.xlane.xlu0 %1975
        %v1977 = vsel %vm719, %v626, -inf
        %1978 = vmax.xlane.f32.xlu0 %v1977
        %v1979 = vpop.xlane.xlu0 %1978
        %v1980 = vsel %vm719, %v627, -inf
        %1981 = vmax.xlane.f32.xlu0 %v1980
        %v1982 = vpop.xlane.xlu0 %1981
        %v1983 = vsel %vm719, %v628, -inf
        %1984 = vmax.xlane.f32.xlu0 %v1983
        %v1985 = vpop.xlane.xlu0 %1984
        %v1986 = vsel %vm719, %v629, -inf
        %1987 = vmax.xlane.f32.xlu0 %v1986
        %v1988 = vpop.xlane.xlu0 %1987
        %v1989 = vsel %vm719, %v630, -inf
        %1990 = vmax.xlane.f32.xlu0 %v1989
        %v1991 = vpop.xlane.xlu0 %1990
        %v1992 = vsel %vm719, %v631, -inf
        %1993 = vmax.xlane.f32.xlu0 %v1992
        %v1994 = vpop.xlane.xlu0 %1993
        %v1995 = vsel %vm719, %v632, -inf
        %1996 = vmax.xlane.f32.xlu0 %v1995
        %v1997 = vpop.xlane.xlu0 %1996
        %v1998 = vsel %vm719, %v633, -inf
        %1999 = vmax.xlane.f32.xlu0 %v1998
        %v2000 = vpop.xlane.xlu0 %1999
        %v2001 = vsel %vm719, %v634, -inf
        %2002 = vmax.xlane.f32.xlu0 %v2001
        %v2003 = vpop.xlane.xlu0 %2002
        %v2004 = vsel %vm719, %v635, -inf
        %2005 = vmax.xlane.f32.xlu0 %v2004
        %v2006 = vpop.xlane.xlu0 %2005
        %v2007 = vsel %vm719, %v636, -inf
        %2008 = vmax.xlane.f32.xlu0 %v2007
        %v2009 = vpop.xlane.xlu0 %2008
        %v2010 = vsel %vm719, %v637, -inf
        %2011 = vmax.xlane.f32.xlu0 %v2010
        %v2012 = vpop.xlane.xlu0 %2011
        %v2013 = vsel %vm719, %v638, -inf
        %2014 = vmax.xlane.f32.xlu0 %v2013
        %v2015 = vpop.xlane.xlu0 %2014
        %v2016 = vsel %vm719, %v639, -inf
        %2017 = vmax.xlane.f32.xlu0 %v2016
        %v2018 = vpop.xlane.xlu0 %2017
        %v2019 = vsel %vm719, %v640, -inf
        %2020 = vmax.xlane.f32.xlu0 %v2019
        %v2021 = vpop.xlane.xlu0 %2020
        %v2022 = vsel %vm719, %v641, -inf
        %2023 = vmax.xlane.f32.xlu0 %v2022
        %v2024 = vpop.xlane.xlu0 %2023
        %v2025 = vsel %vm719, %v642, -inf
        %2026 = vmax.xlane.f32.xlu0 %v2025
        %v2027 = vpop.xlane.xlu0 %2026
        %v2028 = vsel %vm719, %v643, -inf
        %2029 = vmax.xlane.f32.xlu0 %v2028
        %v2030 = vpop.xlane.xlu0 %2029
        %v2031 = vsel %vm719, %v644, -inf
        %2032 = vmax.xlane.f32.xlu0 %v2031
        %v2033 = vpop.xlane.xlu0 %2032
        %v2034 = vsel %vm719, %v645, -inf
        %2035 = vmax.xlane.f32.xlu0 %v2034
        %v2036 = vpop.xlane.xlu0 %2035
        %v2037 = vsel %vm719, %v646, -inf
        %2038 = vmax.xlane.f32.xlu0 %v2037
        %v2039 = vpop.xlane.xlu0 %2038
        %v2040 = vsel %vm719, %v647, -inf
        %2041 = vmax.xlane.f32.xlu0 %v2040
        %v2042 = vpop.xlane.xlu0 %2041
        %v2043 = vsel %vm719, %v648, -inf
        %2044 = vmax.xlane.f32.xlu0 %v2043
        %v2045 = vpop.xlane.xlu0 %2044
        %v2046 = vsel %vm719, %v649, -inf
        %2047 = vmax.xlane.f32.xlu0 %v2046
        %v2048 = vpop.xlane.xlu0 %2047
        %v2049 = vsel %vm719, %v650, -inf
        %2050 = vmax.xlane.f32.xlu0 %v2049
        %v2051 = vpop.xlane.xlu0 %2050
        %v2052 = vsel %vm719, %v651, -inf
        %2053 = vmax.xlane.f32.xlu0 %v2052
        %v2054 = vpop.xlane.xlu0 %2053
        %v2055 = vsel %vm719, %v652, -inf
        %2056 = vmax.xlane.f32.xlu0 %v2055
        %v2057 = vpop.xlane.xlu0 %2056
        %v2058 = vsel %vm719, %v653, -inf
        %2059 = vmax.xlane.f32.xlu0 %v2058
        %v2060 = vpop.xlane.xlu0 %2059
        %v2061 = vsel %vm719, %v654, -inf
        %2062 = vmax.xlane.f32.xlu0 %v2061
        %v2063 = vpop.xlane.xlu0 %2062
        %v2064 = vsel %vm719, %v655, -inf
        %2065 = vmax.xlane.f32.xlu0 %v2064
        %v2066 = vpop.xlane.xlu0 %2065
        %v2067 = vsel %vm719, %v656, -inf
        %2068 = vmax.xlane.f32.xlu0 %v2067
        %v2069 = vpop.xlane.xlu0 %2068
        %v2070 = vsel %vm719, %v657, -inf
        %2071 = vmax.xlane.f32.xlu0 %v2070
        %v2072 = vpop.xlane.xlu0 %2071
        %v2073 = vsel %vm719, %v658, -inf
        %2074 = vmax.xlane.f32.xlu0 %v2073
        %v2075 = vpop.xlane.xlu0 %2074
        %v2076 = vsel %vm719, %v659, -inf
        %2077 = vmax.xlane.f32.xlu0 %v2076
        %v2078 = vpop.xlane.xlu0 %2077
        %v2079 = vsel %vm719, %v660, -inf
        %2080 = vmax.xlane.f32.xlu0 %v2079
        %v2081 = vpop.xlane.xlu0 %2080
        %v2082 = vsel %vm719, %v661, -inf
        %2083 = vmax.xlane.f32.xlu0 %v2082
        %v2084 = vpop.xlane.xlu0 %2083
        %v2085 = vsel %vm719, %v662, -inf
        %2086 = vmax.xlane.f32.xlu0 %v2085
        %v2087 = vpop.xlane.xlu0 %2086
        %v2088 = vsel %vm719, %v663, -inf
        %2089 = vmax.xlane.f32.xlu0 %v2088
        %v2090 = vpop.xlane.xlu0 %2089
        %v2091 = vsel %vm719, %v664, -inf
        %2092 = vmax.xlane.f32.xlu0 %v2091
        %v2093 = vpop.xlane.xlu0 %2092
        %v2094 = vsel %vm719, %v665, -inf
        %2095 = vmax.xlane.f32.xlu0 %v2094
        %v2096 = vpop.xlane.xlu0 %2095
        %v2097 = vsel %vm719, %v666, -inf
        %2098 = vmax.xlane.f32.xlu0 %v2097
        %v2099 = vpop.xlane.xlu0 %2098
        %v2100 = vsel %vm719, %v667, -inf
        %2101 = vmax.xlane.f32.xlu0 %v2100
        %v2102 = vpop.xlane.xlu0 %2101
        %v2103 = vsel %vm719, %v668, -inf
        %2104 = vmax.xlane.f32.xlu0 %v2103
        %v2105 = vpop.xlane.xlu0 %2104
        %v2106 = vsel %vm719, %v669, -inf
        %2107 = vmax.xlane.f32.xlu0 %v2106
        %v2108 = vpop.xlane.xlu0 %2107
        %v2109 = vsel %vm719, %v670, -inf
        %2110 = vmax.xlane.f32.xlu0 %v2109
        %v2111 = vpop.xlane.xlu0 %2110
        %v2112 = vsel %vm719, %v671, -inf
        %2113 = vmax.xlane.f32.xlu0 %v2112
        %v2114 = vpop.xlane.xlu0 %2113
        %v2115 = vsel %vm719, %v672, -inf
        %2116 = vmax.xlane.f32.xlu0 %v2115
        %v2117 = vpop.xlane.xlu0 %2116
        %v2118 = vsel %vm719, %v673, -inf
        %2119 = vmax.xlane.f32.xlu0 %v2118
        %v2120 = vpop.xlane.xlu0 %2119
        %v2121 = vsel %vm719, %v674, -inf
        %2122 = vmax.xlane.f32.xlu0 %v2121
        %v2123 = vpop.xlane.xlu0 %2122
        %v2124 = vsel %vm719, %v675, -inf
        %2125 = vmax.xlane.f32.xlu0 %v2124
        %v2126 = vpop.xlane.xlu0 %2125
        %v2127 = vsel %vm719, %v676, -inf
        %2128 = vmax.xlane.f32.xlu0 %v2127
        %v2129 = vpop.xlane.xlu0 %2128
        %v2130 = vsel %vm719, %v677, -inf
        %2131 = vmax.xlane.f32.xlu0 %v2130
        %v2132 = vpop.xlane.xlu0 %2131
        %v2133 = vsel %vm719, %v678, -inf
        %2134 = vmax.xlane.f32.xlu0 %v2133
        %v2135 = vpop.xlane.xlu0 %2134
        %v2136 = vsel %vm719, %v679, -inf
        %2137 = vmax.xlane.f32.xlu0 %v2136
        %v2138 = vpop.xlane.xlu0 %2137
        %v2139 = vsel %vm719, %v680, -inf
        %2140 = vmax.xlane.f32.xlu0 %v2139
        %v2141 = vpop.xlane.xlu0 %2140
        %v2142 = vsel %vm719, %v681, -inf
        %2143 = vmax.xlane.f32.xlu0 %v2142
        %v2144 = vpop.xlane.xlu0 %2143
        %v2145 = vsel %vm719, %v682, -inf
        %2146 = vmax.xlane.f32.xlu0 %v2145
        %v2147 = vpop.xlane.xlu0 %2146
        %v2148 = vsel %vm719, %v683, -inf
        %2149 = vmax.xlane.f32.xlu0 %v2148
        %v2150 = vpop.xlane.xlu0 %2149
        %v2151 = vsel %vm719, %v684, -inf
        %2152 = vmax.xlane.f32.xlu0 %v2151
        %v2153 = vpop.xlane.xlu0 %2152
        %v2154 = vsel %vm719, %v685, -inf
        %2155 = vmax.xlane.f32.xlu0 %v2154
        %v2156 = vpop.xlane.xlu0 %2155
        %v2157 = vsel %vm719, %v686, -inf
        %2158 = vmax.xlane.f32.xlu0 %v2157
        %v2159 = vpop.xlane.xlu0 %2158
        %v2160 = vsel %vm719, %v687, -inf
        %2161 = vmax.xlane.f32.xlu0 %v2160
        %v2162 = vpop.xlane.xlu0 %2161
        %v2163 = vsel %vm719, %v688, -inf
        %2164 = vmax.xlane.f32.xlu0 %v2163
        %v2165 = vpop.xlane.xlu0 %2164
        %v2166 = vsel %vm719, %v689, -inf
        %2167 = vmax.xlane.f32.xlu0 %v2166
        %v2168 = vpop.xlane.xlu0 %2167
        %v2169 = vsel %vm719, %v690, -inf
        %2170 = vmax.xlane.f32.xlu0 %v2169
        %v2171 = vpop.xlane.xlu0 %2170
        %v2172 = vsel %vm719, %v691, -inf
        %2173 = vmax.xlane.f32.xlu0 %v2172
        %v2174 = vpop.xlane.xlu0 %2173
        %v2175 = vsel %vm719, %v692, -inf
        %2176 = vmax.xlane.f32.xlu0 %v2175
        %v2177 = vpop.xlane.xlu0 %2176
        %v2178 = vsel %vm719, %v693, -inf
        %2179 = vmax.xlane.f32.xlu0 %v2178
        %v2180 = vpop.xlane.xlu0 %2179
        %v2181 = vsel %vm719, %v694, -inf
        %2182 = vmax.xlane.f32.xlu0 %v2181
        %v2183 = vpop.xlane.xlu0 %2182
        %v2184 = vsel %vm719, %v695, -inf
        %2185 = vmax.xlane.f32.xlu0 %v2184
        %v2186 = vpop.xlane.xlu0 %2185
        %v2187 = vsel %vm719, %v696, -inf
        %2188 = vmax.xlane.f32.xlu0 %v2187
        %v2189 = vpop.xlane.xlu0 %2188
        %v2190 = vsel %vm719, %v697, -inf
        %2191 = vmax.xlane.f32.xlu0 %v2190
        %v2192 = vpop.xlane.xlu0 %2191
        %v2193 = vsel %vm719, %v698, -inf
        %2194 = vmax.xlane.f32.xlu0 %v2193
        %v2195 = vpop.xlane.xlu0 %2194
        %v2196 = vsel %vm719, %v699, -inf
        %2197 = vmax.xlane.f32.xlu0 %v2196
        %v2198 = vpop.xlane.xlu0 %2197
        %v2199 = vsel %vm719, %v700, -inf
        %2200 = vmax.xlane.f32.xlu0 %v2199
        %v2201 = vpop.xlane.xlu0 %2200
        %v2202 = vsel %vm719, %v701, -inf
        %2203 = vmax.xlane.f32.xlu0 %v2202
        %v2204 = vpop.xlane.xlu0 %2203
        %v2205 = vsel %vm719, %v702, -inf
        %2206 = vmax.xlane.f32.xlu0 %v2205
        %v2207 = vpop.xlane.xlu0 %2206
        %v2208 = vsel %vm719, %v703, -inf
        %2209 = vmax.xlane.f32.xlu0 %v2208
        %v2210 = vpop.xlane.xlu0 %2209
        %v2211 = vsel %vm719, %v704, -inf
        %2212 = vmax.xlane.f32.xlu0 %v2211
        %v2213 = vpop.xlane.xlu0 %2212
        %v2214 = vsel %vm719, %v705, -inf
        %2215 = vmax.xlane.f32.xlu0 %v2214
        %v2216 = vpop.xlane.xlu0 %2215
        %v2217 = vsel %vm719, %v706, -inf
        %2218 = vmax.xlane.f32.xlu0 %v2217
        %v2219 = vpop.xlane.xlu0 %2218
        %v2220 = vsel %vm719, %v707, -inf
        %2221 = vmax.xlane.f32.xlu0 %v2220
        %v2222 = vpop.xlane.xlu0 %2221
        %v2223 = vsel %vm719, %v708, -inf
        %2224 = vmax.xlane.f32.xlu0 %v2223
        %v2225 = vpop.xlane.xlu0 %2224
        %v2226 = vsel %vm719, %v709, -inf
        %2227 = vmax.xlane.f32.xlu0 %v2226
        %v2228 = vpop.xlane.xlu0 %2227
        %v2229 = vsel %vm719, %v710, -inf
        %2230 = vmax.xlane.f32.xlu0 %v2229
        %v2231 = vpop.xlane.xlu0 %2230
        %v2232 = vsel %vm719, %v711, -inf
        %2233 = vmax.xlane.f32.xlu0 %v2232
        %v2234 = vpop.xlane.xlu0 %2233
        %v2235 = vsel %vm719, %v712, -inf
        %2236 = vmax.xlane.f32.xlu0 %v2235
        %v2237 = vpop.xlane.xlu0 %2236
        %v2238 = vsel %vm719, %v713, -inf
        %2239 = vmax.xlane.f32.xlu0 %v2238
        %v2240 = vpop.xlane.xlu0 %2239
        %v2241 = vsel %vm719, %v714, -inf
        %2242 = vmax.xlane.f32.xlu0 %v2241
        %v2243 = vpop.xlane.xlu0 %2242
        %v2244 = vsel %vm719, %v715, -inf
        %2245 = vmax.xlane.f32.xlu0 %v2244
        %v2246 = vpop.xlane.xlu0 %2245
        %v2247 = vsel %vm719, %v716, -inf
        %2248 = vmax.xlane.f32.xlu0 %v2247
        %v2249 = vpop.xlane.xlu0 %2248
        %v2250 = vsel %vm719, %v717, -inf
        %2251 = vmax.xlane.f32.xlu0 %v2250
        %v2252 = vpop.xlane.xlu0 %2251
        %v2253 = vsel %vm719, %v718, -inf
        %2254 = vmax.xlane.f32.xlu0 %v2253
        %v2255 = vpop.xlane.xlu0 %2254
        %v2256 = vld [vmem:[#allocation2] sm:$0xff]
        %v2257 = vld [vmem:[%s1] sm:$0xff]
        %v2258 = vld [vmem:[%s1 + $0x8] sm:$0xff]
        %v2259 = vld [vmem:[%s1 + $0x10] sm:$0xff]
        %v2260 = vld [vmem:[%s1 + $0x18] sm:$0xff]
        %v2261 = vld [vmem:[%s1 + $0x20] sm:$0xff]
        %v2262 = vld [vmem:[%s1 + $0x28] sm:$0xff]
        %v2263 = vld [vmem:[%s1 + $0x30] sm:$0xff]
        %v2264 = vld [vmem:[%s1 + $0x38] sm:$0xff]
        %v2265 = vld [vmem:[%s1 + $0x40] sm:$0xff]
        %v2266 = vld [vmem:[%s1 + $0x48] sm:$0xff]
        %v2267 = vld [vmem:[%s1 + $0x50] sm:$0xff]
        %v2268 = vld [vmem:[%s1 + $0x58] sm:$0xff]
        %v2269 = vld [vmem:[%s1 + $0x60] sm:$0xff]
        %v2270 = vld [vmem:[%s1 + $0x68] sm:$0xff]
        %v2271 = vld [vmem:[%s1 + $0x70] sm:$0xff]
        %v2272 = vld [vmem:[%s1 + $0x78] sm:$0xff]
        %v2273 = vld [vmem:[%s1 + $0x80] sm:$0xff]
        %v2274 = vld [vmem:[%s1 + $0x88] sm:$0xff]
        %v2275 = vld [vmem:[%s1 + $0x90] sm:$0xff]
        %v2276 = vld [vmem:[%s1 + $0x98] sm:$0xff]
        %v2277 = vld [vmem:[%s1 + $0xa0] sm:$0xff]
        %v2278 = vld [vmem:[%s1 + $0xa8] sm:$0xff]
        %v2279 = vld [vmem:[%s1 + $0xb0] sm:$0xff]
        %v2280 = vld [vmem:[%s1 + $0xb8] sm:$0xff]
        %v2281 = vld [vmem:[%s1 + $0xc0] sm:$0xff]
        %v2282 = vld [vmem:[%s1 + $0xc8] sm:$0xff]
        %v2283 = vld [vmem:[%s1 + $0xd0] sm:$0xff]
        %v2284 = vld [vmem:[%s1 + $0xd8] sm:$0xff]
        %v2285 = vld [vmem:[%s1 + $0xe0] sm:$0xff]
        %v2286 = vld [vmem:[%s1 + $0xe8] sm:$0xff]
        %v2287 = vld [vmem:[%s1 + $0xf0] sm:$0xff]
        %v2288 = vld [vmem:[%s1 + $0xf8] sm:$0xff]
        %v2289 = vld [vmem:[%s1 + $0x100] sm:$0xff]
        %v2290 = vld [vmem:[%s1 + $0x108] sm:$0xff]
        %v2291 = vld [vmem:[%s1 + $0x110] sm:$0xff]
        %v2292 = vld [vmem:[%s1 + $0x118] sm:$0xff]
        %v2293 = vld [vmem:[%s1 + $0x120] sm:$0xff]
        %v2294 = vld [vmem:[%s1 + $0x128] sm:$0xff]
        %v2295 = vld [vmem:[%s1 + $0x130] sm:$0xff]
        %v2296 = vld [vmem:[%s1 + $0x138] sm:$0xff]
        %v2297 = vld [vmem:[%s1 + $0x140] sm:$0xff]
        %v2298 = vld [vmem:[%s1 + $0x148] sm:$0xff]
        %v2299 = vld [vmem:[%s1 + $0x150] sm:$0xff]
        %v2300 = vld [vmem:[%s1 + $0x158] sm:$0xff]
        %v2301 = vld [vmem:[%s1 + $0x160] sm:$0xff]
        %v2302 = vld [vmem:[%s1 + $0x168] sm:$0xff]
        %v2303 = vld [vmem:[%s1 + $0x170] sm:$0xff]
        %v2304 = vld [vmem:[%s1 + $0x178] sm:$0xff]
        %v2305 = vld [vmem:[%s1 + $0x180] sm:$0xff]
        %v2306 = vld [vmem:[%s1 + $0x188] sm:$0xff]
        %v2307 = vld [vmem:[%s1 + $0x190] sm:$0xff]
        %v2308 = vld [vmem:[%s1 + $0x198] sm:$0xff]
        %v2309 = vld [vmem:[%s1 + $0x1a0] sm:$0xff]
        %v2310 = vld [vmem:[%s1 + $0x1a8] sm:$0xff]
        %v2311 = vld [vmem:[%s1 + $0x1b0] sm:$0xff]
        %v2312 = vld [vmem:[%s1 + $0x1b8] sm:$0xff]
        %v2313 = vld [vmem:[%s1 + $0x1c0] sm:$0xff]
        %v2314 = vld [vmem:[%s1 + $0x1c8] sm:$0xff]
        %v2315 = vld [vmem:[%s1 + $0x1d0] sm:$0xff]
        %v2316 = vld [vmem:[%s1 + $0x1d8] sm:$0xff]
        %v2317 = vld [vmem:[%s1 + $0x1e0] sm:$0xff]
        %v2318 = vld [vmem:[%s1 + $0x1e8] sm:$0xff]
        %v2319 = vld [vmem:[%s1 + $0x1f0] sm:$0xff]
        %v2320 = vld [vmem:[%s1 + $0x1f8] sm:$0xff]
        %v2833 = vlaneseq
        %v2834 = vand.u32 %v2833, 127
        %v2835 = vperm.slane %v722, %v2834
        %v2836 = vadd.s32 %v2834, 4294967288
        %v2837 = vperm.slane %v725, %v2836
        %vm2838 = vcmask 130112
        %v2839 = vsel %vm2838, %v2837, %v2835
        %v2840 = vadd.s32 %v2834, 4294967280
        %v2841 = vperm.slane %v728, %v2840
        %vm2842 = vcmask 195712
        %v2843 = vsel %vm2842, %v2841, %v2839
        %v2844 = vadd.s32 %v2834, 4294967272
        %v2845 = vperm.slane %v731, %v2844
        %vm2846 = vcmask 261312
        %v2847 = vsel %vm2846, %v2845, %v2843
        %v2848 = vadd.s32 %v2834, 4294967264
        %v2849 = vperm.slane %v734, %v2848
        %vm2850 = vcmask 326912
        %v2851 = vsel %vm2850, %v2849, %v2847
        %v2852 = vadd.s32 %v2834, 4294967256
        %v2853 = vperm.slane %v737, %v2852
        %vm2854 = vcmask 392512
        %v2855 = vsel %vm2854, %v2853, %v2851
        %v2856 = vadd.s32 %v2834, 4294967248
        %v2857 = vperm.slane %v740, %v2856
        %vm2858 = vcmask 458112
        %v2859 = vsel %vm2858, %v2857, %v2855
        %v2860 = vadd.s32 %v2834, 4294967240
        %v2861 = vperm.slane %v743, %v2860
        %vm2862 = vcmask 523712
        %v2863 = vsel %vm2862, %v2861, %v2859
        %v2864 = vadd.s32 %v2834, 4294967232
        %v2865 = vperm.slane %v746, %v2864
        %vm2866 = vcmask 589312
        %v2867 = vsel %vm2866, %v2865, %v2863
        %v2868 = vadd.s32 %v2834, 4294967224
        %v2869 = vperm.slane %v749, %v2868
        %vm2870 = vcmask 654912
        %v2871 = vsel %vm2870, %v2869, %v2867
        %v2872 = vadd.s32 %v2834, 4294967216
        %v2873 = vperm.slane %v752, %v2872
        %vm2874 = vcmask 720512
        %v2875 = vsel %vm2874, %v2873, %v2871
        %v2876 = vadd.s32 %v2834, 4294967208
        %v2877 = vperm.slane %v755, %v2876
        %vm2878 = vcmask 786112
        %v2879 = vsel %vm2878, %v2877, %v2875
        %v2880 = vadd.s32 %v2834, 4294967200
        %v2881 = vperm.slane %v758, %v2880
        %vm2882 = vcmask 851712
        %v2883 = vsel %vm2882, %v2881, %v2879
        %v2884 = vadd.s32 %v2834, 4294967192
        %v2885 = vperm.slane %v761, %v2884
        %vm2886 = vcmask 917312
        %v2887 = vsel %vm2886, %v2885, %v2883
        %v2888 = vadd.s32 %v2834, 4294967184
        %v2889 = vperm.slane %v764, %v2888
        %vm2890 = vcmask 982912
        %v2891 = vsel %vm2890, %v2889, %v2887
        %v2892 = vadd.s32 %v2834, 4294967176
        %v2893 = vperm.slane %v767, %v2892
        %vm2894 = vcmask 1048512
        %v2895 = vsel %vm2894, %v2893, %v2891
        %v2896 = vperm.slane %v770, %v2834
        %v2897 = vperm.slane %v773, %v2836
        %v2898 = vsel %vm2838, %v2897, %v2896
        %v2899 = vperm.slane %v776, %v2840
        %v2900 = vsel %vm2842, %v2899, %v2898
        %v2901 = vperm.slane %v779, %v2844
        %v2902 = vsel %vm2846, %v2901, %v2900
        %v2903 = vperm.slane %v782, %v2848
        %v2904 = vsel %vm2850, %v2903, %v2902
        %v2905 = vperm.slane %v785, %v2852
        %v2906 = vsel %vm2854, %v2905, %v2904
        %v2907 = vperm.slane %v788, %v2856
        %v2908 = vsel %vm2858, %v2907, %v2906
        %v2909 = vperm.slane %v791, %v2860
        %v2910 = vsel %vm2862, %v2909, %v2908
        %v2911 = vperm.slane %v794, %v2864
        %v2912 = vsel %vm2866, %v2911, %v2910
        %v2913 = vperm.slane %v797, %v2868
        %v2914 = vsel %vm2870, %v2913, %v2912
        %v2915 = vperm.slane %v800, %v2872
        %v2916 = vsel %vm2874, %v2915, %v2914
        %v2917 = vperm.slane %v803, %v2876
        %v2918 = vsel %vm2878, %v2917, %v2916
        %v2919 = vperm.slane %v806, %v2880
        %v2920 = vsel %vm2882, %v2919, %v2918
        %v2921 = vperm.slane %v809, %v2884
        %v2922 = vsel %vm2886, %v2921, %v2920
        %v2923 = vperm.slane %v812, %v2888
        %v2924 = vsel %vm2890, %v2923, %v2922
        %v2925 = vperm.slane %v815, %v2892
        %v2926 = vsel %vm2894, %v2925, %v2924
        %v2927 = vperm.slane %v818, %v2834
        %v2928 = vperm.slane %v821, %v2836
        %v2929 = vsel %vm2838, %v2928, %v2927
        %v2930 = vperm.slane %v824, %v2840
        %v2931 = vsel %vm2842, %v2930, %v2929
        %v2932 = vperm.slane %v827, %v2844
        %v2933 = vsel %vm2846, %v2932, %v2931
        %v2934 = vperm.slane %v830, %v2848
        %v2935 = vsel %vm2850, %v2934, %v2933
        %v2936 = vperm.slane %v833, %v2852
        %v2937 = vsel %vm2854, %v2936, %v2935
        %v2938 = vperm.slane %v836, %v2856
        %v2939 = vsel %vm2858, %v2938, %v2937
        %v2940 = vperm.slane %v839, %v2860
        %v2941 = vsel %vm2862, %v2940, %v2939
        %v2942 = vperm.slane %v842, %v2864
        %v2943 = vsel %vm2866, %v2942, %v2941
        %v2944 = vperm.slane %v845, %v2868
        %v2945 = vsel %vm2870, %v2944, %v2943
        %v2946 = vperm.slane %v848, %v2872
        %v2947 = vsel %vm2874, %v2946, %v2945
        %v2948 = vperm.slane %v851, %v2876
        %v2949 = vsel %vm2878, %v2948, %v2947
        %v2950 = vperm.slane %v854, %v2880
        %v2951 = vsel %vm2882, %v2950, %v2949
        %v2952 = vperm.slane %v857, %v2884
        %v2953 = vsel %vm2886, %v2952, %v2951
        %v2954 = vperm.slane %v860, %v2888
        %v2955 = vsel %vm2890, %v2954, %v2953
        %v2956 = vperm.slane %v863, %v2892
        %v2957 = vsel %vm2894, %v2956, %v2955
        %v2958 = vperm.slane %v866, %v2834
        %v2959 = vperm.slane %v869, %v2836
        %v2960 = vsel %vm2838, %v2959, %v2958
        %v2961 = vperm.slane %v872, %v2840
        %v2962 = vsel %vm2842, %v2961, %v2960
        %v2963 = vperm.slane %v875, %v2844
        %v2964 = vsel %vm2846, %v2963, %v2962
        %v2965 = vperm.slane %v878, %v2848
        %v2966 = vsel %vm2850, %v2965, %v2964
        %v2967 = vperm.slane %v881, %v2852
        %v2968 = vsel %vm2854, %v2967, %v2966
        %v2969 = vperm.slane %v884, %v2856
        %v2970 = vsel %vm2858, %v2969, %v2968
        %v2971 = vperm.slane %v887, %v2860
        %v2972 = vsel %vm2862, %v2971, %v2970
        %v2973 = vperm.slane %v890, %v2864
        %v2974 = vsel %vm2866, %v2973, %v2972
        %v2975 = vperm.slane %v893, %v2868
        %v2976 = vsel %vm2870, %v2975, %v2974
        %v2977 = vperm.slane %v896, %v2872
        %v2978 = vsel %vm2874, %v2977, %v2976
        %v2979 = vperm.slane %v899, %v2876
        %v2980 = vsel %vm2878, %v2979, %v2978
        %v2981 = vperm.slane %v902, %v2880
        %v2982 = vsel %vm2882, %v2981, %v2980
        %v2983 = vperm.slane %v905, %v2884
        %v2984 = vsel %vm2886, %v2983, %v2982
        %v2985 = vperm.slane %v908, %v2888
        %v2986 = vsel %vm2890, %v2985, %v2984
        %v2987 = vperm.slane %v911, %v2892
        %v2988 = vsel %vm2894, %v2987, %v2986
        %v2989 = vperm.slane %v914, %v2834
        %v2990 = vperm.slane %v917, %v2836
        %v2991 = vsel %vm2838, %v2990, %v2989
        %v2992 = vperm.slane %v920, %v2840
        %v2993 = vsel %vm2842, %v2992, %v2991
        %v2994 = vperm.slane %v923, %v2844
        %v2995 = vsel %vm2846, %v2994, %v2993
        %v2996 = vperm.slane %v926, %v2848
        %v2997 = vsel %vm2850, %v2996, %v2995
        %v2998 = vperm.slane %v929, %v2852
        %v2999 = vsel %vm2854, %v2998, %v2997
        %v3000 = vperm.slane %v932, %v2856
        %v3001 = vsel %vm2858, %v3000, %v2999
        %v3002 = vperm.slane %v935, %v2860
        %v3003 = vsel %vm2862, %v3002, %v3001
        %v3004 = vperm.slane %v938, %v2864
        %v3005 = vsel %vm2866, %v3004, %v3003
        %v3006 = vperm.slane %v941, %v2868
        %v3007 = vsel %vm2870, %v3006, %v3005
        %v3008 = vperm.slane %v944, %v2872
        %v3009 = vsel %vm2874, %v3008, %v3007
        %v3010 = vperm.slane %v947, %v2876
        %v3011 = vsel %vm2878, %v3010, %v3009
        %v3012 = vperm.slane %v950, %v2880
        %v3013 = vsel %vm2882, %v3012, %v3011
        %v3014 = vperm.slane %v953, %v2884
        %v3015 = vsel %vm2886, %v3014, %v3013
        %v3016 = vperm.slane %v956, %v2888
        %v3017 = vsel %vm2890, %v3016, %v3015
        %v3018 = vperm.slane %v959, %v2892
        %v3019 = vsel %vm2894, %v3018, %v3017
        %v3020 = vperm.slane %v962, %v2834
        %v3021 = vperm.slane %v965, %v2836
        %v3022 = vsel %vm2838, %v3021, %v3020
        %v3023 = vperm.slane %v968, %v2840
        %v3024 = vsel %vm2842, %v3023, %v3022
        %v3025 = vperm.slane %v971, %v2844
        %v3026 = vsel %vm2846, %v3025, %v3024
        %v3027 = vperm.slane %v974, %v2848
        %v3028 = vsel %vm2850, %v3027, %v3026
        %v3029 = vperm.slane %v977, %v2852
        %v3030 = vsel %vm2854, %v3029, %v3028
        %v3031 = vperm.slane %v980, %v2856
        %v3032 = vsel %vm2858, %v3031, %v3030
        %v3033 = vperm.slane %v983, %v2860
        %v3034 = vsel %vm2862, %v3033, %v3032
        %v3035 = vperm.slane %v986, %v2864
        %v3036 = vsel %vm2866, %v3035, %v3034
        %v3037 = vperm.slane %v989, %v2868
        %v3038 = vsel %vm2870, %v3037, %v3036
        %v3039 = vperm.slane %v992, %v2872
        %v3040 = vsel %vm2874, %v3039, %v3038
        %v3041 = vperm.slane %v995, %v2876
        %v3042 = vsel %vm2878, %v3041, %v3040
        %v3043 = vperm.slane %v998, %v2880
        %v3044 = vsel %vm2882, %v3043, %v3042
        %v3045 = vperm.slane %v1001, %v2884
        %v3046 = vsel %vm2886, %v3045, %v3044
        %v3047 = vperm.slane %v1004, %v2888
        %v3048 = vsel %vm2890, %v3047, %v3046
        %v3049 = vperm.slane %v1007, %v2892
        %v3050 = vsel %vm2894, %v3049, %v3048
        %v3051 = vperm.slane %v1010, %v2834
        %v3052 = vperm.slane %v1013, %v2836
        %v3053 = vsel %vm2838, %v3052, %v3051
        %v3054 = vperm.slane %v1016, %v2840
        %v3055 = vsel %vm2842, %v3054, %v3053
        %v3056 = vperm.slane %v1019, %v2844
        %v3057 = vsel %vm2846, %v3056, %v3055
        %v3058 = vperm.slane %v1022, %v2848
        %v3059 = vsel %vm2850, %v3058, %v3057
        %v3060 = vperm.slane %v1025, %v2852
        %v3061 = vsel %vm2854, %v3060, %v3059
        %v3062 = vperm.slane %v1028, %v2856
        %v3063 = vsel %vm2858, %v3062, %v3061
        %v3064 = vperm.slane %v1031, %v2860
        %v3065 = vsel %vm2862, %v3064, %v3063
        %v3066 = vperm.slane %v1034, %v2864
        %v3067 = vsel %vm2866, %v3066, %v3065
        %v3068 = vperm.slane %v1037, %v2868
        %v3069 = vsel %vm2870, %v3068, %v3067
        %v3070 = vperm.slane %v1040, %v2872
        %v3071 = vsel %vm2874, %v3070, %v3069
        %v3072 = vperm.slane %v1043, %v2876
        %v3073 = vsel %vm2878, %v3072, %v3071
        %v3074 = vperm.slane %v1046, %v2880
        %v3075 = vsel %vm2882, %v3074, %v3073
        %v3076 = vperm.slane %v1049, %v2884
        %v3077 = vsel %vm2886, %v3076, %v3075
        %v3078 = vperm.slane %v1052, %v2888
        %v3079 = vsel %vm2890, %v3078, %v3077
        %v3080 = vperm.slane %v1055, %v2892
        %v3081 = vsel %vm2894, %v3080, %v3079
        %v3082 = vperm.slane %v1058, %v2834
        %v3083 = vperm.slane %v1061, %v2836
        %v3084 = vsel %vm2838, %v3083, %v3082
        %v3085 = vperm.slane %v1064, %v2840
        %v3086 = vsel %vm2842, %v3085, %v3084
        %v3087 = vperm.slane %v1067, %v2844
        %v3088 = vsel %vm2846, %v3087, %v3086
        %v3089 = vperm.slane %v1070, %v2848
        %v3090 = vsel %vm2850, %v3089, %v3088
        %v3091 = vperm.slane %v1073, %v2852
        %v3092 = vsel %vm2854, %v3091, %v3090
        %v3093 = vperm.slane %v1076, %v2856
        %v3094 = vsel %vm2858, %v3093, %v3092
        %v3095 = vperm.slane %v1079, %v2860
        %v3096 = vsel %vm2862, %v3095, %v3094
        %v3097 = vperm.slane %v1082, %v2864
        %v3098 = vsel %vm2866, %v3097, %v3096
        %v3099 = vperm.slane %v1085, %v2868
        %v3100 = vsel %vm2870, %v3099, %v3098
        %v3101 = vperm.slane %v1088, %v2872
        %v3102 = vsel %vm2874, %v3101, %v3100
        %v3103 = vperm.slane %v1091, %v2876
        %v3104 = vsel %vm2878, %v3103, %v3102
        %v3105 = vperm.slane %v1094, %v2880
        %v3106 = vsel %vm2882, %v3105, %v3104
        %v3107 = vperm.slane %v1097, %v2884
        %v3108 = vsel %vm2886, %v3107, %v3106
        %v3109 = vperm.slane %v1100, %v2888
        %v3110 = vsel %vm2890, %v3109, %v3108
        %v3111 = vperm.slane %v1103, %v2892
        %v3112 = vsel %vm2894, %v3111, %v3110
        %v3113 = vperm.slane %v1106, %v2834
        %v3114 = vperm.slane %v1109, %v2836
        %v3115 = vsel %vm2838, %v3114, %v3113
        %v3116 = vperm.slane %v1112, %v2840
        %v3117 = vsel %vm2842, %v3116, %v3115
        %v3118 = vperm.slane %v1115, %v2844
        %v3119 = vsel %vm2846, %v3118, %v3117
        %v3120 = vperm.slane %v1118, %v2848
        %v3121 = vsel %vm2850, %v3120, %v3119
        %v3122 = vperm.slane %v1121, %v2852
        %v3123 = vsel %vm2854, %v3122, %v3121
        %v3124 = vperm.slane %v1124, %v2856
        %v3125 = vsel %vm2858, %v3124, %v3123
        %v3126 = vperm.slane %v1127, %v2860
        %v3127 = vsel %vm2862, %v3126, %v3125
        %v3128 = vperm.slane %v1130, %v2864
        %v3129 = vsel %vm2866, %v3128, %v3127
        %v3130 = vperm.slane %v1133, %v2868
        %v3131 = vsel %vm2870, %v3130, %v3129
        %v3132 = vperm.slane %v1136, %v2872
        %v3133 = vsel %vm2874, %v3132, %v3131
        %v3134 = vperm.slane %v1139, %v2876
        %v3135 = vsel %vm2878, %v3134, %v3133
        %v3136 = vperm.slane %v1142, %v2880
        %v3137 = vsel %vm2882, %v3136, %v3135
        %v3138 = vperm.slane %v1145, %v2884
        %v3139 = vsel %vm2886, %v3138, %v3137
        %v3140 = vperm.slane %v1148, %v2888
        %v3141 = vsel %vm2890, %v3140, %v3139
        %v3142 = vperm.slane %v1151, %v2892
        %v3143 = vsel %vm2894, %v3142, %v3141
        %v3144 = vperm.slane %v1154, %v2834
        %v3145 = vperm.slane %v1157, %v2836
        %v3146 = vsel %vm2838, %v3145, %v3144
        %v3147 = vperm.slane %v1160, %v2840
        %v3148 = vsel %vm2842, %v3147, %v3146
        %v3149 = vperm.slane %v1163, %v2844
        %v3150 = vsel %vm2846, %v3149, %v3148
        %v3151 = vperm.slane %v1166, %v2848
        %v3152 = vsel %vm2850, %v3151, %v3150
        %v3153 = vperm.slane %v1169, %v2852
        %v3154 = vsel %vm2854, %v3153, %v3152
        %v3155 = vperm.slane %v1172, %v2856
        %v3156 = vsel %vm2858, %v3155, %v3154
        %v3157 = vperm.slane %v1175, %v2860
        %v3158 = vsel %vm2862, %v3157, %v3156
        %v3159 = vperm.slane %v1178, %v2864
        %v3160 = vsel %vm2866, %v3159, %v3158
        %v3161 = vperm.slane %v1181, %v2868
        %v3162 = vsel %vm2870, %v3161, %v3160
        %v3163 = vperm.slane %v1184, %v2872
        %v3164 = vsel %vm2874, %v3163, %v3162
        %v3165 = vperm.slane %v1187, %v2876
        %v3166 = vsel %vm2878, %v3165, %v3164
        %v3167 = vperm.slane %v1190, %v2880
        %v3168 = vsel %vm2882, %v3167, %v3166
        %v3169 = vperm.slane %v1193, %v2884
        %v3170 = vsel %vm2886, %v3169, %v3168
        %v3171 = vperm.slane %v1196, %v2888
        %v3172 = vsel %vm2890, %v3171, %v3170
        %v3173 = vperm.slane %v1199, %v2892
        %v3174 = vsel %vm2894, %v3173, %v3172
        %v3175 = vperm.slane %v1202, %v2834
        %v3176 = vperm.slane %v1205, %v2836
        %v3177 = vsel %vm2838, %v3176, %v3175
        %v3178 = vperm.slane %v1208, %v2840
        %v3179 = vsel %vm2842, %v3178, %v3177
        %v3180 = vperm.slane %v1211, %v2844
        %v3181 = vsel %vm2846, %v3180, %v3179
        %v3182 = vperm.slane %v1214, %v2848
        %v3183 = vsel %vm2850, %v3182, %v3181
        %v3184 = vperm.slane %v1217, %v2852
        %v3185 = vsel %vm2854, %v3184, %v3183
        %v3186 = vperm.slane %v1220, %v2856
        %v3187 = vsel %vm2858, %v3186, %v3185
        %v3188 = vperm.slane %v1223, %v2860
        %v3189 = vsel %vm2862, %v3188, %v3187
        %v3190 = vperm.slane %v1226, %v2864
        %v3191 = vsel %vm2866, %v3190, %v3189
        %v3192 = vperm.slane %v1229, %v2868
        %v3193 = vsel %vm2870, %v3192, %v3191
        %v3194 = vperm.slane %v1232, %v2872
        %v3195 = vsel %vm2874, %v3194, %v3193
        %v3196 = vperm.slane %v1235, %v2876
        %v3197 = vsel %vm2878, %v3196, %v3195
        %v3198 = vperm.slane %v1238, %v2880
        %v3199 = vsel %vm2882, %v3198, %v3197
        %v3200 = vperm.slane %v1241, %v2884
        %v3201 = vsel %vm2886, %v3200, %v3199
        %v3202 = vperm.slane %v1244, %v2888
        %v3203 = vsel %vm2890, %v3202, %v3201
        %v3204 = vperm.slane %v1247, %v2892
        %v3205 = vsel %vm2894, %v3204, %v3203
        %v3206 = vperm.slane %v1250, %v2834
        %v3207 = vperm.slane %v1253, %v2836
        %v3208 = vsel %vm2838, %v3207, %v3206
        %v3209 = vperm.slane %v1256, %v2840
        %v3210 = vsel %vm2842, %v3209, %v3208
        %v3211 = vperm.slane %v1259, %v2844
        %v3212 = vsel %vm2846, %v3211, %v3210
        %v3213 = vperm.slane %v1262, %v2848
        %v3214 = vsel %vm2850, %v3213, %v3212
        %v3215 = vperm.slane %v1265, %v2852
        %v3216 = vsel %vm2854, %v3215, %v3214
        %v3217 = vperm.slane %v1268, %v2856
        %v3218 = vsel %vm2858, %v3217, %v3216
        %v3219 = vperm.slane %v1271, %v2860
        %v3220 = vsel %vm2862, %v3219, %v3218
        %v3221 = vperm.slane %v1274, %v2864
        %v3222 = vsel %vm2866, %v3221, %v3220
        %v3223 = vperm.slane %v1277, %v2868
        %v3224 = vsel %vm2870, %v3223, %v3222
        %v3225 = vperm.slane %v1280, %v2872
        %v3226 = vsel %vm2874, %v3225, %v3224
        %v3227 = vperm.slane %v1283, %v2876
        %v3228 = vsel %vm2878, %v3227, %v3226
        %v3229 = vperm.slane %v1286, %v2880
        %v3230 = vsel %vm2882, %v3229, %v3228
        %v3231 = vperm.slane %v1289, %v2884
        %v3232 = vsel %vm2886, %v3231, %v3230
        %v3233 = vperm.slane %v1292, %v2888
        %v3234 = vsel %vm2890, %v3233, %v3232
        %v3235 = vperm.slane %v1295, %v2892
        %v3236 = vsel %vm2894, %v3235, %v3234
        %v3237 = vperm.slane %v1298, %v2834
        %v3238 = vperm.slane %v1301, %v2836
        %v3239 = vsel %vm2838, %v3238, %v3237
        %v3240 = vperm.slane %v1304, %v2840
        %v3241 = vsel %vm2842, %v3240, %v3239
        %v3242 = vperm.slane %v1307, %v2844
        %v3243 = vsel %vm2846, %v3242, %v3241
        %v3244 = vperm.slane %v1310, %v2848
        %v3245 = vsel %vm2850, %v3244, %v3243
        %v3246 = vperm.slane %v1313, %v2852
        %v3247 = vsel %vm2854, %v3246, %v3245
        %v3248 = vperm.slane %v1316, %v2856
        %v3249 = vsel %vm2858, %v3248, %v3247
        %v3250 = vperm.slane %v1319, %v2860
        %v3251 = vsel %vm2862, %v3250, %v3249
        %v3252 = vperm.slane %v1322, %v2864
        %v3253 = vsel %vm2866, %v3252, %v3251
        %v3254 = vperm.slane %v1325, %v2868
        %v3255 = vsel %vm2870, %v3254, %v3253
        %v3256 = vperm.slane %v1328, %v2872
        %v3257 = vsel %vm2874, %v3256, %v3255
        %v3258 = vperm.slane %v1331, %v2876
        %v3259 = vsel %vm2878, %v3258, %v3257
        %v3260 = vperm.slane %v1334, %v2880
        %v3261 = vsel %vm2882, %v3260, %v3259
        %v3262 = vperm.slane %v1337, %v2884
        %v3263 = vsel %vm2886, %v3262, %v3261
        %v3264 = vperm.slane %v1340, %v2888
        %v3265 = vsel %vm2890, %v3264, %v3263
        %v3266 = vperm.slane %v1343, %v2892
        %v3267 = vsel %vm2894, %v3266, %v3265
        %v3268 = vperm.slane %v1346, %v2834
        %v3269 = vperm.slane %v1349, %v2836
        %v3270 = vsel %vm2838, %v3269, %v3268
        %v3271 = vperm.slane %v1352, %v2840
        %v3272 = vsel %vm2842, %v3271, %v3270
        %v3273 = vperm.slane %v1355, %v2844
        %v3274 = vsel %vm2846, %v3273, %v3272
        %v3275 = vperm.slane %v1358, %v2848
        %v3276 = vsel %vm2850, %v3275, %v3274
        %v3277 = vperm.slane %v1361, %v2852
        %v3278 = vsel %vm2854, %v3277, %v3276
        %v3279 = vperm.slane %v1364, %v2856
        %v3280 = vsel %vm2858, %v3279, %v3278
        %v3281 = vperm.slane %v1367, %v2860
        %v3282 = vsel %vm2862, %v3281, %v3280
        %v3283 = vperm.slane %v1370, %v2864
        %v3284 = vsel %vm2866, %v3283, %v3282
        %v3285 = vperm.slane %v1373, %v2868
        %v3286 = vsel %vm2870, %v3285, %v3284
        %v3287 = vperm.slane %v1376, %v2872
        %v3288 = vsel %vm2874, %v3287, %v3286
        %v3289 = vperm.slane %v1379, %v2876
        %v3290 = vsel %vm2878, %v3289, %v3288
        %v3291 = vperm.slane %v1382, %v2880
        %v3292 = vsel %vm2882, %v3291, %v3290
        %v3293 = vperm.slane %v1385, %v2884
        %v3294 = vsel %vm2886, %v3293, %v3292
        %v3295 = vperm.slane %v1388, %v2888
        %v3296 = vsel %vm2890, %v3295, %v3294
        %v3297 = vperm.slane %v1391, %v2892
        %v3298 = vsel %vm2894, %v3297, %v3296
        %v3299 = vperm.slane %v1394, %v2834
        %v3300 = vperm.slane %v1397, %v2836
        %v3301 = vsel %vm2838, %v3300, %v3299
        %v3302 = vperm.slane %v1400, %v2840
        %v3303 = vsel %vm2842, %v3302, %v3301
        %v3304 = vperm.slane %v1403, %v2844
        %v3305 = vsel %vm2846, %v3304, %v3303
        %v3306 = vperm.slane %v1406, %v2848
        %v3307 = vsel %vm2850, %v3306, %v3305
        %v3308 = vperm.slane %v1409, %v2852
        %v3309 = vsel %vm2854, %v3308, %v3307
        %v3310 = vperm.slane %v1412, %v2856
        %v3311 = vsel %vm2858, %v3310, %v3309
        %v3312 = vperm.slane %v1415, %v2860
        %v3313 = vsel %vm2862, %v3312, %v3311
        %v3314 = vperm.slane %v1418, %v2864
        %v3315 = vsel %vm2866, %v3314, %v3313
        %v3316 = vperm.slane %v1421, %v2868
        %v3317 = vsel %vm2870, %v3316, %v3315
        %v3318 = vperm.slane %v1424, %v2872
        %v3319 = vsel %vm2874, %v3318, %v3317
        %v3320 = vperm.slane %v1427, %v2876
        %v3321 = vsel %vm2878, %v3320, %v3319
        %v3322 = vperm.slane %v1430, %v2880
        %v3323 = vsel %vm2882, %v3322, %v3321
        %v3324 = vperm.slane %v1433, %v2884
        %v3325 = vsel %vm2886, %v3324, %v3323
        %v3326 = vperm.slane %v1436, %v2888
        %v3327 = vsel %vm2890, %v3326, %v3325
        %v3328 = vperm.slane %v1439, %v2892
        %v3329 = vsel %vm2894, %v3328, %v3327
        %v3330 = vperm.slane %v1442, %v2834
        %v3331 = vperm.slane %v1445, %v2836
        %v3332 = vsel %vm2838, %v3331, %v3330
        %v3333 = vperm.slane %v1448, %v2840
        %v3334 = vsel %vm2842, %v3333, %v3332
        %v3335 = vperm.slane %v1451, %v2844
        %v3336 = vsel %vm2846, %v3335, %v3334
        %v3337 = vperm.slane %v1454, %v2848
        %v3338 = vsel %vm2850, %v3337, %v3336
        %v3339 = vperm.slane %v1457, %v2852
        %v3340 = vsel %vm2854, %v3339, %v3338
        %v3341 = vperm.slane %v1460, %v2856
        %v3342 = vsel %vm2858, %v3341, %v3340
        %v3343 = vperm.slane %v1463, %v2860
        %v3344 = vsel %vm2862, %v3343, %v3342
        %v3345 = vperm.slane %v1466, %v2864
        %v3346 = vsel %vm2866, %v3345, %v3344
        %v3347 = vperm.slane %v1469, %v2868
        %v3348 = vsel %vm2870, %v3347, %v3346
        %v3349 = vperm.slane %v1472, %v2872
        %v3350 = vsel %vm2874, %v3349, %v3348
        %v3351 = vperm.slane %v1475, %v2876
        %v3352 = vsel %vm2878, %v3351, %v3350
        %v3353 = vperm.slane %v1478, %v2880
        %v3354 = vsel %vm2882, %v3353, %v3352
        %v3355 = vperm.slane %v1481, %v2884
        %v3356 = vsel %vm2886, %v3355, %v3354
        %v3357 = vperm.slane %v1484, %v2888
        %v3358 = vsel %vm2890, %v3357, %v3356
        %v3359 = vperm.slane %v1487, %v2892
        %v3360 = vsel %vm2894, %v3359, %v3358
        %v3361 = vperm.slane %v1490, %v2834
        %v3362 = vperm.slane %v1493, %v2836
        %v3363 = vsel %vm2838, %v3362, %v3361
        %v3364 = vperm.slane %v1496, %v2840
        %v3365 = vsel %vm2842, %v3364, %v3363
        %v3366 = vperm.slane %v1499, %v2844
        %v3367 = vsel %vm2846, %v3366, %v3365
        %v3368 = vperm.slane %v1502, %v2848
        %v3369 = vsel %vm2850, %v3368, %v3367
        %v3370 = vperm.slane %v1505, %v2852
        %v3371 = vsel %vm2854, %v3370, %v3369
        %v3372 = vperm.slane %v1508, %v2856
        %v3373 = vsel %vm2858, %v3372, %v3371
        %v3374 = vperm.slane %v1511, %v2860
        %v3375 = vsel %vm2862, %v3374, %v3373
        %v3376 = vperm.slane %v1514, %v2864
        %v3377 = vsel %vm2866, %v3376, %v3375
        %v3378 = vperm.slane %v1517, %v2868
        %v3379 = vsel %vm2870, %v3378, %v3377
        %v3380 = vperm.slane %v1520, %v2872
        %v3381 = vsel %vm2874, %v3380, %v3379
        %v3382 = vperm.slane %v1523, %v2876
        %v3383 = vsel %vm2878, %v3382, %v3381
        %v3384 = vperm.slane %v1526, %v2880
        %v3385 = vsel %vm2882, %v3384, %v3383
        %v3386 = vperm.slane %v1529, %v2884
        %v3387 = vsel %vm2886, %v3386, %v3385
        %v3388 = vperm.slane %v1532, %v2888
        %v3389 = vsel %vm2890, %v3388, %v3387
        %v3390 = vperm.slane %v1535, %v2892
        %v3391 = vsel %vm2894, %v3390, %v3389
        %v3392 = vperm.slane %v1538, %v2834
        %v3393 = vperm.slane %v1541, %v2836
        %v3394 = vsel %vm2838, %v3393, %v3392
        %v3395 = vperm.slane %v1544, %v2840
        %v3396 = vsel %vm2842, %v3395, %v3394
        %v3397 = vperm.slane %v1547, %v2844
        %v3398 = vsel %vm2846, %v3397, %v3396
        %v3399 = vperm.slane %v1550, %v2848
        %v3400 = vsel %vm2850, %v3399, %v3398
        %v3401 = vperm.slane %v1553, %v2852
        %v3402 = vsel %vm2854, %v3401, %v3400
        %v3403 = vperm.slane %v1556, %v2856
        %v3404 = vsel %vm2858, %v3403, %v3402
        %v3405 = vperm.slane %v1559, %v2860
        %v3406 = vsel %vm2862, %v3405, %v3404
        %v3407 = vperm.slane %v1562, %v2864
        %v3408 = vsel %vm2866, %v3407, %v3406
        %v3409 = vperm.slane %v1565, %v2868
        %v3410 = vsel %vm2870, %v3409, %v3408
        %v3411 = vperm.slane %v1568, %v2872
        %v3412 = vsel %vm2874, %v3411, %v3410
        %v3413 = vperm.slane %v1571, %v2876
        %v3414 = vsel %vm2878, %v3413, %v3412
        %v3415 = vperm.slane %v1574, %v2880
        %v3416 = vsel %vm2882, %v3415, %v3414
        %v3417 = vperm.slane %v1577, %v2884
        %v3418 = vsel %vm2886, %v3417, %v3416
        %v3419 = vperm.slane %v1580, %v2888
        %v3420 = vsel %vm2890, %v3419, %v3418
        %v3421 = vperm.slane %v1583, %v2892
        %v3422 = vsel %vm2894, %v3421, %v3420
        %v3423 = vperm.slane %v1586, %v2834
        %v3424 = vperm.slane %v1589, %v2836
        %v3425 = vsel %vm2838, %v3424, %v3423
        %v3426 = vperm.slane %v1592, %v2840
        %v3427 = vsel %vm2842, %v3426, %v3425
        %v3428 = vperm.slane %v1595, %v2844
        %v3429 = vsel %vm2846, %v3428, %v3427
        %v3430 = vperm.slane %v1598, %v2848
        %v3431 = vsel %vm2850, %v3430, %v3429
        %v3432 = vperm.slane %v1601, %v2852
        %v3433 = vsel %vm2854, %v3432, %v3431
        %v3434 = vperm.slane %v1604, %v2856
        %v3435 = vsel %vm2858, %v3434, %v3433
        %v3436 = vperm.slane %v1607, %v2860
        %v3437 = vsel %vm2862, %v3436, %v3435
        %v3438 = vperm.slane %v1610, %v2864
        %v3439 = vsel %vm2866, %v3438, %v3437
        %v3440 = vperm.slane %v1613, %v2868
        %v3441 = vsel %vm2870, %v3440, %v3439
        %v3442 = vperm.slane %v1616, %v2872
        %v3443 = vsel %vm2874, %v3442, %v3441
        %v3444 = vperm.slane %v1619, %v2876
        %v3445 = vsel %vm2878, %v3444, %v3443
        %v3446 = vperm.slane %v1622, %v2880
        %v3447 = vsel %vm2882, %v3446, %v3445
        %v3448 = vperm.slane %v1625, %v2884
        %v3449 = vsel %vm2886, %v3448, %v3447
        %v3450 = vperm.slane %v1628, %v2888
        %v3451 = vsel %vm2890, %v3450, %v3449
        %v3452 = vperm.slane %v1631, %v2892
        %v3453 = vsel %vm2894, %v3452, %v3451
        %v3454 = vperm.slane %v1634, %v2834
        %v3455 = vperm.slane %v1637, %v2836
        %v3456 = vsel %vm2838, %v3455, %v3454
        %v3457 = vperm.slane %v1640, %v2840
        %v3458 = vsel %vm2842, %v3457, %v3456
        %v3459 = vperm.slane %v1643, %v2844
        %v3460 = vsel %vm2846, %v3459, %v3458
        %v3461 = vperm.slane %v1646, %v2848
        %v3462 = vsel %vm2850, %v3461, %v3460
        %v3463 = vperm.slane %v1649, %v2852
        %v3464 = vsel %vm2854, %v3463, %v3462
        %v3465 = vperm.slane %v1652, %v2856
        %v3466 = vsel %vm2858, %v3465, %v3464
        %v3467 = vperm.slane %v1655, %v2860
        %v3468 = vsel %vm2862, %v3467, %v3466
        %v3469 = vperm.slane %v1658, %v2864
        %v3470 = vsel %vm2866, %v3469, %v3468
        %v3471 = vperm.slane %v1661, %v2868
        %v3472 = vsel %vm2870, %v3471, %v3470
        %v3473 = vperm.slane %v1664, %v2872
        %v3474 = vsel %vm2874, %v3473, %v3472
        %v3475 = vperm.slane %v1667, %v2876
        %v3476 = vsel %vm2878, %v3475, %v3474
        %v3477 = vperm.slane %v1670, %v2880
        %v3478 = vsel %vm2882, %v3477, %v3476
        %v3479 = vperm.slane %v1673, %v2884
        %v3480 = vsel %vm2886, %v3479, %v3478
        %v3481 = vperm.slane %v1676, %v2888
        %v3482 = vsel %vm2890, %v3481, %v3480
        %v3483 = vperm.slane %v1679, %v2892
        %v3484 = vsel %vm2894, %v3483, %v3482
        %v3485 = vperm.slane %v1682, %v2834
        %v3486 = vperm.slane %v1685, %v2836
        %v3487 = vsel %vm2838, %v3486, %v3485
        %v3488 = vperm.slane %v1688, %v2840
        %v3489 = vsel %vm2842, %v3488, %v3487
        %v3490 = vperm.slane %v1691, %v2844
        %v3491 = vsel %vm2846, %v3490, %v3489
        %v3492 = vperm.slane %v1694, %v2848
        %v3493 = vsel %vm2850, %v3492, %v3491
        %v3494 = vperm.slane %v1697, %v2852
        %v3495 = vsel %vm2854, %v3494, %v3493
        %v3496 = vperm.slane %v1700, %v2856
        %v3497 = vsel %vm2858, %v3496, %v3495
        %v3498 = vperm.slane %v1703, %v2860
        %v3499 = vsel %vm2862, %v3498, %v3497
        %v3500 = vperm.slane %v1706, %v2864
        %v3501 = vsel %vm2866, %v3500, %v3499
        %v3502 = vperm.slane %v1709, %v2868
        %v3503 = vsel %vm2870, %v3502, %v3501
        %v3504 = vperm.slane %v1712, %v2872
        %v3505 = vsel %vm2874, %v3504, %v3503
        %v3506 = vperm.slane %v1715, %v2876
        %v3507 = vsel %vm2878, %v3506, %v3505
        %v3508 = vperm.slane %v1718, %v2880
        %v3509 = vsel %vm2882, %v3508, %v3507
        %v3510 = vperm.slane %v1721, %v2884
        %v3511 = vsel %vm2886, %v3510, %v3509
        %v3512 = vperm.slane %v1724, %v2888
        %v3513 = vsel %vm2890, %v3512, %v3511
        %v3514 = vperm.slane %v1727, %v2892
        %v3515 = vsel %vm2894, %v3514, %v3513
        %v3516 = vperm.slane %v1730, %v2834
        %v3517 = vperm.slane %v1733, %v2836
        %v3518 = vsel %vm2838, %v3517, %v3516
        %v3519 = vperm.slane %v1736, %v2840
        %v3520 = vsel %vm2842, %v3519, %v3518
        %v3521 = vperm.slane %v1739, %v2844
        %v3522 = vsel %vm2846, %v3521, %v3520
        %v3523 = vperm.slane %v1742, %v2848
        %v3524 = vsel %vm2850, %v3523, %v3522
        %v3525 = vperm.slane %v1745, %v2852
        %v3526 = vsel %vm2854, %v3525, %v3524
        %v3527 = vperm.slane %v1748, %v2856
        %v3528 = vsel %vm2858, %v3527, %v3526
        %v3529 = vperm.slane %v1751, %v2860
        %v3530 = vsel %vm2862, %v3529, %v3528
        %v3531 = vperm.slane %v1754, %v2864
        %v3532 = vsel %vm2866, %v3531, %v3530
        %v3533 = vperm.slane %v1757, %v2868
        %v3534 = vsel %vm2870, %v3533, %v3532
        %v3535 = vperm.slane %v1760, %v2872
        %v3536 = vsel %vm2874, %v3535, %v3534
        %v3537 = vperm.slane %v1763, %v2876
        %v3538 = vsel %vm2878, %v3537, %v3536
        %v3539 = vperm.slane %v1766, %v2880
        %v3540 = vsel %vm2882, %v3539, %v3538
        %v3541 = vperm.slane %v1769, %v2884
        %v3542 = vsel %vm2886, %v3541, %v3540
        %v3543 = vperm.slane %v1772, %v2888
        %v3544 = vsel %vm2890, %v3543, %v3542
        %v3545 = vperm.slane %v1775, %v2892
        %v3546 = vsel %vm2894, %v3545, %v3544
        %v3547 = vperm.slane %v1778, %v2834
        %v3548 = vperm.slane %v1781, %v2836
        %v3549 = vsel %vm2838, %v3548, %v3547
        %v3550 = vperm.slane %v1784, %v2840
        %v3551 = vsel %vm2842, %v3550, %v3549
        %v3552 = vperm.slane %v1787, %v2844
        %v3553 = vsel %vm2846, %v3552, %v3551
        %v3554 = vperm.slane %v1790, %v2848
        %v3555 = vsel %vm2850, %v3554, %v3553
        %v3556 = vperm.slane %v1793, %v2852
        %v3557 = vsel %vm2854, %v3556, %v3555
        %v3558 = vperm.slane %v1796, %v2856
        %v3559 = vsel %vm2858, %v3558, %v3557
        %v3560 = vperm.slane %v1799, %v2860
        %v3561 = vsel %vm2862, %v3560, %v3559
        %v3562 = vperm.slane %v1802, %v2864
        %v3563 = vsel %vm2866, %v3562, %v3561
        %v3564 = vperm.slane %v1805, %v2868
        %v3565 = vsel %vm2870, %v3564, %v3563
        %v3566 = vperm.slane %v1808, %v2872
        %v3567 = vsel %vm2874, %v3566, %v3565
        %v3568 = vperm.slane %v1811, %v2876
        %v3569 = vsel %vm2878, %v3568, %v3567
        %v3570 = vperm.slane %v1814, %v2880
        %v3571 = vsel %vm2882, %v3570, %v3569
        %v3572 = vperm.slane %v1817, %v2884
        %v3573 = vsel %vm2886, %v3572, %v3571
        %v3574 = vperm.slane %v1820, %v2888
        %v3575 = vsel %vm2890, %v3574, %v3573
        %v3576 = vperm.slane %v1823, %v2892
        %v3577 = vsel %vm2894, %v3576, %v3575
        %v3578 = vperm.slane %v1826, %v2834
        %v3579 = vperm.slane %v1829, %v2836
        %v3580 = vsel %vm2838, %v3579, %v3578
        %v3581 = vperm.slane %v1832, %v2840
        %v3582 = vsel %vm2842, %v3581, %v3580
        %v3583 = vperm.slane %v1835, %v2844
        %v3584 = vsel %vm2846, %v3583, %v3582
        %v3585 = vperm.slane %v1838, %v2848
        %v3586 = vsel %vm2850, %v3585, %v3584
        %v3587 = vperm.slane %v1841, %v2852
        %v3588 = vsel %vm2854, %v3587, %v3586
        %v3589 = vperm.slane %v1844, %v2856
        %v3590 = vsel %vm2858, %v3589, %v3588
        %v3591 = vperm.slane %v1847, %v2860
        %v3592 = vsel %vm2862, %v3591, %v3590
        %v3593 = vperm.slane %v1850, %v2864
        %v3594 = vsel %vm2866, %v3593, %v3592
        %v3595 = vperm.slane %v1853, %v2868
        %v3596 = vsel %vm2870, %v3595, %v3594
        %v3597 = vperm.slane %v1856, %v2872
        %v3598 = vsel %vm2874, %v3597, %v3596
        %v3599 = vperm.slane %v1859, %v2876
        %v3600 = vsel %vm2878, %v3599, %v3598
        %v3601 = vperm.slane %v1862, %v2880
        %v3602 = vsel %vm2882, %v3601, %v3600
        %v3603 = vperm.slane %v1865, %v2884
        %v3604 = vsel %vm2886, %v3603, %v3602
        %v3605 = vperm.slane %v1868, %v2888
        %v3606 = vsel %vm2890, %v3605, %v3604
        %v3607 = vperm.slane %v1871, %v2892
        %v3608 = vsel %vm2894, %v3607, %v3606
        %v3609 = vperm.slane %v1874, %v2834
        %v3610 = vperm.slane %v1877, %v2836
        %v3611 = vsel %vm2838, %v3610, %v3609
        %v3612 = vperm.slane %v1880, %v2840
        %v3613 = vsel %vm2842, %v3612, %v3611
        %v3614 = vperm.slane %v1883, %v2844
        %v3615 = vsel %vm2846, %v3614, %v3613
        %v3616 = vperm.slane %v1886, %v2848
        %v3617 = vsel %vm2850, %v3616, %v3615
        %v3618 = vperm.slane %v1889, %v2852
        %v3619 = vsel %vm2854, %v3618, %v3617
        %v3620 = vperm.slane %v1892, %v2856
        %v3621 = vsel %vm2858, %v3620, %v3619
        %v3622 = vperm.slane %v1895, %v2860
        %v3623 = vsel %vm2862, %v3622, %v3621
        %v3624 = vperm.slane %v1898, %v2864
        %v3625 = vsel %vm2866, %v3624, %v3623
        %v3626 = vperm.slane %v1901, %v2868
        %v3627 = vsel %vm2870, %v3626, %v3625
        %v3628 = vperm.slane %v1904, %v2872
        %v3629 = vsel %vm2874, %v3628, %v3627
        %v3630 = vperm.slane %v1907, %v2876
        %v3631 = vsel %vm2878, %v3630, %v3629
        %v3632 = vperm.slane %v1910, %v2880
        %v3633 = vsel %vm2882, %v3632, %v3631
        %v3634 = vperm.slane %v1913, %v2884
        %v3635 = vsel %vm2886, %v3634, %v3633
        %v3636 = vperm.slane %v1916, %v2888
        %v3637 = vsel %vm2890, %v3636, %v3635
        %v3638 = vperm.slane %v1919, %v2892
        %v3639 = vsel %vm2894, %v3638, %v3637
        %v3640 = vperm.slane %v1922, %v2834
        %v3641 = vperm.slane %v1925, %v2836
        %v3642 = vsel %vm2838, %v3641, %v3640
        %v3643 = vperm.slane %v1928, %v2840
        %v3644 = vsel %vm2842, %v3643, %v3642
        %v3645 = vperm.slane %v1931, %v2844
        %v3646 = vsel %vm2846, %v3645, %v3644
        %v3647 = vperm.slane %v1934, %v2848
        %v3648 = vsel %vm2850, %v3647, %v3646
        %v3649 = vperm.slane %v1937, %v2852
        %v3650 = vsel %vm2854, %v3649, %v3648
        %v3651 = vperm.slane %v1940, %v2856
        %v3652 = vsel %vm2858, %v3651, %v3650
        %v3653 = vperm.slane %v1943, %v2860
        %v3654 = vsel %vm2862, %v3653, %v3652
        %v3655 = vperm.slane %v1946, %v2864
        %v3656 = vsel %vm2866, %v3655, %v3654
        %v3657 = vperm.slane %v1949, %v2868
        %v3658 = vsel %vm2870, %v3657, %v3656
        %v3659 = vperm.slane %v1952, %v2872
        %v3660 = vsel %vm2874, %v3659, %v3658
        %v3661 = vperm.slane %v1955, %v2876
        %v3662 = vsel %vm2878, %v3661, %v3660
        %v3663 = vperm.slane %v1958, %v2880
        %v3664 = vsel %vm2882, %v3663, %v3662
        %v3665 = vperm.slane %v1961, %v2884
        %v3666 = vsel %vm2886, %v3665, %v3664
        %v3667 = vperm.slane %v1964, %v2888
        %v3668 = vsel %vm2890, %v3667, %v3666
        %v3669 = vperm.slane %v1967, %v2892
        %v3670 = vsel %vm2894, %v3669, %v3668
        %v3671 = vperm.slane %v1970, %v2834
        %v3672 = vperm.slane %v1973, %v2836
        %v3673 = vsel %vm2838, %v3672, %v3671
        %v3674 = vperm.slane %v1976, %v2840
        %v3675 = vsel %vm2842, %v3674, %v3673
        %v3676 = vperm.slane %v1979, %v2844
        %v3677 = vsel %vm2846, %v3676, %v3675
        %v3678 = vperm.slane %v1982, %v2848
        %v3679 = vsel %vm2850, %v3678, %v3677
        %v3680 = vperm.slane %v1985, %v2852
        %v3681 = vsel %vm2854, %v3680, %v3679
        %v3682 = vperm.slane %v1988, %v2856
        %v3683 = vsel %vm2858, %v3682, %v3681
        %v3684 = vperm.slane %v1991, %v2860
        %v3685 = vsel %vm2862, %v3684, %v3683
        %v3686 = vperm.slane %v1994, %v2864
        %v3687 = vsel %vm2866, %v3686, %v3685
        %v3688 = vperm.slane %v1997, %v2868
        %v3689 = vsel %vm2870, %v3688, %v3687
        %v3690 = vperm.slane %v2000, %v2872
        %v3691 = vsel %vm2874, %v3690, %v3689
        %v3692 = vperm.slane %v2003, %v2876
        %v3693 = vsel %vm2878, %v3692, %v3691
        %v3694 = vperm.slane %v2006, %v2880
        %v3695 = vsel %vm2882, %v3694, %v3693
        %v3696 = vperm.slane %v2009, %v2884
        %v3697 = vsel %vm2886, %v3696, %v3695
        %v3698 = vperm.slane %v2012, %v2888
        %v3699 = vsel %vm2890, %v3698, %v3697
        %v3700 = vperm.slane %v2015, %v2892
        %v3701 = vsel %vm2894, %v3700, %v3699
        %v3702 = vperm.slane %v2018, %v2834
        %v3703 = vperm.slane %v2021, %v2836
        %v3704 = vsel %vm2838, %v3703, %v3702
        %v3705 = vperm.slane %v2024, %v2840
        %v3706 = vsel %vm2842, %v3705, %v3704
        %v3707 = vperm.slane %v2027, %v2844
        %v3708 = vsel %vm2846, %v3707, %v3706
        %v3709 = vperm.slane %v2030, %v2848
        %v3710 = vsel %vm2850, %v3709, %v3708
        %v3711 = vperm.slane %v2033, %v2852
        %v3712 = vsel %vm2854, %v3711, %v3710
        %v3713 = vperm.slane %v2036, %v2856
        %v3714 = vsel %vm2858, %v3713, %v3712
        %v3715 = vperm.slane %v2039, %v2860
        %v3716 = vsel %vm2862, %v3715, %v3714
        %v3717 = vperm.slane %v2042, %v2864
        %v3718 = vsel %vm2866, %v3717, %v3716
        %v3719 = vperm.slane %v2045, %v2868
        %v3720 = vsel %vm2870, %v3719, %v3718
        %v3721 = vperm.slane %v2048, %v2872
        %v3722 = vsel %vm2874, %v3721, %v3720
        %v3723 = vperm.slane %v2051, %v2876
        %v3724 = vsel %vm2878, %v3723, %v3722
        %v3725 = vperm.slane %v2054, %v2880
        %v3726 = vsel %vm2882, %v3725, %v3724
        %v3727 = vperm.slane %v2057, %v2884
        %v3728 = vsel %vm2886, %v3727, %v3726
        %v3729 = vperm.slane %v2060, %v2888
        %v3730 = vsel %vm2890, %v3729, %v3728
        %v3731 = vperm.slane %v2063, %v2892
        %v3732 = vsel %vm2894, %v3731, %v3730
        %v3733 = vperm.slane %v2066, %v2834
        %v3734 = vperm.slane %v2069, %v2836
        %v3735 = vsel %vm2838, %v3734, %v3733
        %v3736 = vperm.slane %v2072, %v2840
        %v3737 = vsel %vm2842, %v3736, %v3735
        %v3738 = vperm.slane %v2075, %v2844
        %v3739 = vsel %vm2846, %v3738, %v3737
        %v3740 = vperm.slane %v2078, %v2848
        %v3741 = vsel %vm2850, %v3740, %v3739
        %v3742 = vperm.slane %v2081, %v2852
        %v3743 = vsel %vm2854, %v3742, %v3741
        %v3744 = vperm.slane %v2084, %v2856
        %v3745 = vsel %vm2858, %v3744, %v3743
        %v3746 = vperm.slane %v2087, %v2860
        %v3747 = vsel %vm2862, %v3746, %v3745
        %v3748 = vperm.slane %v2090, %v2864
        %v3749 = vsel %vm2866, %v3748, %v3747
        %v3750 = vperm.slane %v2093, %v2868
        %v3751 = vsel %vm2870, %v3750, %v3749
        %v3752 = vperm.slane %v2096, %v2872
        %v3753 = vsel %vm2874, %v3752, %v3751
        %v3754 = vperm.slane %v2099, %v2876
        %v3755 = vsel %vm2878, %v3754, %v3753
        %v3756 = vperm.slane %v2102, %v2880
        %v3757 = vsel %vm2882, %v3756, %v3755
        %v3758 = vperm.slane %v2105, %v2884
        %v3759 = vsel %vm2886, %v3758, %v3757
        %v3760 = vperm.slane %v2108, %v2888
        %v3761 = vsel %vm2890, %v3760, %v3759
        %v3762 = vperm.slane %v2111, %v2892
        %v3763 = vsel %vm2894, %v3762, %v3761
        %v3764 = vperm.slane %v2114, %v2834
        %v3765 = vperm.slane %v2117, %v2836
        %v3766 = vsel %vm2838, %v3765, %v3764
        %v3767 = vperm.slane %v2120, %v2840
        %v3768 = vsel %vm2842, %v3767, %v3766
        %v3769 = vperm.slane %v2123, %v2844
        %v3770 = vsel %vm2846, %v3769, %v3768
        %v3771 = vperm.slane %v2126, %v2848
        %v3772 = vsel %vm2850, %v3771, %v3770
        %v3773 = vperm.slane %v2129, %v2852
        %v3774 = vsel %vm2854, %v3773, %v3772
        %v3775 = vperm.slane %v2132, %v2856
        %v3776 = vsel %vm2858, %v3775, %v3774
        %v3777 = vperm.slane %v2135, %v2860
        %v3778 = vsel %vm2862, %v3777, %v3776
        %v3779 = vperm.slane %v2138, %v2864
        %v3780 = vsel %vm2866, %v3779, %v3778
        %v3781 = vperm.slane %v2141, %v2868
        %v3782 = vsel %vm2870, %v3781, %v3780
        %v3783 = vperm.slane %v2144, %v2872
        %v3784 = vsel %vm2874, %v3783, %v3782
        %v3785 = vperm.slane %v2147, %v2876
        %v3786 = vsel %vm2878, %v3785, %v3784
        %v3787 = vperm.slane %v2150, %v2880
        %v3788 = vsel %vm2882, %v3787, %v3786
        %v3789 = vperm.slane %v2153, %v2884
        %v3790 = vsel %vm2886, %v3789, %v3788
        %v3791 = vperm.slane %v2156, %v2888
        %v3792 = vsel %vm2890, %v3791, %v3790
        %v3793 = vperm.slane %v2159, %v2892
        %v3794 = vsel %vm2894, %v3793, %v3792
        %v3795 = vperm.slane %v2162, %v2834
        %v3796 = vperm.slane %v2165, %v2836
        %v3797 = vsel %vm2838, %v3796, %v3795
        %v3798 = vperm.slane %v2168, %v2840
        %v3799 = vsel %vm2842, %v3798, %v3797
        %v3800 = vperm.slane %v2171, %v2844
        %v3801 = vsel %vm2846, %v3800, %v3799
        %v3802 = vperm.slane %v2174, %v2848
        %v3803 = vsel %vm2850, %v3802, %v3801
        %v3804 = vperm.slane %v2177, %v2852
        %v3805 = vsel %vm2854, %v3804, %v3803
        %v3806 = vperm.slane %v2180, %v2856
        %v3807 = vsel %vm2858, %v3806, %v3805
        %v3808 = vperm.slane %v2183, %v2860
        %v3809 = vsel %vm2862, %v3808, %v3807
        %v3810 = vperm.slane %v2186, %v2864
        %v3811 = vsel %vm2866, %v3810, %v3809
        %v3812 = vperm.slane %v2189, %v2868
        %v3813 = vsel %vm2870, %v3812, %v3811
        %v3814 = vperm.slane %v2192, %v2872
        %v3815 = vsel %vm2874, %v3814, %v3813
        %v3816 = vperm.slane %v2195, %v2876
        %v3817 = vsel %vm2878, %v3816, %v3815
        %v3818 = vperm.slane %v2198, %v2880
        %v3819 = vsel %vm2882, %v3818, %v3817
        %v3820 = vperm.slane %v2201, %v2884
        %v3821 = vsel %vm2886, %v3820, %v3819
        %v3822 = vperm.slane %v2204, %v2888
        %v3823 = vsel %vm2890, %v3822, %v3821
        %v3824 = vperm.slane %v2207, %v2892
        %v3825 = vsel %vm2894, %v3824, %v3823
        %v3826 = vperm.slane %v2210, %v2834
        %v3827 = vperm.slane %v2213, %v2836
        %v3828 = vsel %vm2838, %v3827, %v3826
        %v3829 = vperm.slane %v2216, %v2840
        %v3830 = vsel %vm2842, %v3829, %v3828
        %v3831 = vperm.slane %v2219, %v2844
        %v3832 = vsel %vm2846, %v3831, %v3830
        %v3833 = vperm.slane %v2222, %v2848
        %v3834 = vsel %vm2850, %v3833, %v3832
        %v3835 = vperm.slane %v2225, %v2852
        %v3836 = vsel %vm2854, %v3835, %v3834
        %v3837 = vperm.slane %v2228, %v2856
        %v3838 = vsel %vm2858, %v3837, %v3836
        %v3839 = vperm.slane %v2231, %v2860
        %v3840 = vsel %vm2862, %v3839, %v3838
        %v3841 = vperm.slane %v2234, %v2864
        %v3842 = vsel %vm2866, %v3841, %v3840
        %v3843 = vperm.slane %v2237, %v2868
        %v3844 = vsel %vm2870, %v3843, %v3842
        %v3845 = vperm.slane %v2240, %v2872
        %v3846 = vsel %vm2874, %v3845, %v3844
        %v3847 = vperm.slane %v2243, %v2876
        %v3848 = vsel %vm2878, %v3847, %v3846
        %v3849 = vperm.slane %v2246, %v2880
        %v3850 = vsel %vm2882, %v3849, %v3848
        %v3851 = vperm.slane %v2249, %v2884
        %v3852 = vsel %vm2886, %v3851, %v3850
        %v3853 = vperm.slane %v2252, %v2888
        %v3854 = vsel %vm2890, %v3853, %v3852
        %v3855 = vperm.slane %v2255, %v2892
        %v3856 = vsel %vm2894, %v3855, %v3854
        %vm3857 = vcmask 1041409
        %v3858 = vsel %vm3857, %v3019, %v2895
        %vm3859 = vcmask 1042434
        %v3860 = vsel %vm3859, %v3143, %v3858
        %vm3861 = vcmask 1043459
        %v3862 = vsel %vm3861, %v3267, %v3860
        %vm3863 = vcmask 1044484
        %v3864 = vsel %vm3863, %v3391, %v3862
        %vm3865 = vcmask 1045509
        %v3866 = vsel %vm3865, %v3515, %v3864
        %vm3867 = vcmask 1046534
        %v3868 = vsel %vm3867, %v3639, %v3866
        %vm3869 = vcmask 1047559
        %v3870 = vsel %vm3869, %v3763, %v3868
        %v3871 = vsel %vm3857, %v3050, %v2926
        %v3872 = vsel %vm3859, %v3174, %v3871
        %v3873 = vsel %vm3861, %v3298, %v3872
        %v3874 = vsel %vm3863, %v3422, %v3873
        %v3875 = vsel %vm3865, %v3546, %v3874
        %v3876 = vsel %vm3867, %v3670, %v3875
        %v3877 = vsel %vm3869, %v3794, %v3876
        %v3878 = vsel %vm3857, %v3081, %v2957
        %v3879 = vsel %vm3859, %v3205, %v3878
        %v3880 = vsel %vm3861, %v3329, %v3879
        %v3881 = vsel %vm3863, %v3453, %v3880
        %v3882 = vsel %vm3865, %v3577, %v3881
        %v3883 = vsel %vm3867, %v3701, %v3882
        %v3884 = vsel %vm3869, %v3825, %v3883
        %v3885 = vsel %vm3857, %v3112, %v2988
        %v3886 = vsel %vm3859, %v3236, %v3885
        %v3887 = vsel %vm3861, %v3360, %v3886
        %v3888 = vsel %vm3863, %v3484, %v3887
        %v3889 = vsel %vm3865, %v3608, %v3888
        %v3890 = vsel %vm3867, %v3732, %v3889
        %v3891 = vsel %vm3869, %v3856, %v3890
        %3896 = vmatpush.msra.mxu0 %v2272
        %3897 = vmatpush.msra.mxu0 %v2271
        %3898 = vmatpush.msra.mxu0 %v2270
        %3899 = vmatpush.msra.mxu0 %v2269
        %3900 = vmatpush.msra.mxu0 %v2268
        %3901 = vmatpush.msra.mxu0 %v2267
        %3902 = vmatpush.msra.mxu0 %v2266
        %3903 = vmatpush.msra.mxu0 %v2265
        %3904 = vmatpush.msra.mxu0 %v2264
        %3905 = vmatpush.msra.mxu0 %v2263
        %3906 = vmatpush.msra.mxu0 %v2262
        %3907 = vmatpush.msra.mxu0 %v2261
        %3908 = vmatpush.msra.mxu0 %v2260
        %3909 = vmatpush.msra.mxu0 %v2259
        %3910 = vmatpush.msra.mxu0 %v2258
        %3911 = vmatpush.msra.mxu0 %v2257
        %3912 = vmatmul.f32.gmra.mxu0 %v3870
        %v3913 = vpop.f32.mrf.mxu0
        %v3914 = vadd.f32 0.0, %v3913
        %3915 = vdwg.mxu0
        %3916 = vmatpush.msra.mxu0 %v2288
        %3917 = vmatpush.msra.mxu0 %v2287
        %3918 = vmatpush.msra.mxu0 %v2286
        %3919 = vmatpush.msra.mxu0 %v2285
        %3920 = vmatpush.msra.mxu0 %v2284
        %3921 = vmatpush.msra.mxu0 %v2283
        %3922 = vmatpush.msra.mxu0 %v2282
        %3923 = vmatpush.msra.mxu0 %v2281
        %3924 = vmatpush.msra.mxu0 %v2280
        %3925 = vmatpush.msra.mxu0 %v2279
        %3926 = vmatpush.msra.mxu0 %v2278
        %3927 = vmatpush.msra.mxu0 %v2277
        %3928 = vmatpush.msra.mxu0 %v2276
        %3929 = vmatpush.msra.mxu0 %v2275
        %3930 = vmatpush.msra.mxu0 %v2274
        %3931 = vmatpush.msra.mxu0 %v2273
        %3932 = vmatmul.f32.gmra.mxu0 %v3877
        %v3933 = vpop.f32.mrf.mxu0
        %v3934 = vadd.f32 %v3914, %v3933
        %3935 = vdwg.mxu0
        %3936 = vmatpush.msra.mxu0 %v2304
        %3937 = vmatpush.msra.mxu0 %v2303
        %3938 = vmatpush.msra.mxu0 %v2302
        %3939 = vmatpush.msra.mxu0 %v2301
        %3940 = vmatpush.msra.mxu0 %v2300
        %3941 = vmatpush.msra.mxu0 %v2299
        %3942 = vmatpush.msra.mxu0 %v2298
        %3943 = vmatpush.msra.mxu0 %v2297
        %3944 = vmatpush.msra.mxu0 %v2296
        %3945 = vmatpush.msra.mxu0 %v2295
        %3946 = vmatpush.msra.mxu0 %v2294
        %3947 = vmatpush.msra.mxu0 %v2293
        %3948 = vmatpush.msra.mxu0 %v2292
        %3949 = vmatpush.msra.mxu0 %v2291
        %3950 = vmatpush.msra.mxu0 %v2290
        %3951 = vmatpush.msra.mxu0 %v2289
        %3952 = vmatmul.f32.gmra.mxu0 %v3884
        %v3953 = vpop.f32.mrf.mxu0
        %v3954 = vadd.f32 %v3934, %v3953
        %3955 = vdwg.mxu0
        %3956 = vmatpush.msra.mxu0 %v2320
        %3957 = vmatpush.msra.mxu0 %v2319
        %3958 = vmatpush.msra.mxu0 %v2318
        %3959 = vmatpush.msra.mxu0 %v2317
        %3960 = vmatpush.msra.mxu0 %v2316
        %3961 = vmatpush.msra.mxu0 %v2315
        %3962 = vmatpush.msra.mxu0 %v2314
        %3963 = vmatpush.msra.mxu0 %v2313
        %3964 = vmatpush.msra.mxu0 %v2312
        %3965 = vmatpush.msra.mxu0 %v2311
        %3966 = vmatpush.msra.mxu0 %v2310
        %3967 = vmatpush.msra.mxu0 %v2309
        %3968 = vmatpush.msra.mxu0 %v2308
        %3969 = vmatpush.msra.mxu0 %v2307
        %3970 = vmatpush.msra.mxu0 %v2306
        %3971 = vmatpush.msra.mxu0 %v2305
        %3972 = vmatmul.f32.gmra.mxu0 %v3891
        %v3973 = vpop.f32.mrf.mxu0
        %v3974 = vadd.f32 %v3954, %v3973
        %3975 = vdwg.mxu0
        %v3976 = vadd.f32 %v2256, %v3974
        %3977 = vst [vmem:[#allocation2] sm:$0xff] %v3976
        // Predicated region
        $region37: #{_mhcls_pallas.1} parent=31 // pred_check
          %p3978 = pneg %p202
        $region38: #{_mhcls_pallas.1} parent=31 // pred_check_branch
          %3980 = sbr.rel (%p3978) target = $region40
        $region39: #{_mhcls_pallas.1} parent=31 // pred_region
          %v3981 = vld [vmem:[#allocation2] sm:$0xff]
          %v3982 = vld [vmem:[%s2] sm:$0x1]
          %v3984 = vperm.slane %v3982, 0
          %v3986 = vadd.f32 %v3981, %v3984
          %3987 = vst [vmem:[%s189] sm:$0xff] %v3986
        $region40: #{_mhcls_pallas.1} parent=31 // pred_fallthru
          _
        %s3988 = sand.u32 %s107, 1
        %s3989 = scalar_lea.sflag [#allocation4], %s3988
        %s3990 = sand.u32 %s107, 1
        %s3991 = smul.addr %s3990, 8
        %s3992 = scalar_lea.vmem [#allocation3], %s3991
        // Predicated region
        $region41: #{_mhcls_pallas.1} parent=31 // pred_check
          %p3993 = pneg %p117
        $region42: #{_mhcls_pallas.1} parent=31 // pred_check_branch
          %3995 = sbr.rel (%p3993) target = $region44
        $region43: #{_mhcls_pallas.1} parent=31 // pred_region
          %3997 = vsyncadd %s3989, 0
          %s3998 = smul.addr %s21, 8
          %s3999 = scalar_lea.hbm %s3, %s3998
          %s4001 = sshll.u32 %s3992, 4
          %s4002 = int_to_ptr.vmem [resolvable:$true] %s4001
          %s4003 = sshll.u32 %s3999, 4
          %s4004 = int_to_ptr.hbm [resolvable:$true] %s4003
          %4006 = dma.vmem_to_hbm [thread:$0]  %s4002, 128, %s4004, %s3989
        $region44: #{_mhcls_pallas.1} parent=31 // pred_fallthru
          _
      $region32: #{_mhcls_pallas.1} parent=5 // pred_fallthru
        _
      %p4007 = scmp.le.s32.totalorder 2, %s12
      // Predicated region
      $region45: #{_mhcls_pallas.1} parent=5 // pred_check
        %p4008 = pneg %p4007
      $region46: #{_mhcls_pallas.1} parent=5 // pred_check_branch
        %4010 = sbr.rel (%p4008) target = $region48
      $region47: #{_mhcls_pallas.1} parent=5 // pred_region
        %s4011 = ssub.s32 %s12, 2
        // Predicated region
        $region49: #{_mhcls_pallas.1} parent=47 // pred_check
          %p4012 = pneg %p123
        $region50: #{_mhcls_pallas.1} parent=47 // pred_check_branch
          %4014 = sbr.rel (%p4012) target = $region52
        $region51: #{_mhcls_pallas.1} parent=47 // pred_region
          %s4015 = sand.u32 %s108, 1
          %s4016 = scalar_lea.sflag [#allocation4], %s4015
          %s4017 = sand.u32 %s108, 1
          %s4018 = smul.addr %s4017, 8
          %s4019 = scalar_lea.vmem [#allocation3], %s4018
          %4021 = dma.done %s4016, 128
        $region52: #{_mhcls_pallas.1} parent=47 // pred_fallthru
          _
      $region48: #{_mhcls_pallas.1} parent=5 // pred_fallthru
        _
    $region6: #{_mhcls_pallas.1} parent=1 // loop_footer
      %s16 = sadd.s32 1, %s12
    $region7: #{_mhcls_pallas.1} parent=1 // loop_footer_branch
      %11 = sbr.rel target = $region3
    $region8: #{_mhcls_pallas.1} parent=1 // loop_exit
      _
    %4022 = vsyncpa [#allocation4], 1
    %s4023 = scalar_lea.sflag [#allocation4], 1
    %4024 = vsyncpa %s4023, 1

// kernel: _mhcls_pallas.1
$region0: #{_mhcls_pallas.1}
  #allocation0 [shape = 'u32[]', space=smem, size = 0x4, offset = 0x4, fixed_abs, tag = 'smem constant byte address 0x4 - core index']
  #allocation1 [shape = 'u32[72,128]{1,0:T(1,128)}', space=vmem, size = 0x9000, scoped, tag = 'internal scratch']
  #allocation2 [shape = 'f32[8,128]{1,0:T(8,128)}', space=vmem, size = 0x1000, scoped, tag = 'scratch operand']
  %s0 = inlined_call_operand.vmem [shape: f32[16,512,64], index: 0, kind: input, shape index: {}]
  %s1 = inlined_call_operand.vmem [shape: f32[512,128], index: 1, kind: input, shape index: {}]
  %s2 = inlined_call_operand.vmem [shape: f32[1,128], index: 2, kind: input, shape index: {}]
  %s3 = inlined_call_operand.hbm [shape: f32[16,128], index: 3, kind: output, shape index: {}]
  %s4 = sld [smem:[#allocation0]]
  $region53: #{_mhcls_pallas.1} parent=0
    _
  %s6 = ssub.s32 1, %s4
  %s7 = scalar_select 0, %s6, %s4
  $region1: #{_mhcls_pallas.1} parent=0
    #allocation3 [shape = 'u8[8192]{0}', space=vmem, size = 0x2000, scoped, tag = 'output window, operand 0']
    #allocation4 [shape = 's32[2]{0}', space=sflag, size = 0x8, scoped, tag = 'scoped memory for _mhcls_pallas.1']
    %8 = vsyncpa [#allocation4], 0
    %s9 = scalar_lea.sflag [#allocation4], 1
    %10 = vsyncpa %s9, 0
    loop: start=0, step=1, limit=4
    $region2: #{_mhcls_pallas.1} parent=1 // loop_pre_header
      _
    $region3: #{_mhcls_pallas.1} parent=1 // loop_header
      %s12 = sphi 0, %s16
      %p13 = scmp.ge.s32.totalorder %s12, 4
      %s19 = sphi 0, %s31
      %s20 = sphi 0, %s27
      %s21 = sphi 0, %s19
      %s22 = sphi 0, %s20
      %s23 = sphi 0, %s21
      %s24 = sphi 0, %s22
      %s36 = sphi 0, %s38
      %s39 = sphi 0, %s36
      %s40 = sphi 0, %s39
      %s56 = sphi 0, %s40
      %s60 = sphi 0, %s60
      %s62 = sphi 0, %s60
      %s63 = sphi 0, %s62
      %s77 = sphi 0, %s63
      %s81 = sphi 0, %s81
      %s83 = sphi 0, %s81
      %s84 = sphi 0, %s83
      %s98 = sphi 0, %s84
      %s104 = sphi 0, %s106
      %s107 = sphi 0, %s104
      %s108 = sphi 0, %s107
      %s124 = sphi 0, %s108
    $region4: #{_mhcls_pallas.1} parent=1 // loop_header_branch
      %15 = sbr.rel (%p13) target = $region8
    $region5: #{_mhcls_pallas.1} parent=1 // loop_body
      %s17 = ssub.s32 %s12, 1
      %s18 = ssub.s32 %s12, 2
      %s25 = sadd.s32 1, %s20
      %p26 = scmp.ge.s32.totalorder %s25, 1
      %s27 = scalar_select %p26, 0, %s25
      %s28 = sadd.s32 1, %s19
      %s29 = scalar_select %p26, %s28, %s19
      %p30 = scmp.ge.s32.totalorder %s29, 2
      %s31 = scalar_select %p30, 0, %s29
      %s32 = ssub.s32 %s19, %s31
      %s33 = ssub.s32 %s20, %s27
      %s34 = sor.u32 %s32, %s33
      %p35 = scmp.eq.s32.totalorder %s34, 0
      %s37 = sadd.s32 %s36, 1
      %s38 = scalar_select %p35, %s36, %s37
      %p41 = pneg %p35
      %p42 = scmp.eq.s32.totalorder %s12, 1
      %p43 = por %p41, %p42
      %p44 = scmp.ne.s32.totalorder %s36, %s39
      %p45 = scmp.eq.s32.totalorder %s12, 0
      %p46 = por %p44, %p45
      %p47 = scmp.ne.s32.totalorder %s36, %s39
      %p48 = scmp.eq.s32.totalorder %s17, 1
      %p49 = por %p47, %p48
      %p50 = scmp.ne.s32.totalorder %s39, %s40
      %p51 = scmp.eq.s32.totalorder %s17, 0
      %p52 = por %p50, %p51
      %p53 = scmp.ne.s32.totalorder %s39, %s40
      %p54 = scmp.eq.s32.totalorder %s18, 1
      %p55 = por %p53, %p54
      %p57 = scmp.ne.s32.totalorder %s40, %s56
      %p58 = scmp.eq.s32.totalorder %s18, 0
      %p59 = por %p57, %p58
      %s61 = sadd.s32 %s60, 1
      %p64 = scmp.eq.s32.totalorder %s12, 1
      %p65 = scmp.ne.s32.totalorder %s60, %s62
      %p66 = scmp.eq.s32.totalorder %s12, 0
      %p67 = por %p65, %p66
      %p68 = scmp.ne.s32.totalorder %s60, %s62
      %p69 = scmp.eq.s32.totalorder %s17, 1
      %p70 = por %p68, %p69
      %p71 = scmp.ne.s32.totalorder %s62, %s63
      %p72 = scmp.eq.s32.totalorder %s17, 0
      %p73 = por %p71, %p72
      %p74 = scmp.ne.s32.totalorder %s62, %s63
      %p75 = scmp.eq.s32.totalorder %s18, 1
      %p76 = por %p74, %p75
      %p78 = scmp.ne.s32.totalorder %s63, %s77
      %p79 = scmp.eq.s32.totalorder %s18, 0
      %p80 = por %p78, %p79
      %s82 = sadd.s32 %s81, 1
      %p85 = scmp.eq.s32.totalorder %s12, 1
      %p86 = scmp.ne.s32.totalorder %s81, %s83
      %p87 = scmp.eq.s32.totalorder %s12, 0
      %p88 = por %p86, %p87
      %p89 = scmp.ne.s32.totalorder %s81, %s83
      %p90 = scmp.eq.s32.totalorder %s17, 1
      %p91 = por %p89, %p90
      %p92 = scmp.ne.s32.totalorder %s83, %s84
      %p93 = scmp.eq.s32.totalorder %s17, 0
      %p94 = por %p92, %p93
      %p95 = scmp.ne.s32.totalorder %s83, %s84
      %p96 = scmp.eq.s32.totalorder %s18, 1
      %p97 = por %p95, %p96
      %p99 = scmp.ne.s32.totalorder %s84, %s98
      %p100 = scmp.eq.s32.totalorder %s18, 0
      %p101 = por %p99, %p100
      %s102 = ssub.s32 %s19, %s31
      %p103 = scmp.eq.s32.totalorder %s102, 0
      %s105 = sadd.s32 %s104, 1
      %s106 = scalar_select %p103, %s104, %s105
      %p109 = pneg %p103
      %p110 = scmp.eq.s32.totalorder %s12, 1
      %p111 = por %p109, %p110
      %p112 = scmp.ne.s32.totalorder %s104, %s107
      %p113 = scmp.eq.s32.totalorder %s12, 0
      %p114 = por %p112, %p113
      %p115 = scmp.ne.s32.totalorder %s104, %s107
      %p116 = scmp.eq.s32.totalorder %s17, 1
      %p117 = por %p115, %p116
      %p118 = scmp.ne.s32.totalorder %s107, %s108
      %p119 = scmp.eq.s32.totalorder %s17, 0
      %p120 = por %p118, %p119
      %p121 = scmp.ne.s32.totalorder %s107, %s108
      %p122 = scmp.eq.s32.totalorder %s18, 1
      %p123 = por %p121, %p122
      %p125 = scmp.ne.s32.totalorder %s108, %s124
      %p126 = scmp.eq.s32.totalorder %s18, 0
      %p127 = por %p125, %p126
      %p128 = scmp.le.s32.totalorder 1, %s12
      %p129 = scmp.lt.s32.totalorder %s12, 3
      %p130 = pnand %p128, %p129
      %p131 = pneg %p130
      // Predicated region
      $region9: #{_mhcls_pallas.1} parent=5 // pred_check
        _
      $region10: #{_mhcls_pallas.1} parent=5 // pred_check_branch
        %133 = sbr.rel (%p130) target = $region12
      $region11: #{_mhcls_pallas.1} parent=5 // pred_region
        %s134 = ssub.s32 %s12, 1
        // Predicated region
        $region13: #{_mhcls_pallas.1} parent=11 // pred_check
          %p135 = pneg %p73
        $region14: #{_mhcls_pallas.1} parent=11 // pred_check_branch
          %137 = sbr.rel (%p135) target = $region16
        $region15: #{_mhcls_pallas.1} parent=11 // pred_region
          _
        $region16: #{_mhcls_pallas.1} parent=11 // pred_fallthru
          _
        // Predicated region
        $region17: #{_mhcls_pallas.1} parent=11 // pred_check
          %p138 = pneg %p94
        $region18: #{_mhcls_pallas.1} parent=11 // pred_check_branch
          %140 = sbr.rel (%p138) target = $region20
        $region19: #{_mhcls_pallas.1} parent=11 // pred_region
          _
        $region20: #{_mhcls_pallas.1} parent=11 // pred_fallthru
          _
      $region12: #{_mhcls_pallas.1} parent=5 // pred_fallthru
        _
      %p141 = scmp.lt.s32.totalorder %s12, 2
      // Predicated region
      $region21: #{_mhcls_pallas.1} parent=5 // pred_check
        %p142 = pneg %p141
      $region22: #{_mhcls_pallas.1} parent=5 // pred_check_branch
        %144 = sbr.rel (%p142) target = $region24
      $region23: #{_mhcls_pallas.1} parent=5 // pred_region
        // Predicated region
        $region25: #{_mhcls_pallas.1} parent=23 // pred_check
          %p145 = pneg %p46
        $region26: #{_mhcls_pallas.1} parent=23 // pred_check_branch
          %147 = sbr.rel (%p145) target = $region28
        $region27: #{_mhcls_pallas.1} parent=23 // pred_region
          %s148 = smul.u32 8, %s19
          %s149 = smul.u32 64, %s20
          %p150 = scmp.lt.s32.totalorder %s148, 15
          %s151 = scalar_select %p150, %s148, 15
          %p152 = scmp.lt.s32.totalorder %s149, 63
          %s153 = scalar_select %p152, %s149, 63
          %s154 = smul.addr %s151, 64
          %s155 = sadd.s32 %s153, %s154
          %s156 = smul.addr %s155, 8
          %s157 = scalar_lea.vmem %s0, %s156
          %s158 = smul.u32 8, %s19
          %s159 = smul.u32 64, %s20
        $region28: #{_mhcls_pallas.1} parent=23 // pred_fallthru
          _
      $region24: #{_mhcls_pallas.1} parent=5 // pred_fallthru
        _
      %p160 = scmp.le.s32.totalorder 1, %s12
      %p161 = scmp.lt.s32.totalorder %s12, 3
      %p162 = pnand %p160, %p161
      %p163 = pneg %p162
      // Predicated region
      $region29: #{_mhcls_pallas.1} parent=5 // pred_check
        _
      $region30: #{_mhcls_pallas.1} parent=5 // pred_check_branch
        %165 = sbr.rel (%p162) target = $region32
      $region31: #{_mhcls_pallas.1} parent=5 // pred_region
        %s166 = ssub.s32 %s12, 1
        %s167 = smul.u32 8, %s21
        %s168 = smul.u32 64, %s22
        %p169 = scmp.lt.s32.totalorder %s167, 15
        %s170 = scalar_select %p169, %s167, 15
        %p171 = scmp.lt.s32.totalorder %s168, 63
        %s172 = scalar_select %p171, %s168, 63
        %s173 = smul.addr %s170, 64
        %s174 = sadd.s32 %s172, %s173
        %s175 = smul.addr %s174, 8
        %s176 = scalar_lea.vmem %s0, %s175
        %p177 = pneg %p52
        %p178 = pneg %p49
        %p179 = pneg %p73
        %p180 = pneg %p70
        %p181 = pneg %p94
        %p182 = pneg %p91
        %p183 = pneg %p120
        %p184 = pneg %p117
        %s185 = sand.u32 %s107, 1
        %s186 = scalar_lea.sflag [#allocation4], %s185
        %s187 = sand.u32 %s107, 1
        %s188 = smul.addr %s187, 8
        %s189 = scalar_lea.vmem [#allocation3], %s188
        %s190 = smul.u32 8, %s21
        %s191 = smul.u32 64, %s22
        %p192 = scmp.lt.s32.totalorder %s190, 15
        %s193 = scalar_select %p192, %s190, 15
        %p194 = scmp.lt.s32.totalorder %s191, 63
        %s195 = scalar_select %p194, %s191, 63
        %s196 = smul.addr %s193, 64
        %s197 = sadd.s32 %s195, %s196
        %s198 = smul.addr %s197, 8
        %s199 = scalar_lea.vmem %s0, %s198
        %s200 = smul.u32 8, %s21
        %s201 = smul.u32 64, %s22
        %p202 = scmp.eq.s32.totalorder %s22, 0
        // Predicated region
        $region33: #{_mhcls_pallas.1} parent=31 // pred_check
          %p203 = pneg %p202
        $region34: #{_mhcls_pallas.1} parent=31 // pred_check_branch
          %205 = sbr.rel (%p203) target = $region36
        $region35: #{_mhcls_pallas.1} parent=31 // pred_region
          %206 = vst [vmem:[#allocation2] sm:$0xff] 0.0
        $region36: #{_mhcls_pallas.1} parent=31 // pred_fallthru
          _
        %v207 = vld [vmem:[%s199] sm:$0xff]
        %v208 = vld [vmem:[%s199 + $0x8] sm:$0xff]
        %v209 = vld [vmem:[%s199 + $0x10] sm:$0xff]
        %v210 = vld [vmem:[%s199 + $0x18] sm:$0xff]
        %v211 = vld [vmem:[%s199 + $0x20] sm:$0xff]
        %v212 = vld [vmem:[%s199 + $0x28] sm:$0xff]
        %v213 = vld [vmem:[%s199 + $0x30] sm:$0xff]
        %v214 = vld [vmem:[%s199 + $0x38] sm:$0xff]
        %v215 = vld [vmem:[%s199 + $0x40] sm:$0xff]
        %v216 = vld [vmem:[%s199 + $0x48] sm:$0xff]
        %v217 = vld [vmem:[%s199 + $0x50] sm:$0xff]
        %v218 = vld [vmem:[%s199 + $0x58] sm:$0xff]
        %v219 = vld [vmem:[%s199 + $0x60] sm:$0xff]
        %v220 = vld [vmem:[%s199 + $0x68] sm:$0xff]
        %v221 = vld [vmem:[%s199 + $0x70] sm:$0xff]
        %v222 = vld [vmem:[%s199 + $0x78] sm:$0xff]
        %v223 = vld [vmem:[%s199 + $0x80] sm:$0xff]
        %v224 = vld [vmem:[%s199 + $0x88] sm:$0xff]
        %v225 = vld [vmem:[%s199 + $0x90] sm:$0xff]
        %v226 = vld [vmem:[%s199 + $0x98] sm:$0xff]
        %v227 = vld [vmem:[%s199 + $0xa0] sm:$0xff]
        %v228 = vld [vmem:[%s199 + $0xa8] sm:$0xff]
        %v229 = vld [vmem:[%s199 + $0xb0] sm:$0xff]
        %v230 = vld [vmem:[%s199 + $0xb8] sm:$0xff]
        %v231 = vld [vmem:[%s199 + $0xc0] sm:$0xff]
        %v232 = vld [vmem:[%s199 + $0xc8] sm:$0xff]
        %v233 = vld [vmem:[%s199 + $0xd0] sm:$0xff]
        %v234 = vld [vmem:[%s199 + $0xd8] sm:$0xff]
        %v235 = vld [vmem:[%s199 + $0xe0] sm:$0xff]
        %v236 = vld [vmem:[%s199 + $0xe8] sm:$0xff]
        %v237 = vld [vmem:[%s199 + $0xf0] sm:$0xff]
        %v238 = vld [vmem:[%s199 + $0xf8] sm:$0xff]
        %v239 = vld [vmem:[%s199 + $0x100] sm:$0xff]
        %v240 = vld [vmem:[%s199 + $0x108] sm:$0xff]
        %v241 = vld [vmem:[%s199 + $0x110] sm:$0xff]
        %v242 = vld [vmem:[%s199 + $0x118] sm:$0xff]
        %v243 = vld [vmem:[%s199 + $0x120] sm:$0xff]
        %v244 = vld [vmem:[%s199 + $0x128] sm:$0xff]
        %v245 = vld [vmem:[%s199 + $0x130] sm:$0xff]
        %v246 = vld [vmem:[%s199 + $0x138] sm:$0xff]
        %v247 = vld [vmem:[%s199 + $0x140] sm:$0xff]
        %v248 = vld [vmem:[%s199 + $0x148] sm:$0xff]
        %v249 = vld [vmem:[%s199 + $0x150] sm:$0xff]
        %v250 = vld [vmem:[%s199 + $0x158] sm:$0xff]
        %v251 = vld [vmem:[%s199 + $0x160] sm:$0xff]
        %v252 = vld [vmem:[%s199 + $0x168] sm:$0xff]
        %v253 = vld [vmem:[%s199 + $0x170] sm:$0xff]
        %v254 = vld [vmem:[%s199 + $0x178] sm:$0xff]
        %v255 = vld [vmem:[%s199 + $0x180] sm:$0xff]
        %v256 = vld [vmem:[%s199 + $0x188] sm:$0xff]
        %v257 = vld [vmem:[%s199 + $0x190] sm:$0xff]
        %v258 = vld [vmem:[%s199 + $0x198] sm:$0xff]
        %v259 = vld [vmem:[%s199 + $0x1a0] sm:$0xff]
        %v260 = vld [vmem:[%s199 + $0x1a8] sm:$0xff]
        %v261 = vld [vmem:[%s199 + $0x1b0] sm:$0xff]
        %v262 = vld [vmem:[%s199 + $0x1b8] sm:$0xff]
        %v263 = vld [vmem:[%s199 + $0x1c0] sm:$0xff]
        %v264 = vld [vmem:[%s199 + $0x1c8] sm:$0xff]
        %v265 = vld [vmem:[%s199 + $0x1d0] sm:$0xff]
        %v266 = vld [vmem:[%s199 + $0x1d8] sm:$0xff]
        %v267 = vld [vmem:[%s199 + $0x1e0] sm:$0xff]
        %v268 = vld [vmem:[%s199 + $0x1e8] sm:$0xff]
        %v269 = vld [vmem:[%s199 + $0x1f0] sm:$0xff]
        %v270 = vld [vmem:[%s199 + $0x1f8] sm:$0xff]
        %v271 = vld [vmem:[%s199 + $0x200] sm:$0xff]
        %v272 = vld [vmem:[%s199 + $0x208] sm:$0xff]
        %v273 = vld [vmem:[%s199 + $0x210] sm:$0xff]
        %v274 = vld [vmem:[%s199 + $0x218] sm:$0xff]
        %v275 = vld [vmem:[%s199 + $0x220] sm:$0xff]
        %v276 = vld [vmem:[%s199 + $0x228] sm:$0xff]
        %v277 = vld [vmem:[%s199 + $0x230] sm:$0xff]
        %v278 = vld [vmem:[%s199 + $0x238] sm:$0xff]
        %v279 = vld [vmem:[%s199 + $0x240] sm:$0xff]
        %v280 = vld [vmem:[%s199 + $0x248] sm:$0xff]
        %v281 = vld [vmem:[%s199 + $0x250] sm:$0xff]
        %v282 = vld [vmem:[%s199 + $0x258] sm:$0xff]
        %v283 = vld [vmem:[%s199 + $0x260] sm:$0xff]
        %v284 = vld [vmem:[%s199 + $0x268] sm:$0xff]
        %v285 = vld [vmem:[%s199 + $0x270] sm:$0xff]
        %v286 = vld [vmem:[%s199 + $0x278] sm:$0xff]
        %v287 = vld [vmem:[%s199 + $0x280] sm:$0xff]
        %v288 = vld [vmem:[%s199 + $0x288] sm:$0xff]
        %v289 = vld [vmem:[%s199 + $0x290] sm:$0xff]
        %v290 = vld [vmem:[%s199 + $0x298] sm:$0xff]
        %v291 = vld [vmem:[%s199 + $0x2a0] sm:$0xff]
        %v292 = vld [vmem:[%s199 + $0x2a8] sm:$0xff]
        %v293 = vld [vmem:[%s199 + $0x2b0] sm:$0xff]
        %v294 = vld [vmem:[%s199 + $0x2b8] sm:$0xff]
        %v295 = vld [vmem:[%s199 + $0x2c0] sm:$0xff]
        %v296 = vld [vmem:[%s199 + $0x2c8] sm:$0xff]
        %v297 = vld [vmem:[%s199 + $0x2d0] sm:$0xff]
        %v298 = vld [vmem:[%s199 + $0x2d8] sm:$0xff]
        %v299 = vld [vmem:[%s199 + $0x2e0] sm:$0xff]
        %v300 = vld [vmem:[%s199 + $0x2e8] sm:$0xff]
        %v301 = vld [vmem:[%s199 + $0x2f0] sm:$0xff]
        %v302 = vld [vmem:[%s199 + $0x2f8] sm:$0xff]
        %v303 = vld [vmem:[%s199 + $0x300] sm:$0xff]
        %v304 = vld [vmem:[%s199 + $0x308] sm:$0xff]
        %v305 = vld [vmem:[%s199 + $0x310] sm:$0xff]
        %v306 = vld [vmem:[%s199 + $0x318] sm:$0xff]
        %v307 = vld [vmem:[%s199 + $0x320] sm:$0xff]
        %v308 = vld [vmem:[%s199 + $0x328] sm:$0xff]
        %v309 = vld [vmem:[%s199 + $0x330] sm:$0xff]
        %v310 = vld [vmem:[%s199 + $0x338] sm:$0xff]
        %v311 = vld [vmem:[%s199 + $0x340] sm:$0xff]
        %v312 = vld [vmem:[%s199 + $0x348] sm:$0xff]
        %v313 = vld [vmem:[%s199 + $0x350] sm:$0xff]
        %v314 = vld [vmem:[%s199 + $0x358] sm:$0xff]
        %v315 = vld [vmem:[%s199 + $0x360] sm:$0xff]
        %v316 = vld [vmem:[%s199 + $0x368] sm:$0xff]
        %v317 = vld [vmem:[%s199 + $0x370] sm:$0xff]
        %v318 = vld [vmem:[%s199 + $0x378] sm:$0xff]
        %v319 = vld [vmem:[%s199 + $0x380] sm:$0xff]
        %v320 = vld [vmem:[%s199 + $0x388] sm:$0xff]
        %v321 = vld [vmem:[%s199 + $0x390] sm:$0xff]
        %v322 = vld [vmem:[%s199 + $0x398] sm:$0xff]
        %v323 = vld [vmem:[%s199 + $0x3a0] sm:$0xff]
        %v324 = vld [vmem:[%s199 + $0x3a8] sm:$0xff]
        %v325 = vld [vmem:[%s199 + $0x3b0] sm:$0xff]
        %v326 = vld [vmem:[%s199 + $0x3b8] sm:$0xff]
        %v327 = vld [vmem:[%s199 + $0x3c0] sm:$0xff]
        %v328 = vld [vmem:[%s199 + $0x3c8] sm:$0xff]
        %v329 = vld [vmem:[%s199 + $0x3d0] sm:$0xff]
        %v330 = vld [vmem:[%s199 + $0x3d8] sm:$0xff]
        %v331 = vld [vmem:[%s199 + $0x3e0] sm:$0xff]
        %v332 = vld [vmem:[%s199 + $0x3e8] sm:$0xff]
        %v333 = vld [vmem:[%s199 + $0x3f0] sm:$0xff]
        %v334 = vld [vmem:[%s199 + $0x3f8] sm:$0xff]
        %v335 = vld [vmem:[%s199 + $0x400] sm:$0xff]
        %v336 = vld [vmem:[%s199 + $0x408] sm:$0xff]
        %v337 = vld [vmem:[%s199 + $0x410] sm:$0xff]
        %v338 = vld [vmem:[%s199 + $0x418] sm:$0xff]
        %v339 = vld [vmem:[%s199 + $0x420] sm:$0xff]
        %v340 = vld [vmem:[%s199 + $0x428] sm:$0xff]
        %v341 = vld [vmem:[%s199 + $0x430] sm:$0xff]
        %v342 = vld [vmem:[%s199 + $0x438] sm:$0xff]
        %v343 = vld [vmem:[%s199 + $0x440] sm:$0xff]
        %v344 = vld [vmem:[%s199 + $0x448] sm:$0xff]
        %v345 = vld [vmem:[%s199 + $0x450] sm:$0xff]
        %v346 = vld [vmem:[%s199 + $0x458] sm:$0xff]
        %v347 = vld [vmem:[%s199 + $0x460] sm:$0xff]
        %v348 = vld [vmem:[%s199 + $0x468] sm:$0xff]
        %v349 = vld [vmem:[%s199 + $0x470] sm:$0xff]
        %v350 = vld [vmem:[%s199 + $0x478] sm:$0xff]
        %v351 = vld [vmem:[%s199 + $0x480] sm:$0xff]
        %v352 = vld [vmem:[%s199 + $0x488] sm:$0xff]
        %v353 = vld [vmem:[%s199 + $0x490] sm:$0xff]
        %v354 = vld [vmem:[%s199 + $0x498] sm:$0xff]
        %v355 = vld [vmem:[%s199 + $0x4a0] sm:$0xff]
        %v356 = vld [vmem:[%s199 + $0x4a8] sm:$0xff]
        %v357 = vld [vmem:[%s199 + $0x4b0] sm:$0xff]
        %v358 = vld [vmem:[%s199 + $0x4b8] sm:$0xff]
        %v359 = vld [vmem:[%s199 + $0x4c0] sm:$0xff]
        %v360 = vld [vmem:[%s199 + $0x4c8] sm:$0xff]
        %v361 = vld [vmem:[%s199 + $0x4d0] sm:$0xff]
        %v362 = vld [vmem:[%s199 + $0x4d8] sm:$0xff]
        %v363 = vld [vmem:[%s199 + $0x4e0] sm:$0xff]
        %v364 = vld [vmem:[%s199 + $0x4e8] sm:$0xff]
        %v365 = vld [vmem:[%s199 + $0x4f0] sm:$0xff]
        %v366 = vld [vmem:[%s199 + $0x4f8] sm:$0xff]
        %v367 = vld [vmem:[%s199 + $0x500] sm:$0xff]
        %v368 = vld [vmem:[%s199 + $0x508] sm:$0xff]
        %v369 = vld [vmem:[%s199 + $0x510] sm:$0xff]
        %v370 = vld [vmem:[%s199 + $0x518] sm:$0xff]
        %v371 = vld [vmem:[%s199 + $0x520] sm:$0xff]
        %v372 = vld [vmem:[%s199 + $0x528] sm:$0xff]
        %v373 = vld [vmem:[%s199 + $0x530] sm:$0xff]
        %v374 = vld [vmem:[%s199 + $0x538] sm:$0xff]
        %v375 = vld [vmem:[%s199 + $0x540] sm:$0xff]
        %v376 = vld [vmem:[%s199 + $0x548] sm:$0xff]
        %v377 = vld [vmem:[%s199 + $0x550] sm:$0xff]
        %v378 = vld [vmem:[%s199 + $0x558] sm:$0xff]
        %v379 = vld [vmem:[%s199 + $0x560] sm:$0xff]
        %v380 = vld [vmem:[%s199 + $0x568] sm:$0xff]
        %v381 = vld [vmem:[%s199 + $0x570] sm:$0xff]
        %v382 = vld [vmem:[%s199 + $0x578] sm:$0xff]
        %v383 = vld [vmem:[%s199 + $0x580] sm:$0xff]
        %v384 = vld [vmem:[%s199 + $0x588] sm:$0xff]
        %v385 = vld [vmem:[%s199 + $0x590] sm:$0xff]
        %v386 = vld [vmem:[%s199 + $0x598] sm:$0xff]
        %v387 = vld [vmem:[%s199 + $0x5a0] sm:$0xff]
        %v388 = vld [vmem:[%s199 + $0x5a8] sm:$0xff]
        %v389 = vld [vmem:[%s199 + $0x5b0] sm:$0xff]
        %v390 = vld [vmem:[%s199 + $0x5b8] sm:$0xff]
        %v391 = vld [vmem:[%s199 + $0x5c0] sm:$0xff]
        %v392 = vld [vmem:[%s199 + $0x5c8] sm:$0xff]
        %v393 = vld [vmem:[%s199 + $0x5d0] sm:$0xff]
        %v394 = vld [vmem:[%s199 + $0x5d8] sm:$0xff]
        %v395 = vld [vmem:[%s199 + $0x5e0] sm:$0xff]
        %v396 = vld [vmem:[%s199 + $0x5e8] sm:$0xff]
        %v397 = vld [vmem:[%s199 + $0x5f0] sm:$0xff]
        %v398 = vld [vmem:[%s199 + $0x5f8] sm:$0xff]
        %v399 = vld [vmem:[%s199 + $0x600] sm:$0xff]
        %v400 = vld [vmem:[%s199 + $0x608] sm:$0xff]
        %v401 = vld [vmem:[%s199 + $0x610] sm:$0xff]
        %v402 = vld [vmem:[%s199 + $0x618] sm:$0xff]
        %v403 = vld [vmem:[%s199 + $0x620] sm:$0xff]
        %v404 = vld [vmem:[%s199 + $0x628] sm:$0xff]
        %v405 = vld [vmem:[%s199 + $0x630] sm:$0xff]
        %v406 = vld [vmem:[%s199 + $0x638] sm:$0xff]
        %v407 = vld [vmem:[%s199 + $0x640] sm:$0xff]
        %v408 = vld [vmem:[%s199 + $0x648] sm:$0xff]
        %v409 = vld [vmem:[%s199 + $0x650] sm:$0xff]
        %v410 = vld [vmem:[%s199 + $0x658] sm:$0xff]
        %v411 = vld [vmem:[%s199 + $0x660] sm:$0xff]
        %v412 = vld [vmem:[%s199 + $0x668] sm:$0xff]
        %v413 = vld [vmem:[%s199 + $0x670] sm:$0xff]
        %v414 = vld [vmem:[%s199 + $0x678] sm:$0xff]
        %v415 = vld [vmem:[%s199 + $0x680] sm:$0xff]
        %v416 = vld [vmem:[%s199 + $0x688] sm:$0xff]
        %v417 = vld [vmem:[%s199 + $0x690] sm:$0xff]
        %v418 = vld [vmem:[%s199 + $0x698] sm:$0xff]
        %v419 = vld [vmem:[%s199 + $0x6a0] sm:$0xff]
        %v420 = vld [vmem:[%s199 + $0x6a8] sm:$0xff]
        %v421 = vld [vmem:[%s199 + $0x6b0] sm:$0xff]
        %v422 = vld [vmem:[%s199 + $0x6b8] sm:$0xff]
        %v423 = vld [vmem:[%s199 + $0x6c0] sm:$0xff]
        %v424 = vld [vmem:[%s199 + $0x6c8] sm:$0xff]
        %v425 = vld [vmem:[%s199 + $0x6d0] sm:$0xff]
        %v426 = vld [vmem:[%s199 + $0x6d8] sm:$0xff]
        %v427 = vld [vmem:[%s199 + $0x6e0] sm:$0xff]
        %v428 = vld [vmem:[%s199 + $0x6e8] sm:$0xff]
        %v429 = vld [vmem:[%s199 + $0x6f0] sm:$0xff]
        %v430 = vld [vmem:[%s199 + $0x6f8] sm:$0xff]
        %v431 = vld [vmem:[%s199 + $0x700] sm:$0xff]
        %v432 = vld [vmem:[%s199 + $0x708] sm:$0xff]
        %v433 = vld [vmem:[%s199 + $0x710] sm:$0xff]
        %v434 = vld [vmem:[%s199 + $0x718] sm:$0xff]
        %v435 = vld [vmem:[%s199 + $0x720] sm:$0xff]
        %v436 = vld [vmem:[%s199 + $0x728] sm:$0xff]
        %v437 = vld [vmem:[%s199 + $0x730] sm:$0xff]
        %v438 = vld [vmem:[%s199 + $0x738] sm:$0xff]
        %v439 = vld [vmem:[%s199 + $0x740] sm:$0xff]
        %v440 = vld [vmem:[%s199 + $0x748] sm:$0xff]
        %v441 = vld [vmem:[%s199 + $0x750] sm:$0xff]
        %v442 = vld [vmem:[%s199 + $0x758] sm:$0xff]
        %v443 = vld [vmem:[%s199 + $0x760] sm:$0xff]
        %v444 = vld [vmem:[%s199 + $0x768] sm:$0xff]
        %v445 = vld [vmem:[%s199 + $0x770] sm:$0xff]
        %v446 = vld [vmem:[%s199 + $0x778] sm:$0xff]
        %v447 = vld [vmem:[%s199 + $0x780] sm:$0xff]
        %v448 = vld [vmem:[%s199 + $0x788] sm:$0xff]
        %v449 = vld [vmem:[%s199 + $0x790] sm:$0xff]
        %v450 = vld [vmem:[%s199 + $0x798] sm:$0xff]
        %v451 = vld [vmem:[%s199 + $0x7a0] sm:$0xff]
        %v452 = vld [vmem:[%s199 + $0x7a8] sm:$0xff]
        %v453 = vld [vmem:[%s199 + $0x7b0] sm:$0xff]
        %v454 = vld [vmem:[%s199 + $0x7b8] sm:$0xff]
        %v455 = vld [vmem:[%s199 + $0x7c0] sm:$0xff]
        %v456 = vld [vmem:[%s199 + $0x7c8] sm:$0xff]
        %v457 = vld [vmem:[%s199 + $0x7d0] sm:$0xff]
        %v458 = vld [vmem:[%s199 + $0x7d8] sm:$0xff]
        %v459 = vld [vmem:[%s199 + $0x7e0] sm:$0xff]
        %v460 = vld [vmem:[%s199 + $0x7e8] sm:$0xff]
        %v461 = vld [vmem:[%s199 + $0x7f0] sm:$0xff]
        %v462 = vld [vmem:[%s199 + $0x7f8] sm:$0xff]
        %v463 = vld [vmem:[%s199 + $0x800] sm:$0xff]
        %v464 = vld [vmem:[%s199 + $0x808] sm:$0xff]
        %v465 = vld [vmem:[%s199 + $0x810] sm:$0xff]
        %v466 = vld [vmem:[%s199 + $0x818] sm:$0xff]
        %v467 = vld [vmem:[%s199 + $0x820] sm:$0xff]
        %v468 = vld [vmem:[%s199 + $0x828] sm:$0xff]
        %v469 = vld [vmem:[%s199 + $0x830] sm:$0xff]
        %v470 = vld [vmem:[%s199 + $0x838] sm:$0xff]
        %v471 = vld [vmem:[%s199 + $0x840] sm:$0xff]
        %v472 = vld [vmem:[%s199 + $0x848] sm:$0xff]
        %v473 = vld [vmem:[%s199 + $0x850] sm:$0xff]
        %v474 = vld [vmem:[%s199 + $0x858] sm:$0xff]
        %v475 = vld [vmem:[%s199 + $0x860] sm:$0xff]
        %v476 = vld [vmem:[%s199 + $0x868] sm:$0xff]
        %v477 = vld [vmem:[%s199 + $0x870] sm:$0xff]
        %v478 = vld [vmem:[%s199 + $0x878] sm:$0xff]
        %v479 = vld [vmem:[%s199 + $0x880] sm:$0xff]
        %v480 = vld [vmem:[%s199 + $0x888] sm:$0xff]
        %v481 = vld [vmem:[%s199 + $0x890] sm:$0xff]
        %v482 = vld [vmem:[%s199 + $0x898] sm:$0xff]
        %v483 = vld [vmem:[%s199 + $0x8a0] sm:$0xff]
        %v484 = vld [vmem:[%s199 + $0x8a8] sm:$0xff]
        %v485 = vld [vmem:[%s199 + $0x8b0] sm:$0xff]
        %v486 = vld [vmem:[%s199 + $0x8b8] sm:$0xff]
        %v487 = vld [vmem:[%s199 + $0x8c0] sm:$0xff]
        %v488 = vld [vmem:[%s199 + $0x8c8] sm:$0xff]
        %v489 = vld [vmem:[%s199 + $0x8d0] sm:$0xff]
        %v490 = vld [vmem:[%s199 + $0x8d8] sm:$0xff]
        %v491 = vld [vmem:[%s199 + $0x8e0] sm:$0xff]
        %v492 = vld [vmem:[%s199 + $0x8e8] sm:$0xff]
        %v493 = vld [vmem:[%s199 + $0x8f0] sm:$0xff]
        %v494 = vld [vmem:[%s199 + $0x8f8] sm:$0xff]
        %v495 = vld [vmem:[%s199 + $0x900] sm:$0xff]
        %v496 = vld [vmem:[%s199 + $0x908] sm:$0xff]
        %v497 = vld [vmem:[%s199 + $0x910] sm:$0xff]
        %v498 = vld [vmem:[%s199 + $0x918] sm:$0xff]
        %v499 = vld [vmem:[%s199 + $0x920] sm:$0xff]
        %v500 = vld [vmem:[%s199 + $0x928] sm:$0xff]
        %v501 = vld [vmem:[%s199 + $0x930] sm:$0xff]
        %v502 = vld [vmem:[%s199 + $0x938] sm:$0xff]
        %v503 = vld [vmem:[%s199 + $0x940] sm:$0xff]
        %v504 = vld [vmem:[%s199 + $0x948] sm:$0xff]
        %v505 = vld [vmem:[%s199 + $0x950] sm:$0xff]
        %v506 = vld [vmem:[%s199 + $0x958] sm:$0xff]
        %v507 = vld [vmem:[%s199 + $0x960] sm:$0xff]
        %v508 = vld [vmem:[%s199 + $0x968] sm:$0xff]
        %v509 = vld [vmem:[%s199 + $0x970] sm:$0xff]
        %v510 = vld [vmem:[%s199 + $0x978] sm:$0xff]
        %v511 = vld [vmem:[%s199 + $0x980] sm:$0xff]
        %v512 = vld [vmem:[%s199 + $0x988] sm:$0xff]
        %v513 = vld [vmem:[%s199 + $0x990] sm:$0xff]
        %v514 = vld [vmem:[%s199 + $0x998] sm:$0xff]
        %v515 = vld [vmem:[%s199 + $0x9a0] sm:$0xff]
        %v516 = vld [vmem:[%s199 + $0x9a8] sm:$0xff]
        %v517 = vld [vmem:[%s199 + $0x9b0] sm:$0xff]
        %v518 = vld [vmem:[%s199 + $0x9b8] sm:$0xff]
        %v519 = vld [vmem:[%s199 + $0x9c0] sm:$0xff]
        %v520 = vld [vmem:[%s199 + $0x9c8] sm:$0xff]
        %v521 = vld [vmem:[%s199 + $0x9d0] sm:$0xff]
        %v522 = vld [vmem:[%s199 + $0x9d8] sm:$0xff]
        %v523 = vld [vmem:[%s199 + $0x9e0] sm:$0xff]
        %v524 = vld [vmem:[%s199 + $0x9e8] sm:$0xff]
        %v525 = vld [vmem:[%s199 + $0x9f0] sm:$0xff]
        %v526 = vld [vmem:[%s199 + $0x9f8] sm:$0xff]
        %v527 = vld [vmem:[%s199 + $0xa00] sm:$0xff]
        %v528 = vld [vmem:[%s199 + $0xa08] sm:$0xff]
        %v529 = vld [vmem:[%s199 + $0xa10] sm:$0xff]
        %v530 = vld [vmem:[%s199 + $0xa18] sm:$0xff]
        %v531 = vld [vmem:[%s199 + $0xa20] sm:$0xff]
        %v532 = vld [vmem:[%s199 + $0xa28] sm:$0xff]
        %v533 = vld [vmem:[%s199 + $0xa30] sm:$0xff]
        %v534 = vld [vmem:[%s199 + $0xa38] sm:$0xff]
        %v535 = vld [vmem:[%s199 + $0xa40] sm:$0xff]
        %v536 = vld [vmem:[%s199 + $0xa48] sm:$0xff]
        %v537 = vld [vmem:[%s199 + $0xa50] sm:$0xff]
        %v538 = vld [vmem:[%s199 + $0xa58] sm:$0xff]
        %v539 = vld [vmem:[%s199 + $0xa60] sm:$0xff]
        %v540 = vld [vmem:[%s199 + $0xa68] sm:$0xff]
        %v541 = vld [vmem:[%s199 + $0xa70] sm:$0xff]
        %v542 = vld [vmem:[%s199 + $0xa78] sm:$0xff]
        %v543 = vld [vmem:[%s199 + $0xa80] sm:$0xff]
        %v544 = vld [vmem:[%s199 + $0xa88] sm:$0xff]
        %v545 = vld [vmem:[%s199 + $0xa90] sm:$0xff]
        %v546 = vld [vmem:[%s199 + $0xa98] sm:$0xff]
        %v547 = vld [vmem:[%s199 + $0xaa0] sm:$0xff]
        %v548 = vld [vmem:[%s199 + $0xaa8] sm:$0xff]
        %v549 = vld [vmem:[%s199 + $0xab0] sm:$0xff]
        %v550 = vld [vmem:[%s199 + $0xab8] sm:$0xff]
        %v551 = vld [vmem:[%s199 + $0xac0] sm:$0xff]
        %v552 = vld [vmem:[%s199 + $0xac8] sm:$0xff]
        %v553 = vld [vmem:[%s199 + $0xad0] sm:$0xff]
        %v554 = vld [vmem:[%s199 + $0xad8] sm:$0xff]
        %v555 = vld [vmem:[%s199 + $0xae0] sm:$0xff]
        %v556 = vld [vmem:[%s199 + $0xae8] sm:$0xff]
        %v557 = vld [vmem:[%s199 + $0xaf0] sm:$0xff]
        %v558 = vld [vmem:[%s199 + $0xaf8] sm:$0xff]
        %v559 = vld [vmem:[%s199 + $0xb00] sm:$0xff]
        %v560 = vld [vmem:[%s199 + $0xb08] sm:$0xff]
        %v561 = vld [vmem:[%s199 + $0xb10] sm:$0xff]
        %v562 = vld [vmem:[%s199 + $0xb18] sm:$0xff]
        %v563 = vld [vmem:[%s199 + $0xb20] sm:$0xff]
        %v564 = vld [vmem:[%s199 + $0xb28] sm:$0xff]
        %v565 = vld [vmem:[%s199 + $0xb30] sm:$0xff]
        %v566 = vld [vmem:[%s199 + $0xb38] sm:$0xff]
        %v567 = vld [vmem:[%s199 + $0xb40] sm:$0xff]
        %v568 = vld [vmem:[%s199 + $0xb48] sm:$0xff]
        %v569 = vld [vmem:[%s199 + $0xb50] sm:$0xff]
        %v570 = vld [vmem:[%s199 + $0xb58] sm:$0xff]
        %v571 = vld [vmem:[%s199 + $0xb60] sm:$0xff]
        %v572 = vld [vmem:[%s199 + $0xb68] sm:$0xff]
        %v573 = vld [vmem:[%s199 + $0xb70] sm:$0xff]
        %v574 = vld [vmem:[%s199 + $0xb78] sm:$0xff]
        %v575 = vld [vmem:[%s199 + $0xb80] sm:$0xff]
        %v576 = vld [vmem:[%s199 + $0xb88] sm:$0xff]
        %v577 = vld [vmem:[%s199 + $0xb90] sm:$0xff]
        %v578 = vld [vmem:[%s199 + $0xb98] sm:$0xff]
        %v579 = vld [vmem:[%s199 + $0xba0] sm:$0xff]
        %v580 = vld [vmem:[%s199 + $0xba8] sm:$0xff]
        %v581 = vld [vmem:[%s199 + $0xbb0] sm:$0xff]
        %v582 = vld [vmem:[%s199 + $0xbb8] sm:$0xff]
        %v583 = vld [vmem:[%s199 + $0xbc0] sm:$0xff]
        %v584 = vld [vmem:[%s199 + $0xbc8] sm:$0xff]
        %v585 = vld [vmem:[%s199 + $0xbd0] sm:$0xff]
        %v586 = vld [vmem:[%s199 + $0xbd8] sm:$0xff]
        %v587 = vld [vmem:[%s199 + $0xbe0] sm:$0xff]
        %v588 = vld [vmem:[%s199 + $0xbe8] sm:$0xff]
        %v589 = vld [vmem:[%s199 + $0xbf0] sm:$0xff]
        %v590 = vld [vmem:[%s199 + $0xbf8] sm:$0xff]
        %v591 = vld [vmem:[%s199 + $0xc00] sm:$0xff]
        %v592 = vld [vmem:[%s199 + $0xc08] sm:$0xff]
        %v593 = vld [vmem:[%s199 + $0xc10] sm:$0xff]
        %v594 = vld [vmem:[%s199 + $0xc18] sm:$0xff]
        %v595 = vld [vmem:[%s199 + $0xc20] sm:$0xff]
        %v596 = vld [vmem:[%s199 + $0xc28] sm:$0xff]
        %v597 = vld [vmem:[%s199 + $0xc30] sm:$0xff]
        %v598 = vld [vmem:[%s199 + $0xc38] sm:$0xff]
        %v599 = vld [vmem:[%s199 + $0xc40] sm:$0xff]
        %v600 = vld [vmem:[%s199 + $0xc48] sm:$0xff]
        %v601 = vld [vmem:[%s199 + $0xc50] sm:$0xff]
        %v602 = vld [vmem:[%s199 + $0xc58] sm:$0xff]
        %v603 = vld [vmem:[%s199 + $0xc60] sm:$0xff]
        %v604 = vld [vmem:[%s199 + $0xc68] sm:$0xff]
        %v605 = vld [vmem:[%s199 + $0xc70] sm:$0xff]
        %v606 = vld [vmem:[%s199 + $0xc78] sm:$0xff]
        %v607 = vld [vmem:[%s199 + $0xc80] sm:$0xff]
        %v608 = vld [vmem:[%s199 + $0xc88] sm:$0xff]
        %v609 = vld [vmem:[%s199 + $0xc90] sm:$0xff]
        %v610 = vld [vmem:[%s199 + $0xc98] sm:$0xff]
        %v611 = vld [vmem:[%s199 + $0xca0] sm:$0xff]
        %v612 = vld [vmem:[%s199 + $0xca8] sm:$0xff]
        %v613 = vld [vmem:[%s199 + $0xcb0] sm:$0xff]
        %v614 = vld [vmem:[%s199 + $0xcb8] sm:$0xff]
        %v615 = vld [vmem:[%s199 + $0xcc0] sm:$0xff]
        %v616 = vld [vmem:[%s199 + $0xcc8] sm:$0xff]
        %v617 = vld [vmem:[%s199 + $0xcd0] sm:$0xff]
        %v618 = vld [vmem:[%s199 + $0xcd8] sm:$0xff]
        %v619 = vld [vmem:[%s199 + $0xce0] sm:$0xff]
        %v620 = vld [vmem:[%s199 + $0xce8] sm:$0xff]
        %v621 = vld [vmem:[%s199 + $0xcf0] sm:$0xff]
        %v622 = vld [vmem:[%s199 + $0xcf8] sm:$0xff]
        %v623 = vld [vmem:[%s199 + $0xd00] sm:$0xff]
        %v624 = vld [vmem:[%s199 + $0xd08] sm:$0xff]
        %v625 = vld [vmem:[%s199 + $0xd10] sm:$0xff]
        %v626 = vld [vmem:[%s199 + $0xd18] sm:$0xff]
        %v627 = vld [vmem:[%s199 + $0xd20] sm:$0xff]
        %v628 = vld [vmem:[%s199 + $0xd28] sm:$0xff]
        %v629 = vld [vmem:[%s199 + $0xd30] sm:$0xff]
        %v630 = vld [vmem:[%s199 + $0xd38] sm:$0xff]
        %v631 = vld [vmem:[%s199 + $0xd40] sm:$0xff]
        %v632 = vld [vmem:[%s199 + $0xd48] sm:$0xff]
        %v633 = vld [vmem:[%s199 + $0xd50] sm:$0xff]
        %v634 = vld [vmem:[%s199 + $0xd58] sm:$0xff]
        %v635 = vld [vmem:[%s199 + $0xd60] sm:$0xff]
        %v636 = vld [vmem:[%s199 + $0xd68] sm:$0xff]
        %v637 = vld [vmem:[%s199 + $0xd70] sm:$0xff]
        %v638 = vld [vmem:[%s199 + $0xd78] sm:$0xff]
        %v639 = vld [vmem:[%s199 + $0xd80] sm:$0xff]
        %v640 = vld [vmem:[%s199 + $0xd88] sm:$0xff]
        %v641 = vld [vmem:[%s199 + $0xd90] sm:$0xff]
        %v642 = vld [vmem:[%s199 + $0xd98] sm:$0xff]
        %v643 = vld [vmem:[%s199 + $0xda0] sm:$0xff]
        %v644 = vld [vmem:[%s199 + $0xda8] sm:$0xff]
        %v645 = vld [vmem:[%s199 + $0xdb0] sm:$0xff]
        %v646 = vld [vmem:[%s199 + $0xdb8] sm:$0xff]
        %v647 = vld [vmem:[%s199 + $0xdc0] sm:$0xff]
        %v648 = vld [vmem:[%s199 + $0xdc8] sm:$0xff]
        %v649 = vld [vmem:[%s199 + $0xdd0] sm:$0xff]
        %v650 = vld [vmem:[%s199 + $0xdd8] sm:$0xff]
        %v651 = vld [vmem:[%s199 + $0xde0] sm:$0xff]
        %v652 = vld [vmem:[%s199 + $0xde8] sm:$0xff]
        %v653 = vld [vmem:[%s199 + $0xdf0] sm:$0xff]
        %v654 = vld [vmem:[%s199 + $0xdf8] sm:$0xff]
        %v655 = vld [vmem:[%s199 + $0xe00] sm:$0xff]
        %v656 = vld [vmem:[%s199 + $0xe08] sm:$0xff]
        %v657 = vld [vmem:[%s199 + $0xe10] sm:$0xff]
        %v658 = vld [vmem:[%s199 + $0xe18] sm:$0xff]
        %v659 = vld [vmem:[%s199 + $0xe20] sm:$0xff]
        %v660 = vld [vmem:[%s199 + $0xe28] sm:$0xff]
        %v661 = vld [vmem:[%s199 + $0xe30] sm:$0xff]
        %v662 = vld [vmem:[%s199 + $0xe38] sm:$0xff]
        %v663 = vld [vmem:[%s199 + $0xe40] sm:$0xff]
        %v664 = vld [vmem:[%s199 + $0xe48] sm:$0xff]
        %v665 = vld [vmem:[%s199 + $0xe50] sm:$0xff]
        %v666 = vld [vmem:[%s199 + $0xe58] sm:$0xff]
        %v667 = vld [vmem:[%s199 + $0xe60] sm:$0xff]
        %v668 = vld [vmem:[%s199 + $0xe68] sm:$0xff]
        %v669 = vld [vmem:[%s199 + $0xe70] sm:$0xff]
        %v670 = vld [vmem:[%s199 + $0xe78] sm:$0xff]
        %v671 = vld [vmem:[%s199 + $0xe80] sm:$0xff]
        %v672 = vld [vmem:[%s199 + $0xe88] sm:$0xff]
        %v673 = vld [vmem:[%s199 + $0xe90] sm:$0xff]
        %v674 = vld [vmem:[%s199 + $0xe98] sm:$0xff]
        %v675 = vld [vmem:[%s199 + $0xea0] sm:$0xff]
        %v676 = vld [vmem:[%s199 + $0xea8] sm:$0xff]
        %v677 = vld [vmem:[%s199 + $0xeb0] sm:$0xff]
        %v678 = vld [vmem:[%s199 + $0xeb8] sm:$0xff]
        %v679 = vld [vmem:[%s199 + $0xec0] sm:$0xff]
        %v680 = vld [vmem:[%s199 + $0xec8] sm:$0xff]
        %v681 = vld [vmem:[%s199 + $0xed0] sm:$0xff]
        %v682 = vld [vmem:[%s199 + $0xed8] sm:$0xff]
        %v683 = vld [vmem:[%s199 + $0xee0] sm:$0xff]
        %v684 = vld [vmem:[%s199 + $0xee8] sm:$0xff]
        %v685 = vld [vmem:[%s199 + $0xef0] sm:$0xff]
        %v686 = vld [vmem:[%s199 + $0xef8] sm:$0xff]
        %v687 = vld [vmem:[%s199 + $0xf00] sm:$0xff]
        %v688 = vld [vmem:[%s199 + $0xf08] sm:$0xff]
        %v689 = vld [vmem:[%s199 + $0xf10] sm:$0xff]
        %v690 = vld [vmem:[%s199 + $0xf18] sm:$0xff]
        %v691 = vld [vmem:[%s199 + $0xf20] sm:$0xff]
        %v692 = vld [vmem:[%s199 + $0xf28] sm:$0xff]
        %v693 = vld [vmem:[%s199 + $0xf30] sm:$0xff]
        %v694 = vld [vmem:[%s199 + $0xf38] sm:$0xff]
        %v695 = vld [vmem:[%s199 + $0xf40] sm:$0xff]
        %v696 = vld [vmem:[%s199 + $0xf48] sm:$0xff]
        %v697 = vld [vmem:[%s199 + $0xf50] sm:$0xff]
        %v698 = vld [vmem:[%s199 + $0xf58] sm:$0xff]
        %v699 = vld [vmem:[%s199 + $0xf60] sm:$0xff]
        %v700 = vld [vmem:[%s199 + $0xf68] sm:$0xff]
        %v701 = vld [vmem:[%s199 + $0xf70] sm:$0xff]
        %v702 = vld [vmem:[%s199 + $0xf78] sm:$0xff]
        %v703 = vld [vmem:[%s199 + $0xf80] sm:$0xff]
        %v704 = vld [vmem:[%s199 + $0xf88] sm:$0xff]
        %v705 = vld [vmem:[%s199 + $0xf90] sm:$0xff]
        %v706 = vld [vmem:[%s199 + $0xf98] sm:$0xff]
        %v707 = vld [vmem:[%s199 + $0xfa0] sm:$0xff]
        %v708 = vld [vmem:[%s199 + $0xfa8] sm:$0xff]
        %v709 = vld [vmem:[%s199 + $0xfb0] sm:$0xff]
        %v710 = vld [vmem:[%s199 + $0xfb8] sm:$0xff]
        %v711 = vld [vmem:[%s199 + $0xfc0] sm:$0xff]
        %v712 = vld [vmem:[%s199 + $0xfc8] sm:$0xff]
        %v713 = vld [vmem:[%s199 + $0xfd0] sm:$0xff]
        %v714 = vld [vmem:[%s199 + $0xfd8] sm:$0xff]
        %v715 = vld [vmem:[%s199 + $0xfe0] sm:$0xff]
        %v716 = vld [vmem:[%s199 + $0xfe8] sm:$0xff]
        %v717 = vld [vmem:[%s199 + $0xff0] sm:$0xff]
        %v718 = vld [vmem:[%s199 + $0xff8] sm:$0xff]
        %vm719 = vcmask 523264
        %v720 = vsel %vm719, %v207, -inf
        %721 = vmax.xlane.f32.xlu0 %v720
        %v722 = vpop.xlane.xlu0 %721
        %v723 = vsel %vm719, %v208, -inf
        %724 = vmax.xlane.f32.xlu0 %v723
        %v725 = vpop.xlane.xlu0 %724
        %v726 = vsel %vm719, %v209, -inf
        %727 = vmax.xlane.f32.xlu0 %v726
        %v728 = vpop.xlane.xlu0 %727
        %v729 = vsel %vm719, %v210, -inf
        %730 = vmax.xlane.f32.xlu0 %v729
        %v731 = vpop.xlane.xlu0 %730
        %v732 = vsel %vm719, %v211, -inf
        %733 = vmax.xlane.f32.xlu0 %v732
        %v734 = vpop.xlane.xlu0 %733
        %v735 = vsel %vm719, %v212, -inf
        %736 = vmax.xlane.f32.xlu0 %v735
        %v737 = vpop.xlane.xlu0 %736
        %v738 = vsel %vm719, %v213, -inf
        %739 = vmax.xlane.f32.xlu0 %v738
        %v740 = vpop.xlane.xlu0 %739
        %v741 = vsel %vm719, %v214, -inf
        %742 = vmax.xlane.f32.xlu0 %v741
        %v743 = vpop.xlane.xlu0 %742
        %v744 = vsel %vm719, %v215, -inf
        %745 = vmax.xlane.f32.xlu0 %v744
        %v746 = vpop.xlane.xlu0 %745
        %v747 = vsel %vm719, %v216, -inf
        %748 = vmax.xlane.f32.xlu0 %v747
        %v749 = vpop.xlane.xlu0 %748
        %v750 = vsel %vm719, %v217, -inf
        %751 = vmax.xlane.f32.xlu0 %v750
        %v752 = vpop.xlane.xlu0 %751
        %v753 = vsel %vm719, %v218, -inf
        %754 = vmax.xlane.f32.xlu0 %v753
        %v755 = vpop.xlane.xlu0 %754
        %v756 = vsel %vm719, %v219, -inf
        %757 = vmax.xlane.f32.xlu0 %v756
        %v758 = vpop.xlane.xlu0 %757
        %v759 = vsel %vm719, %v220, -inf
        %760 = vmax.xlane.f32.xlu0 %v759
        %v761 = vpop.xlane.xlu0 %760
        %v762 = vsel %vm719, %v221, -inf
        %763 = vmax.xlane.f32.xlu0 %v762
        %v764 = vpop.xlane.xlu0 %763
        %v765 = vsel %vm719, %v222, -inf
        %766 = vmax.xlane.f32.xlu0 %v765
        %v767 = vpop.xlane.xlu0 %766
        %v768 = vsel %vm719, %v223, -inf
        %769 = vmax.xlane.f32.xlu0 %v768
        %v770 = vpop.xlane.xlu0 %769
        %v771 = vsel %vm719, %v224, -inf
        %772 = vmax.xlane.f32.xlu0 %v771
        %v773 = vpop.xlane.xlu0 %772
        %v774 = vsel %vm719, %v225, -inf
        %775 = vmax.xlane.f32.xlu0 %v774
        %v776 = vpop.xlane.xlu0 %775
        %v777 = vsel %vm719, %v226, -inf
        %778 = vmax.xlane.f32.xlu0 %v777
        %v779 = vpop.xlane.xlu0 %778
        %v780 = vsel %vm719, %v227, -inf
        %781 = vmax.xlane.f32.xlu0 %v780
        %v782 = vpop.xlane.xlu0 %781
        %v783 = vsel %vm719, %v228, -inf
        %784 = vmax.xlane.f32.xlu0 %v783
        %v785 = vpop.xlane.xlu0 %784
        %v786 = vsel %vm719, %v229, -inf
        %787 = vmax.xlane.f32.xlu0 %v786
        %v788 = vpop.xlane.xlu0 %787
        %v789 = vsel %vm719, %v230, -inf
        %790 = vmax.xlane.f32.xlu0 %v789
        %v791 = vpop.xlane.xlu0 %790
        %v792 = vsel %vm719, %v231, -inf
        %793 = vmax.xlane.f32.xlu0 %v792
        %v794 = vpop.xlane.xlu0 %793
        %v795 = vsel %vm719, %v232, -inf
        %796 = vmax.xlane.f32.xlu0 %v795
        %v797 = vpop.xlane.xlu0 %796
        %v798 = vsel %vm719, %v233, -inf
        %799 = vmax.xlane.f32.xlu0 %v798
        %v800 = vpop.xlane.xlu0 %799
        %v801 = vsel %vm719, %v234, -inf
        %802 = vmax.xlane.f32.xlu0 %v801
        %v803 = vpop.xlane.xlu0 %802
        %v804 = vsel %vm719, %v235, -inf
        %805 = vmax.xlane.f32.xlu0 %v804
        %v806 = vpop.xlane.xlu0 %805
        %v807 = vsel %vm719, %v236, -inf
        %808 = vmax.xlane.f32.xlu0 %v807
        %v809 = vpop.xlane.xlu0 %808
        %v810 = vsel %vm719, %v237, -inf
        %811 = vmax.xlane.f32.xlu0 %v810
        %v812 = vpop.xlane.xlu0 %811
        %v813 = vsel %vm719, %v238, -inf
        %814 = vmax.xlane.f32.xlu0 %v813
        %v815 = vpop.xlane.xlu0 %814
        %v816 = vsel %vm719, %v239, -inf
        %817 = vmax.xlane.f32.xlu0 %v816
        %v818 = vpop.xlane.xlu0 %817
        %v819 = vsel %vm719, %v240, -inf
        %820 = vmax.xlane.f32.xlu0 %v819
        %v821 = vpop.xlane.xlu0 %820
        %v822 = vsel %vm719, %v241, -inf
        %823 = vmax.xlane.f32.xlu0 %v822
        %v824 = vpop.xlane.xlu0 %823
        %v825 = vsel %vm719, %v242, -inf
        %826 = vmax.xlane.f32.xlu0 %v825
        %v827 = vpop.xlane.xlu0 %826
        %v828 = vsel %vm719, %v243, -inf
        %829 = vmax.xlane.f32.xlu0 %v828
        %v830 = vpop.xlane.xlu0 %829
        %v831 = vsel %vm719, %v244, -inf
        %832 = vmax.xlane.f32.xlu0 %v831
        %v833 = vpop.xlane.xlu0 %832
        %v834 = vsel %vm719, %v245, -inf
        %835 = vmax.xlane.f32.xlu0 %v834
        %v836 = vpop.xlane.xlu0 %835
        %v837 = vsel %vm719, %v246, -inf
        %838 = vmax.xlane.f32.xlu0 %v837
        %v839 = vpop.xlane.xlu0 %838
        %v840 = vsel %vm719, %v247, -inf
        %841 = vmax.xlane.f32.xlu0 %v840
        %v842 = vpop.xlane.xlu0 %841
        %v843 = vsel %vm719, %v248, -inf
        %844 = vmax.xlane.f32.xlu0 %v843
        %v845 = vpop.xlane.xlu0 %844
        %v846 = vsel %vm719, %v249, -inf
        %847 = vmax.xlane.f32.xlu0 %v846
        %v848 = vpop.xlane.xlu0 %847
        %v849 = vsel %vm719, %v250, -inf
        %850 = vmax.xlane.f32.xlu0 %v849
        %v851 = vpop.xlane.xlu0 %850
        %v852 = vsel %vm719, %v251, -inf
        %853 = vmax.xlane.f32.xlu0 %v852
        %v854 = vpop.xlane.xlu0 %853
        %v855 = vsel %vm719, %v252, -inf
        %856 = vmax.xlane.f32.xlu0 %v855
        %v857 = vpop.xlane.xlu0 %856
        %v858 = vsel %vm719, %v253, -inf
        %859 = vmax.xlane.f32.xlu0 %v858
        %v860 = vpop.xlane.xlu0 %859
        %v861 = vsel %vm719, %v254, -inf
        %862 = vmax.xlane.f32.xlu0 %v861
        %v863 = vpop.xlane.xlu0 %862
        %v864 = vsel %vm719, %v255, -inf
        %865 = vmax.xlane.f32.xlu0 %v864
        %v866 = vpop.xlane.xlu0 %865
        %v867 = vsel %vm719, %v256, -inf
        %868 = vmax.xlane.f32.xlu0 %v867
        %v869 = vpop.xlane.xlu0 %868
        %v870 = vsel %vm719, %v257, -inf
        %871 = vmax.xlane.f32.xlu0 %v870
        %v872 = vpop.xlane.xlu0 %871
        %v873 = vsel %vm719, %v258, -inf
        %874 = vmax.xlane.f32.xlu0 %v873
        %v875 = vpop.xlane.xlu0 %874
        %v876 = vsel %vm719, %v259, -inf
        %877 = vmax.xlane.f32.xlu0 %v876
        %v878 = vpop.xlane.xlu0 %877
        %v879 = vsel %vm719, %v260, -inf
        %880 = vmax.xlane.f32.xlu0 %v879
        %v881 = vpop.xlane.xlu0 %880
        %v882 = vsel %vm719, %v261, -inf
        %883 = vmax.xlane.f32.xlu0 %v882
        %v884 = vpop.xlane.xlu0 %883
        %v885 = vsel %vm719, %v262, -inf
        %886 = vmax.xlane.f32.xlu0 %v885
        %v887 = vpop.xlane.xlu0 %886
        %v888 = vsel %vm719, %v263, -inf
        %889 = vmax.xlane.f32.xlu0 %v888
        %v890 = vpop.xlane.xlu0 %889
        %v891 = vsel %vm719, %v264, -inf
        %892 = vmax.xlane.f32.xlu0 %v891
        %v893 = vpop.xlane.xlu0 %892
        %v894 = vsel %vm719, %v265, -inf
        %895 = vmax.xlane.f32.xlu0 %v894
        %v896 = vpop.xlane.xlu0 %895
        %v897 = vsel %vm719, %v266, -inf
        %898 = vmax.xlane.f32.xlu0 %v897
        %v899 = vpop.xlane.xlu0 %898
        %v900 = vsel %vm719, %v267, -inf
        %901 = vmax.xlane.f32.xlu0 %v900
        %v902 = vpop.xlane.xlu0 %901
        %v903 = vsel %vm719, %v268, -inf
        %904 = vmax.xlane.f32.xlu0 %v903
        %v905 = vpop.xlane.xlu0 %904
        %v906 = vsel %vm719, %v269, -inf
        %907 = vmax.xlane.f32.xlu0 %v906
        %v908 = vpop.xlane.xlu0 %907
        %v909 = vsel %vm719, %v270, -inf
        %910 = vmax.xlane.f32.xlu0 %v909
        %v911 = vpop.xlane.xlu0 %910
        %v912 = vsel %vm719, %v271, -inf
        %913 = vmax.xlane.f32.xlu0 %v912
        %v914 = vpop.xlane.xlu0 %913
        %v915 = vsel %vm719, %v272, -inf
        %916 = vmax.xlane.f32.xlu0 %v915
        %v917 = vpop.xlane.xlu0 %916
        %v918 = vsel %vm719, %v273, -inf
        %919 = vmax.xlane.f32.xlu0 %v918
        %v920 = vpop.xlane.xlu0 %919
        %v921 = vsel %vm719, %v274, -inf
        %922 = vmax.xlane.f32.xlu0 %v921
        %v923 = vpop.xlane.xlu0 %922
        %v924 = vsel %vm719, %v275, -inf
        %925 = vmax.xlane.f32.xlu0 %v924
        %v926 = vpop.xlane.xlu0 %925
        %v927 = vsel %vm719, %v276, -inf
        %928 = vmax.xlane.f32.xlu0 %v927
        %v929 = vpop.xlane.xlu0 %928
        %v930 = vsel %vm719, %v277, -inf
        %931 = vmax.xlane.f32.xlu0 %v930
        %v932 = vpop.xlane.xlu0 %931
        %v933 = vsel %vm719, %v278, -inf
        %934 = vmax.xlane.f32.xlu0 %v933
        %v935 = vpop.xlane.xlu0 %934
        %v936 = vsel %vm719, %v279, -inf
        %937 = vmax.xlane.f32.xlu0 %v936
        %v938 = vpop.xlane.xlu0 %937
        %v939 = vsel %vm719, %v280, -inf
        %940 = vmax.xlane.f32.xlu0 %v939
        %v941 = vpop.xlane.xlu0 %940
        %v942 = vsel %vm719, %v281, -inf
        %943 = vmax.xlane.f32.xlu0 %v942
        %v944 = vpop.xlane.xlu0 %943
        %v945 = vsel %vm719, %v282, -inf
        %946 = vmax.xlane.f32.xlu0 %v945
        %v947 = vpop.xlane.xlu0 %946
        %v948 = vsel %vm719, %v283, -inf
        %949 = vmax.xlane.f32.xlu0 %v948
        %v950 = vpop.xlane.xlu0 %949
        %v951 = vsel %vm719, %v284, -inf
        %952 = vmax.xlane.f32.xlu0 %v951
        %v953 = vpop.xlane.xlu0 %952
        %v954 = vsel %vm719, %v285, -inf
        %955 = vmax.xlane.f32.xlu0 %v954
        %v956 = vpop.xlane.xlu0 %955
        %v957 = vsel %vm719, %v286, -inf
        %958 = vmax.xlane.f32.xlu0 %v957
        %v959 = vpop.xlane.xlu0 %958
        %v960 = vsel %vm719, %v287, -inf
        %961 = vmax.xlane.f32.xlu0 %v960
        %v962 = vpop.xlane.xlu0 %961
        %v963 = vsel %vm719, %v288, -inf
        %964 = vmax.xlane.f32.xlu0 %v963
        %v965 = vpop.xlane.xlu0 %964
        %v966 = vsel %vm719, %v289, -inf
        %967 = vmax.xlane.f32.xlu0 %v966
        %v968 = vpop.xlane.xlu0 %967
        %v969 = vsel %vm719, %v290, -inf
        %970 = vmax.xlane.f32.xlu0 %v969
        %v971 = vpop.xlane.xlu0 %970
        %v972 = vsel %vm719, %v291, -inf
        %973 = vmax.xlane.f32.xlu0 %v972
        %v974 = vpop.xlane.xlu0 %973
        %v975 = vsel %vm719, %v292, -inf
        %976 = vmax.xlane.f32.xlu0 %v975
        %v977 = vpop.xlane.xlu0 %976
        %v978 = vsel %vm719, %v293, -inf
        %979 = vmax.xlane.f32.xlu0 %v978
        %v980 = vpop.xlane.xlu0 %979
        %v981 = vsel %vm719, %v294, -inf
        %982 = vmax.xlane.f32.xlu0 %v981
        %v983 = vpop.xlane.xlu0 %982
        %v984 = vsel %vm719, %v295, -inf
        %985 = vmax.xlane.f32.xlu0 %v984
        %v986 = vpop.xlane.xlu0 %985
        %v987 = vsel %vm719, %v296, -inf
        %988 = vmax.xlane.f32.xlu0 %v987
        %v989 = vpop.xlane.xlu0 %988
        %v990 = vsel %vm719, %v297, -inf
        %991 = vmax.xlane.f32.xlu0 %v990
        %v992 = vpop.xlane.xlu0 %991
        %v993 = vsel %vm719, %v298, -inf
        %994 = vmax.xlane.f32.xlu0 %v993
        %v995 = vpop.xlane.xlu0 %994
        %v996 = vsel %vm719, %v299, -inf
        %997 = vmax.xlane.f32.xlu0 %v996
        %v998 = vpop.xlane.xlu0 %997
        %v999 = vsel %vm719, %v300, -inf
        %1000 = vmax.xlane.f32.xlu0 %v999
        %v1001 = vpop.xlane.xlu0 %1000
        %v1002 = vsel %vm719, %v301, -inf
        %1003 = vmax.xlane.f32.xlu0 %v1002
        %v1004 = vpop.xlane.xlu0 %1003
        %v1005 = vsel %vm719, %v302, -inf
        %1006 = vmax.xlane.f32.xlu0 %v1005
        %v1007 = vpop.xlane.xlu0 %1006
        %v1008 = vsel %vm719, %v303, -inf
        %1009 = vmax.xlane.f32.xlu0 %v1008
        %v1010 = vpop.xlane.xlu0 %1009
        %v1011 = vsel %vm719, %v304, -inf
        %1012 = vmax.xlane.f32.xlu0 %v1011
        %v1013 = vpop.xlane.xlu0 %1012
        %v1014 = vsel %vm719, %v305, -inf
        %1015 = vmax.xlane.f32.xlu0 %v1014
        %v1016 = vpop.xlane.xlu0 %1015
        %v1017 = vsel %vm719, %v306, -inf
        %1018 = vmax.xlane.f32.xlu0 %v1017
        %v1019 = vpop.xlane.xlu0 %1018
        %v1020 = vsel %vm719, %v307, -inf
        %1021 = vmax.xlane.f32.xlu0 %v1020
        %v1022 = vpop.xlane.xlu0 %1021
        %v1023 = vsel %vm719, %v308, -inf
        %1024 = vmax.xlane.f32.xlu0 %v1023
        %v1025 = vpop.xlane.xlu0 %1024
        %v1026 = vsel %vm719, %v309, -inf
        %1027 = vmax.xlane.f32.xlu0 %v1026
        %v1028 = vpop.xlane.xlu0 %1027
        %v1029 = vsel %vm719, %v310, -inf
        %1030 = vmax.xlane.f32.xlu0 %v1029
        %v1031 = vpop.xlane.xlu0 %1030
        %v1032 = vsel %vm719, %v311, -inf
        %1033 = vmax.xlane.f32.xlu0 %v1032
        %v1034 = vpop.xlane.xlu0 %1033
        %v1035 = vsel %vm719, %v312, -inf
        %1036 = vmax.xlane.f32.xlu0 %v1035
        %v1037 = vpop.xlane.xlu0 %1036
        %v1038 = vsel %vm719, %v313, -inf
        %1039 = vmax.xlane.f32.xlu0 %v1038
        %v1040 = vpop.xlane.xlu0 %1039
        %v1041 = vsel %vm719, %v314, -inf
        %1042 = vmax.xlane.f32.xlu0 %v1041
        %v1043 = vpop.xlane.xlu0 %1042
        %v1044 = vsel %vm719, %v315, -inf
        %1045 = vmax.xlane.f32.xlu0 %v1044
        %v1046 = vpop.xlane.xlu0 %1045
        %v1047 = vsel %vm719, %v316, -inf
        %1048 = vmax.xlane.f32.xlu0 %v1047
        %v1049 = vpop.xlane.xlu0 %1048
        %v1050 = vsel %vm719, %v317, -inf
        %1051 = vmax.xlane.f32.xlu0 %v1050
        %v1052 = vpop.xlane.xlu0 %1051
        %v1053 = vsel %vm719, %v318, -inf
        %1054 = vmax.xlane.f32.xlu0 %v1053
        %v1055 = vpop.xlane.xlu0 %1054
        %v1056 = vsel %vm719, %v319, -inf
        %1057 = vmax.xlane.f32.xlu0 %v1056
        %v1058 = vpop.xlane.xlu0 %1057
        %v1059 = vsel %vm719, %v320, -inf
        %1060 = vmax.xlane.f32.xlu0 %v1059
        %v1061 = vpop.xlane.xlu0 %1060
        %v1062 = vsel %vm719, %v321, -inf
        %1063 = vmax.xlane.f32.xlu0 %v1062
        %v1064 = vpop.xlane.xlu0 %1063
        %v1065 = vsel %vm719, %v322, -inf
        %1066 = vmax.xlane.f32.xlu0 %v1065
        %v1067 = vpop.xlane.xlu0 %1066
        %v1068 = vsel %vm719, %v323, -inf
        %1069 = vmax.xlane.f32.xlu0 %v1068
        %v1070 = vpop.xlane.xlu0 %1069
        %v1071 = vsel %vm719, %v324, -inf
        %1072 = vmax.xlane.f32.xlu0 %v1071
        %v1073 = vpop.xlane.xlu0 %1072
        %v1074 = vsel %vm719, %v325, -inf
        %1075 = vmax.xlane.f32.xlu0 %v1074
        %v1076 = vpop.xlane.xlu0 %1075
        %v1077 = vsel %vm719, %v326, -inf
        %1078 = vmax.xlane.f32.xlu0 %v1077
        %v1079 = vpop.xlane.xlu0 %1078
        %v1080 = vsel %vm719, %v327, -inf
        %1081 = vmax.xlane.f32.xlu0 %v1080
        %v1082 = vpop.xlane.xlu0 %1081
        %v1083 = vsel %vm719, %v328, -inf
        %1084 = vmax.xlane.f32.xlu0 %v1083
        %v1085 = vpop.xlane.xlu0 %1084
        %v1086 = vsel %vm719, %v329, -inf
        %1087 = vmax.xlane.f32.xlu0 %v1086
        %v1088 = vpop.xlane.xlu0 %1087
        %v1089 = vsel %vm719, %v330, -inf
        %1090 = vmax.xlane.f32.xlu0 %v1089
        %v1091 = vpop.xlane.xlu0 %1090
        %v1092 = vsel %vm719, %v331, -inf
        %1093 = vmax.xlane.f32.xlu0 %v1092
        %v1094 = vpop.xlane.xlu0 %1093
        %v1095 = vsel %vm719, %v332, -inf
        %1096 = vmax.xlane.f32.xlu0 %v1095
        %v1097 = vpop.xlane.xlu0 %1096
        %v1098 = vsel %vm719, %v333, -inf
        %1099 = vmax.xlane.f32.xlu0 %v1098
        %v1100 = vpop.xlane.xlu0 %1099
        %v1101 = vsel %vm719, %v334, -inf
        %1102 = vmax.xlane.f32.xlu0 %v1101
        %v1103 = vpop.xlane.xlu0 %1102
        %v1104 = vsel %vm719, %v335, -inf
        %1105 = vmax.xlane.f32.xlu0 %v1104
        %v1106 = vpop.xlane.xlu0 %1105
        %v1107 = vsel %vm719, %v336, -inf
        %1108 = vmax.xlane.f32.xlu0 %v1107
        %v1109 = vpop.xlane.xlu0 %1108
        %v1110 = vsel %vm719, %v337, -inf
        %1111 = vmax.xlane.f32.xlu0 %v1110
        %v1112 = vpop.xlane.xlu0 %1111
        %v1113 = vsel %vm719, %v338, -inf
        %1114 = vmax.xlane.f32.xlu0 %v1113
        %v1115 = vpop.xlane.xlu0 %1114
        %v1116 = vsel %vm719, %v339, -inf
        %1117 = vmax.xlane.f32.xlu0 %v1116
        %v1118 = vpop.xlane.xlu0 %1117
        %v1119 = vsel %vm719, %v340, -inf
        %1120 = vmax.xlane.f32.xlu0 %v1119
        %v1121 = vpop.xlane.xlu0 %1120
        %v1122 = vsel %vm719, %v341, -inf
        %1123 = vmax.xlane.f32.xlu0 %v1122
        %v1124 = vpop.xlane.xlu0 %1123
        %v1125 = vsel %vm719, %v342, -inf
        %1126 = vmax.xlane.f32.xlu0 %v1125
        %v1127 = vpop.xlane.xlu0 %1126
        %v1128 = vsel %vm719, %v343, -inf
        %1129 = vmax.xlane.f32.xlu0 %v1128
        %v1130 = vpop.xlane.xlu0 %1129
        %v1131 = vsel %vm719, %v344, -inf
        %1132 = vmax.xlane.f32.xlu0 %v1131
        %v1133 = vpop.xlane.xlu0 %1132
        %v1134 = vsel %vm719, %v345, -inf
        %1135 = vmax.xlane.f32.xlu0 %v1134
        %v1136 = vpop.xlane.xlu0 %1135
        %v1137 = vsel %vm719, %v346, -inf
        %1138 = vmax.xlane.f32.xlu0 %v1137
        %v1139 = vpop.xlane.xlu0 %1138
        %v1140 = vsel %vm719, %v347, -inf
        %1141 = vmax.xlane.f32.xlu0 %v1140
        %v1142 = vpop.xlane.xlu0 %1141
        %v1143 = vsel %vm719, %v348, -inf
        %1144 = vmax.xlane.f32.xlu0 %v1143
        %v1145 = vpop.xlane.xlu0 %1144
        %v1146 = vsel %vm719, %v349, -inf
        %1147 = vmax.xlane.f32.xlu0 %v1146
        %v1148 = vpop.xlane.xlu0 %1147
        %v1149 = vsel %vm719, %v350, -inf
        %1150 = vmax.xlane.f32.xlu0 %v1149
        %v1151 = vpop.xlane.xlu0 %1150
        %v1152 = vsel %vm719, %v351, -inf
        %1153 = vmax.xlane.f32.xlu0 %v1152
        %v1154 = vpop.xlane.xlu0 %1153
        %v1155 = vsel %vm719, %v352, -inf
        %1156 = vmax.xlane.f32.xlu0 %v1155
        %v1157 = vpop.xlane.xlu0 %1156
        %v1158 = vsel %vm719, %v353, -inf
        %1159 = vmax.xlane.f32.xlu0 %v1158
        %v1160 = vpop.xlane.xlu0 %1159
        %v1161 = vsel %vm719, %v354, -inf
        %1162 = vmax.xlane.f32.xlu0 %v1161
        %v1163 = vpop.xlane.xlu0 %1162
        %v1164 = vsel %vm719, %v355, -inf
        %1165 = vmax.xlane.f32.xlu0 %v1164
        %v1166 = vpop.xlane.xlu0 %1165
        %v1167 = vsel %vm719, %v356, -inf
        %1168 = vmax.xlane.f32.xlu0 %v1167
        %v1169 = vpop.xlane.xlu0 %1168
        %v1170 = vsel %vm719, %v357, -inf
        %1171 = vmax.xlane.f32.xlu0 %v1170
        %v1172 = vpop.xlane.xlu0 %1171
        %v1173 = vsel %vm719, %v358, -inf
        %1174 = vmax.xlane.f32.xlu0 %v1173
        %v1175 = vpop.xlane.xlu0 %1174
        %v1176 = vsel %vm719, %v359, -inf
        %1177 = vmax.xlane.f32.xlu0 %v1176
        %v1178 = vpop.xlane.xlu0 %1177
        %v1179 = vsel %vm719, %v360, -inf
        %1180 = vmax.xlane.f32.xlu0 %v1179
        %v1181 = vpop.xlane.xlu0 %1180
        %v1182 = vsel %vm719, %v361, -inf
        %1183 = vmax.xlane.f32.xlu0 %v1182
        %v1184 = vpop.xlane.xlu0 %1183
        %v1185 = vsel %vm719, %v362, -inf
        %1186 = vmax.xlane.f32.xlu0 %v1185
        %v1187 = vpop.xlane.xlu0 %1186
        %v1188 = vsel %vm719, %v363, -inf
        %1189 = vmax.xlane.f32.xlu0 %v1188
        %v1190 = vpop.xlane.xlu0 %1189
        %v1191 = vsel %vm719, %v364, -inf
        %1192 = vmax.xlane.f32.xlu0 %v1191
        %v1193 = vpop.xlane.xlu0 %1192
        %v1194 = vsel %vm719, %v365, -inf
        %1195 = vmax.xlane.f32.xlu0 %v1194
        %v1196 = vpop.xlane.xlu0 %1195
        %v1197 = vsel %vm719, %v366, -inf
        %1198 = vmax.xlane.f32.xlu0 %v1197
        %v1199 = vpop.xlane.xlu0 %1198
        %v1200 = vsel %vm719, %v367, -inf
        %1201 = vmax.xlane.f32.xlu0 %v1200
        %v1202 = vpop.xlane.xlu0 %1201
        %v1203 = vsel %vm719, %v368, -inf
        %1204 = vmax.xlane.f32.xlu0 %v1203
        %v1205 = vpop.xlane.xlu0 %1204
        %v1206 = vsel %vm719, %v369, -inf
        %1207 = vmax.xlane.f32.xlu0 %v1206
        %v1208 = vpop.xlane.xlu0 %1207
        %v1209 = vsel %vm719, %v370, -inf
        %1210 = vmax.xlane.f32.xlu0 %v1209
        %v1211 = vpop.xlane.xlu0 %1210
        %v1212 = vsel %vm719, %v371, -inf
        %1213 = vmax.xlane.f32.xlu0 %v1212
        %v1214 = vpop.xlane.xlu0 %1213
        %v1215 = vsel %vm719, %v372, -inf
        %1216 = vmax.xlane.f32.xlu0 %v1215
        %v1217 = vpop.xlane.xlu0 %1216
        %v1218 = vsel %vm719, %v373, -inf
        %1219 = vmax.xlane.f32.xlu0 %v1218
        %v1220 = vpop.xlane.xlu0 %1219
        %v1221 = vsel %vm719, %v374, -inf
        %1222 = vmax.xlane.f32.xlu0 %v1221
        %v1223 = vpop.xlane.xlu0 %1222
        %v1224 = vsel %vm719, %v375, -inf
        %1225 = vmax.xlane.f32.xlu0 %v1224
        %v1226 = vpop.xlane.xlu0 %1225
        %v1227 = vsel %vm719, %v376, -inf
        %1228 = vmax.xlane.f32.xlu0 %v1227
        %v1229 = vpop.xlane.xlu0 %1228
        %v1230 = vsel %vm719, %v377, -inf
        %1231 = vmax.xlane.f32.xlu0 %v1230
        %v1232 = vpop.xlane.xlu0 %1231
        %v1233 = vsel %vm719, %v378, -inf
        %1234 = vmax.xlane.f32.xlu0 %v1233
        %v1235 = vpop.xlane.xlu0 %1234
        %v1236 = vsel %vm719, %v379, -inf
        %1237 = vmax.xlane.f32.xlu0 %v1236
        %v1238 = vpop.xlane.xlu0 %1237
        %v1239 = vsel %vm719, %v380, -inf
        %1240 = vmax.xlane.f32.xlu0 %v1239
        %v1241 = vpop.xlane.xlu0 %1240
        %v1242 = vsel %vm719, %v381, -inf
        %1243 = vmax.xlane.f32.xlu0 %v1242
        %v1244 = vpop.xlane.xlu0 %1243
        %v1245 = vsel %vm719, %v382, -inf
        %1246 = vmax.xlane.f32.xlu0 %v1245
        %v1247 = vpop.xlane.xlu0 %1246
        %v1248 = vsel %vm719, %v383, -inf
        %1249 = vmax.xlane.f32.xlu0 %v1248
        %v1250 = vpop.xlane.xlu0 %1249
        %v1251 = vsel %vm719, %v384, -inf
        %1252 = vmax.xlane.f32.xlu0 %v1251
        %v1253 = vpop.xlane.xlu0 %1252
        %v1254 = vsel %vm719, %v385, -inf
        %1255 = vmax.xlane.f32.xlu0 %v1254
        %v1256 = vpop.xlane.xlu0 %1255
        %v1257 = vsel %vm719, %v386, -inf
        %1258 = vmax.xlane.f32.xlu0 %v1257
        %v1259 = vpop.xlane.xlu0 %1258
        %v1260 = vsel %vm719, %v387, -inf
        %1261 = vmax.xlane.f32.xlu0 %v1260
        %v1262 = vpop.xlane.xlu0 %1261
        %v1263 = vsel %vm719, %v388, -inf
        %1264 = vmax.xlane.f32.xlu0 %v1263
        %v1265 = vpop.xlane.xlu0 %1264
        %v1266 = vsel %vm719, %v389, -inf
        %1267 = vmax.xlane.f32.xlu0 %v1266
        %v1268 = vpop.xlane.xlu0 %1267
        %v1269 = vsel %vm719, %v390, -inf
        %1270 = vmax.xlane.f32.xlu0 %v1269
        %v1271 = vpop.xlane.xlu0 %1270
        %v1272 = vsel %vm719, %v391, -inf
        %1273 = vmax.xlane.f32.xlu0 %v1272
        %v1274 = vpop.xlane.xlu0 %1273
        %v1275 = vsel %vm719, %v392, -inf
        %1276 = vmax.xlane.f32.xlu0 %v1275
        %v1277 = vpop.xlane.xlu0 %1276
        %v1278 = vsel %vm719, %v393, -inf
        %1279 = vmax.xlane.f32.xlu0 %v1278
        %v1280 = vpop.xlane.xlu0 %1279
        %v1281 = vsel %vm719, %v394, -inf
        %1282 = vmax.xlane.f32.xlu0 %v1281
        %v1283 = vpop.xlane.xlu0 %1282
        %v1284 = vsel %vm719, %v395, -inf
        %1285 = vmax.xlane.f32.xlu0 %v1284
        %v1286 = vpop.xlane.xlu0 %1285
        %v1287 = vsel %vm719, %v396, -inf
        %1288 = vmax.xlane.f32.xlu0 %v1287
        %v1289 = vpop.xlane.xlu0 %1288
        %v1290 = vsel %vm719, %v397, -inf
        %1291 = vmax.xlane.f32.xlu0 %v1290
        %v1292 = vpop.xlane.xlu0 %1291
        %v1293 = vsel %vm719, %v398, -inf
        %1294 = vmax.xlane.f32.xlu0 %v1293
        %v1295 = vpop.xlane.xlu0 %1294
        %v1296 = vsel %vm719, %v399, -inf
        %1297 = vmax.xlane.f32.xlu0 %v1296
        %v1298 = vpop.xlane.xlu0 %1297
        %v1299 = vsel %vm719, %v400, -inf
        %1300 = vmax.xlane.f32.xlu0 %v1299
        %v1301 = vpop.xlane.xlu0 %1300
        %v1302 = vsel %vm719, %v401, -inf
        %1303 = vmax.xlane.f32.xlu0 %v1302
        %v1304 = vpop.xlane.xlu0 %1303
        %v1305 = vsel %vm719, %v402, -inf
        %1306 = vmax.xlane.f32.xlu0 %v1305
        %v1307 = vpop.xlane.xlu0 %1306
        %v1308 = vsel %vm719, %v403, -inf
        %1309 = vmax.xlane.f32.xlu0 %v1308
        %v1310 = vpop.xlane.xlu0 %1309
        %v1311 = vsel %vm719, %v404, -inf
        %1312 = vmax.xlane.f32.xlu0 %v1311
        %v1313 = vpop.xlane.xlu0 %1312
        %v1314 = vsel %vm719, %v405, -inf
        %1315 = vmax.xlane.f32.xlu0 %v1314
        %v1316 = vpop.xlane.xlu0 %1315
        %v1317 = vsel %vm719, %v406, -inf
        %1318 = vmax.xlane.f32.xlu0 %v1317
        %v1319 = vpop.xlane.xlu0 %1318
        %v1320 = vsel %vm719, %v407, -inf
        %1321 = vmax.xlane.f32.xlu0 %v1320
        %v1322 = vpop.xlane.xlu0 %1321
        %v1323 = vsel %vm719, %v408, -inf
        %1324 = vmax.xlane.f32.xlu0 %v1323
        %v1325 = vpop.xlane.xlu0 %1324
        %v1326 = vsel %vm719, %v409, -inf
        %1327 = vmax.xlane.f32.xlu0 %v1326
        %v1328 = vpop.xlane.xlu0 %1327
        %v1329 = vsel %vm719, %v410, -inf
        %1330 = vmax.xlane.f32.xlu0 %v1329
        %v1331 = vpop.xlane.xlu0 %1330
        %v1332 = vsel %vm719, %v411, -inf
        %1333 = vmax.xlane.f32.xlu0 %v1332
        %v1334 = vpop.xlane.xlu0 %1333
        %v1335 = vsel %vm719, %v412, -inf
        %1336 = vmax.xlane.f32.xlu0 %v1335
        %v1337 = vpop.xlane.xlu0 %1336
        %v1338 = vsel %vm719, %v413, -inf
        %1339 = vmax.xlane.f32.xlu0 %v1338
        %v1340 = vpop.xlane.xlu0 %1339
        %v1341 = vsel %vm719, %v414, -inf
        %1342 = vmax.xlane.f32.xlu0 %v1341
        %v1343 = vpop.xlane.xlu0 %1342
        %v1344 = vsel %vm719, %v415, -inf
        %1345 = vmax.xlane.f32.xlu0 %v1344
        %v1346 = vpop.xlane.xlu0 %1345
        %v1347 = vsel %vm719, %v416, -inf
        %1348 = vmax.xlane.f32.xlu0 %v1347
        %v1349 = vpop.xlane.xlu0 %1348
        %v1350 = vsel %vm719, %v417, -inf
        %1351 = vmax.xlane.f32.xlu0 %v1350
        %v1352 = vpop.xlane.xlu0 %1351
        %v1353 = vsel %vm719, %v418, -inf
        %1354 = vmax.xlane.f32.xlu0 %v1353
        %v1355 = vpop.xlane.xlu0 %1354
        %v1356 = vsel %vm719, %v419, -inf
        %1357 = vmax.xlane.f32.xlu0 %v1356
        %v1358 = vpop.xlane.xlu0 %1357
        %v1359 = vsel %vm719, %v420, -inf
        %1360 = vmax.xlane.f32.xlu0 %v1359
        %v1361 = vpop.xlane.xlu0 %1360
        %v1362 = vsel %vm719, %v421, -inf
        %1363 = vmax.xlane.f32.xlu0 %v1362
        %v1364 = vpop.xlane.xlu0 %1363
        %v1365 = vsel %vm719, %v422, -inf
        %1366 = vmax.xlane.f32.xlu0 %v1365
        %v1367 = vpop.xlane.xlu0 %1366
        %v1368 = vsel %vm719, %v423, -inf
        %1369 = vmax.xlane.f32.xlu0 %v1368
        %v1370 = vpop.xlane.xlu0 %1369
        %v1371 = vsel %vm719, %v424, -inf
        %1372 = vmax.xlane.f32.xlu0 %v1371
        %v1373 = vpop.xlane.xlu0 %1372
        %v1374 = vsel %vm719, %v425, -inf
        %1375 = vmax.xlane.f32.xlu0 %v1374
        %v1376 = vpop.xlane.xlu0 %1375
        %v1377 = vsel %vm719, %v426, -inf
        %1378 = vmax.xlane.f32.xlu0 %v1377
        %v1379 = vpop.xlane.xlu0 %1378
        %v1380 = vsel %vm719, %v427, -inf
        %1381 = vmax.xlane.f32.xlu0 %v1380
        %v1382 = vpop.xlane.xlu0 %1381
        %v1383 = vsel %vm719, %v428, -inf
        %1384 = vmax.xlane.f32.xlu0 %v1383
        %v1385 = vpop.xlane.xlu0 %1384
        %v1386 = vsel %vm719, %v429, -inf
        %1387 = vmax.xlane.f32.xlu0 %v1386
        %v1388 = vpop.xlane.xlu0 %1387
        %v1389 = vsel %vm719, %v430, -inf
        %1390 = vmax.xlane.f32.xlu0 %v1389
        %v1391 = vpop.xlane.xlu0 %1390
        %v1392 = vsel %vm719, %v431, -inf
        %1393 = vmax.xlane.f32.xlu0 %v1392
        %v1394 = vpop.xlane.xlu0 %1393
        %v1395 = vsel %vm719, %v432, -inf
        %1396 = vmax.xlane.f32.xlu0 %v1395
        %v1397 = vpop.xlane.xlu0 %1396
        %v1398 = vsel %vm719, %v433, -inf
        %1399 = vmax.xlane.f32.xlu0 %v1398
        %v1400 = vpop.xlane.xlu0 %1399
        %v1401 = vsel %vm719, %v434, -inf
        %1402 = vmax.xlane.f32.xlu0 %v1401
        %v1403 = vpop.xlane.xlu0 %1402
        %v1404 = vsel %vm719, %v435, -inf
        %1405 = vmax.xlane.f32.xlu0 %v1404
        %v1406 = vpop.xlane.xlu0 %1405
        %v1407 = vsel %vm719, %v436, -inf
        %1408 = vmax.xlane.f32.xlu0 %v1407
        %v1409 = vpop.xlane.xlu0 %1408
        %v1410 = vsel %vm719, %v437, -inf
        %1411 = vmax.xlane.f32.xlu0 %v1410
        %v1412 = vpop.xlane.xlu0 %1411
        %v1413 = vsel %vm719, %v438, -inf
        %1414 = vmax.xlane.f32.xlu0 %v1413
        %v1415 = vpop.xlane.xlu0 %1414
        %v1416 = vsel %vm719, %v439, -inf
        %1417 = vmax.xlane.f32.xlu0 %v1416
        %v1418 = vpop.xlane.xlu0 %1417
        %v1419 = vsel %vm719, %v440, -inf
        %1420 = vmax.xlane.f32.xlu0 %v1419
        %v1421 = vpop.xlane.xlu0 %1420
        %v1422 = vsel %vm719, %v441, -inf
        %1423 = vmax.xlane.f32.xlu0 %v1422
        %v1424 = vpop.xlane.xlu0 %1423
        %v1425 = vsel %vm719, %v442, -inf
        %1426 = vmax.xlane.f32.xlu0 %v1425
        %v1427 = vpop.xlane.xlu0 %1426
        %v1428 = vsel %vm719, %v443, -inf
        %1429 = vmax.xlane.f32.xlu0 %v1428
        %v1430 = vpop.xlane.xlu0 %1429
        %v1431 = vsel %vm719, %v444, -inf
        %1432 = vmax.xlane.f32.xlu0 %v1431
        %v1433 = vpop.xlane.xlu0 %1432
        %v1434 = vsel %vm719, %v445, -inf
        %1435 = vmax.xlane.f32.xlu0 %v1434
        %v1436 = vpop.xlane.xlu0 %1435
        %v1437 = vsel %vm719, %v446, -inf
        %1438 = vmax.xlane.f32.xlu0 %v1437
        %v1439 = vpop.xlane.xlu0 %1438
        %v1440 = vsel %vm719, %v447, -inf
        %1441 = vmax.xlane.f32.xlu0 %v1440
        %v1442 = vpop.xlane.xlu0 %1441
        %v1443 = vsel %vm719, %v448, -inf
        %1444 = vmax.xlane.f32.xlu0 %v1443
        %v1445 = vpop.xlane.xlu0 %1444
        %v1446 = vsel %vm719, %v449, -inf
        %1447 = vmax.xlane.f32.xlu0 %v1446
        %v1448 = vpop.xlane.xlu0 %1447
        %v1449 = vsel %vm719, %v450, -inf
        %1450 = vmax.xlane.f32.xlu0 %v1449
        %v1451 = vpop.xlane.xlu0 %1450
        %v1452 = vsel %vm719, %v451, -inf
        %1453 = vmax.xlane.f32.xlu0 %v1452
        %v1454 = vpop.xlane.xlu0 %1453
        %v1455 = vsel %vm719, %v452, -inf
        %1456 = vmax.xlane.f32.xlu0 %v1455
        %v1457 = vpop.xlane.xlu0 %1456
        %v1458 = vsel %vm719, %v453, -inf
        %1459 = vmax.xlane.f32.xlu0 %v1458
        %v1460 = vpop.xlane.xlu0 %1459
        %v1461 = vsel %vm719, %v454, -inf
        %1462 = vmax.xlane.f32.xlu0 %v1461
        %v1463 = vpop.xlane.xlu0 %1462
        %v1464 = vsel %vm719, %v455, -inf
        %1465 = vmax.xlane.f32.xlu0 %v1464
        %v1466 = vpop.xlane.xlu0 %1465
        %v1467 = vsel %vm719, %v456, -inf
        %1468 = vmax.xlane.f32.xlu0 %v1467
        %v1469 = vpop.xlane.xlu0 %1468
        %v1470 = vsel %vm719, %v457, -inf
        %1471 = vmax.xlane.f32.xlu0 %v1470
        %v1472 = vpop.xlane.xlu0 %1471
        %v1473 = vsel %vm719, %v458, -inf
        %1474 = vmax.xlane.f32.xlu0 %v1473
        %v1475 = vpop.xlane.xlu0 %1474
        %v1476 = vsel %vm719, %v459, -inf
        %1477 = vmax.xlane.f32.xlu0 %v1476
        %v1478 = vpop.xlane.xlu0 %1477
        %v1479 = vsel %vm719, %v460, -inf
        %1480 = vmax.xlane.f32.xlu0 %v1479
        %v1481 = vpop.xlane.xlu0 %1480
        %v1482 = vsel %vm719, %v461, -inf
        %1483 = vmax.xlane.f32.xlu0 %v1482
        %v1484 = vpop.xlane.xlu0 %1483
        %v1485 = vsel %vm719, %v462, -inf
        %1486 = vmax.xlane.f32.xlu0 %v1485
        %v1487 = vpop.xlane.xlu0 %1486
        %v1488 = vsel %vm719, %v463, -inf
        %1489 = vmax.xlane.f32.xlu0 %v1488
        %v1490 = vpop.xlane.xlu0 %1489
        %v1491 = vsel %vm719, %v464, -inf
        %1492 = vmax.xlane.f32.xlu0 %v1491
        %v1493 = vpop.xlane.xlu0 %1492
        %v1494 = vsel %vm719, %v465, -inf
        %1495 = vmax.xlane.f32.xlu0 %v1494
        %v1496 = vpop.xlane.xlu0 %1495
        %v1497 = vsel %vm719, %v466, -inf
        %1498 = vmax.xlane.f32.xlu0 %v1497
        %v1499 = vpop.xlane.xlu0 %1498
        %v1500 = vsel %vm719, %v467, -inf
        %1501 = vmax.xlane.f32.xlu0 %v1500
        %v1502 = vpop.xlane.xlu0 %1501
        %v1503 = vsel %vm719, %v468, -inf
        %1504 = vmax.xlane.f32.xlu0 %v1503
        %v1505 = vpop.xlane.xlu0 %1504
        %v1506 = vsel %vm719, %v469, -inf
        %1507 = vmax.xlane.f32.xlu0 %v1506
        %v1508 = vpop.xlane.xlu0 %1507
        %v1509 = vsel %vm719, %v470, -inf
        %1510 = vmax.xlane.f32.xlu0 %v1509
        %v1511 = vpop.xlane.xlu0 %1510
        %v1512 = vsel %vm719, %v471, -inf
        %1513 = vmax.xlane.f32.xlu0 %v1512
        %v1514 = vpop.xlane.xlu0 %1513
        %v1515 = vsel %vm719, %v472, -inf
        %1516 = vmax.xlane.f32.xlu0 %v1515
        %v1517 = vpop.xlane.xlu0 %1516
        %v1518 = vsel %vm719, %v473, -inf
        %1519 = vmax.xlane.f32.xlu0 %v1518
        %v1520 = vpop.xlane.xlu0 %1519
        %v1521 = vsel %vm719, %v474, -inf
        %1522 = vmax.xlane.f32.xlu0 %v1521
        %v1523 = vpop.xlane.xlu0 %1522
        %v1524 = vsel %vm719, %v475, -inf
        %1525 = vmax.xlane.f32.xlu0 %v1524
        %v1526 = vpop.xlane.xlu0 %1525
        %v1527 = vsel %vm719, %v476, -inf
        %1528 = vmax.xlane.f32.xlu0 %v1527
        %v1529 = vpop.xlane.xlu0 %1528
        %v1530 = vsel %vm719, %v477, -inf
        %1531 = vmax.xlane.f32.xlu0 %v1530
        %v1532 = vpop.xlane.xlu0 %1531
        %v1533 = vsel %vm719, %v478, -inf
        %1534 = vmax.xlane.f32.xlu0 %v1533
        %v1535 = vpop.xlane.xlu0 %1534
        %v1536 = vsel %vm719, %v479, -inf
        %1537 = vmax.xlane.f32.xlu0 %v1536
        %v1538 = vpop.xlane.xlu0 %1537
        %v1539 = vsel %vm719, %v480, -inf
        %1540 = vmax.xlane.f32.xlu0 %v1539
        %v1541 = vpop.xlane.xlu0 %1540
        %v1542 = vsel %vm719, %v481, -inf
        %1543 = vmax.xlane.f32.xlu0 %v1542
        %v1544 = vpop.xlane.xlu0 %1543
        %v1545 = vsel %vm719, %v482, -inf
        %1546 = vmax.xlane.f32.xlu0 %v1545
        %v1547 = vpop.xlane.xlu0 %1546
        %v1548 = vsel %vm719, %v483, -inf
        %1549 = vmax.xlane.f32.xlu0 %v1548
        %v1550 = vpop.xlane.xlu0 %1549
        %v1551 = vsel %vm719, %v484, -inf
        %1552 = vmax.xlane.f32.xlu0 %v1551
        %v1553 = vpop.xlane.xlu0 %1552
        %v1554 = vsel %vm719, %v485, -inf
        %1555 = vmax.xlane.f32.xlu0 %v1554
        %v1556 = vpop.xlane.xlu0 %1555
        %v1557 = vsel %vm719, %v486, -inf
        %1558 = vmax.xlane.f32.xlu0 %v1557
        %v1559 = vpop.xlane.xlu0 %1558
        %v1560 = vsel %vm719, %v487, -inf
        %1561 = vmax.xlane.f32.xlu0 %v1560
        %v1562 = vpop.xlane.xlu0 %1561
        %v1563 = vsel %vm719, %v488, -inf
        %1564 = vmax.xlane.f32.xlu0 %v1563
        %v1565 = vpop.xlane.xlu0 %1564
        %v1566 = vsel %vm719, %v489, -inf
        %1567 = vmax.xlane.f32.xlu0 %v1566
        %v1568 = vpop.xlane.xlu0 %1567
        %v1569 = vsel %vm719, %v490, -inf
        %1570 = vmax.xlane.f32.xlu0 %v1569
        %v1571 = vpop.xlane.xlu0 %1570
        %v1572 = vsel %vm719, %v491, -inf
        %1573 = vmax.xlane.f32.xlu0 %v1572
        %v1574 = vpop.xlane.xlu0 %1573
        %v1575 = vsel %vm719, %v492, -inf
        %1576 = vmax.xlane.f32.xlu0 %v1575
        %v1577 = vpop.xlane.xlu0 %1576
        %v1578 = vsel %vm719, %v493, -inf
        %1579 = vmax.xlane.f32.xlu0 %v1578
        %v1580 = vpop.xlane.xlu0 %1579
        %v1581 = vsel %vm719, %v494, -inf
        %1582 = vmax.xlane.f32.xlu0 %v1581
        %v1583 = vpop.xlane.xlu0 %1582
        %v1584 = vsel %vm719, %v495, -inf
        %1585 = vmax.xlane.f32.xlu0 %v1584
        %v1586 = vpop.xlane.xlu0 %1585
        %v1587 = vsel %vm719, %v496, -inf
        %1588 = vmax.xlane.f32.xlu0 %v1587
        %v1589 = vpop.xlane.xlu0 %1588
        %v1590 = vsel %vm719, %v497, -inf
        %1591 = vmax.xlane.f32.xlu0 %v1590
        %v1592 = vpop.xlane.xlu0 %1591
        %v1593 = vsel %vm719, %v498, -inf
        %1594 = vmax.xlane.f32.xlu0 %v1593
        %v1595 = vpop.xlane.xlu0 %1594
        %v1596 = vsel %vm719, %v499, -inf
        %1597 = vmax.xlane.f32.xlu0 %v1596
        %v1598 = vpop.xlane.xlu0 %1597
        %v1599 = vsel %vm719, %v500, -inf
        %1600 = vmax.xlane.f32.xlu0 %v1599
        %v1601 = vpop.xlane.xlu0 %1600
        %v1602 = vsel %vm719, %v501, -inf
        %1603 = vmax.xlane.f32.xlu0 %v1602
        %v1604 = vpop.xlane.xlu0 %1603
        %v1605 = vsel %vm719, %v502, -inf
        %1606 = vmax.xlane.f32.xlu0 %v1605
        %v1607 = vpop.xlane.xlu0 %1606
        %v1608 = vsel %vm719, %v503, -inf
        %1609 = vmax.xlane.f32.xlu0 %v1608
        %v1610 = vpop.xlane.xlu0 %1609
        %v1611 = vsel %vm719, %v504, -inf
        %1612 = vmax.xlane.f32.xlu0 %v1611
        %v1613 = vpop.xlane.xlu0 %1612
        %v1614 = vsel %vm719, %v505, -inf
        %1615 = vmax.xlane.f32.xlu0 %v1614
        %v1616 = vpop.xlane.xlu0 %1615
        %v1617 = vsel %vm719, %v506, -inf
        %1618 = vmax.xlane.f32.xlu0 %v1617
        %v1619 = vpop.xlane.xlu0 %1618
        %v1620 = vsel %vm719, %v507, -inf
        %1621 = vmax.xlane.f32.xlu0 %v1620
        %v1622 = vpop.xlane.xlu0 %1621
        %v1623 = vsel %vm719, %v508, -inf
        %1624 = vmax.xlane.f32.xlu0 %v1623
        %v1625 = vpop.xlane.xlu0 %1624
        %v1626 = vsel %vm719, %v509, -inf
        %1627 = vmax.xlane.f32.xlu0 %v1626
        %v1628 = vpop.xlane.xlu0 %1627
        %v1629 = vsel %vm719, %v510, -inf
        %1630 = vmax.xlane.f32.xlu0 %v1629
        %v1631 = vpop.xlane.xlu0 %1630
        %v1632 = vsel %vm719, %v511, -inf
        %1633 = vmax.xlane.f32.xlu0 %v1632
        %v1634 = vpop.xlane.xlu0 %1633
        %v1635 = vsel %vm719, %v512, -inf
        %1636 = vmax.xlane.f32.xlu0 %v1635
        %v1637 = vpop.xlane.xlu0 %1636
        %v1638 = vsel %vm719, %v513, -inf
        %1639 = vmax.xlane.f32.xlu0 %v1638
        %v1640 = vpop.xlane.xlu0 %1639
        %v1641 = vsel %vm719, %v514, -inf
        %1642 = vmax.xlane.f32.xlu0 %v1641
        %v1643 = vpop.xlane.xlu0 %1642
        %v1644 = vsel %vm719, %v515, -inf
        %1645 = vmax.xlane.f32.xlu0 %v1644
        %v1646 = vpop.xlane.xlu0 %1645
        %v1647 = vsel %vm719, %v516, -inf
        %1648 = vmax.xlane.f32.xlu0 %v1647
        %v1649 = vpop.xlane.xlu0 %1648
        %v1650 = vsel %vm719, %v517, -inf
        %1651 = vmax.xlane.f32.xlu0 %v1650
        %v1652 = vpop.xlane.xlu0 %1651
        %v1653 = vsel %vm719, %v518, -inf
        %1654 = vmax.xlane.f32.xlu0 %v1653
        %v1655 = vpop.xlane.xlu0 %1654
        %v1656 = vsel %vm719, %v519, -inf
        %1657 = vmax.xlane.f32.xlu0 %v1656
        %v1658 = vpop.xlane.xlu0 %1657
        %v1659 = vsel %vm719, %v520, -inf
        %1660 = vmax.xlane.f32.xlu0 %v1659
        %v1661 = vpop.xlane.xlu0 %1660
        %v1662 = vsel %vm719, %v521, -inf
        %1663 = vmax.xlane.f32.xlu0 %v1662
        %v1664 = vpop.xlane.xlu0 %1663
        %v1665 = vsel %vm719, %v522, -inf
        %1666 = vmax.xlane.f32.xlu0 %v1665
        %v1667 = vpop.xlane.xlu0 %1666
        %v1668 = vsel %vm719, %v523, -inf
        %1669 = vmax.xlane.f32.xlu0 %v1668
        %v1670 = vpop.xlane.xlu0 %1669
        %v1671 = vsel %vm719, %v524, -inf
        %1672 = vmax.xlane.f32.xlu0 %v1671
        %v1673 = vpop.xlane.xlu0 %1672
        %v1674 = vsel %vm719, %v525, -inf
        %1675 = vmax.xlane.f32.xlu0 %v1674
        %v1676 = vpop.xlane.xlu0 %1675
        %v1677 = vsel %vm719, %v526, -inf
        %1678 = vmax.xlane.f32.xlu0 %v1677
        %v1679 = vpop.xlane.xlu0 %1678
        %v1680 = vsel %vm719, %v527, -inf
        %1681 = vmax.xlane.f32.xlu0 %v1680
        %v1682 = vpop.xlane.xlu0 %1681
        %v1683 = vsel %vm719, %v528, -inf
        %1684 = vmax.xlane.f32.xlu0 %v1683
        %v1685 = vpop.xlane.xlu0 %1684
        %v1686 = vsel %vm719, %v529, -inf
        %1687 = vmax.xlane.f32.xlu0 %v1686
        %v1688 = vpop.xlane.xlu0 %1687
        %v1689 = vsel %vm719, %v530, -inf
        %1690 = vmax.xlane.f32.xlu0 %v1689
        %v1691 = vpop.xlane.xlu0 %1690
        %v1692 = vsel %vm719, %v531, -inf
        %1693 = vmax.xlane.f32.xlu0 %v1692
        %v1694 = vpop.xlane.xlu0 %1693
        %v1695 = vsel %vm719, %v532, -inf
        %1696 = vmax.xlane.f32.xlu0 %v1695
        %v1697 = vpop.xlane.xlu0 %1696
        %v1698 = vsel %vm719, %v533, -inf
        %1699 = vmax.xlane.f32.xlu0 %v1698
        %v1700 = vpop.xlane.xlu0 %1699
        %v1701 = vsel %vm719, %v534, -inf
        %1702 = vmax.xlane.f32.xlu0 %v1701
        %v1703 = vpop.xlane.xlu0 %1702
        %v1704 = vsel %vm719, %v535, -inf
        %1705 = vmax.xlane.f32.xlu0 %v1704
        %v1706 = vpop.xlane.xlu0 %1705
        %v1707 = vsel %vm719, %v536, -inf
        %1708 = vmax.xlane.f32.xlu0 %v1707
        %v1709 = vpop.xlane.xlu0 %1708
        %v1710 = vsel %vm719, %v537, -inf
        %1711 = vmax.xlane.f32.xlu0 %v1710
        %v1712 = vpop.xlane.xlu0 %1711
        %v1713 = vsel %vm719, %v538, -inf
        %1714 = vmax.xlane.f32.xlu0 %v1713
        %v1715 = vpop.xlane.xlu0 %1714
        %v1716 = vsel %vm719, %v539, -inf
        %1717 = vmax.xlane.f32.xlu0 %v1716
        %v1718 = vpop.xlane.xlu0 %1717
        %v1719 = vsel %vm719, %v540, -inf
        %1720 = vmax.xlane.f32.xlu0 %v1719
        %v1721 = vpop.xlane.xlu0 %1720
        %v1722 = vsel %vm719, %v541, -inf
        %1723 = vmax.xlane.f32.xlu0 %v1722
        %v1724 = vpop.xlane.xlu0 %1723
        %v1725 = vsel %vm719, %v542, -inf
        %1726 = vmax.xlane.f32.xlu0 %v1725
        %v1727 = vpop.xlane.xlu0 %1726
        %v1728 = vsel %vm719, %v543, -inf
        %1729 = vmax.xlane.f32.xlu0 %v1728
        %v1730 = vpop.xlane.xlu0 %1729
        %v1731 = vsel %vm719, %v544, -inf
        %1732 = vmax.xlane.f32.xlu0 %v1731
        %v1733 = vpop.xlane.xlu0 %1732
        %v1734 = vsel %vm719, %v545, -inf
        %1735 = vmax.xlane.f32.xlu0 %v1734
        %v1736 = vpop.xlane.xlu0 %1735
        %v1737 = vsel %vm719, %v546, -inf
        %1738 = vmax.xlane.f32.xlu0 %v1737
        %v1739 = vpop.xlane.xlu0 %1738
        %v1740 = vsel %vm719, %v547, -inf
        %1741 = vmax.xlane.f32.xlu0 %v1740
        %v1742 = vpop.xlane.xlu0 %1741
        %v1743 = vsel %vm719, %v548, -inf
        %1744 = vmax.xlane.f32.xlu0 %v1743
        %v1745 = vpop.xlane.xlu0 %1744
        %v1746 = vsel %vm719, %v549, -inf
        %1747 = vmax.xlane.f32.xlu0 %v1746
        %v1748 = vpop.xlane.xlu0 %1747
        %v1749 = vsel %vm719, %v550, -inf
        %1750 = vmax.xlane.f32.xlu0 %v1749
        %v1751 = vpop.xlane.xlu0 %1750
        %v1752 = vsel %vm719, %v551, -inf
        %1753 = vmax.xlane.f32.xlu0 %v1752
        %v1754 = vpop.xlane.xlu0 %1753
        %v1755 = vsel %vm719, %v552, -inf
        %1756 = vmax.xlane.f32.xlu0 %v1755
        %v1757 = vpop.xlane.xlu0 %1756
        %v1758 = vsel %vm719, %v553, -inf
        %1759 = vmax.xlane.f32.xlu0 %v1758
        %v1760 = vpop.xlane.xlu0 %1759
        %v1761 = vsel %vm719, %v554, -inf
        %1762 = vmax.xlane.f32.xlu0 %v1761
        %v1763 = vpop.xlane.xlu0 %1762
        %v1764 = vsel %vm719, %v555, -inf
        %1765 = vmax.xlane.f32.xlu0 %v1764
        %v1766 = vpop.xlane.xlu0 %1765
        %v1767 = vsel %vm719, %v556, -inf
        %1768 = vmax.xlane.f32.xlu0 %v1767
        %v1769 = vpop.xlane.xlu0 %1768
        %v1770 = vsel %vm719, %v557, -inf
        %1771 = vmax.xlane.f32.xlu0 %v1770
        %v1772 = vpop.xlane.xlu0 %1771
        %v1773 = vsel %vm719, %v558, -inf
        %1774 = vmax.xlane.f32.xlu0 %v1773
        %v1775 = vpop.xlane.xlu0 %1774
        %v1776 = vsel %vm719, %v559, -inf
        %1777 = vmax.xlane.f32.xlu0 %v1776
        %v1778 = vpop.xlane.xlu0 %1777
        %v1779 = vsel %vm719, %v560, -inf
        %1780 = vmax.xlane.f32.xlu0 %v1779
        %v1781 = vpop.xlane.xlu0 %1780
        %v1782 = vsel %vm719, %v561, -inf
        %1783 = vmax.xlane.f32.xlu0 %v1782
        %v1784 = vpop.xlane.xlu0 %1783
        %v1785 = vsel %vm719, %v562, -inf
        %1786 = vmax.xlane.f32.xlu0 %v1785
        %v1787 = vpop.xlane.xlu0 %1786
        %v1788 = vsel %vm719, %v563, -inf
        %1789 = vmax.xlane.f32.xlu0 %v1788
        %v1790 = vpop.xlane.xlu0 %1789
        %v1791 = vsel %vm719, %v564, -inf
        %1792 = vmax.xlane.f32.xlu0 %v1791
        %v1793 = vpop.xlane.xlu0 %1792
        %v1794 = vsel %vm719, %v565, -inf
        %1795 = vmax.xlane.f32.xlu0 %v1794
        %v1796 = vpop.xlane.xlu0 %1795
        %v1797 = vsel %vm719, %v566, -inf
        %1798 = vmax.xlane.f32.xlu0 %v1797
        %v1799 = vpop.xlane.xlu0 %1798
        %v1800 = vsel %vm719, %v567, -inf
        %1801 = vmax.xlane.f32.xlu0 %v1800
        %v1802 = vpop.xlane.xlu0 %1801
        %v1803 = vsel %vm719, %v568, -inf
        %1804 = vmax.xlane.f32.xlu0 %v1803
        %v1805 = vpop.xlane.xlu0 %1804
        %v1806 = vsel %vm719, %v569, -inf
        %1807 = vmax.xlane.f32.xlu0 %v1806
        %v1808 = vpop.xlane.xlu0 %1807
        %v1809 = vsel %vm719, %v570, -inf
        %1810 = vmax.xlane.f32.xlu0 %v1809
        %v1811 = vpop.xlane.xlu0 %1810
        %v1812 = vsel %vm719, %v571, -inf
        %1813 = vmax.xlane.f32.xlu0 %v1812
        %v1814 = vpop.xlane.xlu0 %1813
        %v1815 = vsel %vm719, %v572, -inf
        %1816 = vmax.xlane.f32.xlu0 %v1815
        %v1817 = vpop.xlane.xlu0 %1816
        %v1818 = vsel %vm719, %v573, -inf
        %1819 = vmax.xlane.f32.xlu0 %v1818
        %v1820 = vpop.xlane.xlu0 %1819
        %v1821 = vsel %vm719, %v574, -inf
        %1822 = vmax.xlane.f32.xlu0 %v1821
        %v1823 = vpop.xlane.xlu0 %1822
        %v1824 = vsel %vm719, %v575, -inf
        %1825 = vmax.xlane.f32.xlu0 %v1824
        %v1826 = vpop.xlane.xlu0 %1825
        %v1827 = vsel %vm719, %v576, -inf
        %1828 = vmax.xlane.f32.xlu0 %v1827
        %v1829 = vpop.xlane.xlu0 %1828
        %v1830 = vsel %vm719, %v577, -inf
        %1831 = vmax.xlane.f32.xlu0 %v1830
        %v1832 = vpop.xlane.xlu0 %1831
        %v1833 = vsel %vm719, %v578, -inf
        %1834 = vmax.xlane.f32.xlu0 %v1833
        %v1835 = vpop.xlane.xlu0 %1834
        %v1836 = vsel %vm719, %v579, -inf
        %1837 = vmax.xlane.f32.xlu0 %v1836
        %v1838 = vpop.xlane.xlu0 %1837
        %v1839 = vsel %vm719, %v580, -inf
        %1840 = vmax.xlane.f32.xlu0 %v1839
        %v1841 = vpop.xlane.xlu0 %1840
        %v1842 = vsel %vm719, %v581, -inf
        %1843 = vmax.xlane.f32.xlu0 %v1842
        %v1844 = vpop.xlane.xlu0 %1843
        %v1845 = vsel %vm719, %v582, -inf
        %1846 = vmax.xlane.f32.xlu0 %v1845
        %v1847 = vpop.xlane.xlu0 %1846
        %v1848 = vsel %vm719, %v583, -inf
        %1849 = vmax.xlane.f32.xlu0 %v1848
        %v1850 = vpop.xlane.xlu0 %1849
        %v1851 = vsel %vm719, %v584, -inf
        %1852 = vmax.xlane.f32.xlu0 %v1851
        %v1853 = vpop.xlane.xlu0 %1852
        %v1854 = vsel %vm719, %v585, -inf
        %1855 = vmax.xlane.f32.xlu0 %v1854
        %v1856 = vpop.xlane.xlu0 %1855
        %v1857 = vsel %vm719, %v586, -inf
        %1858 = vmax.xlane.f32.xlu0 %v1857
        %v1859 = vpop.xlane.xlu0 %1858
        %v1860 = vsel %vm719, %v587, -inf
        %1861 = vmax.xlane.f32.xlu0 %v1860
        %v1862 = vpop.xlane.xlu0 %1861
        %v1863 = vsel %vm719, %v588, -inf
        %1864 = vmax.xlane.f32.xlu0 %v1863
        %v1865 = vpop.xlane.xlu0 %1864
        %v1866 = vsel %vm719, %v589, -inf
        %1867 = vmax.xlane.f32.xlu0 %v1866
        %v1868 = vpop.xlane.xlu0 %1867
        %v1869 = vsel %vm719, %v590, -inf
        %1870 = vmax.xlane.f32.xlu0 %v1869
        %v1871 = vpop.xlane.xlu0 %1870
        %v1872 = vsel %vm719, %v591, -inf
        %1873 = vmax.xlane.f32.xlu0 %v1872
        %v1874 = vpop.xlane.xlu0 %1873
        %v1875 = vsel %vm719, %v592, -inf
        %1876 = vmax.xlane.f32.xlu0 %v1875
        %v1877 = vpop.xlane.xlu0 %1876
        %v1878 = vsel %vm719, %v593, -inf
        %1879 = vmax.xlane.f32.xlu0 %v1878
        %v1880 = vpop.xlane.xlu0 %1879
        %v1881 = vsel %vm719, %v594, -inf
        %1882 = vmax.xlane.f32.xlu0 %v1881
        %v1883 = vpop.xlane.xlu0 %1882
        %v1884 = vsel %vm719, %v595, -inf
        %1885 = vmax.xlane.f32.xlu0 %v1884
        %v1886 = vpop.xlane.xlu0 %1885
        %v1887 = vsel %vm719, %v596, -inf
        %1888 = vmax.xlane.f32.xlu0 %v1887
        %v1889 = vpop.xlane.xlu0 %1888
        %v1890 = vsel %vm719, %v597, -inf
        %1891 = vmax.xlane.f32.xlu0 %v1890
        %v1892 = vpop.xlane.xlu0 %1891
        %v1893 = vsel %vm719, %v598, -inf
        %1894 = vmax.xlane.f32.xlu0 %v1893
        %v1895 = vpop.xlane.xlu0 %1894
        %v1896 = vsel %vm719, %v599, -inf
        %1897 = vmax.xlane.f32.xlu0 %v1896
        %v1898 = vpop.xlane.xlu0 %1897
        %v1899 = vsel %vm719, %v600, -inf
        %1900 = vmax.xlane.f32.xlu0 %v1899
        %v1901 = vpop.xlane.xlu0 %1900
        %v1902 = vsel %vm719, %v601, -inf
        %1903 = vmax.xlane.f32.xlu0 %v1902
        %v1904 = vpop.xlane.xlu0 %1903
        %v1905 = vsel %vm719, %v602, -inf
        %1906 = vmax.xlane.f32.xlu0 %v1905
        %v1907 = vpop.xlane.xlu0 %1906
        %v1908 = vsel %vm719, %v603, -inf
        %1909 = vmax.xlane.f32.xlu0 %v1908
        %v1910 = vpop.xlane.xlu0 %1909
        %v1911 = vsel %vm719, %v604, -inf
        %1912 = vmax.xlane.f32.xlu0 %v1911
        %v1913 = vpop.xlane.xlu0 %1912
        %v1914 = vsel %vm719, %v605, -inf
        %1915 = vmax.xlane.f32.xlu0 %v1914
        %v1916 = vpop.xlane.xlu0 %1915
        %v1917 = vsel %vm719, %v606, -inf
        %1918 = vmax.xlane.f32.xlu0 %v1917
        %v1919 = vpop.xlane.xlu0 %1918
        %v1920 = vsel %vm719, %v607, -inf
        %1921 = vmax.xlane.f32.xlu0 %v1920
        %v1922 = vpop.xlane.xlu0 %1921
        %v1923 = vsel %vm719, %v608, -inf
        %1924 = vmax.xlane.f32.xlu0 %v1923
        %v1925 = vpop.xlane.xlu0 %1924
        %v1926 = vsel %vm719, %v609, -inf
        %1927 = vmax.xlane.f32.xlu0 %v1926
        %v1928 = vpop.xlane.xlu0 %1927
        %v1929 = vsel %vm719, %v610, -inf
        %1930 = vmax.xlane.f32.xlu0 %v1929
        %v1931 = vpop.xlane.xlu0 %1930
        %v1932 = vsel %vm719, %v611, -inf
        %1933 = vmax.xlane.f32.xlu0 %v1932
        %v1934 = vpop.xlane.xlu0 %1933
        %v1935 = vsel %vm719, %v612, -inf
        %1936 = vmax.xlane.f32.xlu0 %v1935
        %v1937 = vpop.xlane.xlu0 %1936
        %v1938 = vsel %vm719, %v613, -inf
        %1939 = vmax.xlane.f32.xlu0 %v1938
        %v1940 = vpop.xlane.xlu0 %1939
        %v1941 = vsel %vm719, %v614, -inf
        %1942 = vmax.xlane.f32.xlu0 %v1941
        %v1943 = vpop.xlane.xlu0 %1942
        %v1944 = vsel %vm719, %v615, -inf
        %1945 = vmax.xlane.f32.xlu0 %v1944
        %v1946 = vpop.xlane.xlu0 %1945
        %v1947 = vsel %vm719, %v616, -inf
        %1948 = vmax.xlane.f32.xlu0 %v1947
        %v1949 = vpop.xlane.xlu0 %1948
        %v1950 = vsel %vm719, %v617, -inf
        %1951 = vmax.xlane.f32.xlu0 %v1950
        %v1952 = vpop.xlane.xlu0 %1951
        %v1953 = vsel %vm719, %v618, -inf
        %1954 = vmax.xlane.f32.xlu0 %v1953
        %v1955 = vpop.xlane.xlu0 %1954
        %v1956 = vsel %vm719, %v619, -inf
        %1957 = vmax.xlane.f32.xlu0 %v1956
        %v1958 = vpop.xlane.xlu0 %1957
        %v1959 = vsel %vm719, %v620, -inf
        %1960 = vmax.xlane.f32.xlu0 %v1959
        %v1961 = vpop.xlane.xlu0 %1960
        %v1962 = vsel %vm719, %v621, -inf
        %1963 = vmax.xlane.f32.xlu0 %v1962
        %v1964 = vpop.xlane.xlu0 %1963
        %v1965 = vsel %vm719, %v622, -inf
        %1966 = vmax.xlane.f32.xlu0 %v1965
        %v1967 = vpop.xlane.xlu0 %1966
        %v1968 = vsel %vm719, %v623, -inf
        %1969 = vmax.xlane.f32.xlu0 %v1968
        %v1970 = vpop.xlane.xlu0 %1969
        %v1971 = vsel %vm719, %v624, -inf
        %1972 = vmax.xlane.f32.xlu0 %v1971
        %v1973 = vpop.xlane.xlu0 %1972
        %v1974 = vsel %vm719, %v625, -inf
        %1975 = vmax.xlane.f32.xlu0 %v1974
        %v1976 = vpop.xlane.xlu0 %1975
        %v1977 = vsel %vm719, %v626, -inf
        %1978 = vmax.xlane.f32.xlu0 %v1977
        %v1979 = vpop.xlane.xlu0 %1978
        %v1980 = vsel %vm719, %v627, -inf
        %1981 = vmax.xlane.f32.xlu0 %v1980
        %v1982 = vpop.xlane.xlu0 %1981
        %v1983 = vsel %vm719, %v628, -inf
        %1984 = vmax.xlane.f32.xlu0 %v1983
        %v1985 = vpop.xlane.xlu0 %1984
        %v1986 = vsel %vm719, %v629, -inf
        %1987 = vmax.xlane.f32.xlu0 %v1986
        %v1988 = vpop.xlane.xlu0 %1987
        %v1989 = vsel %vm719, %v630, -inf
        %1990 = vmax.xlane.f32.xlu0 %v1989
        %v1991 = vpop.xlane.xlu0 %1990
        %v1992 = vsel %vm719, %v631, -inf
        %1993 = vmax.xlane.f32.xlu0 %v1992
        %v1994 = vpop.xlane.xlu0 %1993
        %v1995 = vsel %vm719, %v632, -inf
        %1996 = vmax.xlane.f32.xlu0 %v1995
        %v1997 = vpop.xlane.xlu0 %1996
        %v1998 = vsel %vm719, %v633, -inf
        %1999 = vmax.xlane.f32.xlu0 %v1998
        %v2000 = vpop.xlane.xlu0 %1999
        %v2001 = vsel %vm719, %v634, -inf
        %2002 = vmax.xlane.f32.xlu0 %v2001
        %v2003 = vpop.xlane.xlu0 %2002
        %v2004 = vsel %vm719, %v635, -inf
        %2005 = vmax.xlane.f32.xlu0 %v2004
        %v2006 = vpop.xlane.xlu0 %2005
        %v2007 = vsel %vm719, %v636, -inf
        %2008 = vmax.xlane.f32.xlu0 %v2007
        %v2009 = vpop.xlane.xlu0 %2008
        %v2010 = vsel %vm719, %v637, -inf
        %2011 = vmax.xlane.f32.xlu0 %v2010
        %v2012 = vpop.xlane.xlu0 %2011
        %v2013 = vsel %vm719, %v638, -inf
        %2014 = vmax.xlane.f32.xlu0 %v2013
        %v2015 = vpop.xlane.xlu0 %2014
        %v2016 = vsel %vm719, %v639, -inf
        %2017 = vmax.xlane.f32.xlu0 %v2016
        %v2018 = vpop.xlane.xlu0 %2017
        %v2019 = vsel %vm719, %v640, -inf
        %2020 = vmax.xlane.f32.xlu0 %v2019
        %v2021 = vpop.xlane.xlu0 %2020
        %v2022 = vsel %vm719, %v641, -inf
        %2023 = vmax.xlane.f32.xlu0 %v2022
        %v2024 = vpop.xlane.xlu0 %2023
        %v2025 = vsel %vm719, %v642, -inf
        %2026 = vmax.xlane.f32.xlu0 %v2025
        %v2027 = vpop.xlane.xlu0 %2026
        %v2028 = vsel %vm719, %v643, -inf
        %2029 = vmax.xlane.f32.xlu0 %v2028
        %v2030 = vpop.xlane.xlu0 %2029
        %v2031 = vsel %vm719, %v644, -inf
        %2032 = vmax.xlane.f32.xlu0 %v2031
        %v2033 = vpop.xlane.xlu0 %2032
        %v2034 = vsel %vm719, %v645, -inf
        %2035 = vmax.xlane.f32.xlu0 %v2034
        %v2036 = vpop.xlane.xlu0 %2035
        %v2037 = vsel %vm719, %v646, -inf
        %2038 = vmax.xlane.f32.xlu0 %v2037
        %v2039 = vpop.xlane.xlu0 %2038
        %v2040 = vsel %vm719, %v647, -inf
        %2041 = vmax.xlane.f32.xlu0 %v2040
        %v2042 = vpop.xlane.xlu0 %2041
        %v2043 = vsel %vm719, %v648, -inf
        %2044 = vmax.xlane.f32.xlu0 %v2043
        %v2045 = vpop.xlane.xlu0 %2044
        %v2046 = vsel %vm719, %v649, -inf
        %2047 = vmax.xlane.f32.xlu0 %v2046
        %v2048 = vpop.xlane.xlu0 %2047
        %v2049 = vsel %vm719, %v650, -inf
        %2050 = vmax.xlane.f32.xlu0 %v2049
        %v2051 = vpop.xlane.xlu0 %2050
        %v2052 = vsel %vm719, %v651, -inf
        %2053 = vmax.xlane.f32.xlu0 %v2052
        %v2054 = vpop.xlane.xlu0 %2053
        %v2055 = vsel %vm719, %v652, -inf
        %2056 = vmax.xlane.f32.xlu0 %v2055
        %v2057 = vpop.xlane.xlu0 %2056
        %v2058 = vsel %vm719, %v653, -inf
        %2059 = vmax.xlane.f32.xlu0 %v2058
        %v2060 = vpop.xlane.xlu0 %2059
        %v2061 = vsel %vm719, %v654, -inf
        %2062 = vmax.xlane.f32.xlu0 %v2061
        %v2063 = vpop.xlane.xlu0 %2062
        %v2064 = vsel %vm719, %v655, -inf
        %2065 = vmax.xlane.f32.xlu0 %v2064
        %v2066 = vpop.xlane.xlu0 %2065
        %v2067 = vsel %vm719, %v656, -inf
        %2068 = vmax.xlane.f32.xlu0 %v2067
        %v2069 = vpop.xlane.xlu0 %2068
        %v2070 = vsel %vm719, %v657, -inf
        %2071 = vmax.xlane.f32.xlu0 %v2070
        %v2072 = vpop.xlane.xlu0 %2071
        %v2073 = vsel %vm719, %v658, -inf
        %2074 = vmax.xlane.f32.xlu0 %v2073
        %v2075 = vpop.xlane.xlu0 %2074
        %v2076 = vsel %vm719, %v659, -inf
        %2077 = vmax.xlane.f32.xlu0 %v2076
        %v2078 = vpop.xlane.xlu0 %2077
        %v2079 = vsel %vm719, %v660, -inf
        %2080 = vmax.xlane.f32.xlu0 %v2079
        %v2081 = vpop.xlane.xlu0 %2080
        %v2082 = vsel %vm719, %v661, -inf
        %2083 = vmax.xlane.f32.xlu0 %v2082
        %v2084 = vpop.xlane.xlu0 %2083
        %v2085 = vsel %vm719, %v662, -inf
        %2086 = vmax.xlane.f32.xlu0 %v2085
        %v2087 = vpop.xlane.xlu0 %2086
        %v2088 = vsel %vm719, %v663, -inf
        %2089 = vmax.xlane.f32.xlu0 %v2088
        %v2090 = vpop.xlane.xlu0 %2089
        %v2091 = vsel %vm719, %v664, -inf
        %2092 = vmax.xlane.f32.xlu0 %v2091
        %v2093 = vpop.xlane.xlu0 %2092
        %v2094 = vsel %vm719, %v665, -inf
        %2095 = vmax.xlane.f32.xlu0 %v2094
        %v2096 = vpop.xlane.xlu0 %2095
        %v2097 = vsel %vm719, %v666, -inf
        %2098 = vmax.xlane.f32.xlu0 %v2097
        %v2099 = vpop.xlane.xlu0 %2098
        %v2100 = vsel %vm719, %v667, -inf
        %2101 = vmax.xlane.f32.xlu0 %v2100
        %v2102 = vpop.xlane.xlu0 %2101
        %v2103 = vsel %vm719, %v668, -inf
        %2104 = vmax.xlane.f32.xlu0 %v2103
        %v2105 = vpop.xlane.xlu0 %2104
        %v2106 = vsel %vm719, %v669, -inf
        %2107 = vmax.xlane.f32.xlu0 %v2106
        %v2108 = vpop.xlane.xlu0 %2107
        %v2109 = vsel %vm719, %v670, -inf
        %2110 = vmax.xlane.f32.xlu0 %v2109
        %v2111 = vpop.xlane.xlu0 %2110
        %v2112 = vsel %vm719, %v671, -inf
        %2113 = vmax.xlane.f32.xlu0 %v2112
        %v2114 = vpop.xlane.xlu0 %2113
        %v2115 = vsel %vm719, %v672, -inf
        %2116 = vmax.xlane.f32.xlu0 %v2115
        %v2117 = vpop.xlane.xlu0 %2116
        %v2118 = vsel %vm719, %v673, -inf
        %2119 = vmax.xlane.f32.xlu0 %v2118
        %v2120 = vpop.xlane.xlu0 %2119
        %v2121 = vsel %vm719, %v674, -inf
        %2122 = vmax.xlane.f32.xlu0 %v2121
        %v2123 = vpop.xlane.xlu0 %2122
        %v2124 = vsel %vm719, %v675, -inf
        %2125 = vmax.xlane.f32.xlu0 %v2124
        %v2126 = vpop.xlane.xlu0 %2125
        %v2127 = vsel %vm719, %v676, -inf
        %2128 = vmax.xlane.f32.xlu0 %v2127
        %v2129 = vpop.xlane.xlu0 %2128
        %v2130 = vsel %vm719, %v677, -inf
        %2131 = vmax.xlane.f32.xlu0 %v2130
        %v2132 = vpop.xlane.xlu0 %2131
        %v2133 = vsel %vm719, %v678, -inf
        %2134 = vmax.xlane.f32.xlu0 %v2133
        %v2135 = vpop.xlane.xlu0 %2134
        %v2136 = vsel %vm719, %v679, -inf
        %2137 = vmax.xlane.f32.xlu0 %v2136
        %v2138 = vpop.xlane.xlu0 %2137
        %v2139 = vsel %vm719, %v680, -inf
        %2140 = vmax.xlane.f32.xlu0 %v2139
        %v2141 = vpop.xlane.xlu0 %2140
        %v2142 = vsel %vm719, %v681, -inf
        %2143 = vmax.xlane.f32.xlu0 %v2142
        %v2144 = vpop.xlane.xlu0 %2143
        %v2145 = vsel %vm719, %v682, -inf
        %2146 = vmax.xlane.f32.xlu0 %v2145
        %v2147 = vpop.xlane.xlu0 %2146
        %v2148 = vsel %vm719, %v683, -inf
        %2149 = vmax.xlane.f32.xlu0 %v2148
        %v2150 = vpop.xlane.xlu0 %2149
        %v2151 = vsel %vm719, %v684, -inf
        %2152 = vmax.xlane.f32.xlu0 %v2151
        %v2153 = vpop.xlane.xlu0 %2152
        %v2154 = vsel %vm719, %v685, -inf
        %2155 = vmax.xlane.f32.xlu0 %v2154
        %v2156 = vpop.xlane.xlu0 %2155
        %v2157 = vsel %vm719, %v686, -inf
        %2158 = vmax.xlane.f32.xlu0 %v2157
        %v2159 = vpop.xlane.xlu0 %2158
        %v2160 = vsel %vm719, %v687, -inf
        %2161 = vmax.xlane.f32.xlu0 %v2160
        %v2162 = vpop.xlane.xlu0 %2161
        %v2163 = vsel %vm719, %v688, -inf
        %2164 = vmax.xlane.f32.xlu0 %v2163
        %v2165 = vpop.xlane.xlu0 %2164
        %v2166 = vsel %vm719, %v689, -inf
        %2167 = vmax.xlane.f32.xlu0 %v2166
        %v2168 = vpop.xlane.xlu0 %2167
        %v2169 = vsel %vm719, %v690, -inf
        %2170 = vmax.xlane.f32.xlu0 %v2169
        %v2171 = vpop.xlane.xlu0 %2170
        %v2172 = vsel %vm719, %v691, -inf
        %2173 = vmax.xlane.f32.xlu0 %v2172
        %v2174 = vpop.xlane.xlu0 %2173
        %v2175 = vsel %vm719, %v692, -inf
        %2176 = vmax.xlane.f32.xlu0 %v2175
        %v2177 = vpop.xlane.xlu0 %2176
        %v2178 = vsel %vm719, %v693, -inf
        %2179 = vmax.xlane.f32.xlu0 %v2178
        %v2180 = vpop.xlane.xlu0 %2179
        %v2181 = vsel %vm719, %v694, -inf
        %2182 = vmax.xlane.f32.xlu0 %v2181
        %v2183 = vpop.xlane.xlu0 %2182
        %v2184 = vsel %vm719, %v695, -inf
        %2185 = vmax.xlane.f32.xlu0 %v2184
        %v2186 = vpop.xlane.xlu0 %2185
        %v2187 = vsel %vm719, %v696, -inf
        %2188 = vmax.xlane.f32.xlu0 %v2187
        %v2189 = vpop.xlane.xlu0 %2188
        %v2190 = vsel %vm719, %v697, -inf
        %2191 = vmax.xlane.f32.xlu0 %v2190
        %v2192 = vpop.xlane.xlu0 %2191
        %v2193 = vsel %vm719, %v698, -inf
        %2194 = vmax.xlane.f32.xlu0 %v2193
        %v2195 = vpop.xlane.xlu0 %2194
        %v2196 = vsel %vm719, %v699, -inf
        %2197 = vmax.xlane.f32.xlu0 %v2196
        %v2198 = vpop.xlane.xlu0 %2197
        %v2199 = vsel %vm719, %v700, -inf
        %2200 = vmax.xlane.f32.xlu0 %v2199
        %v2201 = vpop.xlane.xlu0 %2200
        %v2202 = vsel %vm719, %v701, -inf
        %2203 = vmax.xlane.f32.xlu0 %v2202
        %v2204 = vpop.xlane.xlu0 %2203
        %v2205 = vsel %vm719, %v702, -inf
        %2206 = vmax.xlane.f32.xlu0 %v2205
        %v2207 = vpop.xlane.xlu0 %2206
        %v2208 = vsel %vm719, %v703, -inf
        %2209 = vmax.xlane.f32.xlu0 %v2208
        %v2210 = vpop.xlane.xlu0 %2209
        %v2211 = vsel %vm719, %v704, -inf
        %2212 = vmax.xlane.f32.xlu0 %v2211
        %v2213 = vpop.xlane.xlu0 %2212
        %v2214 = vsel %vm719, %v705, -inf
        %2215 = vmax.xlane.f32.xlu0 %v2214
        %v2216 = vpop.xlane.xlu0 %2215
        %v2217 = vsel %vm719, %v706, -inf
        %2218 = vmax.xlane.f32.xlu0 %v2217
        %v2219 = vpop.xlane.xlu0 %2218
        %v2220 = vsel %vm719, %v707, -inf
        %2221 = vmax.xlane.f32.xlu0 %v2220
        %v2222 = vpop.xlane.xlu0 %2221
        %v2223 = vsel %vm719, %v708, -inf
        %2224 = vmax.xlane.f32.xlu0 %v2223
        %v2225 = vpop.xlane.xlu0 %2224
        %v2226 = vsel %vm719, %v709, -inf
        %2227 = vmax.xlane.f32.xlu0 %v2226
        %v2228 = vpop.xlane.xlu0 %2227
        %v2229 = vsel %vm719, %v710, -inf
        %2230 = vmax.xlane.f32.xlu0 %v2229
        %v2231 = vpop.xlane.xlu0 %2230
        %v2232 = vsel %vm719, %v711, -inf
        %2233 = vmax.xlane.f32.xlu0 %v2232
        %v2234 = vpop.xlane.xlu0 %2233
        %v2235 = vsel %vm719, %v712, -inf
        %2236 = vmax.xlane.f32.xlu0 %v2235
        %v2237 = vpop.xlane.xlu0 %2236
        %v2238 = vsel %vm719, %v713, -inf
        %2239 = vmax.xlane.f32.xlu0 %v2238
        %v2240 = vpop.xlane.xlu0 %2239
        %v2241 = vsel %vm719, %v714, -inf
        %2242 = vmax.xlane.f32.xlu0 %v2241
        %v2243 = vpop.xlane.xlu0 %2242
        %v2244 = vsel %vm719, %v715, -inf
        %2245 = vmax.xlane.f32.xlu0 %v2244
        %v2246 = vpop.xlane.xlu0 %2245
        %v2247 = vsel %vm719, %v716, -inf
        %2248 = vmax.xlane.f32.xlu0 %v2247
        %v2249 = vpop.xlane.xlu0 %2248
        %v2250 = vsel %vm719, %v717, -inf
        %2251 = vmax.xlane.f32.xlu0 %v2250
        %v2252 = vpop.xlane.xlu0 %2251
        %v2253 = vsel %vm719, %v718, -inf
        %2254 = vmax.xlane.f32.xlu0 %v2253
        %v2255 = vpop.xlane.xlu0 %2254
        %v2256 = vld [vmem:[#allocation2] sm:$0xff]
        %v2257 = vld [vmem:[%s1] sm:$0xff]
        %v2258 = vld [vmem:[%s1 + $0x8] sm:$0xff]
        %v2259 = vld [vmem:[%s1 + $0x10] sm:$0xff]
        %v2260 = vld [vmem:[%s1 + $0x18] sm:$0xff]
        %v2261 = vld [vmem:[%s1 + $0x20] sm:$0xff]
        %v2262 = vld [vmem:[%s1 + $0x28] sm:$0xff]
        %v2263 = vld [vmem:[%s1 + $0x30] sm:$0xff]
        %v2264 = vld [vmem:[%s1 + $0x38] sm:$0xff]
        %v2265 = vld [vmem:[%s1 + $0x40] sm:$0xff]
        %v2266 = vld [vmem:[%s1 + $0x48] sm:$0xff]
        %v2267 = vld [vmem:[%s1 + $0x50] sm:$0xff]
        %v2268 = vld [vmem:[%s1 + $0x58] sm:$0xff]
        %v2269 = vld [vmem:[%s1 + $0x60] sm:$0xff]
        %v2270 = vld [vmem:[%s1 + $0x68] sm:$0xff]
        %v2271 = vld [vmem:[%s1 + $0x70] sm:$0xff]
        %v2272 = vld [vmem:[%s1 + $0x78] sm:$0xff]
        %v2273 = vld [vmem:[%s1 + $0x80] sm:$0xff]
        %v2274 = vld [vmem:[%s1 + $0x88] sm:$0xff]
        %v2275 = vld [vmem:[%s1 + $0x90] sm:$0xff]
        %v2276 = vld [vmem:[%s1 + $0x98] sm:$0xff]
        %v2277 = vld [vmem:[%s1 + $0xa0] sm:$0xff]
        %v2278 = vld [vmem:[%s1 + $0xa8] sm:$0xff]
        %v2279 = vld [vmem:[%s1 + $0xb0] sm:$0xff]
        %v2280 = vld [vmem:[%s1 + $0xb8] sm:$0xff]
        %v2281 = vld [vmem:[%s1 + $0xc0] sm:$0xff]
        %v2282 = vld [vmem:[%s1 + $0xc8] sm:$0xff]
        %v2283 = vld [vmem:[%s1 + $0xd0] sm:$0xff]
        %v2284 = vld [vmem:[%s1 + $0xd8] sm:$0xff]
        %v2285 = vld [vmem:[%s1 + $0xe0] sm:$0xff]
        %v2286 = vld [vmem:[%s1 + $0xe8] sm:$0xff]
        %v2287 = vld [vmem:[%s1 + $0xf0] sm:$0xff]
        %v2288 = vld [vmem:[%s1 + $0xf8] sm:$0xff]
        %v2289 = vld [vmem:[%s1 + $0x100] sm:$0xff]
        %v2290 = vld [vmem:[%s1 + $0x108] sm:$0xff]
        %v2291 = vld [vmem:[%s1 + $0x110] sm:$0xff]
        %v2292 = vld [vmem:[%s1 + $0x118] sm:$0xff]
        %v2293 = vld [vmem:[%s1 + $0x120] sm:$0xff]
        %v2294 = vld [vmem:[%s1 + $0x128] sm:$0xff]
        %v2295 = vld [vmem:[%s1 + $0x130] sm:$0xff]
        %v2296 = vld [vmem:[%s1 + $0x138] sm:$0xff]
        %v2297 = vld [vmem:[%s1 + $0x140] sm:$0xff]
        %v2298 = vld [vmem:[%s1 + $0x148] sm:$0xff]
        %v2299 = vld [vmem:[%s1 + $0x150] sm:$0xff]
        %v2300 = vld [vmem:[%s1 + $0x158] sm:$0xff]
        %v2301 = vld [vmem:[%s1 + $0x160] sm:$0xff]
        %v2302 = vld [vmem:[%s1 + $0x168] sm:$0xff]
        %v2303 = vld [vmem:[%s1 + $0x170] sm:$0xff]
        %v2304 = vld [vmem:[%s1 + $0x178] sm:$0xff]
        %v2305 = vld [vmem:[%s1 + $0x180] sm:$0xff]
        %v2306 = vld [vmem:[%s1 + $0x188] sm:$0xff]
        %v2307 = vld [vmem:[%s1 + $0x190] sm:$0xff]
        %v2308 = vld [vmem:[%s1 + $0x198] sm:$0xff]
        %v2309 = vld [vmem:[%s1 + $0x1a0] sm:$0xff]
        %v2310 = vld [vmem:[%s1 + $0x1a8] sm:$0xff]
        %v2311 = vld [vmem:[%s1 + $0x1b0] sm:$0xff]
        %v2312 = vld [vmem:[%s1 + $0x1b8] sm:$0xff]
        %v2313 = vld [vmem:[%s1 + $0x1c0] sm:$0xff]
        %v2314 = vld [vmem:[%s1 + $0x1c8] sm:$0xff]
        %v2315 = vld [vmem:[%s1 + $0x1d0] sm:$0xff]
        %v2316 = vld [vmem:[%s1 + $0x1d8] sm:$0xff]
        %v2317 = vld [vmem:[%s1 + $0x1e0] sm:$0xff]
        %v2318 = vld [vmem:[%s1 + $0x1e8] sm:$0xff]
        %v2319 = vld [vmem:[%s1 + $0x1f0] sm:$0xff]
        %v2320 = vld [vmem:[%s1 + $0x1f8] sm:$0xff]
        %v2833 = vlaneseq
        %v2834 = vand.u32 %v2833, 127
        %v2835 = vperm.slane %v722, %v2834
        %v2836 = vadd.s32 %v2834, 4294967288
        %v2837 = vperm.slane %v725, %v2836
        %vm2838 = vcmask 130112
        %v2839 = vsel %vm2838, %v2837, %v2835
        %v2840 = vadd.s32 %v2834, 4294967280
        %v2841 = vperm.slane %v728, %v2840
        %vm2842 = vcmask 195712
        %v2843 = vsel %vm2842, %v2841, %v2839
        %v2844 = vadd.s32 %v2834, 4294967272
        %v2845 = vperm.slane %v731, %v2844
        %vm2846 = vcmask 261312
        %v2847 = vsel %vm2846, %v2845, %v2843
        %v2848 = vadd.s32 %v2834, 4294967264
        %v2849 = vperm.slane %v734, %v2848
        %vm2850 = vcmask 326912
        %v2851 = vsel %vm2850, %v2849, %v2847
        %v2852 = vadd.s32 %v2834, 4294967256
        %v2853 = vperm.slane %v737, %v2852
        %vm2854 = vcmask 392512
        %v2855 = vsel %vm2854, %v2853, %v2851
        %v2856 = vadd.s32 %v2834, 4294967248
        %v2857 = vperm.slane %v740, %v2856
        %vm2858 = vcmask 458112
        %v2859 = vsel %vm2858, %v2857, %v2855
        %v2860 = vadd.s32 %v2834, 4294967240
        %v2861 = vperm.slane %v743, %v2860
        %vm2862 = vcmask 523712
        %v2863 = vsel %vm2862, %v2861, %v2859
        %v2864 = vadd.s32 %v2834, 4294967232
        %v2865 = vperm.slane %v746, %v2864
        %vm2866 = vcmask 589312
        %v2867 = vsel %vm2866, %v2865, %v2863
        %v2868 = vadd.s32 %v2834, 4294967224
        %v2869 = vperm.slane %v749, %v2868
        %vm2870 = vcmask 654912
        %v2871 = vsel %vm2870, %v2869, %v2867
        %v2872 = vadd.s32 %v2834, 4294967216
        %v2873 = vperm.slane %v752, %v2872
        %vm2874 = vcmask 720512
        %v2875 = vsel %vm2874, %v2873, %v2871
        %v2876 = vadd.s32 %v2834, 4294967208
        %v2877 = vperm.slane %v755, %v2876
        %vm2878 = vcmask 786112
        %v2879 = vsel %vm2878, %v2877, %v2875
        %v2880 = vadd.s32 %v2834, 4294967200
        %v2881 = vperm.slane %v758, %v2880
        %vm2882 = vcmask 851712
        %v2883 = vsel %vm2882, %v2881, %v2879
        %v2884 = vadd.s32 %v2834, 4294967192
        %v2885 = vperm.slane %v761, %v2884
        %vm2886 = vcmask 917312
        %v2887 = vsel %vm2886, %v2885, %v2883
        %v2888 = vadd.s32 %v2834, 4294967184
        %v2889 = vperm.slane %v764, %v2888
        %vm2890 = vcmask 982912
        %v2891 = vsel %vm2890, %v2889, %v2887
        %v2892 = vadd.s32 %v2834, 4294967176
        %v2893 = vperm.slane %v767, %v2892
        %vm2894 = vcmask 1048512
        %v2895 = vsel %vm2894, %v2893, %v2891
        %v2896 = vperm.slane %v770, %v2834
        %v2897 = vperm.slane %v773, %v2836
        %v2898 = vsel %vm2838, %v2897, %v2896
        %v2899 = vperm.slane %v776, %v2840
        %v2900 = vsel %vm2842, %v2899, %v2898
        %v2901 = vperm.slane %v779, %v2844
        %v2902 = vsel %vm2846, %v2901, %v2900
        %v2903 = vperm.slane %v782, %v2848
        %v2904 = vsel %vm2850, %v2903, %v2902
        %v2905 = vperm.slane %v785, %v2852
        %v2906 = vsel %vm2854, %v2905, %v2904
        %v2907 = vperm.slane %v788, %v2856
        %v2908 = vsel %vm2858, %v2907, %v2906
        %v2909 = vperm.slane %v791, %v2860
        %v2910 = vsel %vm2862, %v2909, %v2908
        %v2911 = vperm.slane %v794, %v2864
        %v2912 = vsel %vm2866, %v2911, %v2910
        %v2913 = vperm.slane %v797, %v2868
        %v2914 = vsel %vm2870, %v2913, %v2912
        %v2915 = vperm.slane %v800, %v2872
        %v2916 = vsel %vm2874, %v2915, %v2914
        %v2917 = vperm.slane %v803, %v2876
        %v2918 = vsel %vm2878, %v2917, %v2916
        %v2919 = vperm.slane %v806, %v2880
        %v2920 = vsel %vm2882, %v2919, %v2918
        %v2921 = vperm.slane %v809, %v2884
        %v2922 = vsel %vm2886, %v2921, %v2920
        %v2923 = vperm.slane %v812, %v2888
        %v2924 = vsel %vm2890, %v2923, %v2922
        %v2925 = vperm.slane %v815, %v2892
        %v2926 = vsel %vm2894, %v2925, %v2924
        %v2927 = vperm.slane %v818, %v2834
        %v2928 = vperm.slane %v821, %v2836
        %v2929 = vsel %vm2838, %v2928, %v2927
        %v2930 = vperm.slane %v824, %v2840
        %v2931 = vsel %vm2842, %v2930, %v2929
        %v2932 = vperm.slane %v827, %v2844
        %v2933 = vsel %vm2846, %v2932, %v2931
        %v2934 = vperm.slane %v830, %v2848
        %v2935 = vsel %vm2850, %v2934, %v2933
        %v2936 = vperm.slane %v833, %v2852
        %v2937 = vsel %vm2854, %v2936, %v2935
        %v2938 = vperm.slane %v836, %v2856
        %v2939 = vsel %vm2858, %v2938, %v2937
        %v2940 = vperm.slane %v839, %v2860
        %v2941 = vsel %vm2862, %v2940, %v2939
        %v2942 = vperm.slane %v842, %v2864
        %v2943 = vsel %vm2866, %v2942, %v2941
        %v2944 = vperm.slane %v845, %v2868
        %v2945 = vsel %vm2870, %v2944, %v2943
        %v2946 = vperm.slane %v848, %v2872
        %v2947 = vsel %vm2874, %v2946, %v2945
        %v2948 = vperm.slane %v851, %v2876
        %v2949 = vsel %vm2878, %v2948, %v2947
        %v2950 = vperm.slane %v854, %v2880
        %v2951 = vsel %vm2882, %v2950, %v2949
        %v2952 = vperm.slane %v857, %v2884
        %v2953 = vsel %vm2886, %v2952, %v2951
        %v2954 = vperm.slane %v860, %v2888
        %v2955 = vsel %vm2890, %v2954, %v2953
        %v2956 = vperm.slane %v863, %v2892
        %v2957 = vsel %vm2894, %v2956, %v2955
        %v2958 = vperm.slane %v866, %v2834
        %v2959 = vperm.slane %v869, %v2836
        %v2960 = vsel %vm2838, %v2959, %v2958
        %v2961 = vperm.slane %v872, %v2840
        %v2962 = vsel %vm2842, %v2961, %v2960
        %v2963 = vperm.slane %v875, %v2844
        %v2964 = vsel %vm2846, %v2963, %v2962
        %v2965 = vperm.slane %v878, %v2848
        %v2966 = vsel %vm2850, %v2965, %v2964
        %v2967 = vperm.slane %v881, %v2852
        %v2968 = vsel %vm2854, %v2967, %v2966
        %v2969 = vperm.slane %v884, %v2856
        %v2970 = vsel %vm2858, %v2969, %v2968
        %v2971 = vperm.slane %v887, %v2860
        %v2972 = vsel %vm2862, %v2971, %v2970
        %v2973 = vperm.slane %v890, %v2864
        %v2974 = vsel %vm2866, %v2973, %v2972
        %v2975 = vperm.slane %v893, %v2868
        %v2976 = vsel %vm2870, %v2975, %v2974
        %v2977 = vperm.slane %v896, %v2872
        %v2978 = vsel %vm2874, %v2977, %v2976
        %v2979 = vperm.slane %v899, %v2876
        %v2980 = vsel %vm2878, %v2979, %v2978
        %v2981 = vperm.slane %v902, %v2880
        %v2982 = vsel %vm2882, %v2981, %v2980
        %v2983 = vperm.slane %v905, %v2884
        %v2984 = vsel %vm2886, %v2983, %v2982
        %v2985 = vperm.slane %v908, %v2888
        %v2986 = vsel %vm2890, %v2985, %v2984
        %v2987 = vperm.slane %v911, %v2892
        %v2988 = vsel %vm2894, %v2987, %v2986
        %v2989 = vperm.slane %v914, %v2834
        %v2990 = vperm.slane %v917, %v2836
        %v2991 = vsel %vm2838, %v2990, %v2989
        %v2992 = vperm.slane %v920, %v2840
        %v2993 = vsel %vm2842, %v2992, %v2991
        %v2994 = vperm.slane %v923, %v2844
        %v2995 = vsel %vm2846, %v2994, %v2993
        %v2996 = vperm.slane %v926, %v2848
        %v2997 = vsel %vm2850, %v2996, %v2995
        %v2998 = vperm.slane %v929, %v2852
        %v2999 = vsel %vm2854, %v2998, %v2997
        %v3000 = vperm.slane %v932, %v2856
        %v3001 = vsel %vm2858, %v3000, %v2999
        %v3002 = vperm.slane %v935, %v2860
        %v3003 = vsel %vm2862, %v3002, %v3001
        %v3004 = vperm.slane %v938, %v2864
        %v3005 = vsel %vm2866, %v3004, %v3003
        %v3006 = vperm.slane %v941, %v2868
        %v3007 = vsel %vm2870, %v3006, %v3005
        %v3008 = vperm.slane %v944, %v2872
        %v3009 = vsel %vm2874, %v3008, %v3007
        %v3010 = vperm.slane %v947, %v2876
        %v3011 = vsel %vm2878, %v3010, %v3009
        %v3012 = vperm.slane %v950, %v2880
        %v3013 = vsel %vm2882, %v3012, %v3011
        %v3014 = vperm.slane %v953, %v2884
        %v3015 = vsel %vm2886, %v3014, %v3013
        %v3016 = vperm.slane %v956, %v2888
        %v3017 = vsel %vm2890, %v3016, %v3015
        %v3018 = vperm.slane %v959, %v2892
        %v3019 = vsel %vm2894, %v3018, %v3017
        %v3020 = vperm.slane %v962, %v2834
        %v3021 = vperm.slane %v965, %v2836
        %v3022 = vsel %vm2838, %v3021, %v3020
        %v3023 = vperm.slane %v968, %v2840
        %v3024 = vsel %vm2842, %v3023, %v3022
        %v3025 = vperm.slane %v971, %v2844
        %v3026 = vsel %vm2846, %v3025, %v3024
        %v3027 = vperm.slane %v974, %v2848
        %v3028 = vsel %vm2850, %v3027, %v3026
        %v3029 = vperm.slane %v977, %v2852
        %v3030 = vsel %vm2854, %v3029, %v3028
        %v3031 = vperm.slane %v980, %v2856
        %v3032 = vsel %vm2858, %v3031, %v3030
        %v3033 = vperm.slane %v983, %v2860
        %v3034 = vsel %vm2862, %v3033, %v3032
        %v3035 = vperm.slane %v986, %v2864
        %v3036 = vsel %vm2866, %v3035, %v3034
        %v3037 = vperm.slane %v989, %v2868
        %v3038 = vsel %vm2870, %v3037, %v3036
        %v3039 = vperm.slane %v992, %v2872
        %v3040 = vsel %vm2874, %v3039, %v3038
        %v3041 = vperm.slane %v995, %v2876
        %v3042 = vsel %vm2878, %v3041, %v3040
        %v3043 = vperm.slane %v998, %v2880
        %v3044 = vsel %vm2882, %v3043, %v3042
        %v3045 = vperm.slane %v1001, %v2884
        %v3046 = vsel %vm2886, %v3045, %v3044
        %v3047 = vperm.slane %v1004, %v2888
        %v3048 = vsel %vm2890, %v3047, %v3046
        %v3049 = vperm.slane %v1007, %v2892
        %v3050 = vsel %vm2894, %v3049, %v3048
        %v3051 = vperm.slane %v1010, %v2834
        %v3052 = vperm.slane %v1013, %v2836
        %v3053 = vsel %vm2838, %v3052, %v3051
        %v3054 = vperm.slane %v1016, %v2840
        %v3055 = vsel %vm2842, %v3054, %v3053
        %v3056 = vperm.slane %v1019, %v2844
        %v3057 = vsel %vm2846, %v3056, %v3055
        %v3058 = vperm.slane %v1022, %v2848
        %v3059 = vsel %vm2850, %v3058, %v3057
        %v3060 = vperm.slane %v1025, %v2852
        %v3061 = vsel %vm2854, %v3060, %v3059
        %v3062 = vperm.slane %v1028, %v2856
        %v3063 = vsel %vm2858, %v3062, %v3061
        %v3064 = vperm.slane %v1031, %v2860
        %v3065 = vsel %vm2862, %v3064, %v3063
        %v3066 = vperm.slane %v1034, %v2864
        %v3067 = vsel %vm2866, %v3066, %v3065
        %v3068 = vperm.slane %v1037, %v2868
        %v3069 = vsel %vm2870, %v3068, %v3067
        %v3070 = vperm.slane %v1040, %v2872
        %v3071 = vsel %vm2874, %v3070, %v3069
        %v3072 = vperm.slane %v1043, %v2876
        %v3073 = vsel %vm2878, %v3072, %v3071
        %v3074 = vperm.slane %v1046, %v2880
        %v3075 = vsel %vm2882, %v3074, %v3073
        %v3076 = vperm.slane %v1049, %v2884
        %v3077 = vsel %vm2886, %v3076, %v3075
        %v3078 = vperm.slane %v1052, %v2888
        %v3079 = vsel %vm2890, %v3078, %v3077
        %v3080 = vperm.slane %v1055, %v2892
        %v3081 = vsel %vm2894, %v3080, %v3079
        %v3082 = vperm.slane %v1058, %v2834
        %v3083 = vperm.slane %v1061, %v2836
        %v3084 = vsel %vm2838, %v3083, %v3082
        %v3085 = vperm.slane %v1064, %v2840
        %v3086 = vsel %vm2842, %v3085, %v3084
        %v3087 = vperm.slane %v1067, %v2844
        %v3088 = vsel %vm2846, %v3087, %v3086
        %v3089 = vperm.slane %v1070, %v2848
        %v3090 = vsel %vm2850, %v3089, %v3088
        %v3091 = vperm.slane %v1073, %v2852
        %v3092 = vsel %vm2854, %v3091, %v3090
        %v3093 = vperm.slane %v1076, %v2856
        %v3094 = vsel %vm2858, %v3093, %v3092
        %v3095 = vperm.slane %v1079, %v2860
        %v3096 = vsel %vm2862, %v3095, %v3094
        %v3097 = vperm.slane %v1082, %v2864
        %v3098 = vsel %vm2866, %v3097, %v3096
        %v3099 = vperm.slane %v1085, %v2868
        %v3100 = vsel %vm2870, %v3099, %v3098
        %v3101 = vperm.slane %v1088, %v2872
        %v3102 = vsel %vm2874, %v3101, %v3100
        %v3103 = vperm.slane %v1091, %v2876
        %v3104 = vsel %vm2878, %v3103, %v3102
        %v3105 = vperm.slane %v1094, %v2880
        %v3106 = vsel %vm2882, %v3105, %v3104
        %v3107 = vperm.slane %v1097, %v2884
        %v3108 = vsel %vm2886, %v3107, %v3106
        %v3109 = vperm.slane %v1100, %v2888
        %v3110 = vsel %vm2890, %v3109, %v3108
        %v3111 = vperm.slane %v1103, %v2892
        %v3112 = vsel %vm2894, %v3111, %v3110
        %v3113 = vperm.slane %v1106, %v2834
        %v3114 = vperm.slane %v1109, %v2836
        %v3115 = vsel %vm2838, %v3114, %v3113
        %v3116 = vperm.slane %v1112, %v2840
        %v3117 = vsel %vm2842, %v3116, %v3115
        %v3118 = vperm.slane %v1115, %v2844
        %v3119 = vsel %vm2846, %v3118, %v3117
        %v3120 = vperm.slane %v1118, %v2848
        %v3121 = vsel %vm2850, %v3120, %v3119
        %v3122 = vperm.slane %v1121, %v2852
        %v3123 = vsel %vm2854, %v3122, %v3121
        %v3124 = vperm.slane %v1124, %v2856
        %v3125 = vsel %vm2858, %v3124, %v3123
        %v3126 = vperm.slane %v1127, %v2860
        %v3127 = vsel %vm2862, %v3126, %v3125
        %v3128 = vperm.slane %v1130, %v2864
        %v3129 = vsel %vm2866, %v3128, %v3127
        %v3130 = vperm.slane %v1133, %v2868
        %v3131 = vsel %vm2870, %v3130, %v3129
        %v3132 = vperm.slane %v1136, %v2872
        %v3133 = vsel %vm2874, %v3132, %v3131
        %v3134 = vperm.slane %v1139, %v2876
        %v3135 = vsel %vm2878, %v3134, %v3133
        %v3136 = vperm.slane %v1142, %v2880
        %v3137 = vsel %vm2882, %v3136, %v3135
        %v3138 = vperm.slane %v1145, %v2884
        %v3139 = vsel %vm2886, %v3138, %v3137
        %v3140 = vperm.slane %v1148, %v2888
        %v3141 = vsel %vm2890, %v3140, %v3139
        %v3142 = vperm.slane %v1151, %v2892
        %v3143 = vsel %vm2894, %v3142, %v3141
        %v3144 = vperm.slane %v1154, %v2834
        %v3145 = vperm.slane %v1157, %v2836
        %v3146 = vsel %vm2838, %v3145, %v3144
        %v3147 = vperm.slane %v1160, %v2840
        %v3148 = vsel %vm2842, %v3147, %v3146
        %v3149 = vperm.slane %v1163, %v2844
        %v3150 = vsel %vm2846, %v3149, %v3148
        %v3151 = vperm.slane %v1166, %v2848
        %v3152 = vsel %vm2850, %v3151, %v3150
        %v3153 = vperm.slane %v1169, %v2852
        %v3154 = vsel %vm2854, %v3153, %v3152
        %v3155 = vperm.slane %v1172, %v2856
        %v3156 = vsel %vm2858, %v3155, %v3154
        %v3157 = vperm.slane %v1175, %v2860
        %v3158 = vsel %vm2862, %v3157, %v3156
        %v3159 = vperm.slane %v1178, %v2864
        %v3160 = vsel %vm2866, %v3159, %v3158
        %v3161 = vperm.slane %v1181, %v2868
        %v3162 = vsel %vm2870, %v3161, %v3160
        %v3163 = vperm.slane %v1184, %v2872
        %v3164 = vsel %vm2874, %v3163, %v3162
        %v3165 = vperm.slane %v1187, %v2876
        %v3166 = vsel %vm2878, %v3165, %v3164
        %v3167 = vperm.slane %v1190, %v2880
        %v3168 = vsel %vm2882, %v3167, %v3166
        %v3169 = vperm.slane %v1193, %v2884
        %v3170 = vsel %vm2886, %v3169, %v3168
        %v3171 = vperm.slane %v1196, %v2888
        %v3172 = vsel %vm2890, %v3171, %v3170
        %v3173 = vperm.slane %v1199, %v2892
        %v3174 = vsel %vm2894, %v3173, %v3172
        %v3175 = vperm.slane %v1202, %v2834
        %v3176 = vperm.slane %v1205, %v2836
        %v3177 = vsel %vm2838, %v3176, %v3175
        %v3178 = vperm.slane %v1208, %v2840
        %v3179 = vsel %vm2842, %v3178, %v3177
        %v3180 = vperm.slane %v1211, %v2844
        %v3181 = vsel %vm2846, %v3180, %v3179
        %v3182 = vperm.slane %v1214, %v2848
        %v3183 = vsel %vm2850, %v3182, %v3181
        %v3184 = vperm.slane %v1217, %v2852
        %v3185 = vsel %vm2854, %v3184, %v3183
        %v3186 = vperm.slane %v1220, %v2856
        %v3187 = vsel %vm2858, %v3186, %v3185
        %v3188 = vperm.slane %v1223, %v2860
        %v3189 = vsel %vm2862, %v3188, %v3187
        %v3190 = vperm.slane %v1226, %v2864
        %v3191 = vsel %vm2866, %v3190, %v3189
        %v3192 = vperm.slane %v1229, %v2868
        %v3193 = vsel %vm2870, %v3192, %v3191
        %v3194 = vperm.slane %v1232, %v2872
        %v3195 = vsel %vm2874, %v3194, %v3193
        %v3196 = vperm.slane %v1235, %v2876
        %v3197 = vsel %vm2878, %v3196, %v3195
        %v3198 = vperm.slane %v1238, %v2880
        %v3199 = vsel %vm2882, %v3198, %v3197
        %v3200 = vperm.slane %v1241, %v2884
        %v3201 = vsel %vm2886, %v3200, %v3199
        %v3202 = vperm.slane %v1244, %v2888
        %v3203 = vsel %vm2890, %v3202, %v3201
        %v3204 = vperm.slane %v1247, %v2892
        %v3205 = vsel %vm2894, %v3204, %v3203
        %v3206 = vperm.slane %v1250, %v2834
        %v3207 = vperm.slane %v1253, %v2836
        %v3208 = vsel %vm2838, %v3207, %v3206
        %v3209 = vperm.slane %v1256, %v2840
        %v3210 = vsel %vm2842, %v3209, %v3208
        %v3211 = vperm.slane %v1259, %v2844
        %v3212 = vsel %vm2846, %v3211, %v3210
        %v3213 = vperm.slane %v1262, %v2848
        %v3214 = vsel %vm2850, %v3213, %v3212
        %v3215 = vperm.slane %v1265, %v2852
        %v3216 = vsel %vm2854, %v3215, %v3214
        %v3217 = vperm.slane %v1268, %v2856
        %v3218 = vsel %vm2858, %v3217, %v3216
        %v3219 = vperm.slane %v1271, %v2860
        %v3220 = vsel %vm2862, %v3219, %v3218
        %v3221 = vperm.slane %v1274, %v2864
        %v3222 = vsel %vm2866, %v3221, %v3220
        %v3223 = vperm.slane %v1277, %v2868
        %v3224 = vsel %vm2870, %v3223, %v3222
        %v3225 = vperm.slane %v1280, %v2872
        %v3226 = vsel %vm2874, %v3225, %v3224
        %v3227 = vperm.slane %v1283, %v2876
        %v3228 = vsel %vm2878, %v3227, %v3226
        %v3229 = vperm.slane %v1286, %v2880
        %v3230 = vsel %vm2882, %v3229, %v3228
        %v3231 = vperm.slane %v1289, %v2884
        %v3232 = vsel %vm2886, %v3231, %v3230
        %v3233 = vperm.slane %v1292, %v2888
        %v3234 = vsel %vm2890, %v3233, %v3232
        %v3235 = vperm.slane %v1295, %v2892
        %v3236 = vsel %vm2894, %v3235, %v3234
        %v3237 = vperm.slane %v1298, %v2834
        %v3238 = vperm.slane %v1301, %v2836
        %v3239 = vsel %vm2838, %v3238, %v3237
        %v3240 = vperm.slane %v1304, %v2840
        %v3241 = vsel %vm2842, %v3240, %v3239
        %v3242 = vperm.slane %v1307, %v2844
        %v3243 = vsel %vm2846, %v3242, %v3241
        %v3244 = vperm.slane %v1310, %v2848
        %v3245 = vsel %vm2850, %v3244, %v3243
        %v3246 = vperm.slane %v1313, %v2852
        %v3247 = vsel %vm2854, %v3246, %v3245
        %v3248 = vperm.slane %v1316, %v2856
        %v3249 = vsel %vm2858, %v3248, %v3247
        %v3250 = vperm.slane %v1319, %v2860
        %v3251 = vsel %vm2862, %v3250, %v3249
        %v3252 = vperm.slane %v1322, %v2864
        %v3253 = vsel %vm2866, %v3252, %v3251
        %v3254 = vperm.slane %v1325, %v2868
        %v3255 = vsel %vm2870, %v3254, %v3253
        %v3256 = vperm.slane %v1328, %v2872
        %v3257 = vsel %vm2874, %v3256, %v3255
        %v3258 = vperm.slane %v1331, %v2876
        %v3259 = vsel %vm2878, %v3258, %v3257
        %v3260 = vperm.slane %v1334, %v2880
        %v3261 = vsel %vm2882, %v3260, %v3259
        %v3262 = vperm.slane %v1337, %v2884
        %v3263 = vsel %vm2886, %v3262, %v3261
        %v3264 = vperm.slane %v1340, %v2888
        %v3265 = vsel %vm2890, %v3264, %v3263
        %v3266 = vperm.slane %v1343, %v2892
        %v3267 = vsel %vm2894, %v3266, %v3265
        %v3268 = vperm.slane %v1346, %v2834
        %v3269 = vperm.slane %v1349, %v2836
        %v3270 = vsel %vm2838, %v3269, %v3268
        %v3271 = vperm.slane %v1352, %v2840
        %v3272 = vsel %vm2842, %v3271, %v3270
        %v3273 = vperm.slane %v1355, %v2844
        %v3274 = vsel %vm2846, %v3273, %v3272
        %v3275 = vperm.slane %v1358, %v2848
        %v3276 = vsel %vm2850, %v3275, %v3274
        %v3277 = vperm.slane %v1361, %v2852
        %v3278 = vsel %vm2854, %v3277, %v3276
        %v3279 = vperm.slane %v1364, %v2856
        %v3280 = vsel %vm2858, %v3279, %v3278
        %v3281 = vperm.slane %v1367, %v2860
        %v3282 = vsel %vm2862, %v3281, %v3280
        %v3283 = vperm.slane %v1370, %v2864
        %v3284 = vsel %vm2866, %v3283, %v3282
        %v3285 = vperm.slane %v1373, %v2868
        %v3286 = vsel %vm2870, %v3285, %v3284
        %v3287 = vperm.slane %v1376, %v2872
        %v3288 = vsel %vm2874, %v3287, %v3286
        %v3289 = vperm.slane %v1379, %v2876
        %v3290 = vsel %vm2878, %v3289, %v3288
        %v3291 = vperm.slane %v1382, %v2880
        %v3292 = vsel %vm2882, %v3291, %v3290
        %v3293 = vperm.slane %v1385, %v2884
        %v3294 = vsel %vm2886, %v3293, %v3292
        %v3295 = vperm.slane %v1388, %v2888
        %v3296 = vsel %vm2890, %v3295, %v3294
        %v3297 = vperm.slane %v1391, %v2892
        %v3298 = vsel %vm2894, %v3297, %v3296
        %v3299 = vperm.slane %v1394, %v2834
        %v3300 = vperm.slane %v1397, %v2836
        %v3301 = vsel %vm2838, %v3300, %v3299
        %v3302 = vperm.slane %v1400, %v2840
        %v3303 = vsel %vm2842, %v3302, %v3301
        %v3304 = vperm.slane %v1403, %v2844
        %v3305 = vsel %vm2846, %v3304, %v3303
        %v3306 = vperm.slane %v1406, %v2848
        %v3307 = vsel %vm2850, %v3306, %v3305
        %v3308 = vperm.slane %v1409, %v2852
        %v3309 = vsel %vm2854, %v3308, %v3307
        %v3310 = vperm.slane %v1412, %v2856
        %v3311 = vsel %vm2858, %v3310, %v3309
        %v3312 = vperm.slane %v1415, %v2860
        %v3313 = vsel %vm2862, %v3312, %v3311
        %v3314 = vperm.slane %v1418, %v2864
        %v3315 = vsel %vm2866, %v3314, %v3313
        %v3316 = vperm.slane %v1421, %v2868
        %v3317 = vsel %vm2870, %v3316, %v3315
        %v3318 = vperm.slane %v1424, %v2872
        %v3319 = vsel %vm2874, %v3318, %v3317
        %v3320 = vperm.slane %v1427, %v2876
        %v3321 = vsel %vm2878, %v3320, %v3319
        %v3322 = vperm.slane %v1430, %v2880
        %v3323 = vsel %vm2882, %v3322, %v3321
        %v3324 = vperm.slane %v1433, %v2884
        %v3325 = vsel %vm2886, %v3324, %v3323
        %v3326 = vperm.slane %v1436, %v2888
        %v3327 = vsel %vm2890, %v3326, %v3325
        %v3328 = vperm.slane %v1439, %v2892
        %v3329 = vsel %vm2894, %v3328, %v3327
        %v3330 = vperm.slane %v1442, %v2834
        %v3331 = vperm.slane %v1445, %v2836
        %v3332 = vsel %vm2838, %v3331, %v3330
        %v3333 = vperm.slane %v1448, %v2840
        %v3334 = vsel %vm2842, %v3333, %v3332
        %v3335 = vperm.slane %v1451, %v2844
        %v3336 = vsel %vm2846, %v3335, %v3334
        %v3337 = vperm.slane %v1454, %v2848
        %v3338 = vsel %vm2850, %v3337, %v3336
        %v3339 = vperm.slane %v1457, %v2852
        %v3340 = vsel %vm2854, %v3339, %v3338
        %v3341 = vperm.slane %v1460, %v2856
        %v3342 = vsel %vm2858, %v3341, %v3340
        %v3343 = vperm.slane %v1463, %v2860
        %v3344 = vsel %vm2862, %v3343, %v3342
        %v3345 = vperm.slane %v1466, %v2864
        %v3346 = vsel %vm2866, %v3345, %v3344
        %v3347 = vperm.slane %v1469, %v2868
        %v3348 = vsel %vm2870, %v3347, %v3346
        %v3349 = vperm.slane %v1472, %v2872
        %v3350 = vsel %vm2874, %v3349, %v3348
        %v3351 = vperm.slane %v1475, %v2876
        %v3352 = vsel %vm2878, %v3351, %v3350
        %v3353 = vperm.slane %v1478, %v2880
        %v3354 = vsel %vm2882, %v3353, %v3352
        %v3355 = vperm.slane %v1481, %v2884
        %v3356 = vsel %vm2886, %v3355, %v3354
        %v3357 = vperm.slane %v1484, %v2888
        %v3358 = vsel %vm2890, %v3357, %v3356
        %v3359 = vperm.slane %v1487, %v2892
        %v3360 = vsel %vm2894, %v3359, %v3358
        %v3361 = vperm.slane %v1490, %v2834
        %v3362 = vperm.slane %v1493, %v2836
        %v3363 = vsel %vm2838, %v3362, %v3361
        %v3364 = vperm.slane %v1496, %v2840
        %v3365 = vsel %vm2842, %v3364, %v3363
        %v3366 = vperm.slane %v1499, %v2844
        %v3367 = vsel %vm2846, %v3366, %v3365
        %v3368 = vperm.slane %v1502, %v2848
        %v3369 = vsel %vm2850, %v3368, %v3367
        %v3370 = vperm.slane %v1505, %v2852
        %v3371 = vsel %vm2854, %v3370, %v3369
        %v3372 = vperm.slane %v1508, %v2856
        %v3373 = vsel %vm2858, %v3372, %v3371
        %v3374 = vperm.slane %v1511, %v2860
        %v3375 = vsel %vm2862, %v3374, %v3373
        %v3376 = vperm.slane %v1514, %v2864
        %v3377 = vsel %vm2866, %v3376, %v3375
        %v3378 = vperm.slane %v1517, %v2868
        %v3379 = vsel %vm2870, %v3378, %v3377
        %v3380 = vperm.slane %v1520, %v2872
        %v3381 = vsel %vm2874, %v3380, %v3379
        %v3382 = vperm.slane %v1523, %v2876
        %v3383 = vsel %vm2878, %v3382, %v3381
        %v3384 = vperm.slane %v1526, %v2880
        %v3385 = vsel %vm2882, %v3384, %v3383
        %v3386 = vperm.slane %v1529, %v2884
        %v3387 = vsel %vm2886, %v3386, %v3385
        %v3388 = vperm.slane %v1532, %v2888
        %v3389 = vsel %vm2890, %v3388, %v3387
        %v3390 = vperm.slane %v1535, %v2892
        %v3391 = vsel %vm2894, %v3390, %v3389
        %v3392 = vperm.slane %v1538, %v2834
        %v3393 = vperm.slane %v1541, %v2836
        %v3394 = vsel %vm2838, %v3393, %v3392
        %v3395 = vperm.slane %v1544, %v2840
        %v3396 = vsel %vm2842, %v3395, %v3394
        %v3397 = vperm.slane %v1547, %v2844
        %v3398 = vsel %vm2846, %v3397, %v3396
        %v3399 = vperm.slane %v1550, %v2848
        %v3400 = vsel %vm2850, %v3399, %v3398
        %v3401 = vperm.slane %v1553, %v2852
        %v3402 = vsel %vm2854, %v3401, %v3400
        %v3403 = vperm.slane %v1556, %v2856
        %v3404 = vsel %vm2858, %v3403, %v3402
        %v3405 = vperm.slane %v1559, %v2860
        %v3406 = vsel %vm2862, %v3405, %v3404
        %v3407 = vperm.slane %v1562, %v2864
        %v3408 = vsel %vm2866, %v3407, %v3406
        %v3409 = vperm.slane %v1565, %v2868
        %v3410 = vsel %vm2870, %v3409, %v3408
        %v3411 = vperm.slane %v1568, %v2872
        %v3412 = vsel %vm2874, %v3411, %v3410
        %v3413 = vperm.slane %v1571, %v2876
        %v3414 = vsel %vm2878, %v3413, %v3412
        %v3415 = vperm.slane %v1574, %v2880
        %v3416 = vsel %vm2882, %v3415, %v3414
        %v3417 = vperm.slane %v1577, %v2884
        %v3418 = vsel %vm2886, %v3417, %v3416
        %v3419 = vperm.slane %v1580, %v2888
        %v3420 = vsel %vm2890, %v3419, %v3418
        %v3421 = vperm.slane %v1583, %v2892
        %v3422 = vsel %vm2894, %v3421, %v3420
        %v3423 = vperm.slane %v1586, %v2834
        %v3424 = vperm.slane %v1589, %v2836
        %v3425 = vsel %vm2838, %v3424, %v3423
        %v3426 = vperm.slane %v1592, %v2840
        %v3427 = vsel %vm2842, %v3426, %v3425
        %v3428 = vperm.slane %v1595, %v2844
        %v3429 = vsel %vm2846, %v3428, %v3427
        %v3430 = vperm.slane %v1598, %v2848
        %v3431 = vsel %vm2850, %v3430, %v3429
        %v3432 = vperm.slane %v1601, %v2852
        %v3433 = vsel %vm2854, %v3432, %v3431
        %v3434 = vperm.slane %v1604, %v2856
        %v3435 = vsel %vm2858, %v3434, %v3433
        %v3436 = vperm.slane %v1607, %v2860
        %v3437 = vsel %vm2862, %v3436, %v3435
        %v3438 = vperm.slane %v1610, %v2864
        %v3439 = vsel %vm2866, %v3438, %v3437
        %v3440 = vperm.slane %v1613, %v2868
        %v3441 = vsel %vm2870, %v3440, %v3439
        %v3442 = vperm.slane %v1616, %v2872
        %v3443 = vsel %vm2874, %v3442, %v3441
        %v3444 = vperm.slane %v1619, %v2876
        %v3445 = vsel %vm2878, %v3444, %v3443
        %v3446 = vperm.slane %v1622, %v2880
        %v3447 = vsel %vm2882, %v3446, %v3445
        %v3448 = vperm.slane %v1625, %v2884
        %v3449 = vsel %vm2886, %v3448, %v3447
        %v3450 = vperm.slane %v1628, %v2888
        %v3451 = vsel %vm2890, %v3450, %v3449
        %v3452 = vperm.slane %v1631, %v2892
        %v3453 = vsel %vm2894, %v3452, %v3451
        %v3454 = vperm.slane %v1634, %v2834
        %v3455 = vperm.slane %v1637, %v2836
        %v3456 = vsel %vm2838, %v3455, %v3454
        %v3457 = vperm.slane %v1640, %v2840
        %v3458 = vsel %vm2842, %v3457, %v3456
        %v3459 = vperm.slane %v1643, %v2844
        %v3460 = vsel %vm2846, %v3459, %v3458
        %v3461 = vperm.slane %v1646, %v2848
        %v3462 = vsel %vm2850, %v3461, %v3460
        %v3463 = vperm.slane %v1649, %v2852
        %v3464 = vsel %vm2854, %v3463, %v3462
        %v3465 = vperm.slane %v1652, %v2856
        %v3466 = vsel %vm2858, %v3465, %v3464
        %v3467 = vperm.slane %v1655, %v2860
        %v3468 = vsel %vm2862, %v3467, %v3466
        %v3469 = vperm.slane %v1658, %v2864
        %v3470 = vsel %vm2866, %v3469, %v3468
        %v3471 = vperm.slane %v1661, %v2868
        %v3472 = vsel %vm2870, %v3471, %v3470
        %v3473 = vperm.slane %v1664, %v2872
        %v3474 = vsel %vm2874, %v3473, %v3472
        %v3475 = vperm.slane %v1667, %v2876
        %v3476 = vsel %vm2878, %v3475, %v3474
        %v3477 = vperm.slane %v1670, %v2880
        %v3478 = vsel %vm2882, %v3477, %v3476
        %v3479 = vperm.slane %v1673, %v2884
        %v3480 = vsel %vm2886, %v3479, %v3478
        %v3481 = vperm.slane %v1676, %v2888
        %v3482 = vsel %vm2890, %v3481, %v3480
        %v3483 = vperm.slane %v1679, %v2892
        %v3484 = vsel %vm2894, %v3483, %v3482
        %v3485 = vperm.slane %v1682, %v2834
        %v3486 = vperm.slane %v1685, %v2836
        %v3487 = vsel %vm2838, %v3486, %v3485
        %v3488 = vperm.slane %v1688, %v2840
        %v3489 = vsel %vm2842, %v3488, %v3487
        %v3490 = vperm.slane %v1691, %v2844
        %v3491 = vsel %vm2846, %v3490, %v3489
        %v3492 = vperm.slane %v1694, %v2848
        %v3493 = vsel %vm2850, %v3492, %v3491
        %v3494 = vperm.slane %v1697, %v2852
        %v3495 = vsel %vm2854, %v3494, %v3493
        %v3496 = vperm.slane %v1700, %v2856
        %v3497 = vsel %vm2858, %v3496, %v3495
        %v3498 = vperm.slane %v1703, %v2860
        %v3499 = vsel %vm2862, %v3498, %v3497
        %v3500 = vperm.slane %v1706, %v2864
        %v3501 = vsel %vm2866, %v3500, %v3499
        %v3502 = vperm.slane %v1709, %v2868
        %v3503 = vsel %vm2870, %v3502, %v3501
        %v3504 = vperm.slane %v1712, %v2872
        %v3505 = vsel %vm2874, %v3504, %v3503
        %v3506 = vperm.slane %v1715, %v2876
        %v3507 = vsel %vm2878, %v3506, %v3505
        %v3508 = vperm.slane %v1718, %v2880
        %v3509 = vsel %vm2882, %v3508, %v3507
        %v3510 = vperm.slane %v1721, %v2884
        %v3511 = vsel %vm2886, %v3510, %v3509
        %v3512 = vperm.slane %v1724, %v2888
        %v3513 = vsel %vm2890, %v3512, %v3511
        %v3514 = vperm.slane %v1727, %v2892
        %v3515 = vsel %vm2894, %v3514, %v3513
        %v3516 = vperm.slane %v1730, %v2834
        %v3517 = vperm.slane %v1733, %v2836
        %v3518 = vsel %vm2838, %v3517, %v3516
        %v3519 = vperm.slane %v1736, %v2840
        %v3520 = vsel %vm2842, %v3519, %v3518
        %v3521 = vperm.slane %v1739, %v2844
        %v3522 = vsel %vm2846, %v3521, %v3520
        %v3523 = vperm.slane %v1742, %v2848
        %v3524 = vsel %vm2850, %v3523, %v3522
        %v3525 = vperm.slane %v1745, %v2852
        %v3526 = vsel %vm2854, %v3525, %v3524
        %v3527 = vperm.slane %v1748, %v2856
        %v3528 = vsel %vm2858, %v3527, %v3526
        %v3529 = vperm.slane %v1751, %v2860
        %v3530 = vsel %vm2862, %v3529, %v3528
        %v3531 = vperm.slane %v1754, %v2864
        %v3532 = vsel %vm2866, %v3531, %v3530
        %v3533 = vperm.slane %v1757, %v2868
        %v3534 = vsel %vm2870, %v3533, %v3532
        %v3535 = vperm.slane %v1760, %v2872
        %v3536 = vsel %vm2874, %v3535, %v3534
        %v3537 = vperm.slane %v1763, %v2876
        %v3538 = vsel %vm2878, %v3537, %v3536
        %v3539 = vperm.slane %v1766, %v2880
        %v3540 = vsel %vm2882, %v3539, %v3538
        %v3541 = vperm.slane %v1769, %v2884
        %v3542 = vsel %vm2886, %v3541, %v3540
        %v3543 = vperm.slane %v1772, %v2888
        %v3544 = vsel %vm2890, %v3543, %v3542
        %v3545 = vperm.slane %v1775, %v2892
        %v3546 = vsel %vm2894, %v3545, %v3544
        %v3547 = vperm.slane %v1778, %v2834
        %v3548 = vperm.slane %v1781, %v2836
        %v3549 = vsel %vm2838, %v3548, %v3547
        %v3550 = vperm.slane %v1784, %v2840
        %v3551 = vsel %vm2842, %v3550, %v3549
        %v3552 = vperm.slane %v1787, %v2844
        %v3553 = vsel %vm2846, %v3552, %v3551
        %v3554 = vperm.slane %v1790, %v2848
        %v3555 = vsel %vm2850, %v3554, %v3553
        %v3556 = vperm.slane %v1793, %v2852
        %v3557 = vsel %vm2854, %v3556, %v3555
        %v3558 = vperm.slane %v1796, %v2856
        %v3559 = vsel %vm2858, %v3558, %v3557
        %v3560 = vperm.slane %v1799, %v2860
        %v3561 = vsel %vm2862, %v3560, %v3559
        %v3562 = vperm.slane %v1802, %v2864
        %v3563 = vsel %vm2866, %v3562, %v3561
        %v3564 = vperm.slane %v1805, %v2868
        %v3565 = vsel %vm2870, %v3564, %v3563
        %v3566 = vperm.slane %v1808, %v2872
        %v3567 = vsel %vm2874, %v3566, %v3565
        %v3568 = vperm.slane %v1811, %v2876
        %v3569 = vsel %vm2878, %v3568, %v3567
        %v3570 = vperm.slane %v1814, %v2880
        %v3571 = vsel %vm2882, %v3570, %v3569
        %v3572 = vperm.slane %v1817, %v2884
        %v3573 = vsel %vm2886, %v3572, %v3571
        %v3574 = vperm.slane %v1820, %v2888
        %v3575 = vsel %vm2890, %v3574, %v3573
        %v3576 = vperm.slane %v1823, %v2892
        %v3577 = vsel %vm2894, %v3576, %v3575
        %v3578 = vperm.slane %v1826, %v2834
        %v3579 = vperm.slane %v1829, %v2836
        %v3580 = vsel %vm2838, %v3579, %v3578
        %v3581 = vperm.slane %v1832, %v2840
        %v3582 = vsel %vm2842, %v3581, %v3580
        %v3583 = vperm.slane %v1835, %v2844
        %v3584 = vsel %vm2846, %v3583, %v3582
        %v3585 = vperm.slane %v1838, %v2848
        %v3586 = vsel %vm2850, %v3585, %v3584
        %v3587 = vperm.slane %v1841, %v2852
        %v3588 = vsel %vm2854, %v3587, %v3586
        %v3589 = vperm.slane %v1844, %v2856
        %v3590 = vsel %vm2858, %v3589, %v3588
        %v3591 = vperm.slane %v1847, %v2860
        %v3592 = vsel %vm2862, %v3591, %v3590
        %v3593 = vperm.slane %v1850, %v2864
        %v3594 = vsel %vm2866, %v3593, %v3592
        %v3595 = vperm.slane %v1853, %v2868
        %v3596 = vsel %vm2870, %v3595, %v3594
        %v3597 = vperm.slane %v1856, %v2872
        %v3598 = vsel %vm2874, %v3597, %v3596
        %v3599 = vperm.slane %v1859, %v2876
        %v3600 = vsel %vm2878, %v3599, %v3598
        %v3601 = vperm.slane %v1862, %v2880
        %v3602 = vsel %vm2882, %v3601, %v3600
        %v3603 = vperm.slane %v1865, %v2884
        %v3604 = vsel %vm2886, %v3603, %v3602
        %v3605 = vperm.slane %v1868, %v2888
        %v3606 = vsel %vm2890, %v3605, %v3604
        %v3607 = vperm.slane %v1871, %v2892
        %v3608 = vsel %vm2894, %v3607, %v3606
        %v3609 = vperm.slane %v1874, %v2834
        %v3610 = vperm.slane %v1877, %v2836
        %v3611 = vsel %vm2838, %v3610, %v3609
        %v3612 = vperm.slane %v1880, %v2840
        %v3613 = vsel %vm2842, %v3612, %v3611
        %v3614 = vperm.slane %v1883, %v2844
        %v3615 = vsel %vm2846, %v3614, %v3613
        %v3616 = vperm.slane %v1886, %v2848
        %v3617 = vsel %vm2850, %v3616, %v3615
        %v3618 = vperm.slane %v1889, %v2852
        %v3619 = vsel %vm2854, %v3618, %v3617
        %v3620 = vperm.slane %v1892, %v2856
        %v3621 = vsel %vm2858, %v3620, %v3619
        %v3622 = vperm.slane %v1895, %v2860
        %v3623 = vsel %vm2862, %v3622, %v3621
        %v3624 = vperm.slane %v1898, %v2864
        %v3625 = vsel %vm2866, %v3624, %v3623
        %v3626 = vperm.slane %v1901, %v2868
        %v3627 = vsel %vm2870, %v3626, %v3625
        %v3628 = vperm.slane %v1904, %v2872
        %v3629 = vsel %vm2874, %v3628, %v3627
        %v3630 = vperm.slane %v1907, %v2876
        %v3631 = vsel %vm2878, %v3630, %v3629
        %v3632 = vperm.slane %v1910, %v2880
        %v3633 = vsel %vm2882, %v3632, %v3631
        %v3634 = vperm.slane %v1913, %v2884
        %v3635 = vsel %vm2886, %v3634, %v3633
        %v3636 = vperm.slane %v1916, %v2888
        %v3637 = vsel %vm2890, %v3636, %v3635
        %v3638 = vperm.slane %v1919, %v2892
        %v3639 = vsel %vm2894, %v3638, %v3637
        %v3640 = vperm.slane %v1922, %v2834
        %v3641 = vperm.slane %v1925, %v2836
        %v3642 = vsel %vm2838, %v3641, %v3640
        %v3643 = vperm.slane %v1928, %v2840
        %v3644 = vsel %vm2842, %v3643, %v3642
        %v3645 = vperm.slane %v1931, %v2844
        %v3646 = vsel %vm2846, %v3645, %v3644
        %v3647 = vperm.slane %v1934, %v2848
        %v3648 = vsel %vm2850, %v3647, %v3646
        %v3649 = vperm.slane %v1937, %v2852
        %v3650 = vsel %vm2854, %v3649, %v3648
        %v3651 = vperm.slane %v1940, %v2856
        %v3652 = vsel %vm2858, %v3651, %v3650
        %v3653 = vperm.slane %v1943, %v2860
        %v3654 = vsel %vm2862, %v3653, %v3652
        %v3655 = vperm.slane %v1946, %v2864
        %v3656 = vsel %vm2866, %v3655, %v3654
        %v3657 = vperm.slane %v1949, %v2868
        %v3658 = vsel %vm2870, %v3657, %v3656
        %v3659 = vperm.slane %v1952, %v2872
        %v3660 = vsel %vm2874, %v3659, %v3658
        %v3661 = vperm.slane %v1955, %v2876
        %v3662 = vsel %vm2878, %v3661, %v3660
        %v3663 = vperm.slane %v1958, %v2880
        %v3664 = vsel %vm2882, %v3663, %v3662
        %v3665 = vperm.slane %v1961, %v2884
        %v3666 = vsel %vm2886, %v3665, %v3664
        %v3667 = vperm.slane %v1964, %v2888
        %v3668 = vsel %vm2890, %v3667, %v3666
        %v3669 = vperm.slane %v1967, %v2892
        %v3670 = vsel %vm2894, %v3669, %v3668
        %v3671 = vperm.slane %v1970, %v2834
        %v3672 = vperm.slane %v1973, %v2836
        %v3673 = vsel %vm2838, %v3672, %v3671
        %v3674 = vperm.slane %v1976, %v2840
        %v3675 = vsel %vm2842, %v3674, %v3673
        %v3676 = vperm.slane %v1979, %v2844
        %v3677 = vsel %vm2846, %v3676, %v3675
        %v3678 = vperm.slane %v1982, %v2848
        %v3679 = vsel %vm2850, %v3678, %v3677
        %v3680 = vperm.slane %v1985, %v2852
        %v3681 = vsel %vm2854, %v3680, %v3679
        %v3682 = vperm.slane %v1988, %v2856
        %v3683 = vsel %vm2858, %v3682, %v3681
        %v3684 = vperm.slane %v1991, %v2860
        %v3685 = vsel %vm2862, %v3684, %v3683
        %v3686 = vperm.slane %v1994, %v2864
        %v3687 = vsel %vm2866, %v3686, %v3685
        %v3688 = vperm.slane %v1997, %v2868
        %v3689 = vsel %vm2870, %v3688, %v3687
        %v3690 = vperm.slane %v2000, %v2872
        %v3691 = vsel %vm2874, %v3690, %v3689
        %v3692 = vperm.slane %v2003, %v2876
        %v3693 = vsel %vm2878, %v3692, %v3691
        %v3694 = vperm.slane %v2006, %v2880
        %v3695 = vsel %vm2882, %v3694, %v3693
        %v3696 = vperm.slane %v2009, %v2884
        %v3697 = vsel %vm2886, %v3696, %v3695
        %v3698 = vperm.slane %v2012, %v2888
        %v3699 = vsel %vm2890, %v3698, %v3697
        %v3700 = vperm.slane %v2015, %v2892
        %v3701 = vsel %vm2894, %v3700, %v3699
        %v3702 = vperm.slane %v2018, %v2834
        %v3703 = vperm.slane %v2021, %v2836
        %v3704 = vsel %vm2838, %v3703, %v3702
        %v3705 = vperm.slane %v2024, %v2840
        %v3706 = vsel %vm2842, %v3705, %v3704
        %v3707 = vperm.slane %v2027, %v2844
        %v3708 = vsel %vm2846, %v3707, %v3706
        %v3709 = vperm.slane %v2030, %v2848
        %v3710 = vsel %vm2850, %v3709, %v3708
        %v3711 = vperm.slane %v2033, %v2852
        %v3712 = vsel %vm2854, %v3711, %v3710
        %v3713 = vperm.slane %v2036, %v2856
        %v3714 = vsel %vm2858, %v3713, %v3712
        %v3715 = vperm.slane %v2039, %v2860
        %v3716 = vsel %vm2862, %v3715, %v3714
        %v3717 = vperm.slane %v2042, %v2864
        %v3718 = vsel %vm2866, %v3717, %v3716
        %v3719 = vperm.slane %v2045, %v2868
        %v3720 = vsel %vm2870, %v3719, %v3718
        %v3721 = vperm.slane %v2048, %v2872
        %v3722 = vsel %vm2874, %v3721, %v3720
        %v3723 = vperm.slane %v2051, %v2876
        %v3724 = vsel %vm2878, %v3723, %v3722
        %v3725 = vperm.slane %v2054, %v2880
        %v3726 = vsel %vm2882, %v3725, %v3724
        %v3727 = vperm.slane %v2057, %v2884
        %v3728 = vsel %vm2886, %v3727, %v3726
        %v3729 = vperm.slane %v2060, %v2888
        %v3730 = vsel %vm2890, %v3729, %v3728
        %v3731 = vperm.slane %v2063, %v2892
        %v3732 = vsel %vm2894, %v3731, %v3730
        %v3733 = vperm.slane %v2066, %v2834
        %v3734 = vperm.slane %v2069, %v2836
        %v3735 = vsel %vm2838, %v3734, %v3733
        %v3736 = vperm.slane %v2072, %v2840
        %v3737 = vsel %vm2842, %v3736, %v3735
        %v3738 = vperm.slane %v2075, %v2844
        %v3739 = vsel %vm2846, %v3738, %v3737
        %v3740 = vperm.slane %v2078, %v2848
        %v3741 = vsel %vm2850, %v3740, %v3739
        %v3742 = vperm.slane %v2081, %v2852
        %v3743 = vsel %vm2854, %v3742, %v3741
        %v3744 = vperm.slane %v2084, %v2856
        %v3745 = vsel %vm2858, %v3744, %v3743
        %v3746 = vperm.slane %v2087, %v2860
        %v3747 = vsel %vm2862, %v3746, %v3745
        %v3748 = vperm.slane %v2090, %v2864
        %v3749 = vsel %vm2866, %v3748, %v3747
        %v3750 = vperm.slane %v2093, %v2868
        %v3751 = vsel %vm2870, %v3750, %v3749
        %v3752 = vperm.slane %v2096, %v2872
        %v3753 = vsel %vm2874, %v3752, %v3751
        %v3754 = vperm.slane %v2099, %v2876
        %v3755 = vsel %vm2878, %v3754, %v3753
        %v3756 = vperm.slane %v2102, %v2880
        %v3757 = vsel %vm2882, %v3756, %v3755
        %v3758 = vperm.slane %v2105, %v2884
        %v3759 = vsel %vm2886, %v3758, %v3757
        %v3760 = vperm.slane %v2108, %v2888
        %v3761 = vsel %vm2890, %v3760, %v3759
        %v3762 = vperm.slane %v2111, %v2892
        %v3763 = vsel %vm2894, %v3762, %v3761
        %v3764 = vperm.slane %v2114, %v2834
        %v3765 = vperm.slane %v2117, %v2836
        %v3766 = vsel %vm2838, %v3765, %v3764
        %v3767 = vperm.slane %v2120, %v2840
        %v3768 = vsel %vm2842, %v3767, %v3766
        %v3769 = vperm.slane %v2123, %v2844
        %v3770 = vsel %vm2846, %v3769, %v3768
        %v3771 = vperm.slane %v2126, %v2848
        %v3772 = vsel %vm2850, %v3771, %v3770
        %v3773 = vperm.slane %v2129, %v2852
        %v3774 = vsel %vm2854, %v3773, %v3772
        %v3775 = vperm.slane %v2132, %v2856
        %v3776 = vsel %vm2858, %v3775, %v3774
        %v3777 = vperm.slane %v2135, %v2860
        %v3778 = vsel %vm2862, %v3777, %v3776
        %v3779 = vperm.slane %v2138, %v2864
        %v3780 = vsel %vm2866, %v3779, %v3778
        %v3781 = vperm.slane %v2141, %v2868
        %v3782 = vsel %vm2870, %v3781, %v3780
        %v3783 = vperm.slane %v2144, %v2872
        %v3784 = vsel %vm2874, %v3783, %v3782
        %v3785 = vperm.slane %v2147, %v2876
        %v3786 = vsel %vm2878, %v3785, %v3784
        %v3787 = vperm.slane %v2150, %v2880
        %v3788 = vsel %vm2882, %v3787, %v3786
        %v3789 = vperm.slane %v2153, %v2884
        %v3790 = vsel %vm2886, %v3789, %v3788
        %v3791 = vperm.slane %v2156, %v2888
        %v3792 = vsel %vm2890, %v3791, %v3790
        %v3793 = vperm.slane %v2159, %v2892
        %v3794 = vsel %vm2894, %v3793, %v3792
        %v3795 = vperm.slane %v2162, %v2834
        %v3796 = vperm.slane %v2165, %v2836
        %v3797 = vsel %vm2838, %v3796, %v3795
        %v3798 = vperm.slane %v2168, %v2840
        %v3799 = vsel %vm2842, %v3798, %v3797
        %v3800 = vperm.slane %v2171, %v2844
        %v3801 = vsel %vm2846, %v3800, %v3799
        %v3802 = vperm.slane %v2174, %v2848
        %v3803 = vsel %vm2850, %v3802, %v3801
        %v3804 = vperm.slane %v2177, %v2852
        %v3805 = vsel %vm2854, %v3804, %v3803
        %v3806 = vperm.slane %v2180, %v2856
        %v3807 = vsel %vm2858, %v3806, %v3805
        %v3808 = vperm.slane %v2183, %v2860
        %v3809 = vsel %vm2862, %v3808, %v3807
        %v3810 = vperm.slane %v2186, %v2864
        %v3811 = vsel %vm2866, %v3810, %v3809
        %v3812 = vperm.slane %v2189, %v2868
        %v3813 = vsel %vm2870, %v3812, %v3811
        %v3814 = vperm.slane %v2192, %v2872
        %v3815 = vsel %vm2874, %v3814, %v3813
        %v3816 = vperm.slane %v2195, %v2876
        %v3817 = vsel %vm2878, %v3816, %v3815
        %v3818 = vperm.slane %v2198, %v2880
        %v3819 = vsel %vm2882, %v3818, %v3817
        %v3820 = vperm.slane %v2201, %v2884
        %v3821 = vsel %vm2886, %v3820, %v3819
        %v3822 = vperm.slane %v2204, %v2888
        %v3823 = vsel %vm2890, %v3822, %v3821
        %v3824 = vperm.slane %v2207, %v2892
        %v3825 = vsel %vm2894, %v3824, %v3823
        %v3826 = vperm.slane %v2210, %v2834
        %v3827 = vperm.slane %v2213, %v2836
        %v3828 = vsel %vm2838, %v3827, %v3826
        %v3829 = vperm.slane %v2216, %v2840
        %v3830 = vsel %vm2842, %v3829, %v3828
        %v3831 = vperm.slane %v2219, %v2844
        %v3832 = vsel %vm2846, %v3831, %v3830
        %v3833 = vperm.slane %v2222, %v2848
        %v3834 = vsel %vm2850, %v3833, %v3832
        %v3835 = vperm.slane %v2225, %v2852
        %v3836 = vsel %vm2854, %v3835, %v3834
        %v3837 = vperm.slane %v2228, %v2856
        %v3838 = vsel %vm2858, %v3837, %v3836
        %v3839 = vperm.slane %v2231, %v2860
        %v3840 = vsel %vm2862, %v3839, %v3838
        %v3841 = vperm.slane %v2234, %v2864
        %v3842 = vsel %vm2866, %v3841, %v3840
        %v3843 = vperm.slane %v2237, %v2868
        %v3844 = vsel %vm2870, %v3843, %v3842
        %v3845 = vperm.slane %v2240, %v2872
        %v3846 = vsel %vm2874, %v3845, %v3844
        %v3847 = vperm.slane %v2243, %v2876
        %v3848 = vsel %vm2878, %v3847, %v3846
        %v3849 = vperm.slane %v2246, %v2880
        %v3850 = vsel %vm2882, %v3849, %v3848
        %v3851 = vperm.slane %v2249, %v2884
        %v3852 = vsel %vm2886, %v3851, %v3850
        %v3853 = vperm.slane %v2252, %v2888
        %v3854 = vsel %vm2890, %v3853, %v3852
        %v3855 = vperm.slane %v2255, %v2892
        %v3856 = vsel %vm2894, %v3855, %v3854
        %vm3857 = vcmask 1041409
        %v3858 = vsel %vm3857, %v3019, %v2895
        %vm3859 = vcmask 1042434
        %v3860 = vsel %vm3859, %v3143, %v3858
        %vm3861 = vcmask 1043459
        %v3862 = vsel %vm3861, %v3267, %v3860
        %vm3863 = vcmask 1044484
        %v3864 = vsel %vm3863, %v3391, %v3862
        %vm3865 = vcmask 1045509
        %v3866 = vsel %vm3865, %v3515, %v3864
        %vm3867 = vcmask 1046534
        %v3868 = vsel %vm3867, %v3639, %v3866
        %vm3869 = vcmask 1047559
        %v3870 = vsel %vm3869, %v3763, %v3868
        %v3871 = vsel %vm3857, %v3050, %v2926
        %v3872 = vsel %vm3859, %v3174, %v3871
        %v3873 = vsel %vm3861, %v3298, %v3872
        %v3874 = vsel %vm3863, %v3422, %v3873
        %v3875 = vsel %vm3865, %v3546, %v3874
        %v3876 = vsel %vm3867, %v3670, %v3875
        %v3877 = vsel %vm3869, %v3794, %v3876
        %v3878 = vsel %vm3857, %v3081, %v2957
        %v3879 = vsel %vm3859, %v3205, %v3878
        %v3880 = vsel %vm3861, %v3329, %v3879
        %v3881 = vsel %vm3863, %v3453, %v3880
        %v3882 = vsel %vm3865, %v3577, %v3881
        %v3883 = vsel %vm3867, %v3701, %v3882
        %v3884 = vsel %vm3869, %v3825, %v3883
        %v3885 = vsel %vm3857, %v3112, %v2988
        %v3886 = vsel %vm3859, %v3236, %v3885
        %v3887 = vsel %vm3861, %v3360, %v3886
        %v3888 = vsel %vm3863, %v3484, %v3887
        %v3889 = vsel %vm3865, %v3608, %v3888
        %v3890 = vsel %vm3867, %v3732, %v3889
        %v3891 = vsel %vm3869, %v3856, %v3890
        %3896 = vmatpush.msra.mxu0 %v2272
        %3897 = vmatpush.msra.mxu0 %v2271
        %3898 = vmatpush.msra.mxu0 %v2270
        %3899 = vmatpush.msra.mxu0 %v2269
        %3900 = vmatpush.msra.mxu0 %v2268
        %3901 = vmatpush.msra.mxu0 %v2267
        %3902 = vmatpush.msra.mxu0 %v2266
        %3903 = vmatpush.msra.mxu0 %v2265
        %3904 = vmatpush.msra.mxu0 %v2264
        %3905 = vmatpush.msra.mxu0 %v2263
        %3906 = vmatpush.msra.mxu0 %v2262
        %3907 = vmatpush.msra.mxu0 %v2261
        %3908 = vmatpush.msra.mxu0 %v2260
        %3909 = vmatpush.msra.mxu0 %v2259
        %3910 = vmatpush.msra.mxu0 %v2258
        %3911 = vmatpush.msra.mxu0 %v2257
        %3912 = vmatmul.f32.gmra.mxu0 %v3870
        %v3913 = vpop.f32.mrf.mxu0
        %v3914 = vadd.f32 0.0, %v3913
        %3915 = vdwg.mxu0
        %3916 = vmatpush.msra.mxu0 %v2288
        %3917 = vmatpush.msra.mxu0 %v2287
        %3918 = vmatpush.msra.mxu0 %v2286
        %3919 = vmatpush.msra.mxu0 %v2285
        %3920 = vmatpush.msra.mxu0 %v2284
        %3921 = vmatpush.msra.mxu0 %v2283
        %3922 = vmatpush.msra.mxu0 %v2282
        %3923 = vmatpush.msra.mxu0 %v2281
        %3924 = vmatpush.msra.mxu0 %v2280
        %3925 = vmatpush.msra.mxu0 %v2279
        %3926 = vmatpush.msra.mxu0 %v2278
        %3927 = vmatpush.msra.mxu0 %v2277
        %3928 = vmatpush.msra.mxu0 %v2276
        %3929 = vmatpush.msra.mxu0 %v2275
        %3930 = vmatpush.msra.mxu0 %v2274
        %3931 = vmatpush.msra.mxu0 %v2273
        %3932 = vmatmul.f32.gmra.mxu0 %v3877
        %v3933 = vpop.f32.mrf.mxu0
        %v3934 = vadd.f32 %v3914, %v3933
        %3935 = vdwg.mxu0
        %3936 = vmatpush.msra.mxu0 %v2304
        %3937 = vmatpush.msra.mxu0 %v2303
        %3938 = vmatpush.msra.mxu0 %v2302
        %3939 = vmatpush.msra.mxu0 %v2301
        %3940 = vmatpush.msra.mxu0 %v2300
        %3941 = vmatpush.msra.mxu0 %v2299
        %3942 = vmatpush.msra.mxu0 %v2298
        %3943 = vmatpush.msra.mxu0 %v2297
        %3944 = vmatpush.msra.mxu0 %v2296
        %3945 = vmatpush.msra.mxu0 %v2295
        %3946 = vmatpush.msra.mxu0 %v2294
        %3947 = vmatpush.msra.mxu0 %v2293
        %3948 = vmatpush.msra.mxu0 %v2292
        %3949 = vmatpush.msra.mxu0 %v2291
        %3950 = vmatpush.msra.mxu0 %v2290
        %3951 = vmatpush.msra.mxu0 %v2289
        %3952 = vmatmul.f32.gmra.mxu0 %v3884
        %v3953 = vpop.f32.mrf.mxu0
        %v3954 = vadd.f32 %v3934, %v3953
        %3955 = vdwg.mxu0
        %3956 = vmatpush.msra.mxu0 %v2320
        %3957 = vmatpush.msra.mxu0 %v2319
        %3958 = vmatpush.msra.mxu0 %v2318
        %3959 = vmatpush.msra.mxu0 %v2317
        %3960 = vmatpush.msra.mxu0 %v2316
        %3961 = vmatpush.msra.mxu0 %v2315
        %3962 = vmatpush.msra.mxu0 %v2314
        %3963 = vmatpush.msra.mxu0 %v2313
        %3964 = vmatpush.msra.mxu0 %v2312
        %3965 = vmatpush.msra.mxu0 %v2311
        %3966 = vmatpush.msra.mxu0 %v2310
        %3967 = vmatpush.msra.mxu0 %v2309
        %3968 = vmatpush.msra.mxu0 %v2308
        %3969 = vmatpush.msra.mxu0 %v2307
        %3970 = vmatpush.msra.mxu0 %v2306
        %3971 = vmatpush.msra.mxu0 %v2305
        %3972 = vmatmul.f32.gmra.mxu0 %v3891
        %v3973 = vpop.f32.mrf.mxu0
        %v3974 = vadd.f32 %v3954, %v3973
        %3975 = vdwg.mxu0
        %v3976 = vadd.f32 %v2256, %v3974
        %3977 = vst [vmem:[#allocation2] sm:$0xff] %v3976
        // Predicated region
        $region37: #{_mhcls_pallas.1} parent=31 // pred_check
          %p3978 = pneg %p202
        $region38: #{_mhcls_pallas.1} parent=31 // pred_check_branch
          %3980 = sbr.rel (%p3978) target = $region40
        $region39: #{_mhcls_pallas.1} parent=31 // pred_region
          %v3981 = vld [vmem:[#allocation2] sm:$0xff]
          %v3982 = vld [vmem:[%s2] sm:$0x1]
          %v3984 = vperm.slane %v3982, 0
          %v3986 = vadd.f32 %v3981, %v3984
          %3987 = vst [vmem:[%s189] sm:$0xff] %v3986
        $region40: #{_mhcls_pallas.1} parent=31 // pred_fallthru
          _
        %s3988 = sand.u32 %s107, 1
        %s3989 = scalar_lea.sflag [#allocation4], %s3988
        %s3990 = sand.u32 %s107, 1
        %s3991 = smul.addr %s3990, 8
        %s3992 = scalar_lea.vmem [#allocation3], %s3991
        // Predicated region
        $region41: #{_mhcls_pallas.1} parent=31 // pred_check
          %p3993 = pneg %p117
        $region42: #{_mhcls_pallas.1} parent=31 // pred_check_branch
          %3995 = sbr.rel (%p3993) target = $region44
        $region43: #{_mhcls_pallas.1} parent=31 // pred_region
          %3997 = vsyncadd %s3989, 0
          %s3998 = smul.addr %s21, 8
          %s3999 = scalar_lea.hbm %s3, %s3998
          %s4001 = sshll.u32 %s3992, 4
          %s4002 = int_to_ptr.vmem [resolvable:$true] %s4001
          %s4003 = sshll.u32 %s3999, 4
          %s4004 = int_to_ptr.hbm [resolvable:$true] %s4003
          %4006 = dma.vmem_to_hbm [thread:$0]  %s4002, 128, %s4004, %s3989
        $region44: #{_mhcls_pallas.1} parent=31 // pred_fallthru
          _
      $region32: #{_mhcls_pallas.1} parent=5 // pred_fallthru
        _
      %p4007 = scmp.le.s32.totalorder 2, %s12
      // Predicated region
      $region45: #{_mhcls_pallas.1} parent=5 // pred_check
        %p4008 = pneg %p4007
      $region46: #{_mhcls_pallas.1} parent=5 // pred_check_branch
        %4010 = sbr.rel (%p4008) target = $region48
      $region47: #{_mhcls_pallas.1} parent=5 // pred_region
        %s4011 = ssub.s32 %s12, 2
        // Predicated region
        $region49: #{_mhcls_pallas.1} parent=47 // pred_check
          %p4012 = pneg %p123
        $region50: #{_mhcls_pallas.1} parent=47 // pred_check_branch
          %4014 = sbr.rel (%p4012) target = $region52
        $region51: #{_mhcls_pallas.1} parent=47 // pred_region
          %s4015 = sand.u32 %s108, 1
          %s4016 = scalar_lea.sflag [#allocation4], %s4015
          %s4017 = sand.u32 %s108, 1
          %s4018 = smul.addr %s4017, 8
          %s4019 = scalar_lea.vmem [#allocation3], %s4018
          %4021 = dma.done %s4016, 128
        $region52: #{_mhcls_pallas.1} parent=47 // pred_fallthru
          _
      $region48: #{_mhcls_pallas.1} parent=5 // pred_fallthru
        _
    $region6: #{_mhcls_pallas.1} parent=1 // loop_footer
      %s16 = sadd.s32 1, %s12
    $region7: #{_mhcls_pallas.1} parent=1 // loop_footer_branch
      %11 = sbr.rel target = $region3
    $region8: #{_mhcls_pallas.1} parent=1 // loop_exit
      _
    %4022 = vsyncpa [#allocation4], 1
    %s4023 = scalar_lea.sflag [#allocation4], 1
    %4024 = vsyncpa %s4023, 1

</llo_original>
